<compile_context>
chip_gen: v6e
topology: v6e:2x2x1
jax: 0.10.0
libtpu: 0.0.40
codegen_flags: <defaults>
</compile_context>

<pallas_src>
import math

import jax
import jax.numpy as jnp
from jax.experimental import pallas as pl
from jax.experimental.pallas import tpu as pltpu


_VMEM = pl.BlockSpec(memory_space=pltpu.MemorySpace.VMEM)
_ANY = pl.BlockSpec(memory_space=pl.ANY)


# ---------------------------------------------------------------------------
# Fused Pallas kernel: embed-activations -> LSTM x2 (wavefront) -> FC
# ---------------------------------------------------------------------------

def _tiny_rnn_kernel(emb_ref, w_ih0_ref, w_hh0_ref, b0_ref,
                     w_cat1_hbm, b1_ref, fc_w_hbm, fc_b_ref,
                     h0_ref, c0_ref,
                     logits_ref, hn_ref, cn_ref,
                     xproj_scr, seq_scr, w1_vmem, fcw_vmem, dma_sem):
    """Whole TinyRNN forward (eval mode) in one kernel.

    emb_ref    : (T*Bp, E)  bf16  time-major flattened embedded inputs
    w_ih0_ref  : (E, 4H)    bf16  layer-0 input->gates   (gate order i,f,o,g)
    w_hh0_ref  : (H, 4H)    bf16  layer-0 hidden->gates
    b0_ref     : (1, 4H)    f32   layer-0 combined bias (b_ih + b_hh)
    w_cat1_hbm : (2H, 4H)   bf16  [W_ih1; W_hh1] stacked (in HBM, DMA'd manually)
    b1_ref     : (1, 4H)    f32   layer-1 combined bias
    fc_w_hbm   : (H, V)     bf16  FC weight (in HBM, DMA'd manually)
    fc_b_ref   : (1, V)     f32
    h0/c0_ref  : (2, Bp, H) f32   initial state per layer
    logits_ref : (T*Bp, V)  f32
    hn/cn_ref  : (2, Bp, H) f32
    xproj_scr  : (T*Bp, 4H) f32   precomputed layer-0 input projections
    seq_scr    : (T*Bp, H)  f32   layer-1 hidden sequence (FC input)
    w1/fcw_vmem: VMEM landing buffers for the manually prefetched weights
    dma_sem    : DMA semaphores (2,)
    """
    TB, E = emb_ref.shape
    H = w_hh0_ref.shape[0]
    Bp = h0_ref.shape[1]
    T = TB // Bp
    f32 = jnp.float32
    bf16 = jnp.bfloat16

    # Kick off DMA of layer-1 / FC weights immediately; hidden behind layer-0.
    cp_w1 = pltpu.make_async_copy(w_cat1_hbm, w1_vmem, dma_sem.at[0])
    cp_fc = pltpu.make_async_copy(fc_w_hbm, fcw_vmem, dma_sem.at[1])
    cp_w1.start()
    cp_fc.start()

    def cell(gates, c):
        # Gate column order is (i, f, o, g): one contiguous sigmoid slab (3H)
        # plus one tanh slab (H).  All element-wise math in f32.
        sg = jax.nn.sigmoid(gates[:, :3 * H])
        i = sg[:, 0 * H:1 * H]
        f = sg[:, 1 * H:2 * H]
        o = sg[:, 2 * H:3 * H]
        g = jnp.tanh(gates[:, 3 * H:])
        c_new = f * c + i * g
        h_new = o * jnp.tanh(c_new)
        return h_new, c_new

    # Layer-0 input projection hoisted out of the recurrence (one big matmul).
    xproj_scr[...] = (
        jnp.dot(emb_ref[...], w_ih0_ref[...], preferred_element_type=f32)
        + b0_ref[...])

    w_hh0 = w_hh0_ref[...]                                    # (H, 4H) bf16
    b1_full = jnp.broadcast_to(b1_ref[...], (Bp, 4 * H))      # hoisted broadcast

    h0 = h0_ref[0]
    c0 = c0_ref[0]
    h1 = h0_ref[1]
    c1 = c0_ref[1]

    # Wavefront: round r runs layer-0 step r and layer-1 step r-1; the two
    # chains are independent within a round, so MXU/EUP latency overlaps.
    w_cat1 = None
    for r in range(T + 1):                       # static unroll (T small & fixed)
        nh0 = nc0 = None
        if r < T:
            g0 = (xproj_scr[pl.ds(r * Bp, Bp), :]
                  + jnp.dot(h0.astype(bf16), w_hh0, preferred_element_type=f32))
            nh0, nc0 = cell(g0, c0)
        if r >= 1:
            if r == 1:
                cp_w1.wait()                     # first use of prefetched weight
                w_cat1 = w1_vmem[...]            # (2H, 4H) bf16
            # Fused K=2H gate matmul: [h0_{r-1}, h1_{r-2}] @ [W_ih1; W_hh1].
            # (inter-layer dropout p=0.2 is identity in eval mode)
            x1 = jnp.concatenate([h0.astype(bf16), h1.astype(bf16)], axis=1)
            g1 = jnp.dot(x1, w_cat1, preferred_element_type=f32) + b1_full
            h1, c1 = cell(g1, c1)
            seq_scr[pl.ds((r - 1) * Bp, Bp), :] = h1
        if r < T:
            h0, c0 = nh0, nc0

    hn_ref[0] = h0
    cn_ref[0] = c0
    hn_ref[1] = h1
    cn_ref[1] = c1

    # FC head (post-LSTM dropout p=0.3 is identity in eval mode).
    cp_fc.wait()
    logits_ref[...] = (
        jnp.dot(seq_scr[...].astype(bf16), fcw_vmem[...],
                preferred_element_type=f32)
        + fc_b_ref[...])


# ---------------------------------------------------------------------------
# Parameters (torch-layout) and kernel-layout preparation
# ---------------------------------------------------------------------------

def init_params(key, vocab_size, embed_size=128, hidden_size=256, num_layers=2):
    """Deterministic parameter init mirroring the torch module's shapes.
    Weights are stored transposed vs torch: W_ih (Din,4H), W_hh (H,4H), fc_w (H,V);
    gate column order is torch's (i, f, g, o)."""
    keys = jax.random.split(key, 2 + 4 * num_layers + 2)
    ki = iter(keys)

    params = {
        "vocab_size": vocab_size,
        "embed_size": embed_size,
        "hidden_size": hidden_size,
        "num_layers": num_layers,
    }
    # nn.Embedding: N(0, 1)
    params["embed"] = jax.random.normal(next(ki), (vocab_size, embed_size),
                                        jnp.float32)

    # nn.LSTM: uniform(-1/sqrt(H), 1/sqrt(H))
    bound = 1.0 / math.sqrt(hidden_size)
    lstm = []
    for layer in range(num_layers):
        in_dim = embed_size if layer == 0 else hidden_size
        w_ih = jax.random.uniform(next(ki), (in_dim, 4 * hidden_size),
                                  jnp.float32, -bound, bound)
        w_hh = jax.random.uniform(next(ki), (hidden_size, 4 * hidden_size),
                                  jnp.float32, -bound, bound)
        b_ih = jax.random.uniform(next(ki), (4 * hidden_size,),
                                  jnp.float32, -bound, bound)
        b_hh = jax.random.uniform(next(ki), (4 * hidden_size,),
                                  jnp.float32, -bound, bound)
        lstm.append({"w_ih": w_ih, "w_hh": w_hh,
                     "b": (b_ih + b_hh).reshape(1, 4 * hidden_size)})
    params["lstm"] = lstm

    # nn.Linear(hidden, vocab): uniform(-1/sqrt(H), 1/sqrt(H)); stored (H, V).
    params["fc_w"] = jax.random.uniform(next(ki), (hidden_size, vocab_size),
                                        jnp.float32, -bound, bound)
    params["fc_b"] = jax.random.uniform(next(ki), (1, vocab_size),
                                        jnp.float32, -bound, bound)
    return params


def _permute_ifgo_to_ifog(w):
    """Reorder gate columns from torch (i, f, g, o) to kernel (i, f, o, g)."""
    i, f, g, o = jnp.split(w, 4, axis=-1)
    return jnp.concatenate([i, f, o, g], axis=-1)


def _prepare_kernel_params(params):
    """Gate-permuted, bf16 weights + f32 biases in the layout the kernel wants."""
    p0, p1 = params["lstm"]
    bf16 = jnp.bfloat16
    w_ih0 = _permute_ifgo_to_ifog(p0["w_ih"]).astype(bf16)
    w_hh0 = _permute_ifgo_to_ifog(p0["w_hh"]).astype(bf16)
    b0 = _permute_ifgo_to_ifog(p0["b"])
    w_cat1 = jnp.concatenate(
        [_permute_ifgo_to_ifog(p1["w_ih"]),
         _permute_ifgo_to_ifog(p1["w_hh"])], axis=0).astype(bf16)   # (2H, 4H)
    b1 = _permute_ifgo_to_ifog(p1["b"])
    fc_w = params["fc_w"].astype(bf16)
    fc_b = params["fc_b"]
    return w_ih0, w_hh0, b0, w_cat1, b1, fc_w, fc_b


# ---------------------------------------------------------------------------
# Wrapper
# ---------------------------------------------------------------------------

def tiny_rnn_forward(params, tokens, hidden=None):
    """tokens: int32 (B, T).  Returns (logits (B,T,V), (h_n, c_n) each (L,B,H))."""
    B, T = tokens.shape
    H = params["hidden_size"]
    L = params["num_layers"]
    V = params["vocab_size"]
    E = params["embed_size"]
    assert L == 2, "fused kernel is specialized for the module's num_layers=2"

    Bp = max(16, -(-B // 16) * 16)   # bf16 packs 16 sublane rows per vreg tile

    # Embedding lookup (gather) + pad, time-major flattened; glue kept in JAX.
    # TODO(synk): fold the token gather into the kernel (scalar-prefetch ids or
    # one-hot matmul against a VMEM-resident table) to drop this XLA launch.
    emb = jnp.take(params["embed"], tokens.T, axis=0)            # (T, B, E) f32
    emb = jnp.pad(emb, ((0, 0), (0, Bp - B), (0, 0)))
    emb = emb.reshape(T * Bp, E).astype(jnp.bfloat16)            # (T*Bp, E)

    if hidden is None:
        h0 = jnp.zeros((L, Bp, H), jnp.float32)
        c0 = jnp.zeros((L, Bp, H), jnp.float32)
    else:
        h0, c0 = hidden
        h0 = jnp.pad(h0.astype(jnp.float32), ((0, 0), (0, Bp - B), (0, 0)))
        c0 = jnp.pad(c0.astype(jnp.float32), ((0, 0), (0, Bp - B), (0, 0)))

    w_ih0, w_hh0, b0, w_cat1, b1, fc_w, fc_b = _prepare_kernel_params(params)

    logits_p, hn_p, cn_p = pl.pallas_call(
        _tiny_rnn_kernel,
        out_shape=(
            jax.ShapeDtypeStruct((T * Bp, V), jnp.float32),   # logits (time-major flat)
            jax.ShapeDtypeStruct((L, Bp, H), jnp.float32),    # h_n
            jax.ShapeDtypeStruct((L, Bp, H), jnp.float32),    # c_n
        ),
        in_specs=[
            _VMEM,   # emb
            _VMEM,   # w_ih0
            _VMEM,   # w_hh0
            _VMEM,   # b0
            _ANY,    # w_cat1  (stays in HBM; manually prefetched behind layer 0)
            _VMEM,   # b1
            _ANY,    # fc_w    (stays in HBM; manually prefetched)
            _VMEM,   # fc_b
            _VMEM,   # h0
            _VMEM,   # c0
        ],
        out_specs=(_VMEM, _VMEM, _VMEM),
        scratch_shapes=[
            pltpu.VMEM((T * Bp, 4 * H), jnp.float32),     # layer-0 input projections
            pltpu.VMEM((T * Bp, H), jnp.float32),         # layer-1 hidden sequence
            pltpu.VMEM((2 * H, 4 * H), jnp.bfloat16),     # w_cat1 landing buffer
            pltpu.VMEM((H, V), jnp.bfloat16),             # fc_w landing buffer
            pltpu.SemaphoreType.DMA((2,)),
        ],
    )(emb, w_ih0, w_hh0, b0, w_cat1, b1, fc_w, fc_b, h0, c0)

    logits = logits_p.reshape(T, Bp, V)[:, :B, :].transpose(1, 0, 2)   # (B, T, V)
    return logits, (hn_p[:, :B, :], cn_p[:, :B, :])


# ---------------------------------------------------------------------------
# Pure-JAX reference for sanity checking
# ---------------------------------------------------------------------------

def _reference_forward(params, tokens, hidden=None, matmul_dtype=None):
    """Torch-faithful reference (gate order i,f,g,o).  matmul_dtype=bfloat16
    mirrors the kernel's bf16-operand / f32-accumulate MXU numerics."""
    B, T = tokens.shape
    H = params["hidden_size"]
    L = params["num_layers"]

    def mm(a, b):
        if matmul_dtype is not None:
            a = a.astype(matmul_dtype)
            b = b.astype(matmul_dtype)
        return jnp.dot(a, b, preferred_element_type=jnp.float32)

    emb = jnp.take(params["embed"], tokens, axis=0)
    if hidden is None:
        h0 = jnp.zeros((L, B, H), jnp.float32)
        c0 = jnp.zeros((L, B, H), jnp.float32)
    else:
        h0, c0 = hidden

    x = emb
    hns, cns = [], []
    for layer in range(L):
        p = params["lstm"][layer]
        h = h0[layer]
        c = c0[layer]
        outs = []
        for t in range(T):
            gates = mm(x[:, t, :], p["w_ih"]) + mm(h, p["w_hh"]) + p["b"]
            i = jax.nn.sigmoid(gates[:, 0 * H:1 * H])
            f = jax.nn.sigmoid(gates[:, 1 * H:2 * H])
            g = jnp.tanh(gates[:, 2 * H:3 * H])
            o = jax.nn.sigmoid(gates[:, 3 * H:4 * H])
            c = f * c + i * g
            h = o * jnp.tanh(c)
            outs.append(h)
        x = jnp.stack(outs, axis=1)
        hns.append(h)
        cns.append(c)
    logits = mm(x, params["fc_w"]) + params["fc_b"]
    return logits, (jnp.stack(hns), jnp.stack(cns))


# ---------------------------------------------------------------------------
# Main
# ---------------------------------------------------------------------------

if __name__ == "__main__":
    key = jax.random.PRNGKey(0)
    k_params, k_tokens = jax.random.split(key)

    VOCAB = 128        # stand-in for len(stoi) of the text bundle
    EMBED = 128
    HIDDEN = 256       # small test size (module default is 512)
    LAYERS = 2
    B, T = 2, 8

    params = init_params(k_params, VOCAB, EMBED, HIDDEN, LAYERS)
    tokens = jax.random.randint(k_tokens, (B, T), 0, VOCAB, dtype=jnp.int32)

    logits, (h_n, c_n) = tiny_rnn_forward(params, tokens)
    jax.block_until_ready((logits, h_n, c_n))

    assert logits.shape == (B, T, VOCAB)
    assert h_n.shape == (LAYERS, B, HIDDEN) and c_n.shape == (LAYERS, B, HIDDEN)

    # (a) Reference with the kernel's bf16-operand / f32-accumulate numerics.
    m_logits, (m_h, m_c) = _reference_forward(params, tokens,
                                              matmul_dtype=jnp.bfloat16)
    assert jnp.allclose(logits, m_logits, atol=5e-3, rtol=5e-3)
    assert jnp.allclose(h_n, m_h, atol=5e-3, rtol=5e-3)
    assert jnp.allclose(c_n, m_c, atol=5e-3, rtol=5e-3)

    # (b) Full-f32 reference (loose tolerance: matmul operands are bf16).
    r_logits, (r_h, r_c) = _reference_forward(params, tokens)
    assert jnp.allclose(logits, r_logits, atol=7.5e-2, rtol=7.5e-2)
    assert jnp.allclose(h_n, r_h, atol=7.5e-2, rtol=7.5e-2)
    assert jnp.allclose(c_n, r_c, atol=7.5e-2, rtol=7.5e-2)

    print("KERNEL_OK")
</pallas_src>

<mosaic_0001>
module attributes {stable_mosaic.version = 11 : i64} {
  func.func @_tiny_rnn_kernel(%arg0: memref<128x128xbf16, #tpu.memory_space<vmem>>, %arg1: memref<128x1024xbf16, #tpu.memory_space<vmem>>, %arg2: memref<256x1024xbf16, #tpu.memory_space<vmem>>, %arg3: memref<1x1024xf32, #tpu.memory_space<vmem>>, %arg4: memref<512x1024xbf16, #tpu.memory_space<any>>, %arg5: memref<1x1024xf32, #tpu.memory_space<vmem>>, %arg6: memref<256x128xbf16, #tpu.memory_space<any>>, %arg7: memref<1x128xf32, #tpu.memory_space<vmem>>, %arg8: memref<2x16x256xf32, #tpu.memory_space<vmem>>, %arg9: memref<2x16x256xf32, #tpu.memory_space<vmem>>, %arg10: memref<128x128xf32, #tpu.memory_space<vmem>>, %arg11: memref<2x16x256xf32, #tpu.memory_space<vmem>>, %arg12: memref<2x16x256xf32, #tpu.memory_space<vmem>>, %arg13: memref<128x1024xf32, #tpu.memory_space<vmem>>, %arg14: memref<128x256xf32, #tpu.memory_space<vmem>>, %arg15: memref<512x1024xbf16, #tpu.memory_space<vmem>>, %arg16: memref<256x128xbf16, #tpu.memory_space<vmem>>, %arg17: memref<2x!tpu.dma_semaphore, #tpu.memory_space<semaphore_mem>>) attributes {dimension_semantics = [], scalar_prefetch = 0 : i64, scratch_operands = 5 : i64, tpu.core_type = #tpu.core_type<tc>} {
    %c0_i32 = arith.constant 0 : i32
    %0 = tpu.memref_slice %arg17[%c0_i32] : memref<2x!tpu.dma_semaphore, #tpu.memory_space<semaphore_mem>> -> memref<1x!tpu.dma_semaphore, #tpu.memory_space<semaphore_mem>>
    %1 = tpu.memref_squeeze %0 : memref<1x!tpu.dma_semaphore, #tpu.memory_space<semaphore_mem>> -> memref<!tpu.dma_semaphore, #tpu.memory_space<semaphore_mem>>
    tpu.enqueue_dma source(%arg4 : memref<512x1024xbf16, #tpu.memory_space<any>>) target(%arg15 : memref<512x1024xbf16, #tpu.memory_space<vmem>>) target_semaphore(%1 : memref<!tpu.dma_semaphore, #tpu.memory_space<semaphore_mem>>)
    %c1_i32 = arith.constant 1 : i32
    %2 = tpu.memref_slice %arg17[%c1_i32] : memref<2x!tpu.dma_semaphore, #tpu.memory_space<semaphore_mem>> -> memref<1x!tpu.dma_semaphore, #tpu.memory_space<semaphore_mem>>
    %3 = tpu.memref_squeeze %2 : memref<1x!tpu.dma_semaphore, #tpu.memory_space<semaphore_mem>> -> memref<!tpu.dma_semaphore, #tpu.memory_space<semaphore_mem>>
    tpu.enqueue_dma source(%arg6 : memref<256x128xbf16, #tpu.memory_space<any>>) target(%arg16 : memref<256x128xbf16, #tpu.memory_space<vmem>>) target_semaphore(%3 : memref<!tpu.dma_semaphore, #tpu.memory_space<semaphore_mem>>)
    %c0 = arith.constant 0 : index
    %c0_0 = arith.constant 0 : index
    %4 = vector.load %arg0[%c0, %c0_0] : memref<128x128xbf16, #tpu.memory_space<vmem>>, vector<128x128xbf16>
    %c0_1 = arith.constant 0 : index
    %c0_2 = arith.constant 0 : index
    %5 = vector.load %arg1[%c0_1, %c0_2] : memref<128x1024xbf16, #tpu.memory_space<vmem>>, vector<128x1024xbf16>
    %cst = arith.constant dense<0.000000e+00> : vector<128x1024xf32>
    %6 = tpu.matmul %4, %5, %cst {dimension_numbers = #tpu.dot_dimension_numbers<[1], [0], [0], [1], [0, 0, 1, 1], [], []>} : vector<128x128xbf16>, vector<128x1024xbf16>, vector<128x1024xf32> -> vector<128x1024xf32>
    %c0_3 = arith.constant 0 : index
    %c0_4 = arith.constant 0 : index
    %7 = vector.load %arg3[%c0_3, %c0_4] : memref<1x1024xf32, #tpu.memory_space<vmem>>, vector<1x1024xf32>
    %8 = vector.broadcast %7 : vector<1x1024xf32> to vector<128x1024xf32>
    %9 = arith.addf %6, %8 : vector<128x1024xf32>
    %c0_5 = arith.constant 0 : index
    %c0_6 = arith.constant 0 : index
    %10 = vector.load %arg13[%c0_5, %c0_6] : memref<128x1024xf32, #tpu.memory_space<vmem>>, vector<128x1024xf32>
    tpu.vector_store %arg13[%c0_5, %c0_6], %9 {strides = array<i32>} : memref<128x1024xf32, #tpu.memory_space<vmem>>, vector<128x1024xf32>,
    %c0_7 = arith.constant 0 : index
    %c0_8 = arith.constant 0 : index
    %11 = vector.load %arg2[%c0_7, %c0_8] : memref<256x1024xbf16, #tpu.memory_space<vmem>>, vector<256x1024xbf16>
    %c0_9 = arith.constant 0 : index
    %c0_10 = arith.constant 0 : index
    %12 = vector.load %arg5[%c0_9, %c0_10] : memref<1x1024xf32, #tpu.memory_space<vmem>>, vector<1x1024xf32>
    %13 = vector.shape_cast %12 : vector<1x1024xf32> to vector<1x1024xf32>
    %14 = vector.broadcast %13 : vector<1x1024xf32> to vector<16x1024xf32>
    %c0_11 = arith.constant 0 : index
    %c0_12 = arith.constant 0 : index
    %c0_13 = arith.constant 0 : index
    %15 = vector.load %arg8[%c0_11, %c0_12, %c0_13] : memref<2x16x256xf32, #tpu.memory_space<vmem>>, vector<1x16x256xf32>
    %16 = vector.shape_cast %15 : vector<1x16x256xf32> to vector<16x256xf32>
    %c0_14 = arith.constant 0 : index
    %c0_15 = arith.constant 0 : index
    %c0_16 = arith.constant 0 : index
    %17 = vector.load %arg9[%c0_14, %c0_15, %c0_16] : memref<2x16x256xf32, #tpu.memory_space<vmem>>, vector<1x16x256xf32>
    %18 = vector.shape_cast %17 : vector<1x16x256xf32> to vector<16x256xf32>
    %c1 = arith.constant 1 : index
    %c0_17 = arith.constant 0 : index
    %c0_18 = arith.constant 0 : index
    %19 = vector.load %arg8[%c1, %c0_17, %c0_18] : memref<2x16x256xf32, #tpu.memory_space<vmem>>, vector<1x16x256xf32>
    %20 = vector.shape_cast %19 : vector<1x16x256xf32> to vector<16x256xf32>
    %c1_19 = arith.constant 1 : index
    %c0_20 = arith.constant 0 : index
    %c0_21 = arith.constant 0 : index
    %21 = vector.load %arg9[%c1_19, %c0_20, %c0_21] : memref<2x16x256xf32, #tpu.memory_space<vmem>>, vector<1x16x256xf32>
    %22 = vector.shape_cast %21 : vector<1x16x256xf32> to vector<16x256xf32>
    %c0_22 = arith.constant 0 : index
    %c0_23 = arith.constant 0 : index
    %23 = vector.load %arg13[%c0_22, %c0_23] : memref<128x1024xf32, #tpu.memory_space<vmem>>, vector<16x1024xf32>
    %24 = arith.truncf %16 : vector<16x256xf32> to vector<16x256xbf16>
    %cst_24 = arith.constant dense<0.000000e+00> : vector<16x1024xf32>
    %25 = tpu.matmul %24, %11, %cst_24 {dimension_numbers = #tpu.dot_dimension_numbers<[1], [0], [0], [1], [0, 0, 1, 1], [], []>} : vector<16x256xbf16>, vector<256x1024xbf16>, vector<16x1024xf32> -> vector<16x1024xf32>
    %26 = arith.addf %23, %25 : vector<16x1024xf32>
    %27 = vector.extract_strided_slice %26 {offsets = [0, 0], sizes = [16, 768], strides = [1, 1]} : vector<16x1024xf32> to vector<16x768xf32>
    %28 = arith.negf %27 : vector<16x768xf32>
    %29 = math.exp %28 : vector<16x768xf32>
    %cst_25 = arith.constant 1.000000e+00 : f32
    %30 = vector.broadcast %cst_25 : f32 to vector<16x768xf32>
    %31 = arith.addf %30, %29 : vector<16x768xf32>
    %32 = arith.divf %30, %31 : vector<16x768xf32>
    %33 = vector.extract_strided_slice %32 {offsets = [0, 0], sizes = [16, 256], strides = [1, 1]} : vector<16x768xf32> to vector<16x256xf32>
    %34 = vector.extract_strided_slice %32 {offsets = [0, 256], sizes = [16, 256], strides = [1, 1]} : vector<16x768xf32> to vector<16x256xf32>
    %35 = vector.extract_strided_slice %32 {offsets = [0, 512], sizes = [16, 256], strides = [1, 1]} : vector<16x768xf32> to vector<16x256xf32>
    %36 = vector.extract_strided_slice %26 {offsets = [0, 768], sizes = [16, 256], strides = [1, 1]} : vector<16x1024xf32> to vector<16x256xf32>
    %37 = math.tanh %36 : vector<16x256xf32>
    %38 = arith.mulf %34, %18 : vector<16x256xf32>
    %39 = arith.mulf %33, %37 : vector<16x256xf32>
    %40 = arith.addf %38, %39 : vector<16x256xf32>
    %41 = math.tanh %40 : vector<16x256xf32>
    %42 = arith.mulf %35, %41 : vector<16x256xf32>
    %c16 = arith.constant 16 : index
    %c0_26 = arith.constant 0 : index
    %43 = vector.load %arg13[%c16, %c0_26] : memref<128x1024xf32, #tpu.memory_space<vmem>>, vector<16x1024xf32>
    %44 = arith.truncf %42 : vector<16x256xf32> to vector<16x256xbf16>
    %cst_27 = arith.constant dense<0.000000e+00> : vector<16x1024xf32>
    %45 = tpu.matmul %44, %11, %cst_27 {dimension_numbers = #tpu.dot_dimension_numbers<[1], [0], [0], [1], [0, 0, 1, 1], [], []>} : vector<16x256xbf16>, vector<256x1024xbf16>, vector<16x1024xf32> -> vector<16x1024xf32>
    %46 = arith.addf %43, %45 : vector<16x1024xf32>
    %47 = vector.extract_strided_slice %46 {offsets = [0, 0], sizes = [16, 768], strides = [1, 1]} : vector<16x1024xf32> to vector<16x768xf32>
    %48 = arith.negf %47 : vector<16x768xf32>
    %49 = math.exp %48 : vector<16x768xf32>
    %cst_28 = arith.constant 1.000000e+00 : f32
    %50 = vector.broadcast %cst_28 : f32 to vector<16x768xf32>
    %51 = arith.addf %50, %49 : vector<16x768xf32>
    %52 = arith.divf %50, %51 : vector<16x768xf32>
    %53 = vector.extract_strided_slice %52 {offsets = [0, 0], sizes = [16, 256], strides = [1, 1]} : vector<16x768xf32> to vector<16x256xf32>
    %54 = vector.extract_strided_slice %52 {offsets = [0, 256], sizes = [16, 256], strides = [1, 1]} : vector<16x768xf32> to vector<16x256xf32>
    %55 = vector.extract_strided_slice %52 {offsets = [0, 512], sizes = [16, 256], strides = [1, 1]} : vector<16x768xf32> to vector<16x256xf32>
    %56 = vector.extract_strided_slice %46 {offsets = [0, 768], sizes = [16, 256], strides = [1, 1]} : vector<16x1024xf32> to vector<16x256xf32>
    %57 = math.tanh %56 : vector<16x256xf32>
    %58 = arith.mulf %54, %40 : vector<16x256xf32>
    %59 = arith.mulf %53, %57 : vector<16x256xf32>
    %60 = arith.addf %58, %59 : vector<16x256xf32>
    %61 = math.tanh %60 : vector<16x256xf32>
    %62 = arith.mulf %55, %61 : vector<16x256xf32>
    %c0_i32_29 = arith.constant 0 : i32
    %63 = tpu.memref_slice %arg17[%c0_i32_29] : memref<2x!tpu.dma_semaphore, #tpu.memory_space<semaphore_mem>> -> memref<1x!tpu.dma_semaphore, #tpu.memory_space<semaphore_mem>>
    %64 = tpu.memref_squeeze %63 : memref<1x!tpu.dma_semaphore, #tpu.memory_space<semaphore_mem>> -> memref<!tpu.dma_semaphore, #tpu.memory_space<semaphore_mem>>
    tpu.wait_dma2 semaphore(%64 : memref<!tpu.dma_semaphore, #tpu.memory_space<semaphore_mem>>) src(%arg4 : memref<512x1024xbf16, #tpu.memory_space<any>>) dst(%arg15 : memref<512x1024xbf16, #tpu.memory_space<vmem>>)
    %c0_30 = arith.constant 0 : index
    %c0_31 = arith.constant 0 : index
    %65 = vector.load %arg15[%c0_30, %c0_31] : memref<512x1024xbf16, #tpu.memory_space<vmem>>, vector<512x1024xbf16>
    %66 = arith.truncf %42 : vector<16x256xf32> to vector<16x256xbf16>
    %67 = arith.truncf %20 : vector<16x256xf32> to vector<16x256xbf16>
    %68 = tpu.concatenate %66, %67 in 1 : vector<16x256xbf16>, vector<16x256xbf16> -> vector<16x512xbf16>
    %cst_32 = arith.constant dense<0.000000e+00> : vector<16x1024xf32>
    %69 = tpu.matmul %68, %65, %cst_32 {dimension_numbers = #tpu.dot_dimension_numbers<[1], [0], [0], [1], [0, 0, 1, 1], [], []>} : vector<16x512xbf16>, vector<512x1024xbf16>, vector<16x1024xf32> -> vector<16x1024xf32>
    %70 = arith.addf %69, %14 : vector<16x1024xf32>
    %71 = vector.extract_strided_slice %70 {offsets = [0, 0], sizes = [16, 768], strides = [1, 1]} : vector<16x1024xf32> to vector<16x768xf32>
    %72 = arith.negf %71 : vector<16x768xf32>
    %73 = math.exp %72 : vector<16x768xf32>
    %cst_33 = arith.constant 1.000000e+00 : f32
    %74 = vector.broadcast %cst_33 : f32 to vector<16x768xf32>
    %75 = arith.addf %74, %73 : vector<16x768xf32>
    %76 = arith.divf %74, %75 : vector<16x768xf32>
    %77 = vector.extract_strided_slice %76 {offsets = [0, 0], sizes = [16, 256], strides = [1, 1]} : vector<16x768xf32> to vector<16x256xf32>
    %78 = vector.extract_strided_slice %76 {offsets = [0, 256], sizes = [16, 256], strides = [1, 1]} : vector<16x768xf32> to vector<16x256xf32>
    %79 = vector.extract_strided_slice %76 {offsets = [0, 512], sizes = [16, 256], strides = [1, 1]} : vector<16x768xf32> to vector<16x256xf32>
    %80 = vector.extract_strided_slice %70 {offsets = [0, 768], sizes = [16, 256], strides = [1, 1]} : vector<16x1024xf32> to vector<16x256xf32>
    %81 = math.tanh %80 : vector<16x256xf32>
    %82 = arith.mulf %78, %22 : vector<16x256xf32>
    %83 = arith.mulf %77, %81 : vector<16x256xf32>
    %84 = arith.addf %82, %83 : vector<16x256xf32>
    %85 = math.tanh %84 : vector<16x256xf32>
    %86 = arith.mulf %79, %85 : vector<16x256xf32>
    %c0_34 = arith.constant 0 : index
    %c0_35 = arith.constant 0 : index
    %87 = vector.load %arg14[%c0_34, %c0_35] : memref<128x256xf32, #tpu.memory_space<vmem>>, vector<16x256xf32>
    tpu.vector_store %arg14[%c0_34, %c0_35], %86 {strides = array<i32>} : memref<128x256xf32, #tpu.memory_space<vmem>>, vector<16x256xf32>,
    %c32 = arith.constant 32 : index
    %c0_36 = arith.constant 0 : index
    %88 = vector.load %arg13[%c32, %c0_36] : memref<128x1024xf32, #tpu.memory_space<vmem>>, vector<16x1024xf32>
    %89 = arith.truncf %62 : vector<16x256xf32> to vector<16x256xbf16>
    %cst_37 = arith.constant dense<0.000000e+00> : vector<16x1024xf32>
    %90 = tpu.matmul %89, %11, %cst_37 {dimension_numbers = #tpu.dot_dimension_numbers<[1], [0], [0], [1], [0, 0, 1, 1], [], []>} : vector<16x256xbf16>, vector<256x1024xbf16>, vector<16x1024xf32> -> vector<16x1024xf32>
    %91 = arith.addf %88, %90 : vector<16x1024xf32>
    %92 = vector.extract_strided_slice %91 {offsets = [0, 0], sizes = [16, 768], strides = [1, 1]} : vector<16x1024xf32> to vector<16x768xf32>
    %93 = arith.negf %92 : vector<16x768xf32>
    %94 = math.exp %93 : vector<16x768xf32>
    %cst_38 = arith.constant 1.000000e+00 : f32
    %95 = vector.broadcast %cst_38 : f32 to vector<16x768xf32>
    %96 = arith.addf %95, %94 : vector<16x768xf32>
    %97 = arith.divf %95, %96 : vector<16x768xf32>
    %98 = vector.extract_strided_slice %97 {offsets = [0, 0], sizes = [16, 256], strides = [1, 1]} : vector<16x768xf32> to vector<16x256xf32>
    %99 = vector.extract_strided_slice %97 {offsets = [0, 256], sizes = [16, 256], strides = [1, 1]} : vector<16x768xf32> to vector<16x256xf32>
    %100 = vector.extract_strided_slice %97 {offsets = [0, 512], sizes = [16, 256], strides = [1, 1]} : vector<16x768xf32> to vector<16x256xf32>
    %101 = vector.extract_strided_slice %91 {offsets = [0, 768], sizes = [16, 256], strides = [1, 1]} : vector<16x1024xf32> to vector<16x256xf32>
    %102 = math.tanh %101 : vector<16x256xf32>
    %103 = arith.mulf %99, %60 : vector<16x256xf32>
    %104 = arith.mulf %98, %102 : vector<16x256xf32>
    %105 = arith.addf %103, %104 : vector<16x256xf32>
    %106 = math.tanh %105 : vector<16x256xf32>
    %107 = arith.mulf %100, %106 : vector<16x256xf32>
    %108 = arith.truncf %62 : vector<16x256xf32> to vector<16x256xbf16>
    %109 = arith.truncf %86 : vector<16x256xf32> to vector<16x256xbf16>
    %110 = tpu.concatenate %108, %109 in 1 : vector<16x256xbf16>, vector<16x256xbf16> -> vector<16x512xbf16>
    %cst_39 = arith.constant dense<0.000000e+00> : vector<16x1024xf32>
    %111 = tpu.matmul %110, %65, %cst_39 {dimension_numbers = #tpu.dot_dimension_numbers<[1], [0], [0], [1], [0, 0, 1, 1], [], []>} : vector<16x512xbf16>, vector<512x1024xbf16>, vector<16x1024xf32> -> vector<16x1024xf32>
    %112 = arith.addf %111, %14 : vector<16x1024xf32>
    %113 = vector.extract_strided_slice %112 {offsets = [0, 0], sizes = [16, 768], strides = [1, 1]} : vector<16x1024xf32> to vector<16x768xf32>
    %114 = arith.negf %113 : vector<16x768xf32>
    %115 = math.exp %114 : vector<16x768xf32>
    %cst_40 = arith.constant 1.000000e+00 : f32
    %116 = vector.broadcast %cst_40 : f32 to vector<16x768xf32>
    %117 = arith.addf %116, %115 : vector<16x768xf32>
    %118 = arith.divf %116, %117 : vector<16x768xf32>
    %119 = vector.extract_strided_slice %118 {offsets = [0, 0], sizes = [16, 256], strides = [1, 1]} : vector<16x768xf32> to vector<16x256xf32>
    %120 = vector.extract_strided_slice %118 {offsets = [0, 256], sizes = [16, 256], strides = [1, 1]} : vector<16x768xf32> to vector<16x256xf32>
    %121 = vector.extract_strided_slice %118 {offsets = [0, 512], sizes = [16, 256], strides = [1, 1]} : vector<16x768xf32> to vector<16x256xf32>
    %122 = vector.extract_strided_slice %112 {offsets = [0, 768], sizes = [16, 256], strides = [1, 1]} : vector<16x1024xf32> to vector<16x256xf32>
    %123 = math.tanh %122 : vector<16x256xf32>
    %124 = arith.mulf %120, %84 : vector<16x256xf32>
    %125 = arith.mulf %119, %123 : vector<16x256xf32>
    %126 = arith.addf %124, %125 : vector<16x256xf32>
    %127 = math.tanh %126 : vector<16x256xf32>
    %128 = arith.mulf %121, %127 : vector<16x256xf32>
    %c16_41 = arith.constant 16 : index
    %c0_42 = arith.constant 0 : index
    %129 = vector.load %arg14[%c16_41, %c0_42] : memref<128x256xf32, #tpu.memory_space<vmem>>, vector<16x256xf32>
    tpu.vector_store %arg14[%c16_41, %c0_42], %128 {strides = array<i32>} : memref<128x256xf32, #tpu.memory_space<vmem>>, vector<16x256xf32>,
    %c48 = arith.constant 48 : index
    %c0_43 = arith.constant 0 : index
    %130 = vector.load %arg13[%c48, %c0_43] : memref<128x1024xf32, #tpu.memory_space<vmem>>, vector<16x1024xf32>
    %131 = arith.truncf %107 : vector<16x256xf32> to vector<16x256xbf16>
    %cst_44 = arith.constant dense<0.000000e+00> : vector<16x1024xf32>
    %132 = tpu.matmul %131, %11, %cst_44 {dimension_numbers = #tpu.dot_dimension_numbers<[1], [0], [0], [1], [0, 0, 1, 1], [], []>} : vector<16x256xbf16>, vector<256x1024xbf16>, vector<16x1024xf32> -> vector<16x1024xf32>
    %133 = arith.addf %130, %132 : vector<16x1024xf32>
    %134 = vector.extract_strided_slice %133 {offsets = [0, 0], sizes = [16, 768], strides = [1, 1]} : vector<16x1024xf32> to vector<16x768xf32>
    %135 = arith.negf %134 : vector<16x768xf32>
    %136 = math.exp %135 : vector<16x768xf32>
    %cst_45 = arith.constant 1.000000e+00 : f32
    %137 = vector.broadcast %cst_45 : f32 to vector<16x768xf32>
    %138 = arith.addf %137, %136 : vector<16x768xf32>
    %139 = arith.divf %137, %138 : vector<16x768xf32>
    %140 = vector.extract_strided_slice %139 {offsets = [0, 0], sizes = [16, 256], strides = [1, 1]} : vector<16x768xf32> to vector<16x256xf32>
    %141 = vector.extract_strided_slice %139 {offsets = [0, 256], sizes = [16, 256], strides = [1, 1]} : vector<16x768xf32> to vector<16x256xf32>
    %142 = vector.extract_strided_slice %139 {offsets = [0, 512], sizes = [16, 256], strides = [1, 1]} : vector<16x768xf32> to vector<16x256xf32>
    %143 = vector.extract_strided_slice %133 {offsets = [0, 768], sizes = [16, 256], strides = [1, 1]} : vector<16x1024xf32> to vector<16x256xf32>
    %144 = math.tanh %143 : vector<16x256xf32>
    %145 = arith.mulf %141, %105 : vector<16x256xf32>
    %146 = arith.mulf %140, %144 : vector<16x256xf32>
    %147 = arith.addf %145, %146 : vector<16x256xf32>
    %148 = math.tanh %147 : vector<16x256xf32>
    %149 = arith.mulf %142, %148 : vector<16x256xf32>
    %150 = arith.truncf %107 : vector<16x256xf32> to vector<16x256xbf16>
    %151 = arith.truncf %128 : vector<16x256xf32> to vector<16x256xbf16>
    %152 = tpu.concatenate %150, %151 in 1 : vector<16x256xbf16>, vector<16x256xbf16> -> vector<16x512xbf16>
    %cst_46 = arith.constant dense<0.000000e+00> : vector<16x1024xf32>
    %153 = tpu.matmul %152, %65, %cst_46 {dimension_numbers = #tpu.dot_dimension_numbers<[1], [0], [0], [1], [0, 0, 1, 1], [], []>} : vector<16x512xbf16>, vector<512x1024xbf16>, vector<16x1024xf32> -> vector<16x1024xf32>
    %154 = arith.addf %153, %14 : vector<16x1024xf32>
    %155 = vector.extract_strided_slice %154 {offsets = [0, 0], sizes = [16, 768], strides = [1, 1]} : vector<16x1024xf32> to vector<16x768xf32>
    %156 = arith.negf %155 : vector<16x768xf32>
    %157 = math.exp %156 : vector<16x768xf32>
    %cst_47 = arith.constant 1.000000e+00 : f32
    %158 = vector.broadcast %cst_47 : f32 to vector<16x768xf32>
    %159 = arith.addf %158, %157 : vector<16x768xf32>
    %160 = arith.divf %158, %159 : vector<16x768xf32>
    %161 = vector.extract_strided_slice %160 {offsets = [0, 0], sizes = [16, 256], strides = [1, 1]} : vector<16x768xf32> to vector<16x256xf32>
    %162 = vector.extract_strided_slice %160 {offsets = [0, 256], sizes = [16, 256], strides = [1, 1]} : vector<16x768xf32> to vector<16x256xf32>
    %163 = vector.extract_strided_slice %160 {offsets = [0, 512], sizes = [16, 256], strides = [1, 1]} : vector<16x768xf32> to vector<16x256xf32>
    %164 = vector.extract_strided_slice %154 {offsets = [0, 768], sizes = [16, 256], strides = [1, 1]} : vector<16x1024xf32> to vector<16x256xf32>
    %165 = math.tanh %164 : vector<16x256xf32>
    %166 = arith.mulf %162, %126 : vector<16x256xf32>
    %167 = arith.mulf %161, %165 : vector<16x256xf32>
    %168 = arith.addf %166, %167 : vector<16x256xf32>
    %169 = math.tanh %168 : vector<16x256xf32>
    %170 = arith.mulf %163, %169 : vector<16x256xf32>
    %c32_48 = arith.constant 32 : index
    %c0_49 = arith.constant 0 : index
    %171 = vector.load %arg14[%c32_48, %c0_49] : memref<128x256xf32, #tpu.memory_space<vmem>>, vector<16x256xf32>
    tpu.vector_store %arg14[%c32_48, %c0_49], %170 {strides = array<i32>} : memref<128x256xf32, #tpu.memory_space<vmem>>, vector<16x256xf32>,
    %c64 = arith.constant 64 : index
    %c0_50 = arith.constant 0 : index
    %172 = vector.load %arg13[%c64, %c0_50] : memref<128x1024xf32, #tpu.memory_space<vmem>>, vector<16x1024xf32>
    %173 = arith.truncf %149 : vector<16x256xf32> to vector<16x256xbf16>
    %cst_51 = arith.constant dense<0.000000e+00> : vector<16x1024xf32>
    %174 = tpu.matmul %173, %11, %cst_51 {dimension_numbers = #tpu.dot_dimension_numbers<[1], [0], [0], [1], [0, 0, 1, 1], [], []>} : vector<16x256xbf16>, vector<256x1024xbf16>, vector<16x1024xf32> -> vector<16x1024xf32>
    %175 = arith.addf %172, %174 : vector<16x1024xf32>
    %176 = vector.extract_strided_slice %175 {offsets = [0, 0], sizes = [16, 768], strides = [1, 1]} : vector<16x1024xf32> to vector<16x768xf32>
    %177 = arith.negf %176 : vector<16x768xf32>
    %178 = math.exp %177 : vector<16x768xf32>
    %cst_52 = arith.constant 1.000000e+00 : f32
    %179 = vector.broadcast %cst_52 : f32 to vector<16x768xf32>
    %180 = arith.addf %179, %178 : vector<16x768xf32>
    %181 = arith.divf %179, %180 : vector<16x768xf32>
    %182 = vector.extract_strided_slice %181 {offsets = [0, 0], sizes = [16, 256], strides = [1, 1]} : vector<16x768xf32> to vector<16x256xf32>
    %183 = vector.extract_strided_slice %181 {offsets = [0, 256], sizes = [16, 256], strides = [1, 1]} : vector<16x768xf32> to vector<16x256xf32>
    %184 = vector.extract_strided_slice %181 {offsets = [0, 512], sizes = [16, 256], strides = [1, 1]} : vector<16x768xf32> to vector<16x256xf32>
    %185 = vector.extract_strided_slice %175 {offsets = [0, 768], sizes = [16, 256], strides = [1, 1]} : vector<16x1024xf32> to vector<16x256xf32>
    %186 = math.tanh %185 : vector<16x256xf32>
    %187 = arith.mulf %183, %147 : vector<16x256xf32>
    %188 = arith.mulf %182, %186 : vector<16x256xf32>
    %189 = arith.addf %187, %188 : vector<16x256xf32>
    %190 = math.tanh %189 : vector<16x256xf32>
    %191 = arith.mulf %184, %190 : vector<16x256xf32>
    %192 = arith.truncf %149 : vector<16x256xf32> to vector<16x256xbf16>
    %193 = arith.truncf %170 : vector<16x256xf32> to vector<16x256xbf16>
    %194 = tpu.concatenate %192, %193 in 1 : vector<16x256xbf16>, vector<16x256xbf16> -> vector<16x512xbf16>
    %cst_53 = arith.constant dense<0.000000e+00> : vector<16x1024xf32>
    %195 = tpu.matmul %194, %65, %cst_53 {dimension_numbers = #tpu.dot_dimension_numbers<[1], [0], [0], [1], [0, 0, 1, 1], [], []>} : vector<16x512xbf16>, vector<512x1024xbf16>, vector<16x1024xf32> -> vector<16x1024xf32>
    %196 = arith.addf %195, %14 : vector<16x1024xf32>
    %197 = vector.extract_strided_slice %196 {offsets = [0, 0], sizes = [16, 768], strides = [1, 1]} : vector<16x1024xf32> to vector<16x768xf32>
    %198 = arith.negf %197 : vector<16x768xf32>
    %199 = math.exp %198 : vector<16x768xf32>
    %cst_54 = arith.constant 1.000000e+00 : f32
    %200 = vector.broadcast %cst_54 : f32 to vector<16x768xf32>
    %201 = arith.addf %200, %199 : vector<16x768xf32>
    %202 = arith.divf %200, %201 : vector<16x768xf32>
    %203 = vector.extract_strided_slice %202 {offsets = [0, 0], sizes = [16, 256], strides = [1, 1]} : vector<16x768xf32> to vector<16x256xf32>
    %204 = vector.extract_strided_slice %202 {offsets = [0, 256], sizes = [16, 256], strides = [1, 1]} : vector<16x768xf32> to vector<16x256xf32>
    %205 = vector.extract_strided_slice %202 {offsets = [0, 512], sizes = [16, 256], strides = [1, 1]} : vector<16x768xf32> to vector<16x256xf32>
    %206 = vector.extract_strided_slice %196 {offsets = [0, 768], sizes = [16, 256], strides = [1, 1]} : vector<16x1024xf32> to vector<16x256xf32>
    %207 = math.tanh %206 : vector<16x256xf32>
    %208 = arith.mulf %204, %168 : vector<16x256xf32>
    %209 = arith.mulf %203, %207 : vector<16x256xf32>
    %210 = arith.addf %208, %209 : vector<16x256xf32>
    %211 = math.tanh %210 : vector<16x256xf32>
    %212 = arith.mulf %205, %211 : vector<16x256xf32>
    %c48_55 = arith.constant 48 : index
    %c0_56 = arith.constant 0 : index
    %213 = vector.load %arg14[%c48_55, %c0_56] : memref<128x256xf32, #tpu.memory_space<vmem>>, vector<16x256xf32>
    tpu.vector_store %arg14[%c48_55, %c0_56], %212 {strides = array<i32>} : memref<128x256xf32, #tpu.memory_space<vmem>>, vector<16x256xf32>,
    %c80 = arith.constant 80 : index
    %c0_57 = arith.constant 0 : index
    %214 = vector.load %arg13[%c80, %c0_57] : memref<128x1024xf32, #tpu.memory_space<vmem>>, vector<16x1024xf32>
    %215 = arith.truncf %191 : vector<16x256xf32> to vector<16x256xbf16>
    %cst_58 = arith.constant dense<0.000000e+00> : vector<16x1024xf32>
    %216 = tpu.matmul %215, %11, %cst_58 {dimension_numbers = #tpu.dot_dimension_numbers<[1], [0], [0], [1], [0, 0, 1, 1], [], []>} : vector<16x256xbf16>, vector<256x1024xbf16>, vector<16x1024xf32> -> vector<16x1024xf32>
    %217 = arith.addf %214, %216 : vector<16x1024xf32>
    %218 = vector.extract_strided_slice %217 {offsets = [0, 0], sizes = [16, 768], strides = [1, 1]} : vector<16x1024xf32> to vector<16x768xf32>
    %219 = arith.negf %218 : vector<16x768xf32>
    %220 = math.exp %219 : vector<16x768xf32>
    %cst_59 = arith.constant 1.000000e+00 : f32
    %221 = vector.broadcast %cst_59 : f32 to vector<16x768xf32>
    %222 = arith.addf %221, %220 : vector<16x768xf32>
    %223 = arith.divf %221, %222 : vector<16x768xf32>
    %224 = vector.extract_strided_slice %223 {offsets = [0, 0], sizes = [16, 256], strides = [1, 1]} : vector<16x768xf32> to vector<16x256xf32>
    %225 = vector.extract_strided_slice %223 {offsets = [0, 256], sizes = [16, 256], strides = [1, 1]} : vector<16x768xf32> to vector<16x256xf32>
    %226 = vector.extract_strided_slice %223 {offsets = [0, 512], sizes = [16, 256], strides = [1, 1]} : vector<16x768xf32> to vector<16x256xf32>
    %227 = vector.extract_strided_slice %217 {offsets = [0, 768], sizes = [16, 256], strides = [1, 1]} : vector<16x1024xf32> to vector<16x256xf32>
    %228 = math.tanh %227 : vector<16x256xf32>
    %229 = arith.mulf %225, %189 : vector<16x256xf32>
    %230 = arith.mulf %224, %228 : vector<16x256xf32>
    %231 = arith.addf %229, %230 : vector<16x256xf32>
    %232 = math.tanh %231 : vector<16x256xf32>
    %233 = arith.mulf %226, %232 : vector<16x256xf32>
    %234 = arith.truncf %191 : vector<16x256xf32> to vector<16x256xbf16>
    %235 = arith.truncf %212 : vector<16x256xf32> to vector<16x256xbf16>
    %236 = tpu.concatenate %234, %235 in 1 : vector<16x256xbf16>, vector<16x256xbf16> -> vector<16x512xbf16>
    %cst_60 = arith.constant dense<0.000000e+00> : vector<16x1024xf32>
    %237 = tpu.matmul %236, %65, %cst_60 {dimension_numbers = #tpu.dot_dimension_numbers<[1], [0], [0], [1], [0, 0, 1, 1], [], []>} : vector<16x512xbf16>, vector<512x1024xbf16>, vector<16x1024xf32> -> vector<16x1024xf32>
    %238 = arith.addf %237, %14 : vector<16x1024xf32>
    %239 = vector.extract_strided_slice %238 {offsets = [0, 0], sizes = [16, 768], strides = [1, 1]} : vector<16x1024xf32> to vector<16x768xf32>
    %240 = arith.negf %239 : vector<16x768xf32>
    %241 = math.exp %240 : vector<16x768xf32>
    %cst_61 = arith.constant 1.000000e+00 : f32
    %242 = vector.broadcast %cst_61 : f32 to vector<16x768xf32>
    %243 = arith.addf %242, %241 : vector<16x768xf32>
    %244 = arith.divf %242, %243 : vector<16x768xf32>
    %245 = vector.extract_strided_slice %244 {offsets = [0, 0], sizes = [16, 256], strides = [1, 1]} : vector<16x768xf32> to vector<16x256xf32>
    %246 = vector.extract_strided_slice %244 {offsets = [0, 256], sizes = [16, 256], strides = [1, 1]} : vector<16x768xf32> to vector<16x256xf32>
    %247 = vector.extract_strided_slice %244 {offsets = [0, 512], sizes = [16, 256], strides = [1, 1]} : vector<16x768xf32> to vector<16x256xf32>
    %248 = vector.extract_strided_slice %238 {offsets = [0, 768], sizes = [16, 256], strides = [1, 1]} : vector<16x1024xf32> to vector<16x256xf32>
    %249 = math.tanh %248 : vector<16x256xf32>
    %250 = arith.mulf %246, %210 : vector<16x256xf32>
    %251 = arith.mulf %245, %249 : vector<16x256xf32>
    %252 = arith.addf %250, %251 : vector<16x256xf32>
    %253 = math.tanh %252 : vector<16x256xf32>
    %254 = arith.mulf %247, %253 : vector<16x256xf32>
    %c64_62 = arith.constant 64 : index
    %c0_63 = arith.constant 0 : index
    %255 = vector.load %arg14[%c64_62, %c0_63] : memref<128x256xf32, #tpu.memory_space<vmem>>, vector<16x256xf32>
    tpu.vector_store %arg14[%c64_62, %c0_63], %254 {strides = array<i32>} : memref<128x256xf32, #tpu.memory_space<vmem>>, vector<16x256xf32>,
    %c96 = arith.constant 96 : index
    %c0_64 = arith.constant 0 : index
    %256 = vector.load %arg13[%c96, %c0_64] : memref<128x1024xf32, #tpu.memory_space<vmem>>, vector<16x1024xf32>
    %257 = arith.truncf %233 : vector<16x256xf32> to vector<16x256xbf16>
    %cst_65 = arith.constant dense<0.000000e+00> : vector<16x1024xf32>
    %258 = tpu.matmul %257, %11, %cst_65 {dimension_numbers = #tpu.dot_dimension_numbers<[1], [0], [0], [1], [0, 0, 1, 1], [], []>} : vector<16x256xbf16>, vector<256x1024xbf16>, vector<16x1024xf32> -> vector<16x1024xf32>
    %259 = arith.addf %256, %258 : vector<16x1024xf32>
    %260 = vector.extract_strided_slice %259 {offsets = [0, 0], sizes = [16, 768], strides = [1, 1]} : vector<16x1024xf32> to vector<16x768xf32>
    %261 = arith.negf %260 : vector<16x768xf32>
    %262 = math.exp %261 : vector<16x768xf32>
    %cst_66 = arith.constant 1.000000e+00 : f32
    %263 = vector.broadcast %cst_66 : f32 to vector<16x768xf32>
    %264 = arith.addf %263, %262 : vector<16x768xf32>
    %265 = arith.divf %263, %264 : vector<16x768xf32>
    %266 = vector.extract_strided_slice %265 {offsets = [0, 0], sizes = [16, 256], strides = [1, 1]} : vector<16x768xf32> to vector<16x256xf32>
    %267 = vector.extract_strided_slice %265 {offsets = [0, 256], sizes = [16, 256], strides = [1, 1]} : vector<16x768xf32> to vector<16x256xf32>
    %268 = vector.extract_strided_slice %265 {offsets = [0, 512], sizes = [16, 256], strides = [1, 1]} : vector<16x768xf32> to vector<16x256xf32>
    %269 = vector.extract_strided_slice %259 {offsets = [0, 768], sizes = [16, 256], strides = [1, 1]} : vector<16x1024xf32> to vector<16x256xf32>
    %270 = math.tanh %269 : vector<16x256xf32>
    %271 = arith.mulf %267, %231 : vector<16x256xf32>
    %272 = arith.mulf %266, %270 : vector<16x256xf32>
    %273 = arith.addf %271, %272 : vector<16x256xf32>
    %274 = math.tanh %273 : vector<16x256xf32>
    %275 = arith.mulf %268, %274 : vector<16x256xf32>
    %276 = arith.truncf %233 : vector<16x256xf32> to vector<16x256xbf16>
    %277 = arith.truncf %254 : vector<16x256xf32> to vector<16x256xbf16>
    %278 = tpu.concatenate %276, %277 in 1 : vector<16x256xbf16>, vector<16x256xbf16> -> vector<16x512xbf16>
    %cst_67 = arith.constant dense<0.000000e+00> : vector<16x1024xf32>
    %279 = tpu.matmul %278, %65, %cst_67 {dimension_numbers = #tpu.dot_dimension_numbers<[1], [0], [0], [1], [0, 0, 1, 1], [], []>} : vector<16x512xbf16>, vector<512x1024xbf16>, vector<16x1024xf32> -> vector<16x1024xf32>
    %280 = arith.addf %279, %14 : vector<16x1024xf32>
    %281 = vector.extract_strided_slice %280 {offsets = [0, 0], sizes = [16, 768], strides = [1, 1]} : vector<16x1024xf32> to vector<16x768xf32>
    %282 = arith.negf %281 : vector<16x768xf32>
    %283 = math.exp %282 : vector<16x768xf32>
    %cst_68 = arith.constant 1.000000e+00 : f32
    %284 = vector.broadcast %cst_68 : f32 to vector<16x768xf32>
    %285 = arith.addf %284, %283 : vector<16x768xf32>
    %286 = arith.divf %284, %285 : vector<16x768xf32>
    %287 = vector.extract_strided_slice %286 {offsets = [0, 0], sizes = [16, 256], strides = [1, 1]} : vector<16x768xf32> to vector<16x256xf32>
    %288 = vector.extract_strided_slice %286 {offsets = [0, 256], sizes = [16, 256], strides = [1, 1]} : vector<16x768xf32> to vector<16x256xf32>
    %289 = vector.extract_strided_slice %286 {offsets = [0, 512], sizes = [16, 256], strides = [1, 1]} : vector<16x768xf32> to vector<16x256xf32>
    %290 = vector.extract_strided_slice %280 {offsets = [0, 768], sizes = [16, 256], strides = [1, 1]} : vector<16x1024xf32> to vector<16x256xf32>
    %291 = math.tanh %290 : vector<16x256xf32>
    %292 = arith.mulf %288, %252 : vector<16x256xf32>
    %293 = arith.mulf %287, %291 : vector<16x256xf32>
    %294 = arith.addf %292, %293 : vector<16x256xf32>
    %295 = math.tanh %294 : vector<16x256xf32>
    %296 = arith.mulf %289, %295 : vector<16x256xf32>
    %c80_69 = arith.constant 80 : index
    %c0_70 = arith.constant 0 : index
    %297 = vector.load %arg14[%c80_69, %c0_70] : memref<128x256xf32, #tpu.memory_space<vmem>>, vector<16x256xf32>
    tpu.vector_store %arg14[%c80_69, %c0_70], %296 {strides = array<i32>} : memref<128x256xf32, #tpu.memory_space<vmem>>, vector<16x256xf32>,
    %c112 = arith.constant 112 : index
    %c0_71 = arith.constant 0 : index
    %298 = vector.load %arg13[%c112, %c0_71] : memref<128x1024xf32, #tpu.memory_space<vmem>>, vector<16x1024xf32>
    %299 = arith.truncf %275 : vector<16x256xf32> to vector<16x256xbf16>
    %cst_72 = arith.constant dense<0.000000e+00> : vector<16x1024xf32>
    %300 = tpu.matmul %299, %11, %cst_72 {dimension_numbers = #tpu.dot_dimension_numbers<[1], [0], [0], [1], [0, 0, 1, 1], [], []>} : vector<16x256xbf16>, vector<256x1024xbf16>, vector<16x1024xf32> -> vector<16x1024xf32>
    %301 = arith.addf %298, %300 : vector<16x1024xf32>
    %302 = vector.extract_strided_slice %301 {offsets = [0, 0], sizes = [16, 768], strides = [1, 1]} : vector<16x1024xf32> to vector<16x768xf32>
    %303 = arith.negf %302 : vector<16x768xf32>
    %304 = math.exp %303 : vector<16x768xf32>
    %cst_73 = arith.constant 1.000000e+00 : f32
    %305 = vector.broadcast %cst_73 : f32 to vector<16x768xf32>
    %306 = arith.addf %305, %304 : vector<16x768xf32>
    %307 = arith.divf %305, %306 : vector<16x768xf32>
    %308 = vector.extract_strided_slice %307 {offsets = [0, 0], sizes = [16, 256], strides = [1, 1]} : vector<16x768xf32> to vector<16x256xf32>
    %309 = vector.extract_strided_slice %307 {offsets = [0, 256], sizes = [16, 256], strides = [1, 1]} : vector<16x768xf32> to vector<16x256xf32>
    %310 = vector.extract_strided_slice %307 {offsets = [0, 512], sizes = [16, 256], strides = [1, 1]} : vector<16x768xf32> to vector<16x256xf32>
    %311 = vector.extract_strided_slice %301 {offsets = [0, 768], sizes = [16, 256], strides = [1, 1]} : vector<16x1024xf32> to vector<16x256xf32>
    %312 = math.tanh %311 : vector<16x256xf32>
    %313 = arith.mulf %309, %273 : vector<16x256xf32>
    %314 = arith.mulf %308, %312 : vector<16x256xf32>
    %315 = arith.addf %313, %314 : vector<16x256xf32>
    %316 = math.tanh %315 : vector<16x256xf32>
    %317 = arith.mulf %310, %316 : vector<16x256xf32>
    %318 = arith.truncf %275 : vector<16x256xf32> to vector<16x256xbf16>
    %319 = arith.truncf %296 : vector<16x256xf32> to vector<16x256xbf16>
    %320 = tpu.concatenate %318, %319 in 1 : vector<16x256xbf16>, vector<16x256xbf16> -> vector<16x512xbf16>
    %cst_74 = arith.constant dense<0.000000e+00> : vector<16x1024xf32>
    %321 = tpu.matmul %320, %65, %cst_74 {dimension_numbers = #tpu.dot_dimension_numbers<[1], [0], [0], [1], [0, 0, 1, 1], [], []>} : vector<16x512xbf16>, vector<512x1024xbf16>, vector<16x1024xf32> -> vector<16x1024xf32>
    %322 = arith.addf %321, %14 : vector<16x1024xf32>
    %323 = vector.extract_strided_slice %322 {offsets = [0, 0], sizes = [16, 768], strides = [1, 1]} : vector<16x1024xf32> to vector<16x768xf32>
    %324 = arith.negf %323 : vector<16x768xf32>
    %325 = math.exp %324 : vector<16x768xf32>
    %cst_75 = arith.constant 1.000000e+00 : f32
    %326 = vector.broadcast %cst_75 : f32 to vector<16x768xf32>
    %327 = arith.addf %326, %325 : vector<16x768xf32>
    %328 = arith.divf %326, %327 : vector<16x768xf32>
    %329 = vector.extract_strided_slice %328 {offsets = [0, 0], sizes = [16, 256], strides = [1, 1]} : vector<16x768xf32> to vector<16x256xf32>
    %330 = vector.extract_strided_slice %328 {offsets = [0, 256], sizes = [16, 256], strides = [1, 1]} : vector<16x768xf32> to vector<16x256xf32>
    %331 = vector.extract_strided_slice %328 {offsets = [0, 512], sizes = [16, 256], strides = [1, 1]} : vector<16x768xf32> to vector<16x256xf32>
    %332 = vector.extract_strided_slice %322 {offsets = [0, 768], sizes = [16, 256], strides = [1, 1]} : vector<16x1024xf32> to vector<16x256xf32>
    %333 = math.tanh %332 : vector<16x256xf32>
    %334 = arith.mulf %330, %294 : vector<16x256xf32>
    %335 = arith.mulf %329, %333 : vector<16x256xf32>
    %336 = arith.addf %334, %335 : vector<16x256xf32>
    %337 = math.tanh %336 : vector<16x256xf32>
    %338 = arith.mulf %331, %337 : vector<16x256xf32>
    %c96_76 = arith.constant 96 : index
    %c0_77 = arith.constant 0 : index
    %339 = vector.load %arg14[%c96_76, %c0_77] : memref<128x256xf32, #tpu.memory_space<vmem>>, vector<16x256xf32>
    tpu.vector_store %arg14[%c96_76, %c0_77], %338 {strides = array<i32>} : memref<128x256xf32, #tpu.memory_space<vmem>>, vector<16x256xf32>,
    %340 = arith.truncf %317 : vector<16x256xf32> to vector<16x256xbf16>
    %341 = arith.truncf %338 : vector<16x256xf32> to vector<16x256xbf16>
    %342 = tpu.concatenate %340, %341 in 1 : vector<16x256xbf16>, vector<16x256xbf16> -> vector<16x512xbf16>
    %cst_78 = arith.constant dense<0.000000e+00> : vector<16x1024xf32>
    %343 = tpu.matmul %342, %65, %cst_78 {dimension_numbers = #tpu.dot_dimension_numbers<[1], [0], [0], [1], [0, 0, 1, 1], [], []>} : vector<16x512xbf16>, vector<512x1024xbf16>, vector<16x1024xf32> -> vector<16x1024xf32>
    %344 = arith.addf %343, %14 : vector<16x1024xf32>
    %345 = vector.extract_strided_slice %344 {offsets = [0, 0], sizes = [16, 768], strides = [1, 1]} : vector<16x1024xf32> to vector<16x768xf32>
    %346 = arith.negf %345 : vector<16x768xf32>
    %347 = math.exp %346 : vector<16x768xf32>
    %cst_79 = arith.constant 1.000000e+00 : f32
    %348 = vector.broadcast %cst_79 : f32 to vector<16x768xf32>
    %349 = arith.addf %348, %347 : vector<16x768xf32>
    %350 = arith.divf %348, %349 : vector<16x768xf32>
    %351 = vector.extract_strided_slice %350 {offsets = [0, 0], sizes = [16, 256], strides = [1, 1]} : vector<16x768xf32> to vector<16x256xf32>
    %352 = vector.extract_strided_slice %350 {offsets = [0, 256], sizes = [16, 256], strides = [1, 1]} : vector<16x768xf32> to vector<16x256xf32>
    %353 = vector.extract_strided_slice %350 {offsets = [0, 512], sizes = [16, 256], strides = [1, 1]} : vector<16x768xf32> to vector<16x256xf32>
    %354 = vector.extract_strided_slice %344 {offsets = [0, 768], sizes = [16, 256], strides = [1, 1]} : vector<16x1024xf32> to vector<16x256xf32>
    %355 = math.tanh %354 : vector<16x256xf32>
    %356 = arith.mulf %352, %336 : vector<16x256xf32>
    %357 = arith.mulf %351, %355 : vector<16x256xf32>
    %358 = arith.addf %356, %357 : vector<16x256xf32>
    %359 = math.tanh %358 : vector<16x256xf32>
    %360 = arith.mulf %353, %359 : vector<16x256xf32>
    %c112_80 = arith.constant 112 : index
    %c0_81 = arith.constant 0 : index
    %361 = vector.load %arg14[%c112_80, %c0_81] : memref<128x256xf32, #tpu.memory_space<vmem>>, vector<16x256xf32>
    tpu.vector_store %arg14[%c112_80, %c0_81], %360 {strides = array<i32>} : memref<128x256xf32, #tpu.memory_space<vmem>>, vector<16x256xf32>,
    %c0_82 = arith.constant 0 : index
    %c0_83 = arith.constant 0 : index
    %c0_84 = arith.constant 0 : index
    %362 = vector.load %arg11[%c0_82, %c0_83, %c0_84] : memref<2x16x256xf32, #tpu.memory_space<vmem>>, vector<1x16x256xf32>
    %363 = vector.shape_cast %362 : vector<1x16x256xf32> to vector<16x256xf32>
    %364 = vector.shape_cast %317 : vector<16x256xf32> to vector<1x16x256xf32>
    tpu.vector_store %arg11[%c0_82, %c0_83, %c0_84], %364 {strides = array<i32>} : memref<2x16x256xf32, #tpu.memory_space<vmem>>, vector<1x16x256xf32>,
    %c0_85 = arith.constant 0 : index
    %c0_86 = arith.constant 0 : index
    %c0_87 = arith.constant 0 : index
    %365 = vector.load %arg12[%c0_85, %c0_86, %c0_87] : memref<2x16x256xf32, #tpu.memory_space<vmem>>, vector<1x16x256xf32>
    %366 = vector.shape_cast %365 : vector<1x16x256xf32> to vector<16x256xf32>
    %367 = vector.shape_cast %315 : vector<16x256xf32> to vector<1x16x256xf32>
    tpu.vector_store %arg12[%c0_85, %c0_86, %c0_87], %367 {strides = array<i32>} : memref<2x16x256xf32, #tpu.memory_space<vmem>>, vector<1x16x256xf32>,
    %c1_88 = arith.constant 1 : index
    %c0_89 = arith.constant 0 : index
    %c0_90 = arith.constant 0 : index
    %368 = vector.load %arg11[%c1_88, %c0_89, %c0_90] : memref<2x16x256xf32, #tpu.memory_space<vmem>>, vector<1x16x256xf32>
    %369 = vector.shape_cast %368 : vector<1x16x256xf32> to vector<16x256xf32>
    %370 = vector.shape_cast %360 : vector<16x256xf32> to vector<1x16x256xf32>
    tpu.vector_store %arg11[%c1_88, %c0_89, %c0_90], %370 {strides = array<i32>} : memref<2x16x256xf32, #tpu.memory_space<vmem>>, vector<1x16x256xf32>,
    %c1_91 = arith.constant 1 : index
    %c0_92 = arith.constant 0 : index
    %c0_93 = arith.constant 0 : index
    %371 = vector.load %arg12[%c1_91, %c0_92, %c0_93] : memref<2x16x256xf32, #tpu.memory_space<vmem>>, vector<1x16x256xf32>
    %372 = vector.shape_cast %371 : vector<1x16x256xf32> to vector<16x256xf32>
    %373 = vector.shape_cast %358 : vector<16x256xf32> to vector<1x16x256xf32>
    tpu.vector_store %arg12[%c1_91, %c0_92, %c0_93], %373 {strides = array<i32>} : memref<2x16x256xf32, #tpu.memory_space<vmem>>, vector<1x16x256xf32>,
    %c1_i32_94 = arith.constant 1 : i32
    %374 = tpu.memref_slice %arg17[%c1_i32_94] : memref<2x!tpu.dma_semaphore, #tpu.memory_space<semaphore_mem>> -> memref<1x!tpu.dma_semaphore, #tpu.memory_space<semaphore_mem>>
    %375 = tpu.memref_squeeze %374 : memref<1x!tpu.dma_semaphore, #tpu.memory_space<semaphore_mem>> -> memref<!tpu.dma_semaphore, #tpu.memory_space<semaphore_mem>>
    tpu.wait_dma2 semaphore(%375 : memref<!tpu.dma_semaphore, #tpu.memory_space<semaphore_mem>>) src(%arg6 : memref<256x128xbf16, #tpu.memory_space<any>>) dst(%arg16 : memref<256x128xbf16, #tpu.memory_space<vmem>>)
    %c0_95 = arith.constant 0 : index
    %c0_96 = arith.constant 0 : index
    %376 = vector.load %arg14[%c0_95, %c0_96] : memref<128x256xf32, #tpu.memory_space<vmem>>, vector<128x256xf32>
    %377 = arith.truncf %376 : vector<128x256xf32> to vector<128x256xbf16>
    %c0_97 = arith.constant 0 : index
    %c0_98 = arith.constant 0 : index
    %378 = vector.load %arg16[%c0_97, %c0_98] : memref<256x128xbf16, #tpu.memory_space<vmem>>, vector<256x128xbf16>
    %cst_99 = arith.constant dense<0.000000e+00> : vector<128x128xf32>
    %379 = tpu.matmul %377, %378, %cst_99 {dimension_numbers = #tpu.dot_dimension_numbers<[1], [0], [0], [1], [0, 0, 1, 1], [], []>} : vector<128x256xbf16>, vector<256x128xbf16>, vector<128x128xf32> -> vector<128x128xf32>
    %c0_100 = arith.constant 0 : index
    %c0_101 = arith.constant 0 : index
    %380 = vector.load %arg7[%c0_100, %c0_101] : memref<1x128xf32, #tpu.memory_space<vmem>>, vector<1x128xf32>
    %381 = vector.broadcast %380 : vector<1x128xf32> to vector<128x128xf32>
    %382 = arith.addf %379, %381 : vector<128x128xf32>
    %c0_102 = arith.constant 0 : index
    %c0_103 = arith.constant 0 : index
    %383 = vector.load %arg10[%c0_102, %c0_103] : memref<128x128xf32, #tpu.memory_space<vmem>>, vector<128x128xf32>
    tpu.vector_store %arg10[%c0_102, %c0_103], %382 {strides = array<i32>} : memref<128x128xf32, #tpu.memory_space<vmem>>, vector<128x128xf32>,
    return
  }
}

</mosaic_0001>

<llo_original>
// kernel: tpu_custom_call.1
$region0: #{tpu_custom_call.1}
  #allocation0 [shape = 'u32[]', space=smem, size = 0x4, offset = 0x4, fixed_abs, tag = 'smem constant byte address 0x4 - core index']
  #allocation1 [shape = 'u32[144,128]{1,0:T(1,128)}', space=vmem, size = 0x12000, scoped, tag = 'internal scratch']
  #allocation2 [shape = 'f32[128,1024]{1,0:T(8,128)}', space=vmem, size = 0x80000, scoped, tag = 'scratch operand']
  #allocation3 [shape = 'f32[128,256]{1,0:T(8,128)}', space=vmem, size = 0x20000, scoped, tag = 'scratch operand']
  #allocation4 [shape = 'bf16[512,1024]{1,0:T(8,128)(2,1)}', space=vmem, size = 0x100000, scoped, tag = 'scratch operand']
  #allocation5 [shape = 'bf16[256,128]{1,0:T(8,128)(2,1)}', space=vmem, size = 0x10000, scoped, tag = 'scratch operand']
  #allocation6 [shape = 's32[2]{0}', space=sflag, size = 0x8, scoped, tag = 'scratch operand']
  #allocation22 [shape = 's32[]', space=sflag, size = 0x4, offset = 0, fixed_abs, tag = 'sflag constant byte address 0x0 - dummy sync flag']
  #allocation23 [shape = 's32[]', space=sflag, size = 0x4, offset = 0, fixed_abs, tag = 'sflag constant byte address 0x0 - dummy sync flag']
  #allocation24 [shape = 'u32[]', space=smem, size = 0x4, offset = 0x44, fixed_abs, tag = 'smem constant byte address 0x44 - assertion arg 0']
  #allocation25 [shape = 'u32[]', space=smem, size = 0x4, offset = 0x48, fixed_abs, tag = 'smem constant byte address 0x48 - assertion arg 1']
  #allocation26 [shape = 's32[]', space=sflag, size = 0x4, offset = 0, fixed_abs, tag = 'sflag constant byte address 0x0 - dummy sync flag']
  #allocation27 [shape = 's32[]', space=sflag, size = 0x4, offset = 0, fixed_abs, tag = 'sflag constant byte address 0x0 - dummy sync flag']
  %s0 = inlined_call_operand.hbm [shape: bf16[128,128], index: 0, kind: input, shape index: {}]
  %s1 = inlined_call_operand.hbm [shape: bf16[128,1024], index: 1, kind: input, shape index: {}]
  %s2 = inlined_call_operand.hbm [shape: bf16[256,1024], index: 2, kind: input, shape index: {}]
  %s3 = inlined_call_operand.hbm [shape: f32[1,1024], index: 3, kind: input, shape index: {}]
  %s4 = inlined_call_operand.hbm [shape: bf16[512,1024], index: 4, kind: input, shape index: {}]
  %s5 = inlined_call_operand.vmem [shape: f32[1,1024], index: 5, kind: input, shape index: {}]
  %s6 = inlined_call_operand.hbm [shape: bf16[256,128], index: 6, kind: input, shape index: {}]
  %s7 = inlined_call_operand.vmem [shape: f32[1,128], index: 7, kind: input, shape index: {}]
  %s8 = inlined_call_operand.hbm [shape: f32[2,16,256], index: 8, kind: input, shape index: {}]
  %s9 = inlined_call_operand.hbm [shape: f32[2,16,256], index: 9, kind: input, shape index: {}]
  %s10 = inlined_call_operand.hbm [shape: f32[128,128], index: 10, kind: output, shape index: {0}]
  %s11 = inlined_call_operand.hbm [shape: f32[2,16,256], index: 11, kind: output, shape index: {1}]
  %s12 = inlined_call_operand.hbm [shape: f32[2,16,256], index: 12, kind: output, shape index: {2}]
  %13 = xla_tuple %s10, %s11, %s12
  %s14 = sld [smem:[#allocation0]]
  $region90: #{tpu_custom_call.1} parent=0
    _
  %s16 = ssub.s32 1, %s14
  %s17 = scalar_select 0, %s16, %s14
  $region1: #{tpu_custom_call.1} parent=0
    #allocation7 [shape = 'u8[32768]{0}', space=vmem, size = 0x8000, scoped, tag = 'input window, operand 0, single buffered']
    #allocation8 [shape = 's32[1]{0}', space=sflag, size = 0x4, scoped, tag = 'scoped memory for tpu_custom_call.1']
    #allocation9 [shape = 's32[1]{0}', space=sflag, size = 0x4, scoped, tag = 'scoped memory for tpu_custom_call.1']
    #allocation10 [shape = 'u8[262144]{0}', space=vmem, size = 0x40000, scoped, tag = 'input window, operand 1, single buffered']
    #allocation11 [shape = 's32[1]{0}', space=sflag, size = 0x4, scoped, tag = 'scoped memory for tpu_custom_call.1']
    #allocation12 [shape = 'u8[524288]{0}', space=vmem, size = 0x80000, scoped, tag = 'input window, operand 2, single buffered']
    #allocation13 [shape = 'u8[4096]{0}', space=vmem, size = 0x1000, scoped, tag = 'input window, operand 3, single buffered']
    #allocation14 [shape = 's32[1]{0}', space=sflag, size = 0x4, scoped, tag = 'scoped memory for tpu_custom_call.1']
    #allocation15 [shape = 'u8[32768]{0}', space=vmem, size = 0x8000, scoped, tag = 'input window, operand 8, single buffered']
    #allocation16 [shape = 'u8[32768]{0}', space=vmem, size = 0x8000, scoped, tag = 'input window, operand 9, single buffered']
    #allocation17 [shape = 's32[1]{0}', space=sflag, size = 0x4, scoped, tag = 'scoped memory for tpu_custom_call.1']
    #allocation18 [shape = 'u8[65536]{0}', space=vmem, size = 0x10000, scoped, tag = 'output window, operand 0, single buffered']
    #allocation19 [shape = 'u8[32768]{0}', space=vmem, size = 0x8000, scoped, tag = 'output window, operand 1, single buffered']
    #allocation20 [shape = 's32[1]{0}', space=sflag, size = 0x4, scoped, tag = 'scoped memory for tpu_custom_call.1']
    #allocation21 [shape = 'u8[32768]{0}', space=vmem, size = 0x8000, scoped, tag = 'output window, operand 2, single buffered']
    %18 = vsyncpa [#allocation8], 0
    %19 = vsyncpa [#allocation11], 0
    %20 = vsyncpa [#allocation14], 0
    %21 = vsyncpa [#allocation17], 0
    %22 = vsyncpa [#allocation9], 0
    %23 = vsyncpa [#allocation20], 0
    // Predicated region
    $region2: #{tpu_custom_call.1} parent=1 // pred_check
      _
    $region3: #{tpu_custom_call.1} parent=1 // pred_check_branch
      %25 = sbr.rel (0) target = $region5
    $region4: #{tpu_custom_call.1} parent=1 // pred_region
      %s27 = ssub.s32 1024, 1024
      %28 = vsyncadd [#allocation8], %s27
      %s29 = sshll.u32 [#allocation7], 4
      %s30 = int_to_ptr.vmem [resolvable:$true] %s29
      %35 = dma.hbm_to_vmem [thread:$0]  %s0, 1024, %s30, [#allocation8], 64, 64, 4
    $region5: #{tpu_custom_call.1} parent=1 // pred_fallthru
      _
    // Predicated region
    $region6: #{tpu_custom_call.1} parent=1 // pred_check
      _
    $region7: #{tpu_custom_call.1} parent=1 // pred_check_branch
      %37 = sbr.rel (0) target = $region9
    $region8: #{tpu_custom_call.1} parent=1 // pred_region
      %s39 = ssub.s32 8192, 8192
      %40 = vsyncadd [#allocation11], %s39
      %s41 = sshll.u32 [#allocation10], 4
      %s42 = int_to_ptr.vmem [resolvable:$true] %s41
      %47 = dma.hbm_to_vmem [thread:$0]  %s1, 8192, %s42, [#allocation11], 512, 512, 32
    $region9: #{tpu_custom_call.1} parent=1 // pred_fallthru
      _
    // Predicated region
    $region10: #{tpu_custom_call.1} parent=1 // pred_check
      _
    $region11: #{tpu_custom_call.1} parent=1 // pred_check_branch
      %49 = sbr.rel (0) target = $region13
    $region12: #{tpu_custom_call.1} parent=1 // pred_region
      %s51 = ssub.s32 16384, 16384
      %52 = vsyncadd [#allocation11], %s51
      %s53 = sshll.u32 [#allocation12], 4
      %s54 = int_to_ptr.vmem [resolvable:$true] %s53
      %59 = dma.hbm_to_vmem [thread:$0]  %s2, 16384, %s54, [#allocation11], 512, 512, 32
    $region13: #{tpu_custom_call.1} parent=1 // pred_fallthru
      _
    // Predicated region
    $region14: #{tpu_custom_call.1} parent=1 // pred_check
      _
    $region15: #{tpu_custom_call.1} parent=1 // pred_check_branch
      %61 = sbr.rel (0) target = $region17
    $region16: #{tpu_custom_call.1} parent=1 // pred_region
      %s63 = ssub.s32 128, 128
      %64 = vsyncadd [#allocation14], %s63
      %s66 = sshll.u32 [#allocation13], 4
      %s67 = int_to_ptr.vmem [resolvable:$true] %s66
      %69 = dma.hbm_to_vmem [thread:$0]  %s3, 128, %s67, [#allocation14]
    $region17: #{tpu_custom_call.1} parent=1 // pred_fallthru
      _
    // Predicated region
    $region18: #{tpu_custom_call.1} parent=1 // pred_check
      _
    $region19: #{tpu_custom_call.1} parent=1 // pred_check_branch
      %71 = sbr.rel (0) target = $region21
    $region20: #{tpu_custom_call.1} parent=1 // pred_region
      _
    $region21: #{tpu_custom_call.1} parent=1 // pred_fallthru
      _
    // Predicated region
    $region22: #{tpu_custom_call.1} parent=1 // pred_check
      _
    $region23: #{tpu_custom_call.1} parent=1 // pred_check_branch
      %73 = sbr.rel (0) target = $region25
    $region24: #{tpu_custom_call.1} parent=1 // pred_region
      _
    $region25: #{tpu_custom_call.1} parent=1 // pred_fallthru
      _
    // Predicated region
    $region26: #{tpu_custom_call.1} parent=1 // pred_check
      _
    $region27: #{tpu_custom_call.1} parent=1 // pred_check_branch
      %75 = sbr.rel (0) target = $region29
    $region28: #{tpu_custom_call.1} parent=1 // pred_region
      %s77 = ssub.s32 1024, 1024
      %78 = vsyncadd [#allocation14], %s77
      %s79 = sshll.u32 [#allocation15], 4
      %s80 = int_to_ptr.vmem [resolvable:$true] %s79
      %85 = dma.hbm_to_vmem [thread:$0]  %s8, 1024, %s80, [#allocation14], 256, 256, 16
    $region29: #{tpu_custom_call.1} parent=1 // pred_fallthru
      _
    // Predicated region
    $region30: #{tpu_custom_call.1} parent=1 // pred_check
      _
    $region31: #{tpu_custom_call.1} parent=1 // pred_check_branch
      %87 = sbr.rel (0) target = $region33
    $region32: #{tpu_custom_call.1} parent=1 // pred_region
      %s89 = ssub.s32 1024, 1024
      %90 = vsyncadd [#allocation17], %s89
      %s91 = sshll.u32 [#allocation16], 4
      %s92 = int_to_ptr.vmem [resolvable:$true] %s91
      %97 = dma.hbm_to_vmem [thread:$0]  %s9, 1024, %s92, [#allocation17], 256, 256, 16
    $region33: #{tpu_custom_call.1} parent=1 // pred_fallthru
      _
    // Predicated region
    $region34: #{tpu_custom_call.1} parent=1 // pred_check
      _
    $region35: #{tpu_custom_call.1} parent=1 // pred_check_branch
      %99 = sbr.rel (0) target = $region37
    $region36: #{tpu_custom_call.1} parent=1 // pred_region
      %100 = dma.done [#allocation8], 1024
    $region37: #{tpu_custom_call.1} parent=1 // pred_fallthru
      _
    // Predicated region
    $region38: #{tpu_custom_call.1} parent=1 // pred_check
      _
    $region39: #{tpu_custom_call.1} parent=1 // pred_check_branch
      %102 = sbr.rel (0) target = $region41
    $region40: #{tpu_custom_call.1} parent=1 // pred_region
      %103 = dma.done [#allocation11], 8192
    $region41: #{tpu_custom_call.1} parent=1 // pred_fallthru
      _
    // Predicated region
    $region42: #{tpu_custom_call.1} parent=1 // pred_check
      _
    $region43: #{tpu_custom_call.1} parent=1 // pred_check_branch
      %105 = sbr.rel (0) target = $region45
    $region44: #{tpu_custom_call.1} parent=1 // pred_region
      %106 = dma.done [#allocation11], 16384
    $region45: #{tpu_custom_call.1} parent=1 // pred_fallthru
      _
    // Predicated region
    $region46: #{tpu_custom_call.1} parent=1 // pred_check
      _
    $region47: #{tpu_custom_call.1} parent=1 // pred_check_branch
      %108 = sbr.rel (0) target = $region49
    $region48: #{tpu_custom_call.1} parent=1 // pred_region
      %109 = dma.done [#allocation14], 128
    $region49: #{tpu_custom_call.1} parent=1 // pred_fallthru
      _
    // Predicated region
    $region50: #{tpu_custom_call.1} parent=1 // pred_check
      _
    $region51: #{tpu_custom_call.1} parent=1 // pred_check_branch
      %111 = sbr.rel (0) target = $region53
    $region52: #{tpu_custom_call.1} parent=1 // pred_region
      %112 = dma.done [#allocation14], 1024
    $region53: #{tpu_custom_call.1} parent=1 // pred_fallthru
      _
    // Predicated region
    $region54: #{tpu_custom_call.1} parent=1 // pred_check
      _
    $region55: #{tpu_custom_call.1} parent=1 // pred_check_branch
      %114 = sbr.rel (0) target = $region57
    $region56: #{tpu_custom_call.1} parent=1 // pred_region
      %115 = dma.done [#allocation17], 1024
    $region57: #{tpu_custom_call.1} parent=1 // pred_fallthru
      _
    // Predicated region
    $region58: #{tpu_custom_call.1} parent=1 // pred_check
      _
    $region59: #{tpu_custom_call.1} parent=1 // pred_check_branch
      %118 = sbr.rel target = $region61
    $region60: #{tpu_custom_call.1} parent=1 // pred_region
      %119 = sst [smem:[#allocation24]] [#allocation23]
      %120 = sst [smem:[#allocation25]] [#allocation22]
    $region61: #{tpu_custom_call.1} parent=1 // pred_fallthru
      _
    %122 = shalt.err (0)
    %s124 = sshll.u32 [#allocation4], 4
    %s125 = int_to_ptr.vmem [resolvable:$true] %s124
    %127 = dma.hbm_to_vmem [thread:$0]  %s4, 32768, %s125, [#allocation6]
    %s128 = scalar_lea.sflag [#allocation6], 1
    // Predicated region
    $region62: #{tpu_custom_call.1} parent=1 // pred_check
      _
    $region63: #{tpu_custom_call.1} parent=1 // pred_check_branch
      %130 = sbr.rel target = $region65
    $region64: #{tpu_custom_call.1} parent=1 // pred_region
      %131 = sst [smem:[#allocation24]] [#allocation27]
      %132 = sst [smem:[#allocation25]] [#allocation26]
    $region65: #{tpu_custom_call.1} parent=1 // pred_fallthru
      _
    %134 = shalt.err (0)
    %s136 = sshll.u32 [#allocation5], 4
    %s137 = int_to_ptr.vmem [resolvable:$true] %s136
    %139 = dma.hbm_to_vmem [thread:$0]  %s6, 2048, %s137, %s128
    %v140 = vld [vmem:[#allocation7] sm:$0xf]
    %v141 = vld [vmem:[#allocation7 + $0x4] sm:$0xf]
    %v142 = vld [vmem:[#allocation7 + $0x8] sm:$0xf]
    %v143 = vld [vmem:[#allocation7 + $0xc] sm:$0xf]
    %v144 = vld [vmem:[#allocation7 + $0x10] sm:$0xf]
    %v145 = vld [vmem:[#allocation7 + $0x14] sm:$0xf]
    %v146 = vld [vmem:[#allocation7 + $0x18] sm:$0xf]
    %v147 = vld [vmem:[#allocation7 + $0x1c] sm:$0xf]
    %v148 = vld [vmem:[#allocation7 + $0x20] sm:$0xf]
    %v149 = vld [vmem:[#allocation7 + $0x24] sm:$0xf]
    %v150 = vld [vmem:[#allocation7 + $0x28] sm:$0xf]
    %v151 = vld [vmem:[#allocation7 + $0x2c] sm:$0xf]
    %v152 = vld [vmem:[#allocation7 + $0x30] sm:$0xf]
    %v153 = vld [vmem:[#allocation7 + $0x34] sm:$0xf]
    %v154 = vld [vmem:[#allocation7 + $0x38] sm:$0xf]
    %v155 = vld [vmem:[#allocation7 + $0x3c] sm:$0xf]
    %v156 = vld [vmem:[#allocation10] sm:$0xff]
    %v157 = vld [vmem:[#allocation10 + $0x8] sm:$0xff]
    %v158 = vld [vmem:[#allocation10 + $0x10] sm:$0xff]
    %v159 = vld [vmem:[#allocation10 + $0x18] sm:$0xff]
    %v160 = vld [vmem:[#allocation10 + $0x20] sm:$0xff]
    %v161 = vld [vmem:[#allocation10 + $0x28] sm:$0xff]
    %v162 = vld [vmem:[#allocation10 + $0x30] sm:$0xff]
    %v163 = vld [vmem:[#allocation10 + $0x38] sm:$0xff]
    %v164 = vld [vmem:[#allocation10 + $0x40] sm:$0xff]
    %v165 = vld [vmem:[#allocation10 + $0x48] sm:$0xff]
    %v166 = vld [vmem:[#allocation10 + $0x50] sm:$0xff]
    %v167 = vld [vmem:[#allocation10 + $0x58] sm:$0xff]
    %v168 = vld [vmem:[#allocation10 + $0x60] sm:$0xff]
    %v169 = vld [vmem:[#allocation10 + $0x68] sm:$0xff]
    %v170 = vld [vmem:[#allocation10 + $0x70] sm:$0xff]
    %v171 = vld [vmem:[#allocation10 + $0x78] sm:$0xff]
    %v172 = vld [vmem:[#allocation10 + $0x80] sm:$0xff]
    %v173 = vld [vmem:[#allocation10 + $0x88] sm:$0xff]
    %v174 = vld [vmem:[#allocation10 + $0x90] sm:$0xff]
    %v175 = vld [vmem:[#allocation10 + $0x98] sm:$0xff]
    %v176 = vld [vmem:[#allocation10 + $0xa0] sm:$0xff]
    %v177 = vld [vmem:[#allocation10 + $0xa8] sm:$0xff]
    %v178 = vld [vmem:[#allocation10 + $0xb0] sm:$0xff]
    %v179 = vld [vmem:[#allocation10 + $0xb8] sm:$0xff]
    %v180 = vld [vmem:[#allocation10 + $0xc0] sm:$0xff]
    %v181 = vld [vmem:[#allocation10 + $0xc8] sm:$0xff]
    %v182 = vld [vmem:[#allocation10 + $0xd0] sm:$0xff]
    %v183 = vld [vmem:[#allocation10 + $0xd8] sm:$0xff]
    %v184 = vld [vmem:[#allocation10 + $0xe0] sm:$0xff]
    %v185 = vld [vmem:[#allocation10 + $0xe8] sm:$0xff]
    %v186 = vld [vmem:[#allocation10 + $0xf0] sm:$0xff]
    %v187 = vld [vmem:[#allocation10 + $0xf8] sm:$0xff]
    %v188 = vld [vmem:[#allocation10 + $0x100] sm:$0xff]
    %v189 = vld [vmem:[#allocation10 + $0x108] sm:$0xff]
    %v190 = vld [vmem:[#allocation10 + $0x110] sm:$0xff]
    %v191 = vld [vmem:[#allocation10 + $0x118] sm:$0xff]
    %v192 = vld [vmem:[#allocation10 + $0x120] sm:$0xff]
    %v193 = vld [vmem:[#allocation10 + $0x128] sm:$0xff]
    %v194 = vld [vmem:[#allocation10 + $0x130] sm:$0xff]
    %v195 = vld [vmem:[#allocation10 + $0x138] sm:$0xff]
    %v196 = vld [vmem:[#allocation10 + $0x140] sm:$0xff]
    %v197 = vld [vmem:[#allocation10 + $0x148] sm:$0xff]
    %v198 = vld [vmem:[#allocation10 + $0x150] sm:$0xff]
    %v199 = vld [vmem:[#allocation10 + $0x158] sm:$0xff]
    %v200 = vld [vmem:[#allocation10 + $0x160] sm:$0xff]
    %v201 = vld [vmem:[#allocation10 + $0x168] sm:$0xff]
    %v202 = vld [vmem:[#allocation10 + $0x170] sm:$0xff]
    %v203 = vld [vmem:[#allocation10 + $0x178] sm:$0xff]
    %v204 = vld [vmem:[#allocation10 + $0x180] sm:$0xff]
    %v205 = vld [vmem:[#allocation10 + $0x188] sm:$0xff]
    %v206 = vld [vmem:[#allocation10 + $0x190] sm:$0xff]
    %v207 = vld [vmem:[#allocation10 + $0x198] sm:$0xff]
    %v208 = vld [vmem:[#allocation10 + $0x1a0] sm:$0xff]
    %v209 = vld [vmem:[#allocation10 + $0x1a8] sm:$0xff]
    %v210 = vld [vmem:[#allocation10 + $0x1b0] sm:$0xff]
    %v211 = vld [vmem:[#allocation10 + $0x1b8] sm:$0xff]
    %v212 = vld [vmem:[#allocation10 + $0x1c0] sm:$0xff]
    %v213 = vld [vmem:[#allocation10 + $0x1c8] sm:$0xff]
    %v214 = vld [vmem:[#allocation10 + $0x1d0] sm:$0xff]
    %v215 = vld [vmem:[#allocation10 + $0x1d8] sm:$0xff]
    %v216 = vld [vmem:[#allocation10 + $0x1e0] sm:$0xff]
    %v217 = vld [vmem:[#allocation10 + $0x1e8] sm:$0xff]
    %v218 = vld [vmem:[#allocation10 + $0x1f0] sm:$0xff]
    %v219 = vld [vmem:[#allocation10 + $0x1f8] sm:$0xff]
    %v220 = vld [vmem:[#allocation13] sm:$0xff]
    %v222 = vlaneseq
    %v223 = vshrl.u32 %v222, 7
    %v224 = vsub.s32 0, %v223
    %v225 = vrot.slane %v220, %v224
    %v226 = vlaneseq
    %v227 = vshrl.u32 %v226, 7
    %v228 = vsub.s32 1, %v227
    %v229 = vrot.slane %v220, %v228
    %v230 = vlaneseq
    %v231 = vshrl.u32 %v230, 7
    %v232 = vsub.s32 2, %v231
    %v233 = vrot.slane %v220, %v232
    %v234 = vlaneseq
    %v235 = vshrl.u32 %v234, 7
    %v236 = vsub.s32 3, %v235
    %v237 = vrot.slane %v220, %v236
    %v238 = vlaneseq
    %v239 = vshrl.u32 %v238, 7
    %v240 = vsub.s32 4, %v239
    %v241 = vrot.slane %v220, %v240
    %v242 = vlaneseq
    %v243 = vshrl.u32 %v242, 7
    %v244 = vsub.s32 5, %v243
    %v245 = vrot.slane %v220, %v244
    %v246 = vlaneseq
    %v247 = vshrl.u32 %v246, 7
    %v248 = vsub.s32 6, %v247
    %v249 = vrot.slane %v220, %v248
    %v250 = vlaneseq
    %v251 = vshrl.u32 %v250, 7
    %v252 = vsub.s32 7, %v251
    %v253 = vrot.slane %v220, %v252
    %v278 = vunpack.c.l.b16 %v140
    %v279 = vunpack.c.l.b16 %v141
    %v280 = vunpack.c.l.b16 %v142
    %v281 = vunpack.c.l.b16 %v143
    %v282 = vunpack.c.l.b16 %v144
    %v283 = vunpack.c.l.b16 %v145
    %v284 = vunpack.c.l.b16 %v146
    %v285 = vunpack.c.l.b16 %v147
    %v286 = vunpack.c.l.b16 %v148
    %v287 = vunpack.c.l.b16 %v149
    %v288 = vunpack.c.l.b16 %v150
    %v289 = vunpack.c.l.b16 %v151
    %v290 = vunpack.c.l.b16 %v152
    %v291 = vunpack.c.l.b16 %v153
    %v292 = vunpack.c.l.b16 %v154
    %v293 = vunpack.c.l.b16 %v155
    %v294 = vpack.c.b16 %v279, %v278
    %v295 = vpack.c.b16 %v281, %v280
    %v296 = vpack.c.b16 %v283, %v282
    %v297 = vpack.c.b16 %v285, %v284
    %v298 = vpack.c.b16 %v287, %v286
    %v299 = vpack.c.b16 %v289, %v288
    %v300 = vpack.c.b16 %v291, %v290
    %v301 = vpack.c.b16 %v293, %v292
    %v374 = vunpack.c.l.b16 %v156
    %v375 = vunpack.c.h.b16 %v156
    %v376 = vunpack.c.l.b16 %v157
    %v377 = vunpack.c.h.b16 %v157
    %v378 = vunpack.c.l.b16 %v158
    %v379 = vunpack.c.h.b16 %v158
    %v380 = vunpack.c.l.b16 %v159
    %v381 = vunpack.c.h.b16 %v159
    %v382 = vunpack.c.l.b16 %v160
    %v383 = vunpack.c.h.b16 %v160
    %v384 = vunpack.c.l.b16 %v161
    %v385 = vunpack.c.h.b16 %v161
    %v386 = vunpack.c.l.b16 %v162
    %v387 = vunpack.c.h.b16 %v162
    %v388 = vunpack.c.l.b16 %v163
    %v389 = vunpack.c.h.b16 %v163
    %v390 = vunpack.c.l.b16 %v164
    %v391 = vunpack.c.h.b16 %v164
    %v392 = vunpack.c.l.b16 %v165
    %v393 = vunpack.c.h.b16 %v165
    %v394 = vunpack.c.l.b16 %v166
    %v395 = vunpack.c.h.b16 %v166
    %v396 = vunpack.c.l.b16 %v167
    %v397 = vunpack.c.h.b16 %v167
    %v398 = vunpack.c.l.b16 %v168
    %v399 = vunpack.c.h.b16 %v168
    %v400 = vunpack.c.l.b16 %v169
    %v401 = vunpack.c.h.b16 %v169
    %v402 = vunpack.c.l.b16 %v170
    %v403 = vunpack.c.h.b16 %v170
    %v404 = vunpack.c.l.b16 %v171
    %v405 = vunpack.c.h.b16 %v171
    %v406 = vunpack.c.l.b16 %v172
    %v407 = vunpack.c.h.b16 %v172
    %v408 = vunpack.c.l.b16 %v173
    %v409 = vunpack.c.h.b16 %v173
    %v410 = vunpack.c.l.b16 %v174
    %v411 = vunpack.c.h.b16 %v174
    %v412 = vunpack.c.l.b16 %v175
    %v413 = vunpack.c.h.b16 %v175
    %v414 = vunpack.c.l.b16 %v176
    %v415 = vunpack.c.h.b16 %v176
    %v416 = vunpack.c.l.b16 %v177
    %v417 = vunpack.c.h.b16 %v177
    %v418 = vunpack.c.l.b16 %v178
    %v419 = vunpack.c.h.b16 %v178
    %v420 = vunpack.c.l.b16 %v179
    %v421 = vunpack.c.h.b16 %v179
    %v422 = vunpack.c.l.b16 %v180
    %v423 = vunpack.c.h.b16 %v180
    %v424 = vunpack.c.l.b16 %v181
    %v425 = vunpack.c.h.b16 %v181
    %v426 = vunpack.c.l.b16 %v182
    %v427 = vunpack.c.h.b16 %v182
    %v428 = vunpack.c.l.b16 %v183
    %v429 = vunpack.c.h.b16 %v183
    %v430 = vunpack.c.l.b16 %v184
    %v431 = vunpack.c.h.b16 %v184
    %v432 = vunpack.c.l.b16 %v185
    %v433 = vunpack.c.h.b16 %v185
    %v434 = vunpack.c.l.b16 %v186
    %v435 = vunpack.c.h.b16 %v186
    %v436 = vunpack.c.l.b16 %v187
    %v437 = vunpack.c.h.b16 %v187
    %v438 = vunpack.c.l.b16 %v188
    %v439 = vunpack.c.h.b16 %v188
    %v440 = vunpack.c.l.b16 %v189
    %v441 = vunpack.c.h.b16 %v189
    %v442 = vunpack.c.l.b16 %v190
    %v443 = vunpack.c.h.b16 %v190
    %v444 = vunpack.c.l.b16 %v191
    %v445 = vunpack.c.h.b16 %v191
    %v446 = vunpack.c.l.b16 %v192
    %v447 = vunpack.c.h.b16 %v192
    %v448 = vunpack.c.l.b16 %v193
    %v449 = vunpack.c.h.b16 %v193
    %v450 = vunpack.c.l.b16 %v194
    %v451 = vunpack.c.h.b16 %v194
    %v452 = vunpack.c.l.b16 %v195
    %v453 = vunpack.c.h.b16 %v195
    %v454 = vunpack.c.l.b16 %v196
    %v455 = vunpack.c.h.b16 %v196
    %v456 = vunpack.c.l.b16 %v197
    %v457 = vunpack.c.h.b16 %v197
    %v458 = vunpack.c.l.b16 %v198
    %v459 = vunpack.c.h.b16 %v198
    %v460 = vunpack.c.l.b16 %v199
    %v461 = vunpack.c.h.b16 %v199
    %v462 = vunpack.c.l.b16 %v200
    %v463 = vunpack.c.h.b16 %v200
    %v464 = vunpack.c.l.b16 %v201
    %v465 = vunpack.c.h.b16 %v201
    %v466 = vunpack.c.l.b16 %v202
    %v467 = vunpack.c.h.b16 %v202
    %v468 = vunpack.c.l.b16 %v203
    %v469 = vunpack.c.h.b16 %v203
    %v470 = vunpack.c.l.b16 %v204
    %v471 = vunpack.c.h.b16 %v204
    %v472 = vunpack.c.l.b16 %v205
    %v473 = vunpack.c.h.b16 %v205
    %v474 = vunpack.c.l.b16 %v206
    %v475 = vunpack.c.h.b16 %v206
    %v476 = vunpack.c.l.b16 %v207
    %v477 = vunpack.c.h.b16 %v207
    %v478 = vunpack.c.l.b16 %v208
    %v479 = vunpack.c.h.b16 %v208
    %v480 = vunpack.c.l.b16 %v209
    %v481 = vunpack.c.h.b16 %v209
    %v482 = vunpack.c.l.b16 %v210
    %v483 = vunpack.c.h.b16 %v210
    %v484 = vunpack.c.l.b16 %v211
    %v485 = vunpack.c.h.b16 %v211
    %v486 = vunpack.c.l.b16 %v212
    %v487 = vunpack.c.h.b16 %v212
    %v488 = vunpack.c.l.b16 %v213
    %v489 = vunpack.c.h.b16 %v213
    %v490 = vunpack.c.l.b16 %v214
    %v491 = vunpack.c.h.b16 %v214
    %v492 = vunpack.c.l.b16 %v215
    %v493 = vunpack.c.h.b16 %v215
    %v494 = vunpack.c.l.b16 %v216
    %v495 = vunpack.c.h.b16 %v216
    %v496 = vunpack.c.l.b16 %v217
    %v497 = vunpack.c.h.b16 %v217
    %v498 = vunpack.c.l.b16 %v218
    %v499 = vunpack.c.h.b16 %v218
    %v500 = vunpack.c.l.b16 %v219
    %v501 = vunpack.c.h.b16 %v219
    %v502 = vpack.c.b16 %v382, %v374
    %v503 = vpack.c.b16 %v383, %v375
    %v504 = vpack.c.b16 %v384, %v376
    %v505 = vpack.c.b16 %v385, %v377
    %v506 = vpack.c.b16 %v386, %v378
    %v507 = vpack.c.b16 %v387, %v379
    %v508 = vpack.c.b16 %v388, %v380
    %v509 = vpack.c.b16 %v389, %v381
    %v510 = vpack.c.b16 %v398, %v390
    %v511 = vpack.c.b16 %v399, %v391
    %v512 = vpack.c.b16 %v400, %v392
    %v513 = vpack.c.b16 %v401, %v393
    %v514 = vpack.c.b16 %v402, %v394
    %v515 = vpack.c.b16 %v403, %v395
    %v516 = vpack.c.b16 %v404, %v396
    %v517 = vpack.c.b16 %v405, %v397
    %v518 = vpack.c.b16 %v414, %v406
    %v519 = vpack.c.b16 %v415, %v407
    %v520 = vpack.c.b16 %v416, %v408
    %v521 = vpack.c.b16 %v417, %v409
    %v522 = vpack.c.b16 %v418, %v410
    %v523 = vpack.c.b16 %v419, %v411
    %v524 = vpack.c.b16 %v420, %v412
    %v525 = vpack.c.b16 %v421, %v413
    %v526 = vpack.c.b16 %v430, %v422
    %v527 = vpack.c.b16 %v431, %v423
    %v528 = vpack.c.b16 %v432, %v424
    %v529 = vpack.c.b16 %v433, %v425
    %v530 = vpack.c.b16 %v434, %v426
    %v531 = vpack.c.b16 %v435, %v427
    %v532 = vpack.c.b16 %v436, %v428
    %v533 = vpack.c.b16 %v437, %v429
    %v534 = vpack.c.b16 %v446, %v438
    %v535 = vpack.c.b16 %v447, %v439
    %v536 = vpack.c.b16 %v448, %v440
    %v537 = vpack.c.b16 %v449, %v441
    %v538 = vpack.c.b16 %v450, %v442
    %v539 = vpack.c.b16 %v451, %v443
    %v540 = vpack.c.b16 %v452, %v444
    %v541 = vpack.c.b16 %v453, %v445
    %v542 = vpack.c.b16 %v462, %v454
    %v543 = vpack.c.b16 %v463, %v455
    %v544 = vpack.c.b16 %v464, %v456
    %v545 = vpack.c.b16 %v465, %v457
    %v546 = vpack.c.b16 %v466, %v458
    %v547 = vpack.c.b16 %v467, %v459
    %v548 = vpack.c.b16 %v468, %v460
    %v549 = vpack.c.b16 %v469, %v461
    %v550 = vpack.c.b16 %v478, %v470
    %v551 = vpack.c.b16 %v479, %v471
    %v552 = vpack.c.b16 %v480, %v472
    %v553 = vpack.c.b16 %v481, %v473
    %v554 = vpack.c.b16 %v482, %v474
    %v555 = vpack.c.b16 %v483, %v475
    %v556 = vpack.c.b16 %v484, %v476
    %v557 = vpack.c.b16 %v485, %v477
    %v558 = vpack.c.b16 %v494, %v486
    %v559 = vpack.c.b16 %v495, %v487
    %v560 = vpack.c.b16 %v496, %v488
    %v561 = vpack.c.b16 %v497, %v489
    %v562 = vpack.c.b16 %v498, %v490
    %v563 = vpack.c.b16 %v499, %v491
    %v564 = vpack.c.b16 %v500, %v492
    %v565 = vpack.c.b16 %v501, %v493
    %630 = vmatprep.subr.bf16.mxu0 %v559
    %631 = vmatpush1.bf16.msra.mxu0 %v558
    %632 = vmatprep.subr.bf16.mxu0 %v551
    %633 = vmatpush1.bf16.msra.mxu0 %v550
    %634 = vmatprep.subr.bf16.mxu0 %v543
    %635 = vmatpush1.bf16.msra.mxu0 %v542
    %636 = vmatprep.subr.bf16.mxu0 %v535
    %637 = vmatpush1.bf16.msra.mxu0 %v534
    %638 = vmatprep.subr.bf16.mxu0 %v527
    %639 = vmatpush1.bf16.msra.mxu0 %v526
    %640 = vmatprep.subr.bf16.mxu0 %v519
    %641 = vmatpush1.bf16.msra.mxu0 %v518
    %642 = vmatprep.subr.bf16.mxu0 %v511
    %643 = vmatpush1.bf16.msra.mxu0 %v510
    %644 = vmatprep.subr.bf16.mxu0 %v503
    %645 = vmatpush1.bf16.msra.mxu0 %v502
    %646 = vmatprep.subr.bf16.mxu0 0
    %647 = vmatpush2.bf16.msra.mxu0 0
    %648 = vmatprep.subr.bf16.mxu0 0
    %649 = vmatpush2.bf16.msra.mxu0 0
    %650 = vmatprep.subr.bf16.mxu0 0
    %651 = vmatpush2.bf16.msra.mxu0 0
    %652 = vmatprep.subr.bf16.mxu0 0
    %653 = vmatpush2.bf16.msra.mxu0 0
    %654 = vmatprep.subr.bf16.mxu0 0
    %655 = vmatpush2.bf16.msra.mxu0 0
    %656 = vmatprep.subr.bf16.mxu0 0
    %657 = vmatpush2.bf16.msra.mxu0 0
    %658 = vmatprep.subr.bf16.mxu0 0
    %659 = vmatpush2.bf16.msra.mxu0 0
    %660 = vmatprep.subr.bf16.mxu0 0
    %661 = vmatpush2.bf16.msra.mxu0 0
    %662 = vmatprep.mubr.bf16.mxu0 0
    %663 = vmatmul.mubr.bf16.gmra.mxu0 %v294
    %v664 = vpop.f32.mrf.mxu0
    %v665 = vadd.f32 %v225, %v664
    %v666 = vpop.f32.mrf.mxu0
    %v667 = vadd.f32 %v229, %v666
    %v668 = vpop.f32.mrf.mxu0
    %v669 = vadd.f32 %v225, %v668
    %v670 = vpop.f32.mrf.mxu0
    %v671 = vadd.f32 %v229, %v670
    %672 = vmatprep.mubr.bf16.mxu0 0
    %673 = vmatmul.mubr.bf16.gmra.mxu0 %v295
    %v674 = vpop.f32.mrf.mxu0
    %v675 = vadd.f32 %v225, %v674
    %v676 = vpop.f32.mrf.mxu0
    %v677 = vadd.f32 %v229, %v676
    %v678 = vpop.f32.mrf.mxu0
    %v679 = vadd.f32 %v225, %v678
    %v680 = vpop.f32.mrf.mxu0
    %v681 = vadd.f32 %v229, %v680
    %682 = vmatprep.mubr.bf16.mxu0 0
    %683 = vmatmul.mubr.bf16.gmra.mxu0 %v296
    %v684 = vpop.f32.mrf.mxu0
    %v685 = vadd.f32 %v225, %v684
    %v686 = vpop.f32.mrf.mxu0
    %v687 = vadd.f32 %v229, %v686
    %v688 = vpop.f32.mrf.mxu0
    %v689 = vadd.f32 %v225, %v688
    %v690 = vpop.f32.mrf.mxu0
    %v691 = vadd.f32 %v229, %v690
    %692 = vmatprep.mubr.bf16.mxu0 0
    %693 = vmatmul.mubr.bf16.gmra.mxu0 %v297
    %v694 = vpop.f32.mrf.mxu0
    %v695 = vadd.f32 %v225, %v694
    %v696 = vpop.f32.mrf.mxu0
    %v697 = vadd.f32 %v229, %v696
    %v698 = vpop.f32.mrf.mxu0
    %v699 = vadd.f32 %v225, %v698
    %v700 = vpop.f32.mrf.mxu0
    %v701 = vadd.f32 %v229, %v700
    %702 = vmatprep.mubr.bf16.mxu0 0
    %703 = vmatmul.mubr.bf16.gmra.mxu0 %v298
    %v704 = vpop.f32.mrf.mxu0
    %v705 = vadd.f32 %v225, %v704
    %v706 = vpop.f32.mrf.mxu0
    %v707 = vadd.f32 %v229, %v706
    %v708 = vpop.f32.mrf.mxu0
    %v709 = vadd.f32 %v225, %v708
    %v710 = vpop.f32.mrf.mxu0
    %v711 = vadd.f32 %v229, %v710
    %712 = vmatprep.mubr.bf16.mxu0 0
    %713 = vmatmul.mubr.bf16.gmra.mxu0 %v299
    %v714 = vpop.f32.mrf.mxu0
    %v715 = vadd.f32 %v225, %v714
    %v716 = vpop.f32.mrf.mxu0
    %v717 = vadd.f32 %v229, %v716
    %v718 = vpop.f32.mrf.mxu0
    %v719 = vadd.f32 %v225, %v718
    %v720 = vpop.f32.mrf.mxu0
    %v721 = vadd.f32 %v229, %v720
    %722 = vmatprep.mubr.bf16.mxu0 0
    %723 = vmatmul.mubr.bf16.gmra.mxu0 %v300
    %v724 = vpop.f32.mrf.mxu0
    %v725 = vadd.f32 %v225, %v724
    %v726 = vpop.f32.mrf.mxu0
    %v727 = vadd.f32 %v229, %v726
    %v728 = vpop.f32.mrf.mxu0
    %v729 = vadd.f32 %v225, %v728
    %v730 = vpop.f32.mrf.mxu0
    %v731 = vadd.f32 %v229, %v730
    %732 = vmatprep.mubr.bf16.mxu0 0
    %733 = vmatmul.mubr.bf16.gmra.mxu0 %v301
    %v734 = vpop.f32.mrf.mxu0
    %v735 = vadd.f32 %v225, %v734
    %v736 = vpop.f32.mrf.mxu0
    %v737 = vadd.f32 %v229, %v736
    %v738 = vpop.f32.mrf.mxu0
    %v739 = vadd.f32 %v225, %v738
    %v740 = vpop.f32.mrf.mxu0
    %v741 = vadd.f32 %v229, %v740
    %742 = vdwg.mxu0
    %743 = vmatprep.subr.bf16.mxu0 %v561
    %744 = vmatpush1.bf16.msra.mxu0 %v560
    %745 = vmatprep.subr.bf16.mxu0 %v553
    %746 = vmatpush1.bf16.msra.mxu0 %v552
    %747 = vmatprep.subr.bf16.mxu0 %v545
    %748 = vmatpush1.bf16.msra.mxu0 %v544
    %749 = vmatprep.subr.bf16.mxu0 %v537
    %750 = vmatpush1.bf16.msra.mxu0 %v536
    %751 = vmatprep.subr.bf16.mxu0 %v529
    %752 = vmatpush1.bf16.msra.mxu0 %v528
    %753 = vmatprep.subr.bf16.mxu0 %v521
    %754 = vmatpush1.bf16.msra.mxu0 %v520
    %755 = vmatprep.subr.bf16.mxu0 %v513
    %756 = vmatpush1.bf16.msra.mxu0 %v512
    %757 = vmatprep.subr.bf16.mxu0 %v505
    %758 = vmatpush1.bf16.msra.mxu0 %v504
    %759 = vmatprep.subr.bf16.mxu0 0
    %760 = vmatpush2.bf16.msra.mxu0 0
    %761 = vmatprep.subr.bf16.mxu0 0
    %762 = vmatpush2.bf16.msra.mxu0 0
    %763 = vmatprep.subr.bf16.mxu0 0
    %764 = vmatpush2.bf16.msra.mxu0 0
    %765 = vmatprep.subr.bf16.mxu0 0
    %766 = vmatpush2.bf16.msra.mxu0 0
    %767 = vmatprep.subr.bf16.mxu0 0
    %768 = vmatpush2.bf16.msra.mxu0 0
    %769 = vmatprep.subr.bf16.mxu0 0
    %770 = vmatpush2.bf16.msra.mxu0 0
    %771 = vmatprep.subr.bf16.mxu0 0
    %772 = vmatpush2.bf16.msra.mxu0 0
    %773 = vmatprep.subr.bf16.mxu0 0
    %774 = vmatpush2.bf16.msra.mxu0 0
    %775 = vmatprep.mubr.bf16.mxu0 0
    %776 = vmatmul.mubr.bf16.gmra.mxu0 %v294
    %v777 = vpop.f32.mrf.mxu0
    %v778 = vadd.f32 %v233, %v777
    %v779 = vpop.f32.mrf.mxu0
    %v780 = vadd.f32 %v237, %v779
    %v781 = vpop.f32.mrf.mxu0
    %v782 = vadd.f32 %v233, %v781
    %v783 = vpop.f32.mrf.mxu0
    %v784 = vadd.f32 %v237, %v783
    %785 = vmatprep.mubr.bf16.mxu0 0
    %786 = vmatmul.mubr.bf16.gmra.mxu0 %v295
    %v787 = vpop.f32.mrf.mxu0
    %v788 = vadd.f32 %v233, %v787
    %v789 = vpop.f32.mrf.mxu0
    %v790 = vadd.f32 %v237, %v789
    %v791 = vpop.f32.mrf.mxu0
    %v792 = vadd.f32 %v233, %v791
    %v793 = vpop.f32.mrf.mxu0
    %v794 = vadd.f32 %v237, %v793
    %795 = vmatprep.mubr.bf16.mxu0 0
    %796 = vmatmul.mubr.bf16.gmra.mxu0 %v296
    %v797 = vpop.f32.mrf.mxu0
    %v798 = vadd.f32 %v233, %v797
    %v799 = vpop.f32.mrf.mxu0
    %v800 = vadd.f32 %v237, %v799
    %v801 = vpop.f32.mrf.mxu0
    %v802 = vadd.f32 %v233, %v801
    %v803 = vpop.f32.mrf.mxu0
    %v804 = vadd.f32 %v237, %v803
    %805 = vmatprep.mubr.bf16.mxu0 0
    %806 = vmatmul.mubr.bf16.gmra.mxu0 %v297
    %v807 = vpop.f32.mrf.mxu0
    %v808 = vadd.f32 %v233, %v807
    %v809 = vpop.f32.mrf.mxu0
    %v810 = vadd.f32 %v237, %v809
    %v811 = vpop.f32.mrf.mxu0
    %v812 = vadd.f32 %v233, %v811
    %v813 = vpop.f32.mrf.mxu0
    %v814 = vadd.f32 %v237, %v813
    %815 = vmatprep.mubr.bf16.mxu0 0
    %816 = vmatmul.mubr.bf16.gmra.mxu0 %v298
    %v817 = vpop.f32.mrf.mxu0
    %v818 = vadd.f32 %v233, %v817
    %v819 = vpop.f32.mrf.mxu0
    %v820 = vadd.f32 %v237, %v819
    %v821 = vpop.f32.mrf.mxu0
    %v822 = vadd.f32 %v233, %v821
    %v823 = vpop.f32.mrf.mxu0
    %v824 = vadd.f32 %v237, %v823
    %825 = vmatprep.mubr.bf16.mxu0 0
    %826 = vmatmul.mubr.bf16.gmra.mxu0 %v299
    %v827 = vpop.f32.mrf.mxu0
    %v828 = vadd.f32 %v233, %v827
    %v829 = vpop.f32.mrf.mxu0
    %v830 = vadd.f32 %v237, %v829
    %v831 = vpop.f32.mrf.mxu0
    %v832 = vadd.f32 %v233, %v831
    %v833 = vpop.f32.mrf.mxu0
    %v834 = vadd.f32 %v237, %v833
    %835 = vmatprep.mubr.bf16.mxu0 0
    %836 = vmatmul.mubr.bf16.gmra.mxu0 %v300
    %v837 = vpop.f32.mrf.mxu0
    %v838 = vadd.f32 %v233, %v837
    %v839 = vpop.f32.mrf.mxu0
    %v840 = vadd.f32 %v237, %v839
    %v841 = vpop.f32.mrf.mxu0
    %v842 = vadd.f32 %v233, %v841
    %v843 = vpop.f32.mrf.mxu0
    %v844 = vadd.f32 %v237, %v843
    %845 = vmatprep.mubr.bf16.mxu0 0
    %846 = vmatmul.mubr.bf16.gmra.mxu0 %v301
    %v847 = vpop.f32.mrf.mxu0
    %v848 = vadd.f32 %v233, %v847
    %v849 = vpop.f32.mrf.mxu0
    %v850 = vadd.f32 %v237, %v849
    %v851 = vpop.f32.mrf.mxu0
    %v852 = vadd.f32 %v233, %v851
    %v853 = vpop.f32.mrf.mxu0
    %v854 = vadd.f32 %v237, %v853
    %855 = vdwg.mxu0
    %856 = vmatprep.subr.bf16.mxu0 %v563
    %857 = vmatpush1.bf16.msra.mxu0 %v562
    %858 = vmatprep.subr.bf16.mxu0 %v555
    %859 = vmatpush1.bf16.msra.mxu0 %v554
    %860 = vmatprep.subr.bf16.mxu0 %v547
    %861 = vmatpush1.bf16.msra.mxu0 %v546
    %862 = vmatprep.subr.bf16.mxu0 %v539
    %863 = vmatpush1.bf16.msra.mxu0 %v538
    %864 = vmatprep.subr.bf16.mxu0 %v531
    %865 = vmatpush1.bf16.msra.mxu0 %v530
    %866 = vmatprep.subr.bf16.mxu0 %v523
    %867 = vmatpush1.bf16.msra.mxu0 %v522
    %868 = vmatprep.subr.bf16.mxu0 %v515
    %869 = vmatpush1.bf16.msra.mxu0 %v514
    %870 = vmatprep.subr.bf16.mxu0 %v507
    %871 = vmatpush1.bf16.msra.mxu0 %v506
    %872 = vmatprep.subr.bf16.mxu0 0
    %873 = vmatpush2.bf16.msra.mxu0 0
    %874 = vmatprep.subr.bf16.mxu0 0
    %875 = vmatpush2.bf16.msra.mxu0 0
    %876 = vmatprep.subr.bf16.mxu0 0
    %877 = vmatpush2.bf16.msra.mxu0 0
    %878 = vmatprep.subr.bf16.mxu0 0
    %879 = vmatpush2.bf16.msra.mxu0 0
    %880 = vmatprep.subr.bf16.mxu0 0
    %881 = vmatpush2.bf16.msra.mxu0 0
    %882 = vmatprep.subr.bf16.mxu0 0
    %883 = vmatpush2.bf16.msra.mxu0 0
    %884 = vmatprep.subr.bf16.mxu0 0
    %885 = vmatpush2.bf16.msra.mxu0 0
    %886 = vmatprep.subr.bf16.mxu0 0
    %887 = vmatpush2.bf16.msra.mxu0 0
    %888 = vmatprep.mubr.bf16.mxu0 0
    %889 = vmatmul.mubr.bf16.gmra.mxu0 %v294
    %v890 = vpop.f32.mrf.mxu0
    %v891 = vadd.f32 %v241, %v890
    %v892 = vpop.f32.mrf.mxu0
    %v893 = vadd.f32 %v245, %v892
    %v894 = vpop.f32.mrf.mxu0
    %v895 = vadd.f32 %v241, %v894
    %v896 = vpop.f32.mrf.mxu0
    %v897 = vadd.f32 %v245, %v896
    %898 = vmatprep.mubr.bf16.mxu0 0
    %899 = vmatmul.mubr.bf16.gmra.mxu0 %v295
    %v900 = vpop.f32.mrf.mxu0
    %v901 = vadd.f32 %v241, %v900
    %v902 = vpop.f32.mrf.mxu0
    %v903 = vadd.f32 %v245, %v902
    %v904 = vpop.f32.mrf.mxu0
    %v905 = vadd.f32 %v241, %v904
    %v906 = vpop.f32.mrf.mxu0
    %v907 = vadd.f32 %v245, %v906
    %908 = vmatprep.mubr.bf16.mxu0 0
    %909 = vmatmul.mubr.bf16.gmra.mxu0 %v296
    %v910 = vpop.f32.mrf.mxu0
    %v911 = vadd.f32 %v241, %v910
    %v912 = vpop.f32.mrf.mxu0
    %v913 = vadd.f32 %v245, %v912
    %v914 = vpop.f32.mrf.mxu0
    %v915 = vadd.f32 %v241, %v914
    %v916 = vpop.f32.mrf.mxu0
    %v917 = vadd.f32 %v245, %v916
    %918 = vmatprep.mubr.bf16.mxu0 0
    %919 = vmatmul.mubr.bf16.gmra.mxu0 %v297
    %v920 = vpop.f32.mrf.mxu0
    %v921 = vadd.f32 %v241, %v920
    %v922 = vpop.f32.mrf.mxu0
    %v923 = vadd.f32 %v245, %v922
    %v924 = vpop.f32.mrf.mxu0
    %v925 = vadd.f32 %v241, %v924
    %v926 = vpop.f32.mrf.mxu0
    %v927 = vadd.f32 %v245, %v926
    %928 = vmatprep.mubr.bf16.mxu0 0
    %929 = vmatmul.mubr.bf16.gmra.mxu0 %v298
    %v930 = vpop.f32.mrf.mxu0
    %v931 = vadd.f32 %v241, %v930
    %v932 = vpop.f32.mrf.mxu0
    %v933 = vadd.f32 %v245, %v932
    %v934 = vpop.f32.mrf.mxu0
    %v935 = vadd.f32 %v241, %v934
    %v936 = vpop.f32.mrf.mxu0
    %v937 = vadd.f32 %v245, %v936
    %938 = vmatprep.mubr.bf16.mxu0 0
    %939 = vmatmul.mubr.bf16.gmra.mxu0 %v299
    %v940 = vpop.f32.mrf.mxu0
    %v941 = vadd.f32 %v241, %v940
    %v942 = vpop.f32.mrf.mxu0
    %v943 = vadd.f32 %v245, %v942
    %v944 = vpop.f32.mrf.mxu0
    %v945 = vadd.f32 %v241, %v944
    %v946 = vpop.f32.mrf.mxu0
    %v947 = vadd.f32 %v245, %v946
    %948 = vmatprep.mubr.bf16.mxu0 0
    %949 = vmatmul.mubr.bf16.gmra.mxu0 %v300
    %v950 = vpop.f32.mrf.mxu0
    %v951 = vadd.f32 %v241, %v950
    %v952 = vpop.f32.mrf.mxu0
    %v953 = vadd.f32 %v245, %v952
    %v954 = vpop.f32.mrf.mxu0
    %v955 = vadd.f32 %v241, %v954
    %v956 = vpop.f32.mrf.mxu0
    %v957 = vadd.f32 %v245, %v956
    %958 = vmatprep.mubr.bf16.mxu0 0
    %959 = vmatmul.mubr.bf16.gmra.mxu0 %v301
    %v960 = vpop.f32.mrf.mxu0
    %v961 = vadd.f32 %v241, %v960
    %v962 = vpop.f32.mrf.mxu0
    %v963 = vadd.f32 %v245, %v962
    %v964 = vpop.f32.mrf.mxu0
    %v965 = vadd.f32 %v241, %v964
    %v966 = vpop.f32.mrf.mxu0
    %v967 = vadd.f32 %v245, %v966
    %968 = vdwg.mxu0
    %969 = vmatprep.subr.bf16.mxu0 %v565
    %970 = vmatpush1.bf16.msra.mxu0 %v564
    %971 = vmatprep.subr.bf16.mxu0 %v557
    %972 = vmatpush1.bf16.msra.mxu0 %v556
    %973 = vmatprep.subr.bf16.mxu0 %v549
    %974 = vmatpush1.bf16.msra.mxu0 %v548
    %975 = vmatprep.subr.bf16.mxu0 %v541
    %976 = vmatpush1.bf16.msra.mxu0 %v540
    %977 = vmatprep.subr.bf16.mxu0 %v533
    %978 = vmatpush1.bf16.msra.mxu0 %v532
    %979 = vmatprep.subr.bf16.mxu0 %v525
    %980 = vmatpush1.bf16.msra.mxu0 %v524
    %981 = vmatprep.subr.bf16.mxu0 %v517
    %982 = vmatpush1.bf16.msra.mxu0 %v516
    %983 = vmatprep.subr.bf16.mxu0 %v509
    %984 = vmatpush1.bf16.msra.mxu0 %v508
    %985 = vmatprep.subr.bf16.mxu0 0
    %986 = vmatpush2.bf16.msra.mxu0 0
    %987 = vmatprep.subr.bf16.mxu0 0
    %988 = vmatpush2.bf16.msra.mxu0 0
    %989 = vmatprep.subr.bf16.mxu0 0
    %990 = vmatpush2.bf16.msra.mxu0 0
    %991 = vmatprep.subr.bf16.mxu0 0
    %992 = vmatpush2.bf16.msra.mxu0 0
    %993 = vmatprep.subr.bf16.mxu0 0
    %994 = vmatpush2.bf16.msra.mxu0 0
    %995 = vmatprep.subr.bf16.mxu0 0
    %996 = vmatpush2.bf16.msra.mxu0 0
    %997 = vmatprep.subr.bf16.mxu0 0
    %998 = vmatpush2.bf16.msra.mxu0 0
    %999 = vmatprep.subr.bf16.mxu0 0
    %1000 = vmatpush2.bf16.msra.mxu0 0
    %1001 = vmatprep.mubr.bf16.mxu0 0
    %1002 = vmatmul.mubr.bf16.gmra.mxu0 %v294
    %v1003 = vpop.f32.mrf.mxu0
    %v1004 = vadd.f32 %v249, %v1003
    %v1005 = vpop.f32.mrf.mxu0
    %v1006 = vadd.f32 %v253, %v1005
    %v1007 = vpop.f32.mrf.mxu0
    %v1008 = vadd.f32 %v249, %v1007
    %v1009 = vpop.f32.mrf.mxu0
    %v1010 = vadd.f32 %v253, %v1009
    %1011 = vmatprep.mubr.bf16.mxu0 0
    %1012 = vmatmul.mubr.bf16.gmra.mxu0 %v295
    %v1013 = vpop.f32.mrf.mxu0
    %v1014 = vadd.f32 %v249, %v1013
    %v1015 = vpop.f32.mrf.mxu0
    %v1016 = vadd.f32 %v253, %v1015
    %v1017 = vpop.f32.mrf.mxu0
    %v1018 = vadd.f32 %v249, %v1017
    %v1019 = vpop.f32.mrf.mxu0
    %v1020 = vadd.f32 %v253, %v1019
    %1021 = vmatprep.mubr.bf16.mxu0 0
    %1022 = vmatmul.mubr.bf16.gmra.mxu0 %v296
    %v1023 = vpop.f32.mrf.mxu0
    %v1024 = vadd.f32 %v249, %v1023
    %v1025 = vpop.f32.mrf.mxu0
    %v1026 = vadd.f32 %v253, %v1025
    %v1027 = vpop.f32.mrf.mxu0
    %v1028 = vadd.f32 %v249, %v1027
    %v1029 = vpop.f32.mrf.mxu0
    %v1030 = vadd.f32 %v253, %v1029
    %1031 = vmatprep.mubr.bf16.mxu0 0
    %1032 = vmatmul.mubr.bf16.gmra.mxu0 %v297
    %v1033 = vpop.f32.mrf.mxu0
    %v1034 = vadd.f32 %v249, %v1033
    %v1035 = vpop.f32.mrf.mxu0
    %v1036 = vadd.f32 %v253, %v1035
    %v1037 = vpop.f32.mrf.mxu0
    %v1038 = vadd.f32 %v249, %v1037
    %v1039 = vpop.f32.mrf.mxu0
    %v1040 = vadd.f32 %v253, %v1039
    %1041 = vmatprep.mubr.bf16.mxu0 0
    %1042 = vmatmul.mubr.bf16.gmra.mxu0 %v298
    %v1043 = vpop.f32.mrf.mxu0
    %v1044 = vadd.f32 %v249, %v1043
    %v1045 = vpop.f32.mrf.mxu0
    %v1046 = vadd.f32 %v253, %v1045
    %v1047 = vpop.f32.mrf.mxu0
    %v1048 = vadd.f32 %v249, %v1047
    %v1049 = vpop.f32.mrf.mxu0
    %v1050 = vadd.f32 %v253, %v1049
    %1051 = vmatprep.mubr.bf16.mxu0 0
    %1052 = vmatmul.mubr.bf16.gmra.mxu0 %v299
    %v1053 = vpop.f32.mrf.mxu0
    %v1054 = vadd.f32 %v249, %v1053
    %v1055 = vpop.f32.mrf.mxu0
    %v1056 = vadd.f32 %v253, %v1055
    %v1057 = vpop.f32.mrf.mxu0
    %v1058 = vadd.f32 %v249, %v1057
    %v1059 = vpop.f32.mrf.mxu0
    %v1060 = vadd.f32 %v253, %v1059
    %1061 = vmatprep.mubr.bf16.mxu0 0
    %1062 = vmatmul.mubr.bf16.gmra.mxu0 %v300
    %v1063 = vpop.f32.mrf.mxu0
    %v1064 = vadd.f32 %v249, %v1063
    %v1065 = vpop.f32.mrf.mxu0
    %v1066 = vadd.f32 %v253, %v1065
    %v1067 = vpop.f32.mrf.mxu0
    %v1068 = vadd.f32 %v249, %v1067
    %v1069 = vpop.f32.mrf.mxu0
    %v1070 = vadd.f32 %v253, %v1069
    %1071 = vmatprep.mubr.bf16.mxu0 0
    %1072 = vmatmul.mubr.bf16.gmra.mxu0 %v301
    %v1073 = vpop.f32.mrf.mxu0
    %v1074 = vadd.f32 %v249, %v1073
    %v1075 = vpop.f32.mrf.mxu0
    %v1076 = vadd.f32 %v253, %v1075
    %v1077 = vpop.f32.mrf.mxu0
    %v1078 = vadd.f32 %v249, %v1077
    %v1079 = vpop.f32.mrf.mxu0
    %v1080 = vadd.f32 %v253, %v1079
    %1081 = vdwg.mxu0
    %1082 = vst [vmem:[#allocation2] sm:$0xff] %v665
    %1083 = vst [vmem:[#allocation2 + $0x8] sm:$0xff] %v667
    %1084 = vst [vmem:[#allocation2 + $0x10] sm:$0xff] %v778
    %1085 = vst [vmem:[#allocation2 + $0x18] sm:$0xff] %v780
    %1086 = vst [vmem:[#allocation2 + $0x20] sm:$0xff] %v891
    %1087 = vst [vmem:[#allocation2 + $0x28] sm:$0xff] %v893
    %1088 = vst [vmem:[#allocation2 + $0x30] sm:$0xff] %v1004
    %1089 = vst [vmem:[#allocation2 + $0x38] sm:$0xff] %v1006
    %1090 = vst [vmem:[#allocation2 + $0x40] sm:$0xff] %v669
    %1091 = vst [vmem:[#allocation2 + $0x48] sm:$0xff] %v671
    %1092 = vst [vmem:[#allocation2 + $0x50] sm:$0xff] %v782
    %1093 = vst [vmem:[#allocation2 + $0x58] sm:$0xff] %v784
    %1094 = vst [vmem:[#allocation2 + $0x60] sm:$0xff] %v895
    %1095 = vst [vmem:[#allocation2 + $0x68] sm:$0xff] %v897
    %1096 = vst [vmem:[#allocation2 + $0x70] sm:$0xff] %v1008
    %1097 = vst [vmem:[#allocation2 + $0x78] sm:$0xff] %v1010
    %1098 = vst [vmem:[#allocation2 + $0x80] sm:$0xff] %v675
    %1099 = vst [vmem:[#allocation2 + $0x88] sm:$0xff] %v677
    %1100 = vst [vmem:[#allocation2 + $0x90] sm:$0xff] %v788
    %1101 = vst [vmem:[#allocation2 + $0x98] sm:$0xff] %v790
    %1102 = vst [vmem:[#allocation2 + $0xa0] sm:$0xff] %v901
    %1103 = vst [vmem:[#allocation2 + $0xa8] sm:$0xff] %v903
    %1104 = vst [vmem:[#allocation2 + $0xb0] sm:$0xff] %v1014
    %1105 = vst [vmem:[#allocation2 + $0xb8] sm:$0xff] %v1016
    %1106 = vst [vmem:[#allocation2 + $0xc0] sm:$0xff] %v679
    %1107 = vst [vmem:[#allocation2 + $0xc8] sm:$0xff] %v681
    %1108 = vst [vmem:[#allocation2 + $0xd0] sm:$0xff] %v792
    %1109 = vst [vmem:[#allocation2 + $0xd8] sm:$0xff] %v794
    %1110 = vst [vmem:[#allocation2 + $0xe0] sm:$0xff] %v905
    %1111 = vst [vmem:[#allocation2 + $0xe8] sm:$0xff] %v907
    %1112 = vst [vmem:[#allocation2 + $0xf0] sm:$0xff] %v1018
    %1113 = vst [vmem:[#allocation2 + $0xf8] sm:$0xff] %v1020
    %1114 = vst [vmem:[#allocation2 + $0x100] sm:$0xff] %v685
    %1115 = vst [vmem:[#allocation2 + $0x108] sm:$0xff] %v687
    %1116 = vst [vmem:[#allocation2 + $0x110] sm:$0xff] %v798
    %1117 = vst [vmem:[#allocation2 + $0x118] sm:$0xff] %v800
    %1118 = vst [vmem:[#allocation2 + $0x120] sm:$0xff] %v911
    %1119 = vst [vmem:[#allocation2 + $0x128] sm:$0xff] %v913
    %1120 = vst [vmem:[#allocation2 + $0x130] sm:$0xff] %v1024
    %1121 = vst [vmem:[#allocation2 + $0x138] sm:$0xff] %v1026
    %1122 = vst [vmem:[#allocation2 + $0x140] sm:$0xff] %v689
    %1123 = vst [vmem:[#allocation2 + $0x148] sm:$0xff] %v691
    %1124 = vst [vmem:[#allocation2 + $0x150] sm:$0xff] %v802
    %1125 = vst [vmem:[#allocation2 + $0x158] sm:$0xff] %v804
    %1126 = vst [vmem:[#allocation2 + $0x160] sm:$0xff] %v915
    %1127 = vst [vmem:[#allocation2 + $0x168] sm:$0xff] %v917
    %1128 = vst [vmem:[#allocation2 + $0x170] sm:$0xff] %v1028
    %1129 = vst [vmem:[#allocation2 + $0x178] sm:$0xff] %v1030
    %1130 = vst [vmem:[#allocation2 + $0x180] sm:$0xff] %v695
    %1131 = vst [vmem:[#allocation2 + $0x188] sm:$0xff] %v697
    %1132 = vst [vmem:[#allocation2 + $0x190] sm:$0xff] %v808
    %1133 = vst [vmem:[#allocation2 + $0x198] sm:$0xff] %v810
    %1134 = vst [vmem:[#allocation2 + $0x1a0] sm:$0xff] %v921
    %1135 = vst [vmem:[#allocation2 + $0x1a8] sm:$0xff] %v923
    %1136 = vst [vmem:[#allocation2 + $0x1b0] sm:$0xff] %v1034
    %1137 = vst [vmem:[#allocation2 + $0x1b8] sm:$0xff] %v1036
    %1138 = vst [vmem:[#allocation2 + $0x1c0] sm:$0xff] %v699
    %1139 = vst [vmem:[#allocation2 + $0x1c8] sm:$0xff] %v701
    %1140 = vst [vmem:[#allocation2 + $0x1d0] sm:$0xff] %v812
    %1141 = vst [vmem:[#allocation2 + $0x1d8] sm:$0xff] %v814
    %1142 = vst [vmem:[#allocation2 + $0x1e0] sm:$0xff] %v925
    %1143 = vst [vmem:[#allocation2 + $0x1e8] sm:$0xff] %v927
    %1144 = vst [vmem:[#allocation2 + $0x1f0] sm:$0xff] %v1038
    %1145 = vst [vmem:[#allocation2 + $0x1f8] sm:$0xff] %v1040
    %1146 = vst [vmem:[#allocation2 + $0x200] sm:$0xff] %v705
    %1147 = vst [vmem:[#allocation2 + $0x208] sm:$0xff] %v707
    %1148 = vst [vmem:[#allocation2 + $0x210] sm:$0xff] %v818
    %1149 = vst [vmem:[#allocation2 + $0x218] sm:$0xff] %v820
    %1150 = vst [vmem:[#allocation2 + $0x220] sm:$0xff] %v931
    %1151 = vst [vmem:[#allocation2 + $0x228] sm:$0xff] %v933
    %1152 = vst [vmem:[#allocation2 + $0x230] sm:$0xff] %v1044
    %1153 = vst [vmem:[#allocation2 + $0x238] sm:$0xff] %v1046
    %1154 = vst [vmem:[#allocation2 + $0x240] sm:$0xff] %v709
    %1155 = vst [vmem:[#allocation2 + $0x248] sm:$0xff] %v711
    %1156 = vst [vmem:[#allocation2 + $0x250] sm:$0xff] %v822
    %1157 = vst [vmem:[#allocation2 + $0x258] sm:$0xff] %v824
    %1158 = vst [vmem:[#allocation2 + $0x260] sm:$0xff] %v935
    %1159 = vst [vmem:[#allocation2 + $0x268] sm:$0xff] %v937
    %1160 = vst [vmem:[#allocation2 + $0x270] sm:$0xff] %v1048
    %1161 = vst [vmem:[#allocation2 + $0x278] sm:$0xff] %v1050
    %1162 = vst [vmem:[#allocation2 + $0x280] sm:$0xff] %v715
    %1163 = vst [vmem:[#allocation2 + $0x288] sm:$0xff] %v717
    %1164 = vst [vmem:[#allocation2 + $0x290] sm:$0xff] %v828
    %1165 = vst [vmem:[#allocation2 + $0x298] sm:$0xff] %v830
    %1166 = vst [vmem:[#allocation2 + $0x2a0] sm:$0xff] %v941
    %1167 = vst [vmem:[#allocation2 + $0x2a8] sm:$0xff] %v943
    %1168 = vst [vmem:[#allocation2 + $0x2b0] sm:$0xff] %v1054
    %1169 = vst [vmem:[#allocation2 + $0x2b8] sm:$0xff] %v1056
    %1170 = vst [vmem:[#allocation2 + $0x2c0] sm:$0xff] %v719
    %1171 = vst [vmem:[#allocation2 + $0x2c8] sm:$0xff] %v721
    %1172 = vst [vmem:[#allocation2 + $0x2d0] sm:$0xff] %v832
    %1173 = vst [vmem:[#allocation2 + $0x2d8] sm:$0xff] %v834
    %1174 = vst [vmem:[#allocation2 + $0x2e0] sm:$0xff] %v945
    %1175 = vst [vmem:[#allocation2 + $0x2e8] sm:$0xff] %v947
    %1176 = vst [vmem:[#allocation2 + $0x2f0] sm:$0xff] %v1058
    %1177 = vst [vmem:[#allocation2 + $0x2f8] sm:$0xff] %v1060
    %1178 = vst [vmem:[#allocation2 + $0x300] sm:$0xff] %v725
    %1179 = vst [vmem:[#allocation2 + $0x308] sm:$0xff] %v727
    %1180 = vst [vmem:[#allocation2 + $0x310] sm:$0xff] %v838
    %1181 = vst [vmem:[#allocation2 + $0x318] sm:$0xff] %v840
    %1182 = vst [vmem:[#allocation2 + $0x320] sm:$0xff] %v951
    %1183 = vst [vmem:[#allocation2 + $0x328] sm:$0xff] %v953
    %1184 = vst [vmem:[#allocation2 + $0x330] sm:$0xff] %v1064
    %1185 = vst [vmem:[#allocation2 + $0x338] sm:$0xff] %v1066
    %1186 = vst [vmem:[#allocation2 + $0x340] sm:$0xff] %v729
    %1187 = vst [vmem:[#allocation2 + $0x348] sm:$0xff] %v731
    %1188 = vst [vmem:[#allocation2 + $0x350] sm:$0xff] %v842
    %1189 = vst [vmem:[#allocation2 + $0x358] sm:$0xff] %v844
    %1190 = vst [vmem:[#allocation2 + $0x360] sm:$0xff] %v955
    %1191 = vst [vmem:[#allocation2 + $0x368] sm:$0xff] %v957
    %1192 = vst [vmem:[#allocation2 + $0x370] sm:$0xff] %v1068
    %1193 = vst [vmem:[#allocation2 + $0x378] sm:$0xff] %v1070
    %1194 = vst [vmem:[#allocation2 + $0x380] sm:$0xff] %v735
    %1195 = vst [vmem:[#allocation2 + $0x388] sm:$0xff] %v737
    %1196 = vst [vmem:[#allocation2 + $0x390] sm:$0xff] %v848
    %1197 = vst [vmem:[#allocation2 + $0x398] sm:$0xff] %v850
    %1198 = vst [vmem:[#allocation2 + $0x3a0] sm:$0xff] %v961
    %1199 = vst [vmem:[#allocation2 + $0x3a8] sm:$0xff] %v963
    %1200 = vst [vmem:[#allocation2 + $0x3b0] sm:$0xff] %v1074
    %1201 = vst [vmem:[#allocation2 + $0x3b8] sm:$0xff] %v1076
    %1202 = vst [vmem:[#allocation2 + $0x3c0] sm:$0xff] %v739
    %1203 = vst [vmem:[#allocation2 + $0x3c8] sm:$0xff] %v741
    %1204 = vst [vmem:[#allocation2 + $0x3d0] sm:$0xff] %v852
    %1205 = vst [vmem:[#allocation2 + $0x3d8] sm:$0xff] %v854
    %1206 = vst [vmem:[#allocation2 + $0x3e0] sm:$0xff] %v965
    %1207 = vst [vmem:[#allocation2 + $0x3e8] sm:$0xff] %v967
    %1208 = vst [vmem:[#allocation2 + $0x3f0] sm:$0xff] %v1078
    %1209 = vst [vmem:[#allocation2 + $0x3f8] sm:$0xff] %v1080
    %v1210 = vld [vmem:[#allocation12] sm:$0xff]
    %v1211 = vld [vmem:[#allocation12 + $0x8] sm:$0xff]
    %v1212 = vld [vmem:[#allocation12 + $0x10] sm:$0xff]
    %v1213 = vld [vmem:[#allocation12 + $0x18] sm:$0xff]
    %v1214 = vld [vmem:[#allocation12 + $0x20] sm:$0xff]
    %v1215 = vld [vmem:[#allocation12 + $0x28] sm:$0xff]
    %v1216 = vld [vmem:[#allocation12 + $0x30] sm:$0xff]
    %v1217 = vld [vmem:[#allocation12 + $0x38] sm:$0xff]
    %v1218 = vld [vmem:[#allocation12 + $0x40] sm:$0xff]
    %v1219 = vld [vmem:[#allocation12 + $0x48] sm:$0xff]
    %v1220 = vld [vmem:[#allocation12 + $0x50] sm:$0xff]
    %v1221 = vld [vmem:[#allocation12 + $0x58] sm:$0xff]
    %v1222 = vld [vmem:[#allocation12 + $0x60] sm:$0xff]
    %v1223 = vld [vmem:[#allocation12 + $0x68] sm:$0xff]
    %v1224 = vld [vmem:[#allocation12 + $0x70] sm:$0xff]
    %v1225 = vld [vmem:[#allocation12 + $0x78] sm:$0xff]
    %v1226 = vld [vmem:[#allocation12 + $0x80] sm:$0xff]
    %v1227 = vld [vmem:[#allocation12 + $0x88] sm:$0xff]
    %v1228 = vld [vmem:[#allocation12 + $0x90] sm:$0xff]
    %v1229 = vld [vmem:[#allocation12 + $0x98] sm:$0xff]
    %v1230 = vld [vmem:[#allocation12 + $0xa0] sm:$0xff]
    %v1231 = vld [vmem:[#allocation12 + $0xa8] sm:$0xff]
    %v1232 = vld [vmem:[#allocation12 + $0xb0] sm:$0xff]
    %v1233 = vld [vmem:[#allocation12 + $0xb8] sm:$0xff]
    %v1234 = vld [vmem:[#allocation12 + $0xc0] sm:$0xff]
    %v1235 = vld [vmem:[#allocation12 + $0xc8] sm:$0xff]
    %v1236 = vld [vmem:[#allocation12 + $0xd0] sm:$0xff]
    %v1237 = vld [vmem:[#allocation12 + $0xd8] sm:$0xff]
    %v1238 = vld [vmem:[#allocation12 + $0xe0] sm:$0xff]
    %v1239 = vld [vmem:[#allocation12 + $0xe8] sm:$0xff]
    %v1240 = vld [vmem:[#allocation12 + $0xf0] sm:$0xff]
    %v1241 = vld [vmem:[#allocation12 + $0xf8] sm:$0xff]
    %v1242 = vld [vmem:[#allocation12 + $0x100] sm:$0xff]
    %v1243 = vld [vmem:[#allocation12 + $0x108] sm:$0xff]
    %v1244 = vld [vmem:[#allocation12 + $0x110] sm:$0xff]
    %v1245 = vld [vmem:[#allocation12 + $0x118] sm:$0xff]
    %v1246 = vld [vmem:[#allocation12 + $0x120] sm:$0xff]
    %v1247 = vld [vmem:[#allocation12 + $0x128] sm:$0xff]
    %v1248 = vld [vmem:[#allocation12 + $0x130] sm:$0xff]
    %v1249 = vld [vmem:[#allocation12 + $0x138] sm:$0xff]
    %v1250 = vld [vmem:[#allocation12 + $0x140] sm:$0xff]
    %v1251 = vld [vmem:[#allocation12 + $0x148] sm:$0xff]
    %v1252 = vld [vmem:[#allocation12 + $0x150] sm:$0xff]
    %v1253 = vld [vmem:[#allocation12 + $0x158] sm:$0xff]
    %v1254 = vld [vmem:[#allocation12 + $0x160] sm:$0xff]
    %v1255 = vld [vmem:[#allocation12 + $0x168] sm:$0xff]
    %v1256 = vld [vmem:[#allocation12 + $0x170] sm:$0xff]
    %v1257 = vld [vmem:[#allocation12 + $0x178] sm:$0xff]
    %v1258 = vld [vmem:[#allocation12 + $0x180] sm:$0xff]
    %v1259 = vld [vmem:[#allocation12 + $0x188] sm:$0xff]
    %v1260 = vld [vmem:[#allocation12 + $0x190] sm:$0xff]
    %v1261 = vld [vmem:[#allocation12 + $0x198] sm:$0xff]
    %v1262 = vld [vmem:[#allocation12 + $0x1a0] sm:$0xff]
    %v1263 = vld [vmem:[#allocation12 + $0x1a8] sm:$0xff]
    %v1264 = vld [vmem:[#allocation12 + $0x1b0] sm:$0xff]
    %v1265 = vld [vmem:[#allocation12 + $0x1b8] sm:$0xff]
    %v1266 = vld [vmem:[#allocation12 + $0x1c0] sm:$0xff]
    %v1267 = vld [vmem:[#allocation12 + $0x1c8] sm:$0xff]
    %v1268 = vld [vmem:[#allocation12 + $0x1d0] sm:$0xff]
    %v1269 = vld [vmem:[#allocation12 + $0x1d8] sm:$0xff]
    %v1270 = vld [vmem:[#allocation12 + $0x1e0] sm:$0xff]
    %v1271 = vld [vmem:[#allocation12 + $0x1e8] sm:$0xff]
    %v1272 = vld [vmem:[#allocation12 + $0x1f0] sm:$0xff]
    %v1273 = vld [vmem:[#allocation12 + $0x1f8] sm:$0xff]
    %v1274 = vld [vmem:[#allocation12 + $0x200] sm:$0xff]
    %v1275 = vld [vmem:[#allocation12 + $0x208] sm:$0xff]
    %v1276 = vld [vmem:[#allocation12 + $0x210] sm:$0xff]
    %v1277 = vld [vmem:[#allocation12 + $0x218] sm:$0xff]
    %v1278 = vld [vmem:[#allocation12 + $0x220] sm:$0xff]
    %v1279 = vld [vmem:[#allocation12 + $0x228] sm:$0xff]
    %v1280 = vld [vmem:[#allocation12 + $0x230] sm:$0xff]
    %v1281 = vld [vmem:[#allocation12 + $0x238] sm:$0xff]
    %v1282 = vld [vmem:[#allocation12 + $0x240] sm:$0xff]
    %v1283 = vld [vmem:[#allocation12 + $0x248] sm:$0xff]
    %v1284 = vld [vmem:[#allocation12 + $0x250] sm:$0xff]
    %v1285 = vld [vmem:[#allocation12 + $0x258] sm:$0xff]
    %v1286 = vld [vmem:[#allocation12 + $0x260] sm:$0xff]
    %v1287 = vld [vmem:[#allocation12 + $0x268] sm:$0xff]
    %v1288 = vld [vmem:[#allocation12 + $0x270] sm:$0xff]
    %v1289 = vld [vmem:[#allocation12 + $0x278] sm:$0xff]
    %v1290 = vld [vmem:[#allocation12 + $0x280] sm:$0xff]
    %v1291 = vld [vmem:[#allocation12 + $0x288] sm:$0xff]
    %v1292 = vld [vmem:[#allocation12 + $0x290] sm:$0xff]
    %v1293 = vld [vmem:[#allocation12 + $0x298] sm:$0xff]
    %v1294 = vld [vmem:[#allocation12 + $0x2a0] sm:$0xff]
    %v1295 = vld [vmem:[#allocation12 + $0x2a8] sm:$0xff]
    %v1296 = vld [vmem:[#allocation12 + $0x2b0] sm:$0xff]
    %v1297 = vld [vmem:[#allocation12 + $0x2b8] sm:$0xff]
    %v1298 = vld [vmem:[#allocation12 + $0x2c0] sm:$0xff]
    %v1299 = vld [vmem:[#allocation12 + $0x2c8] sm:$0xff]
    %v1300 = vld [vmem:[#allocation12 + $0x2d0] sm:$0xff]
    %v1301 = vld [vmem:[#allocation12 + $0x2d8] sm:$0xff]
    %v1302 = vld [vmem:[#allocation12 + $0x2e0] sm:$0xff]
    %v1303 = vld [vmem:[#allocation12 + $0x2e8] sm:$0xff]
    %v1304 = vld [vmem:[#allocation12 + $0x2f0] sm:$0xff]
    %v1305 = vld [vmem:[#allocation12 + $0x2f8] sm:$0xff]
    %v1306 = vld [vmem:[#allocation12 + $0x300] sm:$0xff]
    %v1307 = vld [vmem:[#allocation12 + $0x308] sm:$0xff]
    %v1308 = vld [vmem:[#allocation12 + $0x310] sm:$0xff]
    %v1309 = vld [vmem:[#allocation12 + $0x318] sm:$0xff]
    %v1310 = vld [vmem:[#allocation12 + $0x320] sm:$0xff]
    %v1311 = vld [vmem:[#allocation12 + $0x328] sm:$0xff]
    %v1312 = vld [vmem:[#allocation12 + $0x330] sm:$0xff]
    %v1313 = vld [vmem:[#allocation12 + $0x338] sm:$0xff]
    %v1314 = vld [vmem:[#allocation12 + $0x340] sm:$0xff]
    %v1315 = vld [vmem:[#allocation12 + $0x348] sm:$0xff]
    %v1316 = vld [vmem:[#allocation12 + $0x350] sm:$0xff]
    %v1317 = vld [vmem:[#allocation12 + $0x358] sm:$0xff]
    %v1318 = vld [vmem:[#allocation12 + $0x360] sm:$0xff]
    %v1319 = vld [vmem:[#allocation12 + $0x368] sm:$0xff]
    %v1320 = vld [vmem:[#allocation12 + $0x370] sm:$0xff]
    %v1321 = vld [vmem:[#allocation12 + $0x378] sm:$0xff]
    %v1322 = vld [vmem:[#allocation12 + $0x380] sm:$0xff]
    %v1323 = vld [vmem:[#allocation12 + $0x388] sm:$0xff]
    %v1324 = vld [vmem:[#allocation12 + $0x390] sm:$0xff]
    %v1325 = vld [vmem:[#allocation12 + $0x398] sm:$0xff]
    %v1326 = vld [vmem:[#allocation12 + $0x3a0] sm:$0xff]
    %v1327 = vld [vmem:[#allocation12 + $0x3a8] sm:$0xff]
    %v1328 = vld [vmem:[#allocation12 + $0x3b0] sm:$0xff]
    %v1329 = vld [vmem:[#allocation12 + $0x3b8] sm:$0xff]
    %v1330 = vld [vmem:[#allocation12 + $0x3c0] sm:$0xff]
    %v1331 = vld [vmem:[#allocation12 + $0x3c8] sm:$0xff]
    %v1332 = vld [vmem:[#allocation12 + $0x3d0] sm:$0xff]
    %v1333 = vld [vmem:[#allocation12 + $0x3d8] sm:$0xff]
    %v1334 = vld [vmem:[#allocation12 + $0x3e0] sm:$0xff]
    %v1335 = vld [vmem:[#allocation12 + $0x3e8] sm:$0xff]
    %v1336 = vld [vmem:[#allocation12 + $0x3f0] sm:$0xff]
    %v1337 = vld [vmem:[#allocation12 + $0x3f8] sm:$0xff]
    %v1338 = vld [vmem:[%s5] sm:$0xff]
    %v1340 = vlaneseq
    %v1341 = vshrl.u32 %v1340, 7
    %v1342 = vsub.s32 0, %v1341
    %v1343 = vrot.slane %v1338, %v1342
    %v1344 = vlaneseq
    %v1345 = vshrl.u32 %v1344, 7
    %v1346 = vsub.s32 1, %v1345
    %v1347 = vrot.slane %v1338, %v1346
    %v1348 = vlaneseq
    %v1349 = vshrl.u32 %v1348, 7
    %v1350 = vsub.s32 2, %v1349
    %v1351 = vrot.slane %v1338, %v1350
    %v1352 = vlaneseq
    %v1353 = vshrl.u32 %v1352, 7
    %v1354 = vsub.s32 3, %v1353
    %v1355 = vrot.slane %v1338, %v1354
    %v1356 = vlaneseq
    %v1357 = vshrl.u32 %v1356, 7
    %v1358 = vsub.s32 4, %v1357
    %v1359 = vrot.slane %v1338, %v1358
    %v1360 = vlaneseq
    %v1361 = vshrl.u32 %v1360, 7
    %v1362 = vsub.s32 5, %v1361
    %v1363 = vrot.slane %v1338, %v1362
    %v1364 = vlaneseq
    %v1365 = vshrl.u32 %v1364, 7
    %v1366 = vsub.s32 6, %v1365
    %v1367 = vrot.slane %v1338, %v1366
    %v1368 = vlaneseq
    %v1369 = vshrl.u32 %v1368, 7
    %v1370 = vsub.s32 7, %v1369
    %v1371 = vrot.slane %v1338, %v1370
    %v1380 = vld [vmem:[#allocation15] sm:$0xff]
    %v1381 = vld [vmem:[#allocation15 + $0x8] sm:$0xff]
    %v1382 = vld [vmem:[#allocation15 + $0x10] sm:$0xff]
    %v1383 = vld [vmem:[#allocation15 + $0x18] sm:$0xff]
    %v1384 = vld [vmem:[#allocation16] sm:$0xff]
    %v1385 = vld [vmem:[#allocation16 + $0x8] sm:$0xff]
    %v1386 = vld [vmem:[#allocation16 + $0x10] sm:$0xff]
    %v1387 = vld [vmem:[#allocation16 + $0x18] sm:$0xff]
    %s1388 = scalar_lea.vmem [#allocation15], 32
    %v1389 = vld [vmem:[%s1388] sm:$0xff]
    %v1390 = vld [vmem:[%s1388 + $0x8] sm:$0xff]
    %v1391 = vld [vmem:[%s1388 + $0x10] sm:$0xff]
    %v1392 = vld [vmem:[%s1388 + $0x18] sm:$0xff]
    %s1393 = scalar_lea.vmem [#allocation16], 32
    %v1394 = vld [vmem:[%s1393] sm:$0xff]
    %v1395 = vld [vmem:[%s1393 + $0x8] sm:$0xff]
    %v1396 = vld [vmem:[%s1393 + $0x10] sm:$0xff]
    %v1397 = vld [vmem:[%s1393 + $0x18] sm:$0xff]
    %v1398 = vld [vmem:[#allocation2] sm:$0xff]
    %v1399 = vld [vmem:[#allocation2 + $0x8] sm:$0xff]
    %v1400 = vld [vmem:[#allocation2 + $0x10] sm:$0xff]
    %v1401 = vld [vmem:[#allocation2 + $0x18] sm:$0xff]
    %v1402 = vld [vmem:[#allocation2 + $0x20] sm:$0xff]
    %v1403 = vld [vmem:[#allocation2 + $0x28] sm:$0xff]
    %v1404 = vld [vmem:[#allocation2 + $0x30] sm:$0xff]
    %v1405 = vld [vmem:[#allocation2 + $0x38] sm:$0xff]
    %v1406 = vld [vmem:[#allocation2 + $0x40] sm:$0xff]
    %v1407 = vld [vmem:[#allocation2 + $0x48] sm:$0xff]
    %v1408 = vld [vmem:[#allocation2 + $0x50] sm:$0xff]
    %v1409 = vld [vmem:[#allocation2 + $0x58] sm:$0xff]
    %v1410 = vld [vmem:[#allocation2 + $0x60] sm:$0xff]
    %v1411 = vld [vmem:[#allocation2 + $0x68] sm:$0xff]
    %v1412 = vld [vmem:[#allocation2 + $0x70] sm:$0xff]
    %v1413 = vld [vmem:[#allocation2 + $0x78] sm:$0xff]
    %v1414 = vpack.c.bf16 %v1382, %v1380
    %v1415 = vpack.c.bf16 %v1383, %v1381
    %v1544 = vunpack.c.l.b16 %v1210
    %v1545 = vunpack.c.h.b16 %v1210
    %v1546 = vunpack.c.l.b16 %v1211
    %v1547 = vunpack.c.h.b16 %v1211
    %v1548 = vunpack.c.l.b16 %v1212
    %v1549 = vunpack.c.h.b16 %v1212
    %v1550 = vunpack.c.l.b16 %v1213
    %v1551 = vunpack.c.h.b16 %v1213
    %v1552 = vunpack.c.l.b16 %v1214
    %v1553 = vunpack.c.h.b16 %v1214
    %v1554 = vunpack.c.l.b16 %v1215
    %v1555 = vunpack.c.h.b16 %v1215
    %v1556 = vunpack.c.l.b16 %v1216
    %v1557 = vunpack.c.h.b16 %v1216
    %v1558 = vunpack.c.l.b16 %v1217
    %v1559 = vunpack.c.h.b16 %v1217
    %v1560 = vunpack.c.l.b16 %v1218
    %v1561 = vunpack.c.h.b16 %v1218
    %v1562 = vunpack.c.l.b16 %v1219
    %v1563 = vunpack.c.h.b16 %v1219
    %v1564 = vunpack.c.l.b16 %v1220
    %v1565 = vunpack.c.h.b16 %v1220
    %v1566 = vunpack.c.l.b16 %v1221
    %v1567 = vunpack.c.h.b16 %v1221
    %v1568 = vunpack.c.l.b16 %v1222
    %v1569 = vunpack.c.h.b16 %v1222
    %v1570 = vunpack.c.l.b16 %v1223
    %v1571 = vunpack.c.h.b16 %v1223
    %v1572 = vunpack.c.l.b16 %v1224
    %v1573 = vunpack.c.h.b16 %v1224
    %v1574 = vunpack.c.l.b16 %v1225
    %v1575 = vunpack.c.h.b16 %v1225
    %v1576 = vunpack.c.l.b16 %v1226
    %v1577 = vunpack.c.h.b16 %v1226
    %v1578 = vunpack.c.l.b16 %v1227
    %v1579 = vunpack.c.h.b16 %v1227
    %v1580 = vunpack.c.l.b16 %v1228
    %v1581 = vunpack.c.h.b16 %v1228
    %v1582 = vunpack.c.l.b16 %v1229
    %v1583 = vunpack.c.h.b16 %v1229
    %v1584 = vunpack.c.l.b16 %v1230
    %v1585 = vunpack.c.h.b16 %v1230
    %v1586 = vunpack.c.l.b16 %v1231
    %v1587 = vunpack.c.h.b16 %v1231
    %v1588 = vunpack.c.l.b16 %v1232
    %v1589 = vunpack.c.h.b16 %v1232
    %v1590 = vunpack.c.l.b16 %v1233
    %v1591 = vunpack.c.h.b16 %v1233
    %v1592 = vunpack.c.l.b16 %v1234
    %v1593 = vunpack.c.h.b16 %v1234
    %v1594 = vunpack.c.l.b16 %v1235
    %v1595 = vunpack.c.h.b16 %v1235
    %v1596 = vunpack.c.l.b16 %v1236
    %v1597 = vunpack.c.h.b16 %v1236
    %v1598 = vunpack.c.l.b16 %v1237
    %v1599 = vunpack.c.h.b16 %v1237
    %v1600 = vunpack.c.l.b16 %v1238
    %v1601 = vunpack.c.h.b16 %v1238
    %v1602 = vunpack.c.l.b16 %v1239
    %v1603 = vunpack.c.h.b16 %v1239
    %v1604 = vunpack.c.l.b16 %v1240
    %v1605 = vunpack.c.h.b16 %v1240
    %v1606 = vunpack.c.l.b16 %v1241
    %v1607 = vunpack.c.h.b16 %v1241
    %v1608 = vunpack.c.l.b16 %v1242
    %v1609 = vunpack.c.h.b16 %v1242
    %v1610 = vunpack.c.l.b16 %v1243
    %v1611 = vunpack.c.h.b16 %v1243
    %v1612 = vunpack.c.l.b16 %v1244
    %v1613 = vunpack.c.h.b16 %v1244
    %v1614 = vunpack.c.l.b16 %v1245
    %v1615 = vunpack.c.h.b16 %v1245
    %v1616 = vunpack.c.l.b16 %v1246
    %v1617 = vunpack.c.h.b16 %v1246
    %v1618 = vunpack.c.l.b16 %v1247
    %v1619 = vunpack.c.h.b16 %v1247
    %v1620 = vunpack.c.l.b16 %v1248
    %v1621 = vunpack.c.h.b16 %v1248
    %v1622 = vunpack.c.l.b16 %v1249
    %v1623 = vunpack.c.h.b16 %v1249
    %v1624 = vunpack.c.l.b16 %v1250
    %v1625 = vunpack.c.h.b16 %v1250
    %v1626 = vunpack.c.l.b16 %v1251
    %v1627 = vunpack.c.h.b16 %v1251
    %v1628 = vunpack.c.l.b16 %v1252
    %v1629 = vunpack.c.h.b16 %v1252
    %v1630 = vunpack.c.l.b16 %v1253
    %v1631 = vunpack.c.h.b16 %v1253
    %v1632 = vunpack.c.l.b16 %v1254
    %v1633 = vunpack.c.h.b16 %v1254
    %v1634 = vunpack.c.l.b16 %v1255
    %v1635 = vunpack.c.h.b16 %v1255
    %v1636 = vunpack.c.l.b16 %v1256
    %v1637 = vunpack.c.h.b16 %v1256
    %v1638 = vunpack.c.l.b16 %v1257
    %v1639 = vunpack.c.h.b16 %v1257
    %v1640 = vunpack.c.l.b16 %v1258
    %v1641 = vunpack.c.h.b16 %v1258
    %v1642 = vunpack.c.l.b16 %v1259
    %v1643 = vunpack.c.h.b16 %v1259
    %v1644 = vunpack.c.l.b16 %v1260
    %v1645 = vunpack.c.h.b16 %v1260
    %v1646 = vunpack.c.l.b16 %v1261
    %v1647 = vunpack.c.h.b16 %v1261
    %v1648 = vunpack.c.l.b16 %v1262
    %v1649 = vunpack.c.h.b16 %v1262
    %v1650 = vunpack.c.l.b16 %v1263
    %v1651 = vunpack.c.h.b16 %v1263
    %v1652 = vunpack.c.l.b16 %v1264
    %v1653 = vunpack.c.h.b16 %v1264
    %v1654 = vunpack.c.l.b16 %v1265
    %v1655 = vunpack.c.h.b16 %v1265
    %v1656 = vunpack.c.l.b16 %v1266
    %v1657 = vunpack.c.h.b16 %v1266
    %v1658 = vunpack.c.l.b16 %v1267
    %v1659 = vunpack.c.h.b16 %v1267
    %v1660 = vunpack.c.l.b16 %v1268
    %v1661 = vunpack.c.h.b16 %v1268
    %v1662 = vunpack.c.l.b16 %v1269
    %v1663 = vunpack.c.h.b16 %v1269
    %v1664 = vunpack.c.l.b16 %v1270
    %v1665 = vunpack.c.h.b16 %v1270
    %v1666 = vunpack.c.l.b16 %v1271
    %v1667 = vunpack.c.h.b16 %v1271
    %v1668 = vunpack.c.l.b16 %v1272
    %v1669 = vunpack.c.h.b16 %v1272
    %v1670 = vunpack.c.l.b16 %v1273
    %v1671 = vunpack.c.h.b16 %v1273
    %v1672 = vunpack.c.l.b16 %v1274
    %v1673 = vunpack.c.h.b16 %v1274
    %v1674 = vunpack.c.l.b16 %v1275
    %v1675 = vunpack.c.h.b16 %v1275
    %v1676 = vunpack.c.l.b16 %v1276
    %v1677 = vunpack.c.h.b16 %v1276
    %v1678 = vunpack.c.l.b16 %v1277
    %v1679 = vunpack.c.h.b16 %v1277
    %v1680 = vunpack.c.l.b16 %v1278
    %v1681 = vunpack.c.h.b16 %v1278
    %v1682 = vunpack.c.l.b16 %v1279
    %v1683 = vunpack.c.h.b16 %v1279
    %v1684 = vunpack.c.l.b16 %v1280
    %v1685 = vunpack.c.h.b16 %v1280
    %v1686 = vunpack.c.l.b16 %v1281
    %v1687 = vunpack.c.h.b16 %v1281
    %v1688 = vunpack.c.l.b16 %v1282
    %v1689 = vunpack.c.h.b16 %v1282
    %v1690 = vunpack.c.l.b16 %v1283
    %v1691 = vunpack.c.h.b16 %v1283
    %v1692 = vunpack.c.l.b16 %v1284
    %v1693 = vunpack.c.h.b16 %v1284
    %v1694 = vunpack.c.l.b16 %v1285
    %v1695 = vunpack.c.h.b16 %v1285
    %v1696 = vunpack.c.l.b16 %v1286
    %v1697 = vunpack.c.h.b16 %v1286
    %v1698 = vunpack.c.l.b16 %v1287
    %v1699 = vunpack.c.h.b16 %v1287
    %v1700 = vunpack.c.l.b16 %v1288
    %v1701 = vunpack.c.h.b16 %v1288
    %v1702 = vunpack.c.l.b16 %v1289
    %v1703 = vunpack.c.h.b16 %v1289
    %v1704 = vunpack.c.l.b16 %v1290
    %v1705 = vunpack.c.h.b16 %v1290
    %v1706 = vunpack.c.l.b16 %v1291
    %v1707 = vunpack.c.h.b16 %v1291
    %v1708 = vunpack.c.l.b16 %v1292
    %v1709 = vunpack.c.h.b16 %v1292
    %v1710 = vunpack.c.l.b16 %v1293
    %v1711 = vunpack.c.h.b16 %v1293
    %v1712 = vunpack.c.l.b16 %v1294
    %v1713 = vunpack.c.h.b16 %v1294
    %v1714 = vunpack.c.l.b16 %v1295
    %v1715 = vunpack.c.h.b16 %v1295
    %v1716 = vunpack.c.l.b16 %v1296
    %v1717 = vunpack.c.h.b16 %v1296
    %v1718 = vunpack.c.l.b16 %v1297
    %v1719 = vunpack.c.h.b16 %v1297
    %v1720 = vunpack.c.l.b16 %v1298
    %v1721 = vunpack.c.h.b16 %v1298
    %v1722 = vunpack.c.l.b16 %v1299
    %v1723 = vunpack.c.h.b16 %v1299
    %v1724 = vunpack.c.l.b16 %v1300
    %v1725 = vunpack.c.h.b16 %v1300
    %v1726 = vunpack.c.l.b16 %v1301
    %v1727 = vunpack.c.h.b16 %v1301
    %v1728 = vunpack.c.l.b16 %v1302
    %v1729 = vunpack.c.h.b16 %v1302
    %v1730 = vunpack.c.l.b16 %v1303
    %v1731 = vunpack.c.h.b16 %v1303
    %v1732 = vunpack.c.l.b16 %v1304
    %v1733 = vunpack.c.h.b16 %v1304
    %v1734 = vunpack.c.l.b16 %v1305
    %v1735 = vunpack.c.h.b16 %v1305
    %v1736 = vunpack.c.l.b16 %v1306
    %v1737 = vunpack.c.h.b16 %v1306
    %v1738 = vunpack.c.l.b16 %v1307
    %v1739 = vunpack.c.h.b16 %v1307
    %v1740 = vunpack.c.l.b16 %v1308
    %v1741 = vunpack.c.h.b16 %v1308
    %v1742 = vunpack.c.l.b16 %v1309
    %v1743 = vunpack.c.h.b16 %v1309
    %v1744 = vunpack.c.l.b16 %v1310
    %v1745 = vunpack.c.h.b16 %v1310
    %v1746 = vunpack.c.l.b16 %v1311
    %v1747 = vunpack.c.h.b16 %v1311
    %v1748 = vunpack.c.l.b16 %v1312
    %v1749 = vunpack.c.h.b16 %v1312
    %v1750 = vunpack.c.l.b16 %v1313
    %v1751 = vunpack.c.h.b16 %v1313
    %v1752 = vunpack.c.l.b16 %v1314
    %v1753 = vunpack.c.h.b16 %v1314
    %v1754 = vunpack.c.l.b16 %v1315
    %v1755 = vunpack.c.h.b16 %v1315
    %v1756 = vunpack.c.l.b16 %v1316
    %v1757 = vunpack.c.h.b16 %v1316
    %v1758 = vunpack.c.l.b16 %v1317
    %v1759 = vunpack.c.h.b16 %v1317
    %v1760 = vunpack.c.l.b16 %v1318
    %v1761 = vunpack.c.h.b16 %v1318
    %v1762 = vunpack.c.l.b16 %v1319
    %v1763 = vunpack.c.h.b16 %v1319
    %v1764 = vunpack.c.l.b16 %v1320
    %v1765 = vunpack.c.h.b16 %v1320
    %v1766 = vunpack.c.l.b16 %v1321
    %v1767 = vunpack.c.h.b16 %v1321
    %v1768 = vunpack.c.l.b16 %v1322
    %v1769 = vunpack.c.h.b16 %v1322
    %v1770 = vunpack.c.l.b16 %v1323
    %v1771 = vunpack.c.h.b16 %v1323
    %v1772 = vunpack.c.l.b16 %v1324
    %v1773 = vunpack.c.h.b16 %v1324
    %v1774 = vunpack.c.l.b16 %v1325
    %v1775 = vunpack.c.h.b16 %v1325
    %v1776 = vunpack.c.l.b16 %v1326
    %v1777 = vunpack.c.h.b16 %v1326
    %v1778 = vunpack.c.l.b16 %v1327
    %v1779 = vunpack.c.h.b16 %v1327
    %v1780 = vunpack.c.l.b16 %v1328
    %v1781 = vunpack.c.h.b16 %v1328
    %v1782 = vunpack.c.l.b16 %v1329
    %v1783 = vunpack.c.h.b16 %v1329
    %v1784 = vunpack.c.l.b16 %v1330
    %v1785 = vunpack.c.h.b16 %v1330
    %v1786 = vunpack.c.l.b16 %v1331
    %v1787 = vunpack.c.h.b16 %v1331
    %v1788 = vunpack.c.l.b16 %v1332
    %v1789 = vunpack.c.h.b16 %v1332
    %v1790 = vunpack.c.l.b16 %v1333
    %v1791 = vunpack.c.h.b16 %v1333
    %v1792 = vunpack.c.l.b16 %v1334
    %v1793 = vunpack.c.h.b16 %v1334
    %v1794 = vunpack.c.l.b16 %v1335
    %v1795 = vunpack.c.h.b16 %v1335
    %v1796 = vunpack.c.l.b16 %v1336
    %v1797 = vunpack.c.h.b16 %v1336
    %v1798 = vunpack.c.l.b16 %v1337
    %v1799 = vunpack.c.h.b16 %v1337
    %v1800 = vpack.c.b16 %v1552, %v1544
    %v1801 = vpack.c.b16 %v1553, %v1545
    %v1802 = vpack.c.b16 %v1554, %v1546
    %v1803 = vpack.c.b16 %v1555, %v1547
    %v1804 = vpack.c.b16 %v1556, %v1548
    %v1805 = vpack.c.b16 %v1557, %v1549
    %v1806 = vpack.c.b16 %v1558, %v1550
    %v1807 = vpack.c.b16 %v1559, %v1551
    %v1808 = vpack.c.b16 %v1568, %v1560
    %v1809 = vpack.c.b16 %v1569, %v1561
    %v1810 = vpack.c.b16 %v1570, %v1562
    %v1811 = vpack.c.b16 %v1571, %v1563
    %v1812 = vpack.c.b16 %v1572, %v1564
    %v1813 = vpack.c.b16 %v1573, %v1565
    %v1814 = vpack.c.b16 %v1574, %v1566
    %v1815 = vpack.c.b16 %v1575, %v1567
    %v1816 = vpack.c.b16 %v1584, %v1576
    %v1817 = vpack.c.b16 %v1585, %v1577
    %v1818 = vpack.c.b16 %v1586, %v1578
    %v1819 = vpack.c.b16 %v1587, %v1579
    %v1820 = vpack.c.b16 %v1588, %v1580
    %v1821 = vpack.c.b16 %v1589, %v1581
    %v1822 = vpack.c.b16 %v1590, %v1582
    %v1823 = vpack.c.b16 %v1591, %v1583
    %v1824 = vpack.c.b16 %v1600, %v1592
    %v1825 = vpack.c.b16 %v1601, %v1593
    %v1826 = vpack.c.b16 %v1602, %v1594
    %v1827 = vpack.c.b16 %v1603, %v1595
    %v1828 = vpack.c.b16 %v1604, %v1596
    %v1829 = vpack.c.b16 %v1605, %v1597
    %v1830 = vpack.c.b16 %v1606, %v1598
    %v1831 = vpack.c.b16 %v1607, %v1599
    %v1832 = vpack.c.b16 %v1616, %v1608
    %v1833 = vpack.c.b16 %v1617, %v1609
    %v1834 = vpack.c.b16 %v1618, %v1610
    %v1835 = vpack.c.b16 %v1619, %v1611
    %v1836 = vpack.c.b16 %v1620, %v1612
    %v1837 = vpack.c.b16 %v1621, %v1613
    %v1838 = vpack.c.b16 %v1622, %v1614
    %v1839 = vpack.c.b16 %v1623, %v1615
    %v1840 = vpack.c.b16 %v1632, %v1624
    %v1841 = vpack.c.b16 %v1633, %v1625
    %v1842 = vpack.c.b16 %v1634, %v1626
    %v1843 = vpack.c.b16 %v1635, %v1627
    %v1844 = vpack.c.b16 %v1636, %v1628
    %v1845 = vpack.c.b16 %v1637, %v1629
    %v1846 = vpack.c.b16 %v1638, %v1630
    %v1847 = vpack.c.b16 %v1639, %v1631
    %v1848 = vpack.c.b16 %v1648, %v1640
    %v1849 = vpack.c.b16 %v1649, %v1641
    %v1850 = vpack.c.b16 %v1650, %v1642
    %v1851 = vpack.c.b16 %v1651, %v1643
    %v1852 = vpack.c.b16 %v1652, %v1644
    %v1853 = vpack.c.b16 %v1653, %v1645
    %v1854 = vpack.c.b16 %v1654, %v1646
    %v1855 = vpack.c.b16 %v1655, %v1647
    %v1856 = vpack.c.b16 %v1664, %v1656
    %v1857 = vpack.c.b16 %v1665, %v1657
    %v1858 = vpack.c.b16 %v1666, %v1658
    %v1859 = vpack.c.b16 %v1667, %v1659
    %v1860 = vpack.c.b16 %v1668, %v1660
    %v1861 = vpack.c.b16 %v1669, %v1661
    %v1862 = vpack.c.b16 %v1670, %v1662
    %v1863 = vpack.c.b16 %v1671, %v1663
    %v1864 = vpack.c.b16 %v1680, %v1672
    %v1865 = vpack.c.b16 %v1681, %v1673
    %v1866 = vpack.c.b16 %v1682, %v1674
    %v1867 = vpack.c.b16 %v1683, %v1675
    %v1868 = vpack.c.b16 %v1684, %v1676
    %v1869 = vpack.c.b16 %v1685, %v1677
    %v1870 = vpack.c.b16 %v1686, %v1678
    %v1871 = vpack.c.b16 %v1687, %v1679
    %v1872 = vpack.c.b16 %v1696, %v1688
    %v1873 = vpack.c.b16 %v1697, %v1689
    %v1874 = vpack.c.b16 %v1698, %v1690
    %v1875 = vpack.c.b16 %v1699, %v1691
    %v1876 = vpack.c.b16 %v1700, %v1692
    %v1877 = vpack.c.b16 %v1701, %v1693
    %v1878 = vpack.c.b16 %v1702, %v1694
    %v1879 = vpack.c.b16 %v1703, %v1695
    %v1880 = vpack.c.b16 %v1712, %v1704
    %v1881 = vpack.c.b16 %v1713, %v1705
    %v1882 = vpack.c.b16 %v1714, %v1706
    %v1883 = vpack.c.b16 %v1715, %v1707
    %v1884 = vpack.c.b16 %v1716, %v1708
    %v1885 = vpack.c.b16 %v1717, %v1709
    %v1886 = vpack.c.b16 %v1718, %v1710
    %v1887 = vpack.c.b16 %v1719, %v1711
    %v1888 = vpack.c.b16 %v1728, %v1720
    %v1889 = vpack.c.b16 %v1729, %v1721
    %v1890 = vpack.c.b16 %v1730, %v1722
    %v1891 = vpack.c.b16 %v1731, %v1723
    %v1892 = vpack.c.b16 %v1732, %v1724
    %v1893 = vpack.c.b16 %v1733, %v1725
    %v1894 = vpack.c.b16 %v1734, %v1726
    %v1895 = vpack.c.b16 %v1735, %v1727
    %v1896 = vpack.c.b16 %v1744, %v1736
    %v1897 = vpack.c.b16 %v1745, %v1737
    %v1898 = vpack.c.b16 %v1746, %v1738
    %v1899 = vpack.c.b16 %v1747, %v1739
    %v1900 = vpack.c.b16 %v1748, %v1740
    %v1901 = vpack.c.b16 %v1749, %v1741
    %v1902 = vpack.c.b16 %v1750, %v1742
    %v1903 = vpack.c.b16 %v1751, %v1743
    %v1904 = vpack.c.b16 %v1760, %v1752
    %v1905 = vpack.c.b16 %v1761, %v1753
    %v1906 = vpack.c.b16 %v1762, %v1754
    %v1907 = vpack.c.b16 %v1763, %v1755
    %v1908 = vpack.c.b16 %v1764, %v1756
    %v1909 = vpack.c.b16 %v1765, %v1757
    %v1910 = vpack.c.b16 %v1766, %v1758
    %v1911 = vpack.c.b16 %v1767, %v1759
    %v1912 = vpack.c.b16 %v1776, %v1768
    %v1913 = vpack.c.b16 %v1777, %v1769
    %v1914 = vpack.c.b16 %v1778, %v1770
    %v1915 = vpack.c.b16 %v1779, %v1771
    %v1916 = vpack.c.b16 %v1780, %v1772
    %v1917 = vpack.c.b16 %v1781, %v1773
    %v1918 = vpack.c.b16 %v1782, %v1774
    %v1919 = vpack.c.b16 %v1783, %v1775
    %v1920 = vpack.c.b16 %v1792, %v1784
    %v1921 = vpack.c.b16 %v1793, %v1785
    %v1922 = vpack.c.b16 %v1794, %v1786
    %v1923 = vpack.c.b16 %v1795, %v1787
    %v1924 = vpack.c.b16 %v1796, %v1788
    %v1925 = vpack.c.b16 %v1797, %v1789
    %v1926 = vpack.c.b16 %v1798, %v1790
    %v1927 = vpack.c.b16 %v1799, %v1791
    %2056 = vmatprep.subr.bf16.mxu0 %v1857
    %2057 = vmatpush1.bf16.msra.mxu0 %v1856
    %2058 = vmatprep.subr.bf16.mxu0 %v1849
    %2059 = vmatpush1.bf16.msra.mxu0 %v1848
    %2060 = vmatprep.subr.bf16.mxu0 %v1841
    %2061 = vmatpush1.bf16.msra.mxu0 %v1840
    %2062 = vmatprep.subr.bf16.mxu0 %v1833
    %2063 = vmatpush1.bf16.msra.mxu0 %v1832
    %2064 = vmatprep.subr.bf16.mxu0 %v1825
    %2065 = vmatpush1.bf16.msra.mxu0 %v1824
    %2066 = vmatprep.subr.bf16.mxu0 %v1817
    %2067 = vmatpush1.bf16.msra.mxu0 %v1816
    %2068 = vmatprep.subr.bf16.mxu0 %v1809
    %2069 = vmatpush1.bf16.msra.mxu0 %v1808
    %2070 = vmatprep.subr.bf16.mxu0 %v1801
    %2071 = vmatpush1.bf16.msra.mxu0 %v1800
    %2072 = vmatprep.subr.bf16.mxu0 %v1921
    %2073 = vmatpush2.bf16.msra.mxu0 %v1920
    %2074 = vmatprep.subr.bf16.mxu0 %v1913
    %2075 = vmatpush2.bf16.msra.mxu0 %v1912
    %2076 = vmatprep.subr.bf16.mxu0 %v1905
    %2077 = vmatpush2.bf16.msra.mxu0 %v1904
    %2078 = vmatprep.subr.bf16.mxu0 %v1897
    %2079 = vmatpush2.bf16.msra.mxu0 %v1896
    %2080 = vmatprep.subr.bf16.mxu0 %v1889
    %2081 = vmatpush2.bf16.msra.mxu0 %v1888
    %2082 = vmatprep.subr.bf16.mxu0 %v1881
    %2083 = vmatpush2.bf16.msra.mxu0 %v1880
    %2084 = vmatprep.subr.bf16.mxu0 %v1873
    %2085 = vmatpush2.bf16.msra.mxu0 %v1872
    %2086 = vmatprep.subr.bf16.mxu0 %v1865
    %2087 = vmatpush2.bf16.msra.mxu0 %v1864
    %2088 = vmatprep.mubr.bf16.mxu0 %v1415
    %2089 = vmatmul.mubr.bf16.gmra.mxu0 %v1414
    %v2090 = vpop.f32.mrf.mxu0
    %v2091 = vadd.f32 0.0, %v2090
    %v2092 = vpop.f32.mrf.mxu0
    %v2093 = vadd.f32 0.0, %v2092
    %v2094 = vpop.f32.mrf.mxu0
    %v2095 = vadd.f32 0.0, %v2094
    %v2096 = vpop.f32.mrf.mxu0
    %v2097 = vadd.f32 0.0, %v2096
    %2098 = vdwg.mxu0
    %2099 = vmatprep.subr.bf16.mxu0 %v1859
    %2100 = vmatpush1.bf16.msra.mxu0 %v1858
    %2101 = vmatprep.subr.bf16.mxu0 %v1851
    %2102 = vmatpush1.bf16.msra.mxu0 %v1850
    %2103 = vmatprep.subr.bf16.mxu0 %v1843
    %2104 = vmatpush1.bf16.msra.mxu0 %v1842
    %2105 = vmatprep.subr.bf16.mxu0 %v1835
    %2106 = vmatpush1.bf16.msra.mxu0 %v1834
    %2107 = vmatprep.subr.bf16.mxu0 %v1827
    %2108 = vmatpush1.bf16.msra.mxu0 %v1826
    %2109 = vmatprep.subr.bf16.mxu0 %v1819
    %2110 = vmatpush1.bf16.msra.mxu0 %v1818
    %2111 = vmatprep.subr.bf16.mxu0 %v1811
    %2112 = vmatpush1.bf16.msra.mxu0 %v1810
    %2113 = vmatprep.subr.bf16.mxu0 %v1803
    %2114 = vmatpush1.bf16.msra.mxu0 %v1802
    %2115 = vmatprep.subr.bf16.mxu0 %v1923
    %2116 = vmatpush2.bf16.msra.mxu0 %v1922
    %2117 = vmatprep.subr.bf16.mxu0 %v1915
    %2118 = vmatpush2.bf16.msra.mxu0 %v1914
    %2119 = vmatprep.subr.bf16.mxu0 %v1907
    %2120 = vmatpush2.bf16.msra.mxu0 %v1906
    %2121 = vmatprep.subr.bf16.mxu0 %v1899
    %2122 = vmatpush2.bf16.msra.mxu0 %v1898
    %2123 = vmatprep.subr.bf16.mxu0 %v1891
    %2124 = vmatpush2.bf16.msra.mxu0 %v1890
    %2125 = vmatprep.subr.bf16.mxu0 %v1883
    %2126 = vmatpush2.bf16.msra.mxu0 %v1882
    %2127 = vmatprep.subr.bf16.mxu0 %v1875
    %2128 = vmatpush2.bf16.msra.mxu0 %v1874
    %2129 = vmatprep.subr.bf16.mxu0 %v1867
    %2130 = vmatpush2.bf16.msra.mxu0 %v1866
    %2131 = vmatprep.mubr.bf16.mxu0 %v1415
    %2132 = vmatmul.mubr.bf16.gmra.mxu0 %v1414
    %v2133 = vpop.f32.mrf.mxu0
    %v2134 = vadd.f32 0.0, %v2133
    %v2135 = vpop.f32.mrf.mxu0
    %v2136 = vadd.f32 0.0, %v2135
    %v2137 = vpop.f32.mrf.mxu0
    %v2138 = vadd.f32 0.0, %v2137
    %v2139 = vpop.f32.mrf.mxu0
    %v2140 = vadd.f32 0.0, %v2139
    %2141 = vdwg.mxu0
    %2142 = vmatprep.subr.bf16.mxu0 %v1861
    %2143 = vmatpush1.bf16.msra.mxu0 %v1860
    %2144 = vmatprep.subr.bf16.mxu0 %v1853
    %2145 = vmatpush1.bf16.msra.mxu0 %v1852
    %2146 = vmatprep.subr.bf16.mxu0 %v1845
    %2147 = vmatpush1.bf16.msra.mxu0 %v1844
    %2148 = vmatprep.subr.bf16.mxu0 %v1837
    %2149 = vmatpush1.bf16.msra.mxu0 %v1836
    %2150 = vmatprep.subr.bf16.mxu0 %v1829
    %2151 = vmatpush1.bf16.msra.mxu0 %v1828
    %2152 = vmatprep.subr.bf16.mxu0 %v1821
    %2153 = vmatpush1.bf16.msra.mxu0 %v1820
    %2154 = vmatprep.subr.bf16.mxu0 %v1813
    %2155 = vmatpush1.bf16.msra.mxu0 %v1812
    %2156 = vmatprep.subr.bf16.mxu0 %v1805
    %2157 = vmatpush1.bf16.msra.mxu0 %v1804
    %2158 = vmatprep.subr.bf16.mxu0 %v1925
    %2159 = vmatpush2.bf16.msra.mxu0 %v1924
    %2160 = vmatprep.subr.bf16.mxu0 %v1917
    %2161 = vmatpush2.bf16.msra.mxu0 %v1916
    %2162 = vmatprep.subr.bf16.mxu0 %v1909
    %2163 = vmatpush2.bf16.msra.mxu0 %v1908
    %2164 = vmatprep.subr.bf16.mxu0 %v1901
    %2165 = vmatpush2.bf16.msra.mxu0 %v1900
    %2166 = vmatprep.subr.bf16.mxu0 %v1893
    %2167 = vmatpush2.bf16.msra.mxu0 %v1892
    %2168 = vmatprep.subr.bf16.mxu0 %v1885
    %2169 = vmatpush2.bf16.msra.mxu0 %v1884
    %2170 = vmatprep.subr.bf16.mxu0 %v1877
    %2171 = vmatpush2.bf16.msra.mxu0 %v1876
    %2172 = vmatprep.subr.bf16.mxu0 %v1869
    %2173 = vmatpush2.bf16.msra.mxu0 %v1868
    %2174 = vmatprep.mubr.bf16.mxu0 %v1415
    %2175 = vmatmul.mubr.bf16.gmra.mxu0 %v1414
    %v2176 = vpop.f32.mrf.mxu0
    %v2177 = vadd.f32 0.0, %v2176
    %v2178 = vpop.f32.mrf.mxu0
    %v2179 = vadd.f32 0.0, %v2178
    %v2180 = vpop.f32.mrf.mxu0
    %v2181 = vadd.f32 0.0, %v2180
    %v2182 = vpop.f32.mrf.mxu0
    %v2183 = vadd.f32 0.0, %v2182
    %2184 = vdwg.mxu0
    %2185 = vmatprep.subr.bf16.mxu0 %v1863
    %2186 = vmatpush1.bf16.msra.mxu0 %v1862
    %2187 = vmatprep.subr.bf16.mxu0 %v1855
    %2188 = vmatpush1.bf16.msra.mxu0 %v1854
    %2189 = vmatprep.subr.bf16.mxu0 %v1847
    %2190 = vmatpush1.bf16.msra.mxu0 %v1846
    %2191 = vmatprep.subr.bf16.mxu0 %v1839
    %2192 = vmatpush1.bf16.msra.mxu0 %v1838
    %2193 = vmatprep.subr.bf16.mxu0 %v1831
    %2194 = vmatpush1.bf16.msra.mxu0 %v1830
    %2195 = vmatprep.subr.bf16.mxu0 %v1823
    %2196 = vmatpush1.bf16.msra.mxu0 %v1822
    %2197 = vmatprep.subr.bf16.mxu0 %v1815
    %2198 = vmatpush1.bf16.msra.mxu0 %v1814
    %2199 = vmatprep.subr.bf16.mxu0 %v1807
    %2200 = vmatpush1.bf16.msra.mxu0 %v1806
    %2201 = vmatprep.subr.bf16.mxu0 %v1927
    %2202 = vmatpush2.bf16.msra.mxu0 %v1926
    %2203 = vmatprep.subr.bf16.mxu0 %v1919
    %2204 = vmatpush2.bf16.msra.mxu0 %v1918
    %2205 = vmatprep.subr.bf16.mxu0 %v1911
    %2206 = vmatpush2.bf16.msra.mxu0 %v1910
    %2207 = vmatprep.subr.bf16.mxu0 %v1903
    %2208 = vmatpush2.bf16.msra.mxu0 %v1902
    %2209 = vmatprep.subr.bf16.mxu0 %v1895
    %2210 = vmatpush2.bf16.msra.mxu0 %v1894
    %2211 = vmatprep.subr.bf16.mxu0 %v1887
    %2212 = vmatpush2.bf16.msra.mxu0 %v1886
    %2213 = vmatprep.subr.bf16.mxu0 %v1879
    %2214 = vmatpush2.bf16.msra.mxu0 %v1878
    %2215 = vmatprep.subr.bf16.mxu0 %v1871
    %2216 = vmatpush2.bf16.msra.mxu0 %v1870
    %2217 = vmatprep.mubr.bf16.mxu0 %v1415
    %2218 = vmatmul.mubr.bf16.gmra.mxu0 %v1414
    %v2219 = vpop.f32.mrf.mxu0
    %v2220 = vadd.f32 0.0, %v2219
    %v2221 = vpop.f32.mrf.mxu0
    %v2222 = vadd.f32 0.0, %v2221
    %v2223 = vpop.f32.mrf.mxu0
    %v2224 = vadd.f32 0.0, %v2223
    %v2225 = vpop.f32.mrf.mxu0
    %v2226 = vadd.f32 0.0, %v2225
    %2227 = vdwg.mxu0
    %v2228 = vadd.f32 %v1398, %v2091
    %v2229 = vadd.f32 %v1399, %v2093
    %v2230 = vadd.f32 %v1400, %v2134
    %v2231 = vadd.f32 %v1401, %v2136
    %v2232 = vadd.f32 %v1402, %v2177
    %v2233 = vadd.f32 %v1403, %v2179
    %v2234 = vadd.f32 %v1404, %v2220
    %v2235 = vadd.f32 %v1405, %v2222
    %v2236 = vadd.f32 %v1406, %v2095
    %v2237 = vadd.f32 %v1407, %v2097
    %v2238 = vadd.f32 %v1408, %v2138
    %v2239 = vadd.f32 %v1409, %v2140
    %v2240 = vadd.f32 %v1410, %v2181
    %v2241 = vadd.f32 %v1411, %v2183
    %v2242 = vadd.f32 %v1412, %v2224
    %v2243 = vadd.f32 %v1413, %v2226
    %v2244 = vxor.u32 %v2228, 2147483648
    %v2245 = vxor.u32 %v2229, 2147483648
    %v2246 = vxor.u32 %v2230, 2147483648
    %v2247 = vxor.u32 %v2231, 2147483648
    %v2248 = vxor.u32 %v2232, 2147483648
    %v2249 = vxor.u32 %v2233, 2147483648
    %v2250 = vxor.u32 %v2236, 2147483648
    %v2251 = vxor.u32 %v2237, 2147483648
    %v2252 = vxor.u32 %v2238, 2147483648
    %v2253 = vxor.u32 %v2239, 2147483648
    %v2254 = vxor.u32 %v2240, 2147483648
    %v2255 = vxor.u32 %v2241, 2147483648
    %v2256 = vmul.f32 %v2244, 1.442695
    %v2257 = vpow.pop %v2256
    %v2258 = vmul.f32 %v2245, 1.442695
    %v2259 = vpow.pop %v2258
    %v2260 = vmul.f32 %v2246, 1.442695
    %v2261 = vpow.pop %v2260
    %v2262 = vmul.f32 %v2247, 1.442695
    %v2263 = vpow.pop %v2262
    %v2264 = vmul.f32 %v2248, 1.442695
    %v2265 = vpow.pop %v2264
    %v2266 = vmul.f32 %v2249, 1.442695
    %v2267 = vpow.pop %v2266
    %v2268 = vmul.f32 %v2250, 1.442695
    %v2269 = vpow.pop %v2268
    %v2270 = vmul.f32 %v2251, 1.442695
    %v2271 = vpow.pop %v2270
    %v2272 = vmul.f32 %v2252, 1.442695
    %v2273 = vpow.pop %v2272
    %v2274 = vmul.f32 %v2253, 1.442695
    %v2275 = vpow.pop %v2274
    %v2276 = vmul.f32 %v2254, 1.442695
    %v2277 = vpow.pop %v2276
    %v2278 = vmul.f32 %v2255, 1.442695
    %v2279 = vpow.pop %v2278
    %v2280 = vadd.f32 %v2257, 1.0
    %v2281 = vadd.f32 %v2259, 1.0
    %v2282 = vadd.f32 %v2261, 1.0
    %v2283 = vadd.f32 %v2263, 1.0
    %v2284 = vadd.f32 %v2265, 1.0
    %v2285 = vadd.f32 %v2267, 1.0
    %v2286 = vadd.f32 %v2269, 1.0
    %v2287 = vadd.f32 %v2271, 1.0
    %v2288 = vadd.f32 %v2273, 1.0
    %v2289 = vadd.f32 %v2275, 1.0
    %v2290 = vadd.f32 %v2277, 1.0
    %v2291 = vadd.f32 %v2279, 1.0
    %v2292 = vrcp.pop %v2280
    %v2293 = vmul.f32 1.0, %v2292
    %v2294 = vrcp.pop %v2281
    %v2295 = vmul.f32 1.0, %v2294
    %v2296 = vrcp.pop %v2282
    %v2297 = vmul.f32 1.0, %v2296
    %v2298 = vrcp.pop %v2283
    %v2299 = vmul.f32 1.0, %v2298
    %v2300 = vrcp.pop %v2284
    %v2301 = vmul.f32 1.0, %v2300
    %v2302 = vrcp.pop %v2285
    %v2303 = vmul.f32 1.0, %v2302
    %v2304 = vrcp.pop %v2286
    %v2305 = vmul.f32 1.0, %v2304
    %v2306 = vrcp.pop %v2287
    %v2307 = vmul.f32 1.0, %v2306
    %v2308 = vrcp.pop %v2288
    %v2309 = vmul.f32 1.0, %v2308
    %v2310 = vrcp.pop %v2289
    %v2311 = vmul.f32 1.0, %v2310
    %v2312 = vrcp.pop %v2290
    %v2313 = vmul.f32 1.0, %v2312
    %v2314 = vrcp.pop %v2291
    %v2315 = vmul.f32 1.0, %v2314
    %v2316 = vtanh.pop %v2234
    %v2317 = vtanh.pop %v2235
    %v2318 = vtanh.pop %v2242
    %v2319 = vtanh.pop %v2243
    %v2320 = vmul.f32 %v2297, %v1384
    %v2321 = vmul.f32 %v2299, %v1385
    %v2322 = vmul.f32 %v2309, %v1386
    %v2323 = vmul.f32 %v2311, %v1387
    %v2324 = vmul.f32 %v2293, %v2316
    %v2325 = vmul.f32 %v2295, %v2317
    %v2326 = vmul.f32 %v2305, %v2318
    %v2327 = vmul.f32 %v2307, %v2319
    %v2328 = vadd.f32 %v2320, %v2324
    %v2329 = vadd.f32 %v2321, %v2325
    %v2330 = vadd.f32 %v2322, %v2326
    %v2331 = vadd.f32 %v2323, %v2327
    %v2332 = vtanh.pop %v2328
    %v2333 = vtanh.pop %v2329
    %v2334 = vtanh.pop %v2330
    %v2335 = vtanh.pop %v2331
    %v2336 = vmul.f32 %v2301, %v2332
    %v2337 = vmul.f32 %v2303, %v2333
    %v2338 = vmul.f32 %v2313, %v2334
    %v2339 = vmul.f32 %v2315, %v2335
    %v2340 = vld [vmem:[#allocation2 + $0x80] sm:$0xff]
    %v2341 = vld [vmem:[#allocation2 + $0x88] sm:$0xff]
    %v2342 = vld [vmem:[#allocation2 + $0x90] sm:$0xff]
    %v2343 = vld [vmem:[#allocation2 + $0x98] sm:$0xff]
    %v2344 = vld [vmem:[#allocation2 + $0xa0] sm:$0xff]
    %v2345 = vld [vmem:[#allocation2 + $0xa8] sm:$0xff]
    %v2346 = vld [vmem:[#allocation2 + $0xb0] sm:$0xff]
    %v2347 = vld [vmem:[#allocation2 + $0xb8] sm:$0xff]
    %v2348 = vld [vmem:[#allocation2 + $0xc0] sm:$0xff]
    %v2349 = vld [vmem:[#allocation2 + $0xc8] sm:$0xff]
    %v2350 = vld [vmem:[#allocation2 + $0xd0] sm:$0xff]
    %v2351 = vld [vmem:[#allocation2 + $0xd8] sm:$0xff]
    %v2352 = vld [vmem:[#allocation2 + $0xe0] sm:$0xff]
    %v2353 = vld [vmem:[#allocation2 + $0xe8] sm:$0xff]
    %v2354 = vld [vmem:[#allocation2 + $0xf0] sm:$0xff]
    %v2355 = vld [vmem:[#allocation2 + $0xf8] sm:$0xff]
    %v2356 = vpack.c.bf16 %v2338, %v2336
    %v2357 = vpack.c.bf16 %v2339, %v2337
    %2358 = vmatprep.subr.bf16.mxu0 %v1857
    %2359 = vmatpush1.bf16.msra.mxu0 %v1856
    %2360 = vmatprep.subr.bf16.mxu0 %v1849
    %2361 = vmatpush1.bf16.msra.mxu0 %v1848
    %2362 = vmatprep.subr.bf16.mxu0 %v1841
    %2363 = vmatpush1.bf16.msra.mxu0 %v1840
    %2364 = vmatprep.subr.bf16.mxu0 %v1833
    %2365 = vmatpush1.bf16.msra.mxu0 %v1832
    %2366 = vmatprep.subr.bf16.mxu0 %v1825
    %2367 = vmatpush1.bf16.msra.mxu0 %v1824
    %2368 = vmatprep.subr.bf16.mxu0 %v1817
    %2369 = vmatpush1.bf16.msra.mxu0 %v1816
    %2370 = vmatprep.subr.bf16.mxu0 %v1809
    %2371 = vmatpush1.bf16.msra.mxu0 %v1808
    %2372 = vmatprep.subr.bf16.mxu0 %v1801
    %2373 = vmatpush1.bf16.msra.mxu0 %v1800
    %2374 = vmatprep.subr.bf16.mxu0 %v1921
    %2375 = vmatpush2.bf16.msra.mxu0 %v1920
    %2376 = vmatprep.subr.bf16.mxu0 %v1913
    %2377 = vmatpush2.bf16.msra.mxu0 %v1912
    %2378 = vmatprep.subr.bf16.mxu0 %v1905
    %2379 = vmatpush2.bf16.msra.mxu0 %v1904
    %2380 = vmatprep.subr.bf16.mxu0 %v1897
    %2381 = vmatpush2.bf16.msra.mxu0 %v1896
    %2382 = vmatprep.subr.bf16.mxu0 %v1889
    %2383 = vmatpush2.bf16.msra.mxu0 %v1888
    %2384 = vmatprep.subr.bf16.mxu0 %v1881
    %2385 = vmatpush2.bf16.msra.mxu0 %v1880
    %2386 = vmatprep.subr.bf16.mxu0 %v1873
    %2387 = vmatpush2.bf16.msra.mxu0 %v1872
    %2388 = vmatprep.subr.bf16.mxu0 %v1865
    %2389 = vmatpush2.bf16.msra.mxu0 %v1864
    %2390 = vmatprep.mubr.bf16.mxu0 %v2357
    %2391 = vmatmul.mubr.bf16.gmra.mxu0 %v2356
    %v2392 = vpop.f32.mrf.mxu0
    %v2393 = vadd.f32 0.0, %v2392
    %v2394 = vpop.f32.mrf.mxu0
    %v2395 = vadd.f32 0.0, %v2394
    %v2396 = vpop.f32.mrf.mxu0
    %v2397 = vadd.f32 0.0, %v2396
    %v2398 = vpop.f32.mrf.mxu0
    %v2399 = vadd.f32 0.0, %v2398
    %2400 = vdwg.mxu0
    %2401 = vmatprep.subr.bf16.mxu0 %v1859
    %2402 = vmatpush1.bf16.msra.mxu0 %v1858
    %2403 = vmatprep.subr.bf16.mxu0 %v1851
    %2404 = vmatpush1.bf16.msra.mxu0 %v1850
    %2405 = vmatprep.subr.bf16.mxu0 %v1843
    %2406 = vmatpush1.bf16.msra.mxu0 %v1842
    %2407 = vmatprep.subr.bf16.mxu0 %v1835
    %2408 = vmatpush1.bf16.msra.mxu0 %v1834
    %2409 = vmatprep.subr.bf16.mxu0 %v1827
    %2410 = vmatpush1.bf16.msra.mxu0 %v1826
    %2411 = vmatprep.subr.bf16.mxu0 %v1819
    %2412 = vmatpush1.bf16.msra.mxu0 %v1818
    %2413 = vmatprep.subr.bf16.mxu0 %v1811
    %2414 = vmatpush1.bf16.msra.mxu0 %v1810
    %2415 = vmatprep.subr.bf16.mxu0 %v1803
    %2416 = vmatpush1.bf16.msra.mxu0 %v1802
    %2417 = vmatprep.subr.bf16.mxu0 %v1923
    %2418 = vmatpush2.bf16.msra.mxu0 %v1922
    %2419 = vmatprep.subr.bf16.mxu0 %v1915
    %2420 = vmatpush2.bf16.msra.mxu0 %v1914
    %2421 = vmatprep.subr.bf16.mxu0 %v1907
    %2422 = vmatpush2.bf16.msra.mxu0 %v1906
    %2423 = vmatprep.subr.bf16.mxu0 %v1899
    %2424 = vmatpush2.bf16.msra.mxu0 %v1898
    %2425 = vmatprep.subr.bf16.mxu0 %v1891
    %2426 = vmatpush2.bf16.msra.mxu0 %v1890
    %2427 = vmatprep.subr.bf16.mxu0 %v1883
    %2428 = vmatpush2.bf16.msra.mxu0 %v1882
    %2429 = vmatprep.subr.bf16.mxu0 %v1875
    %2430 = vmatpush2.bf16.msra.mxu0 %v1874
    %2431 = vmatprep.subr.bf16.mxu0 %v1867
    %2432 = vmatpush2.bf16.msra.mxu0 %v1866
    %2433 = vmatprep.mubr.bf16.mxu0 %v2357
    %2434 = vmatmul.mubr.bf16.gmra.mxu0 %v2356
    %v2435 = vpop.f32.mrf.mxu0
    %v2436 = vadd.f32 0.0, %v2435
    %v2437 = vpop.f32.mrf.mxu0
    %v2438 = vadd.f32 0.0, %v2437
    %v2439 = vpop.f32.mrf.mxu0
    %v2440 = vadd.f32 0.0, %v2439
    %v2441 = vpop.f32.mrf.mxu0
    %v2442 = vadd.f32 0.0, %v2441
    %2443 = vdwg.mxu0
    %2444 = vmatprep.subr.bf16.mxu0 %v1861
    %2445 = vmatpush1.bf16.msra.mxu0 %v1860
    %2446 = vmatprep.subr.bf16.mxu0 %v1853
    %2447 = vmatpush1.bf16.msra.mxu0 %v1852
    %2448 = vmatprep.subr.bf16.mxu0 %v1845
    %2449 = vmatpush1.bf16.msra.mxu0 %v1844
    %2450 = vmatprep.subr.bf16.mxu0 %v1837
    %2451 = vmatpush1.bf16.msra.mxu0 %v1836
    %2452 = vmatprep.subr.bf16.mxu0 %v1829
    %2453 = vmatpush1.bf16.msra.mxu0 %v1828
    %2454 = vmatprep.subr.bf16.mxu0 %v1821
    %2455 = vmatpush1.bf16.msra.mxu0 %v1820
    %2456 = vmatprep.subr.bf16.mxu0 %v1813
    %2457 = vmatpush1.bf16.msra.mxu0 %v1812
    %2458 = vmatprep.subr.bf16.mxu0 %v1805
    %2459 = vmatpush1.bf16.msra.mxu0 %v1804
    %2460 = vmatprep.subr.bf16.mxu0 %v1925
    %2461 = vmatpush2.bf16.msra.mxu0 %v1924
    %2462 = vmatprep.subr.bf16.mxu0 %v1917
    %2463 = vmatpush2.bf16.msra.mxu0 %v1916
    %2464 = vmatprep.subr.bf16.mxu0 %v1909
    %2465 = vmatpush2.bf16.msra.mxu0 %v1908
    %2466 = vmatprep.subr.bf16.mxu0 %v1901
    %2467 = vmatpush2.bf16.msra.mxu0 %v1900
    %2468 = vmatprep.subr.bf16.mxu0 %v1893
    %2469 = vmatpush2.bf16.msra.mxu0 %v1892
    %2470 = vmatprep.subr.bf16.mxu0 %v1885
    %2471 = vmatpush2.bf16.msra.mxu0 %v1884
    %2472 = vmatprep.subr.bf16.mxu0 %v1877
    %2473 = vmatpush2.bf16.msra.mxu0 %v1876
    %2474 = vmatprep.subr.bf16.mxu0 %v1869
    %2475 = vmatpush2.bf16.msra.mxu0 %v1868
    %2476 = vmatprep.mubr.bf16.mxu0 %v2357
    %2477 = vmatmul.mubr.bf16.gmra.mxu0 %v2356
    %v2478 = vpop.f32.mrf.mxu0
    %v2479 = vadd.f32 0.0, %v2478
    %v2480 = vpop.f32.mrf.mxu0
    %v2481 = vadd.f32 0.0, %v2480
    %v2482 = vpop.f32.mrf.mxu0
    %v2483 = vadd.f32 0.0, %v2482
    %v2484 = vpop.f32.mrf.mxu0
    %v2485 = vadd.f32 0.0, %v2484
    %2486 = vdwg.mxu0
    %2487 = vmatprep.subr.bf16.mxu0 %v1863
    %2488 = vmatpush1.bf16.msra.mxu0 %v1862
    %2489 = vmatprep.subr.bf16.mxu0 %v1855
    %2490 = vmatpush1.bf16.msra.mxu0 %v1854
    %2491 = vmatprep.subr.bf16.mxu0 %v1847
    %2492 = vmatpush1.bf16.msra.mxu0 %v1846
    %2493 = vmatprep.subr.bf16.mxu0 %v1839
    %2494 = vmatpush1.bf16.msra.mxu0 %v1838
    %2495 = vmatprep.subr.bf16.mxu0 %v1831
    %2496 = vmatpush1.bf16.msra.mxu0 %v1830
    %2497 = vmatprep.subr.bf16.mxu0 %v1823
    %2498 = vmatpush1.bf16.msra.mxu0 %v1822
    %2499 = vmatprep.subr.bf16.mxu0 %v1815
    %2500 = vmatpush1.bf16.msra.mxu0 %v1814
    %2501 = vmatprep.subr.bf16.mxu0 %v1807
    %2502 = vmatpush1.bf16.msra.mxu0 %v1806
    %2503 = vmatprep.subr.bf16.mxu0 %v1927
    %2504 = vmatpush2.bf16.msra.mxu0 %v1926
    %2505 = vmatprep.subr.bf16.mxu0 %v1919
    %2506 = vmatpush2.bf16.msra.mxu0 %v1918
    %2507 = vmatprep.subr.bf16.mxu0 %v1911
    %2508 = vmatpush2.bf16.msra.mxu0 %v1910
    %2509 = vmatprep.subr.bf16.mxu0 %v1903
    %2510 = vmatpush2.bf16.msra.mxu0 %v1902
    %2511 = vmatprep.subr.bf16.mxu0 %v1895
    %2512 = vmatpush2.bf16.msra.mxu0 %v1894
    %2513 = vmatprep.subr.bf16.mxu0 %v1887
    %2514 = vmatpush2.bf16.msra.mxu0 %v1886
    %2515 = vmatprep.subr.bf16.mxu0 %v1879
    %2516 = vmatpush2.bf16.msra.mxu0 %v1878
    %2517 = vmatprep.subr.bf16.mxu0 %v1871
    %2518 = vmatpush2.bf16.msra.mxu0 %v1870
    %2519 = vmatprep.mubr.bf16.mxu0 %v2357
    %2520 = vmatmul.mubr.bf16.gmra.mxu0 %v2356
    %v2521 = vpop.f32.mrf.mxu0
    %v2522 = vadd.f32 0.0, %v2521
    %v2523 = vpop.f32.mrf.mxu0
    %v2524 = vadd.f32 0.0, %v2523
    %v2525 = vpop.f32.mrf.mxu0
    %v2526 = vadd.f32 0.0, %v2525
    %v2527 = vpop.f32.mrf.mxu0
    %v2528 = vadd.f32 0.0, %v2527
    %2529 = vdwg.mxu0
    %v2530 = vadd.f32 %v2340, %v2393
    %v2531 = vadd.f32 %v2341, %v2395
    %v2532 = vadd.f32 %v2342, %v2436
    %v2533 = vadd.f32 %v2343, %v2438
    %v2534 = vadd.f32 %v2344, %v2479
    %v2535 = vadd.f32 %v2345, %v2481
    %v2536 = vadd.f32 %v2346, %v2522
    %v2537 = vadd.f32 %v2347, %v2524
    %v2538 = vadd.f32 %v2348, %v2397
    %v2539 = vadd.f32 %v2349, %v2399
    %v2540 = vadd.f32 %v2350, %v2440
    %v2541 = vadd.f32 %v2351, %v2442
    %v2542 = vadd.f32 %v2352, %v2483
    %v2543 = vadd.f32 %v2353, %v2485
    %v2544 = vadd.f32 %v2354, %v2526
    %v2545 = vadd.f32 %v2355, %v2528
    %v2546 = vxor.u32 %v2530, 2147483648
    %v2547 = vxor.u32 %v2531, 2147483648
    %v2548 = vxor.u32 %v2532, 2147483648
    %v2549 = vxor.u32 %v2533, 2147483648
    %v2550 = vxor.u32 %v2534, 2147483648
    %v2551 = vxor.u32 %v2535, 2147483648
    %v2552 = vxor.u32 %v2538, 2147483648
    %v2553 = vxor.u32 %v2539, 2147483648
    %v2554 = vxor.u32 %v2540, 2147483648
    %v2555 = vxor.u32 %v2541, 2147483648
    %v2556 = vxor.u32 %v2542, 2147483648
    %v2557 = vxor.u32 %v2543, 2147483648
    %v2558 = vmul.f32 %v2546, 1.442695
    %v2559 = vpow.pop %v2558
    %v2560 = vmul.f32 %v2547, 1.442695
    %v2561 = vpow.pop %v2560
    %v2562 = vmul.f32 %v2548, 1.442695
    %v2563 = vpow.pop %v2562
    %v2564 = vmul.f32 %v2549, 1.442695
    %v2565 = vpow.pop %v2564
    %v2566 = vmul.f32 %v2550, 1.442695
    %v2567 = vpow.pop %v2566
    %v2568 = vmul.f32 %v2551, 1.442695
    %v2569 = vpow.pop %v2568
    %v2570 = vmul.f32 %v2552, 1.442695
    %v2571 = vpow.pop %v2570
    %v2572 = vmul.f32 %v2553, 1.442695
    %v2573 = vpow.pop %v2572
    %v2574 = vmul.f32 %v2554, 1.442695
    %v2575 = vpow.pop %v2574
    %v2576 = vmul.f32 %v2555, 1.442695
    %v2577 = vpow.pop %v2576
    %v2578 = vmul.f32 %v2556, 1.442695
    %v2579 = vpow.pop %v2578
    %v2580 = vmul.f32 %v2557, 1.442695
    %v2581 = vpow.pop %v2580
    %v2582 = vadd.f32 %v2559, 1.0
    %v2583 = vadd.f32 %v2561, 1.0
    %v2584 = vadd.f32 %v2563, 1.0
    %v2585 = vadd.f32 %v2565, 1.0
    %v2586 = vadd.f32 %v2567, 1.0
    %v2587 = vadd.f32 %v2569, 1.0
    %v2588 = vadd.f32 %v2571, 1.0
    %v2589 = vadd.f32 %v2573, 1.0
    %v2590 = vadd.f32 %v2575, 1.0
    %v2591 = vadd.f32 %v2577, 1.0
    %v2592 = vadd.f32 %v2579, 1.0
    %v2593 = vadd.f32 %v2581, 1.0
    %v2594 = vrcp.pop %v2582
    %v2595 = vmul.f32 1.0, %v2594
    %v2596 = vrcp.pop %v2583
    %v2597 = vmul.f32 1.0, %v2596
    %v2598 = vrcp.pop %v2584
    %v2599 = vmul.f32 1.0, %v2598
    %v2600 = vrcp.pop %v2585
    %v2601 = vmul.f32 1.0, %v2600
    %v2602 = vrcp.pop %v2586
    %v2603 = vmul.f32 1.0, %v2602
    %v2604 = vrcp.pop %v2587
    %v2605 = vmul.f32 1.0, %v2604
    %v2606 = vrcp.pop %v2588
    %v2607 = vmul.f32 1.0, %v2606
    %v2608 = vrcp.pop %v2589
    %v2609 = vmul.f32 1.0, %v2608
    %v2610 = vrcp.pop %v2590
    %v2611 = vmul.f32 1.0, %v2610
    %v2612 = vrcp.pop %v2591
    %v2613 = vmul.f32 1.0, %v2612
    %v2614 = vrcp.pop %v2592
    %v2615 = vmul.f32 1.0, %v2614
    %v2616 = vrcp.pop %v2593
    %v2617 = vmul.f32 1.0, %v2616
    %v2618 = vtanh.pop %v2536
    %v2619 = vtanh.pop %v2537
    %v2620 = vtanh.pop %v2544
    %v2621 = vtanh.pop %v2545
    %v2622 = vmul.f32 %v2599, %v2328
    %v2623 = vmul.f32 %v2601, %v2329
    %v2624 = vmul.f32 %v2611, %v2330
    %v2625 = vmul.f32 %v2613, %v2331
    %v2626 = vmul.f32 %v2595, %v2618
    %v2627 = vmul.f32 %v2597, %v2619
    %v2628 = vmul.f32 %v2607, %v2620
    %v2629 = vmul.f32 %v2609, %v2621
    %v2630 = vadd.f32 %v2622, %v2626
    %v2631 = vadd.f32 %v2623, %v2627
    %v2632 = vadd.f32 %v2624, %v2628
    %v2633 = vadd.f32 %v2625, %v2629
    %v2634 = vtanh.pop %v2630
    %v2635 = vtanh.pop %v2631
    %v2636 = vtanh.pop %v2632
    %v2637 = vtanh.pop %v2633
    %v2638 = vmul.f32 %v2603, %v2634
    %v2639 = vmul.f32 %v2605, %v2635
    %v2640 = vmul.f32 %v2615, %v2636
    %v2641 = vmul.f32 %v2617, %v2637
    %s2642 = smul.u32 4, 64
    %s2643 = smul.u32 %s2642, 8
    %s2644 = sshll.u32 %s2643, 4
    %2645 = dma.done [#allocation6], %s2644
    %v2646 = vld [vmem:[#allocation4] sm:$0xff]
    %v2647 = vld [vmem:[#allocation4 + $0x8] sm:$0xff]
    %v2648 = vld [vmem:[#allocation4 + $0x10] sm:$0xff]
    %v2649 = vld [vmem:[#allocation4 + $0x18] sm:$0xff]
    %v2650 = vld [vmem:[#allocation4 + $0x20] sm:$0xff]
    %v2651 = vld [vmem:[#allocation4 + $0x28] sm:$0xff]
    %v2652 = vld [vmem:[#allocation4 + $0x30] sm:$0xff]
    %v2653 = vld [vmem:[#allocation4 + $0x38] sm:$0xff]
    %v2654 = vld [vmem:[#allocation4 + $0x40] sm:$0xff]
    %v2655 = vld [vmem:[#allocation4 + $0x48] sm:$0xff]
    %v2656 = vld [vmem:[#allocation4 + $0x50] sm:$0xff]
    %v2657 = vld [vmem:[#allocation4 + $0x58] sm:$0xff]
    %v2658 = vld [vmem:[#allocation4 + $0x60] sm:$0xff]
    %v2659 = vld [vmem:[#allocation4 + $0x68] sm:$0xff]
    %v2660 = vld [vmem:[#allocation4 + $0x70] sm:$0xff]
    %v2661 = vld [vmem:[#allocation4 + $0x78] sm:$0xff]
    %v2662 = vld [vmem:[#allocation4 + $0x80] sm:$0xff]
    %v2663 = vld [vmem:[#allocation4 + $0x88] sm:$0xff]
    %v2664 = vld [vmem:[#allocation4 + $0x90] sm:$0xff]
    %v2665 = vld [vmem:[#allocation4 + $0x98] sm:$0xff]
    %v2666 = vld [vmem:[#allocation4 + $0xa0] sm:$0xff]
    %v2667 = vld [vmem:[#allocation4 + $0xa8] sm:$0xff]
    %v2668 = vld [vmem:[#allocation4 + $0xb0] sm:$0xff]
    %v2669 = vld [vmem:[#allocation4 + $0xb8] sm:$0xff]
    %v2670 = vld [vmem:[#allocation4 + $0xc0] sm:$0xff]
    %v2671 = vld [vmem:[#allocation4 + $0xc8] sm:$0xff]
    %v2672 = vld [vmem:[#allocation4 + $0xd0] sm:$0xff]
    %v2673 = vld [vmem:[#allocation4 + $0xd8] sm:$0xff]
    %v2674 = vld [vmem:[#allocation4 + $0xe0] sm:$0xff]
    %v2675 = vld [vmem:[#allocation4 + $0xe8] sm:$0xff]
    %v2676 = vld [vmem:[#allocation4 + $0xf0] sm:$0xff]
    %v2677 = vld [vmem:[#allocation4 + $0xf8] sm:$0xff]
    %v2678 = vld [vmem:[#allocation4 + $0x100] sm:$0xff]
    %v2679 = vld [vmem:[#allocation4 + $0x108] sm:$0xff]
    %v2680 = vld [vmem:[#allocation4 + $0x110] sm:$0xff]
    %v2681 = vld [vmem:[#allocation4 + $0x118] sm:$0xff]
    %v2682 = vld [vmem:[#allocation4 + $0x120] sm:$0xff]
    %v2683 = vld [vmem:[#allocation4 + $0x128] sm:$0xff]
    %v2684 = vld [vmem:[#allocation4 + $0x130] sm:$0xff]
    %v2685 = vld [vmem:[#allocation4 + $0x138] sm:$0xff]
    %v2686 = vld [vmem:[#allocation4 + $0x140] sm:$0xff]
    %v2687 = vld [vmem:[#allocation4 + $0x148] sm:$0xff]
    %v2688 = vld [vmem:[#allocation4 + $0x150] sm:$0xff]
    %v2689 = vld [vmem:[#allocation4 + $0x158] sm:$0xff]
    %v2690 = vld [vmem:[#allocation4 + $0x160] sm:$0xff]
    %v2691 = vld [vmem:[#allocation4 + $0x168] sm:$0xff]
    %v2692 = vld [vmem:[#allocation4 + $0x170] sm:$0xff]
    %v2693 = vld [vmem:[#allocation4 + $0x178] sm:$0xff]
    %v2694 = vld [vmem:[#allocation4 + $0x180] sm:$0xff]
    %v2695 = vld [vmem:[#allocation4 + $0x188] sm:$0xff]
    %v2696 = vld [vmem:[#allocation4 + $0x190] sm:$0xff]
    %v2697 = vld [vmem:[#allocation4 + $0x198] sm:$0xff]
    %v2698 = vld [vmem:[#allocation4 + $0x1a0] sm:$0xff]
    %v2699 = vld [vmem:[#allocation4 + $0x1a8] sm:$0xff]
    %v2700 = vld [vmem:[#allocation4 + $0x1b0] sm:$0xff]
    %v2701 = vld [vmem:[#allocation4 + $0x1b8] sm:$0xff]
    %v2702 = vld [vmem:[#allocation4 + $0x1c0] sm:$0xff]
    %v2703 = vld [vmem:[#allocation4 + $0x1c8] sm:$0xff]
    %v2704 = vld [vmem:[#allocation4 + $0x1d0] sm:$0xff]
    %v2705 = vld [vmem:[#allocation4 + $0x1d8] sm:$0xff]
    %v2706 = vld [vmem:[#allocation4 + $0x1e0] sm:$0xff]
    %v2707 = vld [vmem:[#allocation4 + $0x1e8] sm:$0xff]
    %v2708 = vld [vmem:[#allocation4 + $0x1f0] sm:$0xff]
    %v2709 = vld [vmem:[#allocation4 + $0x1f8] sm:$0xff]
    %v2710 = vld [vmem:[#allocation4 + $0x200] sm:$0xff]
    %v2711 = vld [vmem:[#allocation4 + $0x208] sm:$0xff]
    %v2712 = vld [vmem:[#allocation4 + $0x210] sm:$0xff]
    %v2713 = vld [vmem:[#allocation4 + $0x218] sm:$0xff]
    %v2714 = vld [vmem:[#allocation4 + $0x220] sm:$0xff]
    %v2715 = vld [vmem:[#allocation4 + $0x228] sm:$0xff]
    %v2716 = vld [vmem:[#allocation4 + $0x230] sm:$0xff]
    %v2717 = vld [vmem:[#allocation4 + $0x238] sm:$0xff]
    %v2718 = vld [vmem:[#allocation4 + $0x240] sm:$0xff]
    %v2719 = vld [vmem:[#allocation4 + $0x248] sm:$0xff]
    %v2720 = vld [vmem:[#allocation4 + $0x250] sm:$0xff]
    %v2721 = vld [vmem:[#allocation4 + $0x258] sm:$0xff]
    %v2722 = vld [vmem:[#allocation4 + $0x260] sm:$0xff]
    %v2723 = vld [vmem:[#allocation4 + $0x268] sm:$0xff]
    %v2724 = vld [vmem:[#allocation4 + $0x270] sm:$0xff]
    %v2725 = vld [vmem:[#allocation4 + $0x278] sm:$0xff]
    %v2726 = vld [vmem:[#allocation4 + $0x280] sm:$0xff]
    %v2727 = vld [vmem:[#allocation4 + $0x288] sm:$0xff]
    %v2728 = vld [vmem:[#allocation4 + $0x290] sm:$0xff]
    %v2729 = vld [vmem:[#allocation4 + $0x298] sm:$0xff]
    %v2730 = vld [vmem:[#allocation4 + $0x2a0] sm:$0xff]
    %v2731 = vld [vmem:[#allocation4 + $0x2a8] sm:$0xff]
    %v2732 = vld [vmem:[#allocation4 + $0x2b0] sm:$0xff]
    %v2733 = vld [vmem:[#allocation4 + $0x2b8] sm:$0xff]
    %v2734 = vld [vmem:[#allocation4 + $0x2c0] sm:$0xff]
    %v2735 = vld [vmem:[#allocation4 + $0x2c8] sm:$0xff]
    %v2736 = vld [vmem:[#allocation4 + $0x2d0] sm:$0xff]
    %v2737 = vld [vmem:[#allocation4 + $0x2d8] sm:$0xff]
    %v2738 = vld [vmem:[#allocation4 + $0x2e0] sm:$0xff]
    %v2739 = vld [vmem:[#allocation4 + $0x2e8] sm:$0xff]
    %v2740 = vld [vmem:[#allocation4 + $0x2f0] sm:$0xff]
    %v2741 = vld [vmem:[#allocation4 + $0x2f8] sm:$0xff]
    %v2742 = vld [vmem:[#allocation4 + $0x300] sm:$0xff]
    %v2743 = vld [vmem:[#allocation4 + $0x308] sm:$0xff]
    %v2744 = vld [vmem:[#allocation4 + $0x310] sm:$0xff]
    %v2745 = vld [vmem:[#allocation4 + $0x318] sm:$0xff]
    %v2746 = vld [vmem:[#allocation4 + $0x320] sm:$0xff]
    %v2747 = vld [vmem:[#allocation4 + $0x328] sm:$0xff]
    %v2748 = vld [vmem:[#allocation4 + $0x330] sm:$0xff]
    %v2749 = vld [vmem:[#allocation4 + $0x338] sm:$0xff]
    %v2750 = vld [vmem:[#allocation4 + $0x340] sm:$0xff]
    %v2751 = vld [vmem:[#allocation4 + $0x348] sm:$0xff]
    %v2752 = vld [vmem:[#allocation4 + $0x350] sm:$0xff]
    %v2753 = vld [vmem:[#allocation4 + $0x358] sm:$0xff]
    %v2754 = vld [vmem:[#allocation4 + $0x360] sm:$0xff]
    %v2755 = vld [vmem:[#allocation4 + $0x368] sm:$0xff]
    %v2756 = vld [vmem:[#allocation4 + $0x370] sm:$0xff]
    %v2757 = vld [vmem:[#allocation4 + $0x378] sm:$0xff]
    %v2758 = vld [vmem:[#allocation4 + $0x380] sm:$0xff]
    %v2759 = vld [vmem:[#allocation4 + $0x388] sm:$0xff]
    %v2760 = vld [vmem:[#allocation4 + $0x390] sm:$0xff]
    %v2761 = vld [vmem:[#allocation4 + $0x398] sm:$0xff]
    %v2762 = vld [vmem:[#allocation4 + $0x3a0] sm:$0xff]
    %v2763 = vld [vmem:[#allocation4 + $0x3a8] sm:$0xff]
    %v2764 = vld [vmem:[#allocation4 + $0x3b0] sm:$0xff]
    %v2765 = vld [vmem:[#allocation4 + $0x3b8] sm:$0xff]
    %v2766 = vld [vmem:[#allocation4 + $0x3c0] sm:$0xff]
    %v2767 = vld [vmem:[#allocation4 + $0x3c8] sm:$0xff]
    %v2768 = vld [vmem:[#allocation4 + $0x3d0] sm:$0xff]
    %v2769 = vld [vmem:[#allocation4 + $0x3d8] sm:$0xff]
    %v2770 = vld [vmem:[#allocation4 + $0x3e0] sm:$0xff]
    %v2771 = vld [vmem:[#allocation4 + $0x3e8] sm:$0xff]
    %v2772 = vld [vmem:[#allocation4 + $0x3f0] sm:$0xff]
    %v2773 = vld [vmem:[#allocation4 + $0x3f8] sm:$0xff]
    %v2774 = vld [vmem:[#allocation4 + $0x400] sm:$0xff]
    %v2775 = vld [vmem:[#allocation4 + $0x408] sm:$0xff]
    %v2776 = vld [vmem:[#allocation4 + $0x410] sm:$0xff]
    %v2777 = vld [vmem:[#allocation4 + $0x418] sm:$0xff]
    %v2778 = vld [vmem:[#allocation4 + $0x420] sm:$0xff]
    %v2779 = vld [vmem:[#allocation4 + $0x428] sm:$0xff]
    %v2780 = vld [vmem:[#allocation4 + $0x430] sm:$0xff]
    %v2781 = vld [vmem:[#allocation4 + $0x438] sm:$0xff]
    %v2782 = vld [vmem:[#allocation4 + $0x440] sm:$0xff]
    %v2783 = vld [vmem:[#allocation4 + $0x448] sm:$0xff]
    %v2784 = vld [vmem:[#allocation4 + $0x450] sm:$0xff]
    %v2785 = vld [vmem:[#allocation4 + $0x458] sm:$0xff]
    %v2786 = vld [vmem:[#allocation4 + $0x460] sm:$0xff]
    %v2787 = vld [vmem:[#allocation4 + $0x468] sm:$0xff]
    %v2788 = vld [vmem:[#allocation4 + $0x470] sm:$0xff]
    %v2789 = vld [vmem:[#allocation4 + $0x478] sm:$0xff]
    %v2790 = vld [vmem:[#allocation4 + $0x480] sm:$0xff]
    %v2791 = vld [vmem:[#allocation4 + $0x488] sm:$0xff]
    %v2792 = vld [vmem:[#allocation4 + $0x490] sm:$0xff]
    %v2793 = vld [vmem:[#allocation4 + $0x498] sm:$0xff]
    %v2794 = vld [vmem:[#allocation4 + $0x4a0] sm:$0xff]
    %v2795 = vld [vmem:[#allocation4 + $0x4a8] sm:$0xff]
    %v2796 = vld [vmem:[#allocation4 + $0x4b0] sm:$0xff]
    %v2797 = vld [vmem:[#allocation4 + $0x4b8] sm:$0xff]
    %v2798 = vld [vmem:[#allocation4 + $0x4c0] sm:$0xff]
    %v2799 = vld [vmem:[#allocation4 + $0x4c8] sm:$0xff]
    %v2800 = vld [vmem:[#allocation4 + $0x4d0] sm:$0xff]
    %v2801 = vld [vmem:[#allocation4 + $0x4d8] sm:$0xff]
    %v2802 = vld [vmem:[#allocation4 + $0x4e0] sm:$0xff]
    %v2803 = vld [vmem:[#allocation4 + $0x4e8] sm:$0xff]
    %v2804 = vld [vmem:[#allocation4 + $0x4f0] sm:$0xff]
    %v2805 = vld [vmem:[#allocation4 + $0x4f8] sm:$0xff]
    %v2806 = vld [vmem:[#allocation4 + $0x500] sm:$0xff]
    %v2807 = vld [vmem:[#allocation4 + $0x508] sm:$0xff]
    %v2808 = vld [vmem:[#allocation4 + $0x510] sm:$0xff]
    %v2809 = vld [vmem:[#allocation4 + $0x518] sm:$0xff]
    %v2810 = vld [vmem:[#allocation4 + $0x520] sm:$0xff]
    %v2811 = vld [vmem:[#allocation4 + $0x528] sm:$0xff]
    %v2812 = vld [vmem:[#allocation4 + $0x530] sm:$0xff]
    %v2813 = vld [vmem:[#allocation4 + $0x538] sm:$0xff]
    %v2814 = vld [vmem:[#allocation4 + $0x540] sm:$0xff]
    %v2815 = vld [vmem:[#allocation4 + $0x548] sm:$0xff]
    %v2816 = vld [vmem:[#allocation4 + $0x550] sm:$0xff]
    %v2817 = vld [vmem:[#allocation4 + $0x558] sm:$0xff]
    %v2818 = vld [vmem:[#allocation4 + $0x560] sm:$0xff]
    %v2819 = vld [vmem:[#allocation4 + $0x568] sm:$0xff]
    %v2820 = vld [vmem:[#allocation4 + $0x570] sm:$0xff]
    %v2821 = vld [vmem:[#allocation4 + $0x578] sm:$0xff]
    %v2822 = vld [vmem:[#allocation4 + $0x580] sm:$0xff]
    %v2823 = vld [vmem:[#allocation4 + $0x588] sm:$0xff]
    %v2824 = vld [vmem:[#allocation4 + $0x590] sm:$0xff]
    %v2825 = vld [vmem:[#allocation4 + $0x598] sm:$0xff]
    %v2826 = vld [vmem:[#allocation4 + $0x5a0] sm:$0xff]
    %v2827 = vld [vmem:[#allocation4 + $0x5a8] sm:$0xff]
    %v2828 = vld [vmem:[#allocation4 + $0x5b0] sm:$0xff]
    %v2829 = vld [vmem:[#allocation4 + $0x5b8] sm:$0xff]
    %v2830 = vld [vmem:[#allocation4 + $0x5c0] sm:$0xff]
    %v2831 = vld [vmem:[#allocation4 + $0x5c8] sm:$0xff]
    %v2832 = vld [vmem:[#allocation4 + $0x5d0] sm:$0xff]
    %v2833 = vld [vmem:[#allocation4 + $0x5d8] sm:$0xff]
    %v2834 = vld [vmem:[#allocation4 + $0x5e0] sm:$0xff]
    %v2835 = vld [vmem:[#allocation4 + $0x5e8] sm:$0xff]
    %v2836 = vld [vmem:[#allocation4 + $0x5f0] sm:$0xff]
    %v2837 = vld [vmem:[#allocation4 + $0x5f8] sm:$0xff]
    %v2838 = vld [vmem:[#allocation4 + $0x600] sm:$0xff]
    %v2839 = vld [vmem:[#allocation4 + $0x608] sm:$0xff]
    %v2840 = vld [vmem:[#allocation4 + $0x610] sm:$0xff]
    %v2841 = vld [vmem:[#allocation4 + $0x618] sm:$0xff]
    %v2842 = vld [vmem:[#allocation4 + $0x620] sm:$0xff]
    %v2843 = vld [vmem:[#allocation4 + $0x628] sm:$0xff]
    %v2844 = vld [vmem:[#allocation4 + $0x630] sm:$0xff]
    %v2845 = vld [vmem:[#allocation4 + $0x638] sm:$0xff]
    %v2846 = vld [vmem:[#allocation4 + $0x640] sm:$0xff]
    %v2847 = vld [vmem:[#allocation4 + $0x648] sm:$0xff]
    %v2848 = vld [vmem:[#allocation4 + $0x650] sm:$0xff]
    %v2849 = vld [vmem:[#allocation4 + $0x658] sm:$0xff]
    %v2850 = vld [vmem:[#allocation4 + $0x660] sm:$0xff]
    %v2851 = vld [vmem:[#allocation4 + $0x668] sm:$0xff]
    %v2852 = vld [vmem:[#allocation4 + $0x670] sm:$0xff]
    %v2853 = vld [vmem:[#allocation4 + $0x678] sm:$0xff]
    %v2854 = vld [vmem:[#allocation4 + $0x680] sm:$0xff]
    %v2855 = vld [vmem:[#allocation4 + $0x688] sm:$0xff]
    %v2856 = vld [vmem:[#allocation4 + $0x690] sm:$0xff]
    %v2857 = vld [vmem:[#allocation4 + $0x698] sm:$0xff]
    %v2858 = vld [vmem:[#allocation4 + $0x6a0] sm:$0xff]
    %v2859 = vld [vmem:[#allocation4 + $0x6a8] sm:$0xff]
    %v2860 = vld [vmem:[#allocation4 + $0x6b0] sm:$0xff]
    %v2861 = vld [vmem:[#allocation4 + $0x6b8] sm:$0xff]
    %v2862 = vld [vmem:[#allocation4 + $0x6c0] sm:$0xff]
    %v2863 = vld [vmem:[#allocation4 + $0x6c8] sm:$0xff]
    %v2864 = vld [vmem:[#allocation4 + $0x6d0] sm:$0xff]
    %v2865 = vld [vmem:[#allocation4 + $0x6d8] sm:$0xff]
    %v2866 = vld [vmem:[#allocation4 + $0x6e0] sm:$0xff]
    %v2867 = vld [vmem:[#allocation4 + $0x6e8] sm:$0xff]
    %v2868 = vld [vmem:[#allocation4 + $0x6f0] sm:$0xff]
    %v2869 = vld [vmem:[#allocation4 + $0x6f8] sm:$0xff]
    %v2870 = vld [vmem:[#allocation4 + $0x700] sm:$0xff]
    %v2871 = vld [vmem:[#allocation4 + $0x708] sm:$0xff]
    %v2872 = vld [vmem:[#allocation4 + $0x710] sm:$0xff]
    %v2873 = vld [vmem:[#allocation4 + $0x718] sm:$0xff]
    %v2874 = vld [vmem:[#allocation4 + $0x720] sm:$0xff]
    %v2875 = vld [vmem:[#allocation4 + $0x728] sm:$0xff]
    %v2876 = vld [vmem:[#allocation4 + $0x730] sm:$0xff]
    %v2877 = vld [vmem:[#allocation4 + $0x738] sm:$0xff]
    %v2878 = vld [vmem:[#allocation4 + $0x740] sm:$0xff]
    %v2879 = vld [vmem:[#allocation4 + $0x748] sm:$0xff]
    %v2880 = vld [vmem:[#allocation4 + $0x750] sm:$0xff]
    %v2881 = vld [vmem:[#allocation4 + $0x758] sm:$0xff]
    %v2882 = vld [vmem:[#allocation4 + $0x760] sm:$0xff]
    %v2883 = vld [vmem:[#allocation4 + $0x768] sm:$0xff]
    %v2884 = vld [vmem:[#allocation4 + $0x770] sm:$0xff]
    %v2885 = vld [vmem:[#allocation4 + $0x778] sm:$0xff]
    %v2886 = vld [vmem:[#allocation4 + $0x780] sm:$0xff]
    %v2887 = vld [vmem:[#allocation4 + $0x788] sm:$0xff]
    %v2888 = vld [vmem:[#allocation4 + $0x790] sm:$0xff]
    %v2889 = vld [vmem:[#allocation4 + $0x798] sm:$0xff]
    %v2890 = vld [vmem:[#allocation4 + $0x7a0] sm:$0xff]
    %v2891 = vld [vmem:[#allocation4 + $0x7a8] sm:$0xff]
    %v2892 = vld [vmem:[#allocation4 + $0x7b0] sm:$0xff]
    %v2893 = vld [vmem:[#allocation4 + $0x7b8] sm:$0xff]
    %v2894 = vld [vmem:[#allocation4 + $0x7c0] sm:$0xff]
    %v2895 = vld [vmem:[#allocation4 + $0x7c8] sm:$0xff]
    %v2896 = vld [vmem:[#allocation4 + $0x7d0] sm:$0xff]
    %v2897 = vld [vmem:[#allocation4 + $0x7d8] sm:$0xff]
    %v2898 = vld [vmem:[#allocation4 + $0x7e0] sm:$0xff]
    %v2899 = vld [vmem:[#allocation4 + $0x7e8] sm:$0xff]
    %v2900 = vld [vmem:[#allocation4 + $0x7f0] sm:$0xff]
    %v2901 = vld [vmem:[#allocation4 + $0x7f8] sm:$0xff]
    %v2902 = vpack.c.bf16 %v1391, %v1389
    %v2903 = vpack.c.bf16 %v1392, %v1390
    %v3160 = vunpack.c.l.b16 %v2646
    %v3161 = vunpack.c.h.b16 %v2646
    %v3162 = vunpack.c.l.b16 %v2647
    %v3163 = vunpack.c.h.b16 %v2647
    %v3164 = vunpack.c.l.b16 %v2648
    %v3165 = vunpack.c.h.b16 %v2648
    %v3166 = vunpack.c.l.b16 %v2649
    %v3167 = vunpack.c.h.b16 %v2649
    %v3168 = vunpack.c.l.b16 %v2650
    %v3169 = vunpack.c.h.b16 %v2650
    %v3170 = vunpack.c.l.b16 %v2651
    %v3171 = vunpack.c.h.b16 %v2651
    %v3172 = vunpack.c.l.b16 %v2652
    %v3173 = vunpack.c.h.b16 %v2652
    %v3174 = vunpack.c.l.b16 %v2653
    %v3175 = vunpack.c.h.b16 %v2653
    %v3176 = vunpack.c.l.b16 %v2654
    %v3177 = vunpack.c.h.b16 %v2654
    %v3178 = vunpack.c.l.b16 %v2655
    %v3179 = vunpack.c.h.b16 %v2655
    %v3180 = vunpack.c.l.b16 %v2656
    %v3181 = vunpack.c.h.b16 %v2656
    %v3182 = vunpack.c.l.b16 %v2657
    %v3183 = vunpack.c.h.b16 %v2657
    %v3184 = vunpack.c.l.b16 %v2658
    %v3185 = vunpack.c.h.b16 %v2658
    %v3186 = vunpack.c.l.b16 %v2659
    %v3187 = vunpack.c.h.b16 %v2659
    %v3188 = vunpack.c.l.b16 %v2660
    %v3189 = vunpack.c.h.b16 %v2660
    %v3190 = vunpack.c.l.b16 %v2661
    %v3191 = vunpack.c.h.b16 %v2661
    %v3192 = vunpack.c.l.b16 %v2662
    %v3193 = vunpack.c.h.b16 %v2662
    %v3194 = vunpack.c.l.b16 %v2663
    %v3195 = vunpack.c.h.b16 %v2663
    %v3196 = vunpack.c.l.b16 %v2664
    %v3197 = vunpack.c.h.b16 %v2664
    %v3198 = vunpack.c.l.b16 %v2665
    %v3199 = vunpack.c.h.b16 %v2665
    %v3200 = vunpack.c.l.b16 %v2666
    %v3201 = vunpack.c.h.b16 %v2666
    %v3202 = vunpack.c.l.b16 %v2667
    %v3203 = vunpack.c.h.b16 %v2667
    %v3204 = vunpack.c.l.b16 %v2668
    %v3205 = vunpack.c.h.b16 %v2668
    %v3206 = vunpack.c.l.b16 %v2669
    %v3207 = vunpack.c.h.b16 %v2669
    %v3208 = vunpack.c.l.b16 %v2670
    %v3209 = vunpack.c.h.b16 %v2670
    %v3210 = vunpack.c.l.b16 %v2671
    %v3211 = vunpack.c.h.b16 %v2671
    %v3212 = vunpack.c.l.b16 %v2672
    %v3213 = vunpack.c.h.b16 %v2672
    %v3214 = vunpack.c.l.b16 %v2673
    %v3215 = vunpack.c.h.b16 %v2673
    %v3216 = vunpack.c.l.b16 %v2674
    %v3217 = vunpack.c.h.b16 %v2674
    %v3218 = vunpack.c.l.b16 %v2675
    %v3219 = vunpack.c.h.b16 %v2675
    %v3220 = vunpack.c.l.b16 %v2676
    %v3221 = vunpack.c.h.b16 %v2676
    %v3222 = vunpack.c.l.b16 %v2677
    %v3223 = vunpack.c.h.b16 %v2677
    %v3224 = vunpack.c.l.b16 %v2678
    %v3225 = vunpack.c.h.b16 %v2678
    %v3226 = vunpack.c.l.b16 %v2679
    %v3227 = vunpack.c.h.b16 %v2679
    %v3228 = vunpack.c.l.b16 %v2680
    %v3229 = vunpack.c.h.b16 %v2680
    %v3230 = vunpack.c.l.b16 %v2681
    %v3231 = vunpack.c.h.b16 %v2681
    %v3232 = vunpack.c.l.b16 %v2682
    %v3233 = vunpack.c.h.b16 %v2682
    %v3234 = vunpack.c.l.b16 %v2683
    %v3235 = vunpack.c.h.b16 %v2683
    %v3236 = vunpack.c.l.b16 %v2684
    %v3237 = vunpack.c.h.b16 %v2684
    %v3238 = vunpack.c.l.b16 %v2685
    %v3239 = vunpack.c.h.b16 %v2685
    %v3240 = vunpack.c.l.b16 %v2686
    %v3241 = vunpack.c.h.b16 %v2686
    %v3242 = vunpack.c.l.b16 %v2687
    %v3243 = vunpack.c.h.b16 %v2687
    %v3244 = vunpack.c.l.b16 %v2688
    %v3245 = vunpack.c.h.b16 %v2688
    %v3246 = vunpack.c.l.b16 %v2689
    %v3247 = vunpack.c.h.b16 %v2689
    %v3248 = vunpack.c.l.b16 %v2690
    %v3249 = vunpack.c.h.b16 %v2690
    %v3250 = vunpack.c.l.b16 %v2691
    %v3251 = vunpack.c.h.b16 %v2691
    %v3252 = vunpack.c.l.b16 %v2692
    %v3253 = vunpack.c.h.b16 %v2692
    %v3254 = vunpack.c.l.b16 %v2693
    %v3255 = vunpack.c.h.b16 %v2693
    %v3256 = vunpack.c.l.b16 %v2694
    %v3257 = vunpack.c.h.b16 %v2694
    %v3258 = vunpack.c.l.b16 %v2695
    %v3259 = vunpack.c.h.b16 %v2695
    %v3260 = vunpack.c.l.b16 %v2696
    %v3261 = vunpack.c.h.b16 %v2696
    %v3262 = vunpack.c.l.b16 %v2697
    %v3263 = vunpack.c.h.b16 %v2697
    %v3264 = vunpack.c.l.b16 %v2698
    %v3265 = vunpack.c.h.b16 %v2698
    %v3266 = vunpack.c.l.b16 %v2699
    %v3267 = vunpack.c.h.b16 %v2699
    %v3268 = vunpack.c.l.b16 %v2700
    %v3269 = vunpack.c.h.b16 %v2700
    %v3270 = vunpack.c.l.b16 %v2701
    %v3271 = vunpack.c.h.b16 %v2701
    %v3272 = vunpack.c.l.b16 %v2702
    %v3273 = vunpack.c.h.b16 %v2702
    %v3274 = vunpack.c.l.b16 %v2703
    %v3275 = vunpack.c.h.b16 %v2703
    %v3276 = vunpack.c.l.b16 %v2704
    %v3277 = vunpack.c.h.b16 %v2704
    %v3278 = vunpack.c.l.b16 %v2705
    %v3279 = vunpack.c.h.b16 %v2705
    %v3280 = vunpack.c.l.b16 %v2706
    %v3281 = vunpack.c.h.b16 %v2706
    %v3282 = vunpack.c.l.b16 %v2707
    %v3283 = vunpack.c.h.b16 %v2707
    %v3284 = vunpack.c.l.b16 %v2708
    %v3285 = vunpack.c.h.b16 %v2708
    %v3286 = vunpack.c.l.b16 %v2709
    %v3287 = vunpack.c.h.b16 %v2709
    %v3288 = vunpack.c.l.b16 %v2710
    %v3289 = vunpack.c.h.b16 %v2710
    %v3290 = vunpack.c.l.b16 %v2711
    %v3291 = vunpack.c.h.b16 %v2711
    %v3292 = vunpack.c.l.b16 %v2712
    %v3293 = vunpack.c.h.b16 %v2712
    %v3294 = vunpack.c.l.b16 %v2713
    %v3295 = vunpack.c.h.b16 %v2713
    %v3296 = vunpack.c.l.b16 %v2714
    %v3297 = vunpack.c.h.b16 %v2714
    %v3298 = vunpack.c.l.b16 %v2715
    %v3299 = vunpack.c.h.b16 %v2715
    %v3300 = vunpack.c.l.b16 %v2716
    %v3301 = vunpack.c.h.b16 %v2716
    %v3302 = vunpack.c.l.b16 %v2717
    %v3303 = vunpack.c.h.b16 %v2717
    %v3304 = vunpack.c.l.b16 %v2718
    %v3305 = vunpack.c.h.b16 %v2718
    %v3306 = vunpack.c.l.b16 %v2719
    %v3307 = vunpack.c.h.b16 %v2719
    %v3308 = vunpack.c.l.b16 %v2720
    %v3309 = vunpack.c.h.b16 %v2720
    %v3310 = vunpack.c.l.b16 %v2721
    %v3311 = vunpack.c.h.b16 %v2721
    %v3312 = vunpack.c.l.b16 %v2722
    %v3313 = vunpack.c.h.b16 %v2722
    %v3314 = vunpack.c.l.b16 %v2723
    %v3315 = vunpack.c.h.b16 %v2723
    %v3316 = vunpack.c.l.b16 %v2724
    %v3317 = vunpack.c.h.b16 %v2724
    %v3318 = vunpack.c.l.b16 %v2725
    %v3319 = vunpack.c.h.b16 %v2725
    %v3320 = vunpack.c.l.b16 %v2726
    %v3321 = vunpack.c.h.b16 %v2726
    %v3322 = vunpack.c.l.b16 %v2727
    %v3323 = vunpack.c.h.b16 %v2727
    %v3324 = vunpack.c.l.b16 %v2728
    %v3325 = vunpack.c.h.b16 %v2728
    %v3326 = vunpack.c.l.b16 %v2729
    %v3327 = vunpack.c.h.b16 %v2729
    %v3328 = vunpack.c.l.b16 %v2730
    %v3329 = vunpack.c.h.b16 %v2730
    %v3330 = vunpack.c.l.b16 %v2731
    %v3331 = vunpack.c.h.b16 %v2731
    %v3332 = vunpack.c.l.b16 %v2732
    %v3333 = vunpack.c.h.b16 %v2732
    %v3334 = vunpack.c.l.b16 %v2733
    %v3335 = vunpack.c.h.b16 %v2733
    %v3336 = vunpack.c.l.b16 %v2734
    %v3337 = vunpack.c.h.b16 %v2734
    %v3338 = vunpack.c.l.b16 %v2735
    %v3339 = vunpack.c.h.b16 %v2735
    %v3340 = vunpack.c.l.b16 %v2736
    %v3341 = vunpack.c.h.b16 %v2736
    %v3342 = vunpack.c.l.b16 %v2737
    %v3343 = vunpack.c.h.b16 %v2737
    %v3344 = vunpack.c.l.b16 %v2738
    %v3345 = vunpack.c.h.b16 %v2738
    %v3346 = vunpack.c.l.b16 %v2739
    %v3347 = vunpack.c.h.b16 %v2739
    %v3348 = vunpack.c.l.b16 %v2740
    %v3349 = vunpack.c.h.b16 %v2740
    %v3350 = vunpack.c.l.b16 %v2741
    %v3351 = vunpack.c.h.b16 %v2741
    %v3352 = vunpack.c.l.b16 %v2742
    %v3353 = vunpack.c.h.b16 %v2742
    %v3354 = vunpack.c.l.b16 %v2743
    %v3355 = vunpack.c.h.b16 %v2743
    %v3356 = vunpack.c.l.b16 %v2744
    %v3357 = vunpack.c.h.b16 %v2744
    %v3358 = vunpack.c.l.b16 %v2745
    %v3359 = vunpack.c.h.b16 %v2745
    %v3360 = vunpack.c.l.b16 %v2746
    %v3361 = vunpack.c.h.b16 %v2746
    %v3362 = vunpack.c.l.b16 %v2747
    %v3363 = vunpack.c.h.b16 %v2747
    %v3364 = vunpack.c.l.b16 %v2748
    %v3365 = vunpack.c.h.b16 %v2748
    %v3366 = vunpack.c.l.b16 %v2749
    %v3367 = vunpack.c.h.b16 %v2749
    %v3368 = vunpack.c.l.b16 %v2750
    %v3369 = vunpack.c.h.b16 %v2750
    %v3370 = vunpack.c.l.b16 %v2751
    %v3371 = vunpack.c.h.b16 %v2751
    %v3372 = vunpack.c.l.b16 %v2752
    %v3373 = vunpack.c.h.b16 %v2752
    %v3374 = vunpack.c.l.b16 %v2753
    %v3375 = vunpack.c.h.b16 %v2753
    %v3376 = vunpack.c.l.b16 %v2754
    %v3377 = vunpack.c.h.b16 %v2754
    %v3378 = vunpack.c.l.b16 %v2755
    %v3379 = vunpack.c.h.b16 %v2755
    %v3380 = vunpack.c.l.b16 %v2756
    %v3381 = vunpack.c.h.b16 %v2756
    %v3382 = vunpack.c.l.b16 %v2757
    %v3383 = vunpack.c.h.b16 %v2757
    %v3384 = vunpack.c.l.b16 %v2758
    %v3385 = vunpack.c.h.b16 %v2758
    %v3386 = vunpack.c.l.b16 %v2759
    %v3387 = vunpack.c.h.b16 %v2759
    %v3388 = vunpack.c.l.b16 %v2760
    %v3389 = vunpack.c.h.b16 %v2760
    %v3390 = vunpack.c.l.b16 %v2761
    %v3391 = vunpack.c.h.b16 %v2761
    %v3392 = vunpack.c.l.b16 %v2762
    %v3393 = vunpack.c.h.b16 %v2762
    %v3394 = vunpack.c.l.b16 %v2763
    %v3395 = vunpack.c.h.b16 %v2763
    %v3396 = vunpack.c.l.b16 %v2764
    %v3397 = vunpack.c.h.b16 %v2764
    %v3398 = vunpack.c.l.b16 %v2765
    %v3399 = vunpack.c.h.b16 %v2765
    %v3400 = vunpack.c.l.b16 %v2766
    %v3401 = vunpack.c.h.b16 %v2766
    %v3402 = vunpack.c.l.b16 %v2767
    %v3403 = vunpack.c.h.b16 %v2767
    %v3404 = vunpack.c.l.b16 %v2768
    %v3405 = vunpack.c.h.b16 %v2768
    %v3406 = vunpack.c.l.b16 %v2769
    %v3407 = vunpack.c.h.b16 %v2769
    %v3408 = vunpack.c.l.b16 %v2770
    %v3409 = vunpack.c.h.b16 %v2770
    %v3410 = vunpack.c.l.b16 %v2771
    %v3411 = vunpack.c.h.b16 %v2771
    %v3412 = vunpack.c.l.b16 %v2772
    %v3413 = vunpack.c.h.b16 %v2772
    %v3414 = vunpack.c.l.b16 %v2773
    %v3415 = vunpack.c.h.b16 %v2773
    %v3416 = vunpack.c.l.b16 %v2774
    %v3417 = vunpack.c.h.b16 %v2774
    %v3418 = vunpack.c.l.b16 %v2775
    %v3419 = vunpack.c.h.b16 %v2775
    %v3420 = vunpack.c.l.b16 %v2776
    %v3421 = vunpack.c.h.b16 %v2776
    %v3422 = vunpack.c.l.b16 %v2777
    %v3423 = vunpack.c.h.b16 %v2777
    %v3424 = vunpack.c.l.b16 %v2778
    %v3425 = vunpack.c.h.b16 %v2778
    %v3426 = vunpack.c.l.b16 %v2779
    %v3427 = vunpack.c.h.b16 %v2779
    %v3428 = vunpack.c.l.b16 %v2780
    %v3429 = vunpack.c.h.b16 %v2780
    %v3430 = vunpack.c.l.b16 %v2781
    %v3431 = vunpack.c.h.b16 %v2781
    %v3432 = vunpack.c.l.b16 %v2782
    %v3433 = vunpack.c.h.b16 %v2782
    %v3434 = vunpack.c.l.b16 %v2783
    %v3435 = vunpack.c.h.b16 %v2783
    %v3436 = vunpack.c.l.b16 %v2784
    %v3437 = vunpack.c.h.b16 %v2784
    %v3438 = vunpack.c.l.b16 %v2785
    %v3439 = vunpack.c.h.b16 %v2785
    %v3440 = vunpack.c.l.b16 %v2786
    %v3441 = vunpack.c.h.b16 %v2786
    %v3442 = vunpack.c.l.b16 %v2787
    %v3443 = vunpack.c.h.b16 %v2787
    %v3444 = vunpack.c.l.b16 %v2788
    %v3445 = vunpack.c.h.b16 %v2788
    %v3446 = vunpack.c.l.b16 %v2789
    %v3447 = vunpack.c.h.b16 %v2789
    %v3448 = vunpack.c.l.b16 %v2790
    %v3449 = vunpack.c.h.b16 %v2790
    %v3450 = vunpack.c.l.b16 %v2791
    %v3451 = vunpack.c.h.b16 %v2791
    %v3452 = vunpack.c.l.b16 %v2792
    %v3453 = vunpack.c.h.b16 %v2792
    %v3454 = vunpack.c.l.b16 %v2793
    %v3455 = vunpack.c.h.b16 %v2793
    %v3456 = vunpack.c.l.b16 %v2794
    %v3457 = vunpack.c.h.b16 %v2794
    %v3458 = vunpack.c.l.b16 %v2795
    %v3459 = vunpack.c.h.b16 %v2795
    %v3460 = vunpack.c.l.b16 %v2796
    %v3461 = vunpack.c.h.b16 %v2796
    %v3462 = vunpack.c.l.b16 %v2797
    %v3463 = vunpack.c.h.b16 %v2797
    %v3464 = vunpack.c.l.b16 %v2798
    %v3465 = vunpack.c.h.b16 %v2798
    %v3466 = vunpack.c.l.b16 %v2799
    %v3467 = vunpack.c.h.b16 %v2799
    %v3468 = vunpack.c.l.b16 %v2800
    %v3469 = vunpack.c.h.b16 %v2800
    %v3470 = vunpack.c.l.b16 %v2801
    %v3471 = vunpack.c.h.b16 %v2801
    %v3472 = vunpack.c.l.b16 %v2802
    %v3473 = vunpack.c.h.b16 %v2802
    %v3474 = vunpack.c.l.b16 %v2803
    %v3475 = vunpack.c.h.b16 %v2803
    %v3476 = vunpack.c.l.b16 %v2804
    %v3477 = vunpack.c.h.b16 %v2804
    %v3478 = vunpack.c.l.b16 %v2805
    %v3479 = vunpack.c.h.b16 %v2805
    %v3480 = vunpack.c.l.b16 %v2806
    %v3481 = vunpack.c.h.b16 %v2806
    %v3482 = vunpack.c.l.b16 %v2807
    %v3483 = vunpack.c.h.b16 %v2807
    %v3484 = vunpack.c.l.b16 %v2808
    %v3485 = vunpack.c.h.b16 %v2808
    %v3486 = vunpack.c.l.b16 %v2809
    %v3487 = vunpack.c.h.b16 %v2809
    %v3488 = vunpack.c.l.b16 %v2810
    %v3489 = vunpack.c.h.b16 %v2810
    %v3490 = vunpack.c.l.b16 %v2811
    %v3491 = vunpack.c.h.b16 %v2811
    %v3492 = vunpack.c.l.b16 %v2812
    %v3493 = vunpack.c.h.b16 %v2812
    %v3494 = vunpack.c.l.b16 %v2813
    %v3495 = vunpack.c.h.b16 %v2813
    %v3496 = vunpack.c.l.b16 %v2814
    %v3497 = vunpack.c.h.b16 %v2814
    %v3498 = vunpack.c.l.b16 %v2815
    %v3499 = vunpack.c.h.b16 %v2815
    %v3500 = vunpack.c.l.b16 %v2816
    %v3501 = vunpack.c.h.b16 %v2816
    %v3502 = vunpack.c.l.b16 %v2817
    %v3503 = vunpack.c.h.b16 %v2817
    %v3504 = vunpack.c.l.b16 %v2818
    %v3505 = vunpack.c.h.b16 %v2818
    %v3506 = vunpack.c.l.b16 %v2819
    %v3507 = vunpack.c.h.b16 %v2819
    %v3508 = vunpack.c.l.b16 %v2820
    %v3509 = vunpack.c.h.b16 %v2820
    %v3510 = vunpack.c.l.b16 %v2821
    %v3511 = vunpack.c.h.b16 %v2821
    %v3512 = vunpack.c.l.b16 %v2822
    %v3513 = vunpack.c.h.b16 %v2822
    %v3514 = vunpack.c.l.b16 %v2823
    %v3515 = vunpack.c.h.b16 %v2823
    %v3516 = vunpack.c.l.b16 %v2824
    %v3517 = vunpack.c.h.b16 %v2824
    %v3518 = vunpack.c.l.b16 %v2825
    %v3519 = vunpack.c.h.b16 %v2825
    %v3520 = vunpack.c.l.b16 %v2826
    %v3521 = vunpack.c.h.b16 %v2826
    %v3522 = vunpack.c.l.b16 %v2827
    %v3523 = vunpack.c.h.b16 %v2827
    %v3524 = vunpack.c.l.b16 %v2828
    %v3525 = vunpack.c.h.b16 %v2828
    %v3526 = vunpack.c.l.b16 %v2829
    %v3527 = vunpack.c.h.b16 %v2829
    %v3528 = vunpack.c.l.b16 %v2830
    %v3529 = vunpack.c.h.b16 %v2830
    %v3530 = vunpack.c.l.b16 %v2831
    %v3531 = vunpack.c.h.b16 %v2831
    %v3532 = vunpack.c.l.b16 %v2832
    %v3533 = vunpack.c.h.b16 %v2832
    %v3534 = vunpack.c.l.b16 %v2833
    %v3535 = vunpack.c.h.b16 %v2833
    %v3536 = vunpack.c.l.b16 %v2834
    %v3537 = vunpack.c.h.b16 %v2834
    %v3538 = vunpack.c.l.b16 %v2835
    %v3539 = vunpack.c.h.b16 %v2835
    %v3540 = vunpack.c.l.b16 %v2836
    %v3541 = vunpack.c.h.b16 %v2836
    %v3542 = vunpack.c.l.b16 %v2837
    %v3543 = vunpack.c.h.b16 %v2837
    %v3544 = vunpack.c.l.b16 %v2838
    %v3545 = vunpack.c.h.b16 %v2838
    %v3546 = vunpack.c.l.b16 %v2839
    %v3547 = vunpack.c.h.b16 %v2839
    %v3548 = vunpack.c.l.b16 %v2840
    %v3549 = vunpack.c.h.b16 %v2840
    %v3550 = vunpack.c.l.b16 %v2841
    %v3551 = vunpack.c.h.b16 %v2841
    %v3552 = vunpack.c.l.b16 %v2842
    %v3553 = vunpack.c.h.b16 %v2842
    %v3554 = vunpack.c.l.b16 %v2843
    %v3555 = vunpack.c.h.b16 %v2843
    %v3556 = vunpack.c.l.b16 %v2844
    %v3557 = vunpack.c.h.b16 %v2844
    %v3558 = vunpack.c.l.b16 %v2845
    %v3559 = vunpack.c.h.b16 %v2845
    %v3560 = vunpack.c.l.b16 %v2846
    %v3561 = vunpack.c.h.b16 %v2846
    %v3562 = vunpack.c.l.b16 %v2847
    %v3563 = vunpack.c.h.b16 %v2847
    %v3564 = vunpack.c.l.b16 %v2848
    %v3565 = vunpack.c.h.b16 %v2848
    %v3566 = vunpack.c.l.b16 %v2849
    %v3567 = vunpack.c.h.b16 %v2849
    %v3568 = vunpack.c.l.b16 %v2850
    %v3569 = vunpack.c.h.b16 %v2850
    %v3570 = vunpack.c.l.b16 %v2851
    %v3571 = vunpack.c.h.b16 %v2851
    %v3572 = vunpack.c.l.b16 %v2852
    %v3573 = vunpack.c.h.b16 %v2852
    %v3574 = vunpack.c.l.b16 %v2853
    %v3575 = vunpack.c.h.b16 %v2853
    %v3576 = vunpack.c.l.b16 %v2854
    %v3577 = vunpack.c.h.b16 %v2854
    %v3578 = vunpack.c.l.b16 %v2855
    %v3579 = vunpack.c.h.b16 %v2855
    %v3580 = vunpack.c.l.b16 %v2856
    %v3581 = vunpack.c.h.b16 %v2856
    %v3582 = vunpack.c.l.b16 %v2857
    %v3583 = vunpack.c.h.b16 %v2857
    %v3584 = vunpack.c.l.b16 %v2858
    %v3585 = vunpack.c.h.b16 %v2858
    %v3586 = vunpack.c.l.b16 %v2859
    %v3587 = vunpack.c.h.b16 %v2859
    %v3588 = vunpack.c.l.b16 %v2860
    %v3589 = vunpack.c.h.b16 %v2860
    %v3590 = vunpack.c.l.b16 %v2861
    %v3591 = vunpack.c.h.b16 %v2861
    %v3592 = vunpack.c.l.b16 %v2862
    %v3593 = vunpack.c.h.b16 %v2862
    %v3594 = vunpack.c.l.b16 %v2863
    %v3595 = vunpack.c.h.b16 %v2863
    %v3596 = vunpack.c.l.b16 %v2864
    %v3597 = vunpack.c.h.b16 %v2864
    %v3598 = vunpack.c.l.b16 %v2865
    %v3599 = vunpack.c.h.b16 %v2865
    %v3600 = vunpack.c.l.b16 %v2866
    %v3601 = vunpack.c.h.b16 %v2866
    %v3602 = vunpack.c.l.b16 %v2867
    %v3603 = vunpack.c.h.b16 %v2867
    %v3604 = vunpack.c.l.b16 %v2868
    %v3605 = vunpack.c.h.b16 %v2868
    %v3606 = vunpack.c.l.b16 %v2869
    %v3607 = vunpack.c.h.b16 %v2869
    %v3608 = vunpack.c.l.b16 %v2870
    %v3609 = vunpack.c.h.b16 %v2870
    %v3610 = vunpack.c.l.b16 %v2871
    %v3611 = vunpack.c.h.b16 %v2871
    %v3612 = vunpack.c.l.b16 %v2872
    %v3613 = vunpack.c.h.b16 %v2872
    %v3614 = vunpack.c.l.b16 %v2873
    %v3615 = vunpack.c.h.b16 %v2873
    %v3616 = vunpack.c.l.b16 %v2874
    %v3617 = vunpack.c.h.b16 %v2874
    %v3618 = vunpack.c.l.b16 %v2875
    %v3619 = vunpack.c.h.b16 %v2875
    %v3620 = vunpack.c.l.b16 %v2876
    %v3621 = vunpack.c.h.b16 %v2876
    %v3622 = vunpack.c.l.b16 %v2877
    %v3623 = vunpack.c.h.b16 %v2877
    %v3624 = vunpack.c.l.b16 %v2878
    %v3625 = vunpack.c.h.b16 %v2878
    %v3626 = vunpack.c.l.b16 %v2879
    %v3627 = vunpack.c.h.b16 %v2879
    %v3628 = vunpack.c.l.b16 %v2880
    %v3629 = vunpack.c.h.b16 %v2880
    %v3630 = vunpack.c.l.b16 %v2881
    %v3631 = vunpack.c.h.b16 %v2881
    %v3632 = vunpack.c.l.b16 %v2882
    %v3633 = vunpack.c.h.b16 %v2882
    %v3634 = vunpack.c.l.b16 %v2883
    %v3635 = vunpack.c.h.b16 %v2883
    %v3636 = vunpack.c.l.b16 %v2884
    %v3637 = vunpack.c.h.b16 %v2884
    %v3638 = vunpack.c.l.b16 %v2885
    %v3639 = vunpack.c.h.b16 %v2885
    %v3640 = vunpack.c.l.b16 %v2886
    %v3641 = vunpack.c.h.b16 %v2886
    %v3642 = vunpack.c.l.b16 %v2887
    %v3643 = vunpack.c.h.b16 %v2887
    %v3644 = vunpack.c.l.b16 %v2888
    %v3645 = vunpack.c.h.b16 %v2888
    %v3646 = vunpack.c.l.b16 %v2889
    %v3647 = vunpack.c.h.b16 %v2889
    %v3648 = vunpack.c.l.b16 %v2890
    %v3649 = vunpack.c.h.b16 %v2890
    %v3650 = vunpack.c.l.b16 %v2891
    %v3651 = vunpack.c.h.b16 %v2891
    %v3652 = vunpack.c.l.b16 %v2892
    %v3653 = vunpack.c.h.b16 %v2892
    %v3654 = vunpack.c.l.b16 %v2893
    %v3655 = vunpack.c.h.b16 %v2893
    %v3656 = vunpack.c.l.b16 %v2894
    %v3657 = vunpack.c.h.b16 %v2894
    %v3658 = vunpack.c.l.b16 %v2895
    %v3659 = vunpack.c.h.b16 %v2895
    %v3660 = vunpack.c.l.b16 %v2896
    %v3661 = vunpack.c.h.b16 %v2896
    %v3662 = vunpack.c.l.b16 %v2897
    %v3663 = vunpack.c.h.b16 %v2897
    %v3664 = vunpack.c.l.b16 %v2898
    %v3665 = vunpack.c.h.b16 %v2898
    %v3666 = vunpack.c.l.b16 %v2899
    %v3667 = vunpack.c.h.b16 %v2899
    %v3668 = vunpack.c.l.b16 %v2900
    %v3669 = vunpack.c.h.b16 %v2900
    %v3670 = vunpack.c.l.b16 %v2901
    %v3671 = vunpack.c.h.b16 %v2901
    %v3672 = vpack.c.b16 %v3168, %v3160
    %v3673 = vpack.c.b16 %v3169, %v3161
    %v3674 = vpack.c.b16 %v3170, %v3162
    %v3675 = vpack.c.b16 %v3171, %v3163
    %v3676 = vpack.c.b16 %v3172, %v3164
    %v3677 = vpack.c.b16 %v3173, %v3165
    %v3678 = vpack.c.b16 %v3174, %v3166
    %v3679 = vpack.c.b16 %v3175, %v3167
    %v3680 = vpack.c.b16 %v3184, %v3176
    %v3681 = vpack.c.b16 %v3185, %v3177
    %v3682 = vpack.c.b16 %v3186, %v3178
    %v3683 = vpack.c.b16 %v3187, %v3179
    %v3684 = vpack.c.b16 %v3188, %v3180
    %v3685 = vpack.c.b16 %v3189, %v3181
    %v3686 = vpack.c.b16 %v3190, %v3182
    %v3687 = vpack.c.b16 %v3191, %v3183
    %v3688 = vpack.c.b16 %v3200, %v3192
    %v3689 = vpack.c.b16 %v3201, %v3193
    %v3690 = vpack.c.b16 %v3202, %v3194
    %v3691 = vpack.c.b16 %v3203, %v3195
    %v3692 = vpack.c.b16 %v3204, %v3196
    %v3693 = vpack.c.b16 %v3205, %v3197
    %v3694 = vpack.c.b16 %v3206, %v3198
    %v3695 = vpack.c.b16 %v3207, %v3199
    %v3696 = vpack.c.b16 %v3216, %v3208
    %v3697 = vpack.c.b16 %v3217, %v3209
    %v3698 = vpack.c.b16 %v3218, %v3210
    %v3699 = vpack.c.b16 %v3219, %v3211
    %v3700 = vpack.c.b16 %v3220, %v3212
    %v3701 = vpack.c.b16 %v3221, %v3213
    %v3702 = vpack.c.b16 %v3222, %v3214
    %v3703 = vpack.c.b16 %v3223, %v3215
    %v3704 = vpack.c.b16 %v3232, %v3224
    %v3705 = vpack.c.b16 %v3233, %v3225
    %v3706 = vpack.c.b16 %v3234, %v3226
    %v3707 = vpack.c.b16 %v3235, %v3227
    %v3708 = vpack.c.b16 %v3236, %v3228
    %v3709 = vpack.c.b16 %v3237, %v3229
    %v3710 = vpack.c.b16 %v3238, %v3230
    %v3711 = vpack.c.b16 %v3239, %v3231
    %v3712 = vpack.c.b16 %v3248, %v3240
    %v3713 = vpack.c.b16 %v3249, %v3241
    %v3714 = vpack.c.b16 %v3250, %v3242
    %v3715 = vpack.c.b16 %v3251, %v3243
    %v3716 = vpack.c.b16 %v3252, %v3244
    %v3717 = vpack.c.b16 %v3253, %v3245
    %v3718 = vpack.c.b16 %v3254, %v3246
    %v3719 = vpack.c.b16 %v3255, %v3247
    %v3720 = vpack.c.b16 %v3264, %v3256
    %v3721 = vpack.c.b16 %v3265, %v3257
    %v3722 = vpack.c.b16 %v3266, %v3258
    %v3723 = vpack.c.b16 %v3267, %v3259
    %v3724 = vpack.c.b16 %v3268, %v3260
    %v3725 = vpack.c.b16 %v3269, %v3261
    %v3726 = vpack.c.b16 %v3270, %v3262
    %v3727 = vpack.c.b16 %v3271, %v3263
    %v3728 = vpack.c.b16 %v3280, %v3272
    %v3729 = vpack.c.b16 %v3281, %v3273
    %v3730 = vpack.c.b16 %v3282, %v3274
    %v3731 = vpack.c.b16 %v3283, %v3275
    %v3732 = vpack.c.b16 %v3284, %v3276
    %v3733 = vpack.c.b16 %v3285, %v3277
    %v3734 = vpack.c.b16 %v3286, %v3278
    %v3735 = vpack.c.b16 %v3287, %v3279
    %v3736 = vpack.c.b16 %v3296, %v3288
    %v3737 = vpack.c.b16 %v3297, %v3289
    %v3738 = vpack.c.b16 %v3298, %v3290
    %v3739 = vpack.c.b16 %v3299, %v3291
    %v3740 = vpack.c.b16 %v3300, %v3292
    %v3741 = vpack.c.b16 %v3301, %v3293
    %v3742 = vpack.c.b16 %v3302, %v3294
    %v3743 = vpack.c.b16 %v3303, %v3295
    %v3744 = vpack.c.b16 %v3312, %v3304
    %v3745 = vpack.c.b16 %v3313, %v3305
    %v3746 = vpack.c.b16 %v3314, %v3306
    %v3747 = vpack.c.b16 %v3315, %v3307
    %v3748 = vpack.c.b16 %v3316, %v3308
    %v3749 = vpack.c.b16 %v3317, %v3309
    %v3750 = vpack.c.b16 %v3318, %v3310
    %v3751 = vpack.c.b16 %v3319, %v3311
    %v3752 = vpack.c.b16 %v3328, %v3320
    %v3753 = vpack.c.b16 %v3329, %v3321
    %v3754 = vpack.c.b16 %v3330, %v3322
    %v3755 = vpack.c.b16 %v3331, %v3323
    %v3756 = vpack.c.b16 %v3332, %v3324
    %v3757 = vpack.c.b16 %v3333, %v3325
    %v3758 = vpack.c.b16 %v3334, %v3326
    %v3759 = vpack.c.b16 %v3335, %v3327
    %v3760 = vpack.c.b16 %v3344, %v3336
    %v3761 = vpack.c.b16 %v3345, %v3337
    %v3762 = vpack.c.b16 %v3346, %v3338
    %v3763 = vpack.c.b16 %v3347, %v3339
    %v3764 = vpack.c.b16 %v3348, %v3340
    %v3765 = vpack.c.b16 %v3349, %v3341
    %v3766 = vpack.c.b16 %v3350, %v3342
    %v3767 = vpack.c.b16 %v3351, %v3343
    %v3768 = vpack.c.b16 %v3360, %v3352
    %v3769 = vpack.c.b16 %v3361, %v3353
    %v3770 = vpack.c.b16 %v3362, %v3354
    %v3771 = vpack.c.b16 %v3363, %v3355
    %v3772 = vpack.c.b16 %v3364, %v3356
    %v3773 = vpack.c.b16 %v3365, %v3357
    %v3774 = vpack.c.b16 %v3366, %v3358
    %v3775 = vpack.c.b16 %v3367, %v3359
    %v3776 = vpack.c.b16 %v3376, %v3368
    %v3777 = vpack.c.b16 %v3377, %v3369
    %v3778 = vpack.c.b16 %v3378, %v3370
    %v3779 = vpack.c.b16 %v3379, %v3371
    %v3780 = vpack.c.b16 %v3380, %v3372
    %v3781 = vpack.c.b16 %v3381, %v3373
    %v3782 = vpack.c.b16 %v3382, %v3374
    %v3783 = vpack.c.b16 %v3383, %v3375
    %v3784 = vpack.c.b16 %v3392, %v3384
    %v3785 = vpack.c.b16 %v3393, %v3385
    %v3786 = vpack.c.b16 %v3394, %v3386
    %v3787 = vpack.c.b16 %v3395, %v3387
    %v3788 = vpack.c.b16 %v3396, %v3388
    %v3789 = vpack.c.b16 %v3397, %v3389
    %v3790 = vpack.c.b16 %v3398, %v3390
    %v3791 = vpack.c.b16 %v3399, %v3391
    %v3792 = vpack.c.b16 %v3408, %v3400
    %v3793 = vpack.c.b16 %v3409, %v3401
    %v3794 = vpack.c.b16 %v3410, %v3402
    %v3795 = vpack.c.b16 %v3411, %v3403
    %v3796 = vpack.c.b16 %v3412, %v3404
    %v3797 = vpack.c.b16 %v3413, %v3405
    %v3798 = vpack.c.b16 %v3414, %v3406
    %v3799 = vpack.c.b16 %v3415, %v3407
    %v3800 = vpack.c.b16 %v3424, %v3416
    %v3801 = vpack.c.b16 %v3425, %v3417
    %v3802 = vpack.c.b16 %v3426, %v3418
    %v3803 = vpack.c.b16 %v3427, %v3419
    %v3804 = vpack.c.b16 %v3428, %v3420
    %v3805 = vpack.c.b16 %v3429, %v3421
    %v3806 = vpack.c.b16 %v3430, %v3422
    %v3807 = vpack.c.b16 %v3431, %v3423
    %v3808 = vpack.c.b16 %v3440, %v3432
    %v3809 = vpack.c.b16 %v3441, %v3433
    %v3810 = vpack.c.b16 %v3442, %v3434
    %v3811 = vpack.c.b16 %v3443, %v3435
    %v3812 = vpack.c.b16 %v3444, %v3436
    %v3813 = vpack.c.b16 %v3445, %v3437
    %v3814 = vpack.c.b16 %v3446, %v3438
    %v3815 = vpack.c.b16 %v3447, %v3439
    %v3816 = vpack.c.b16 %v3456, %v3448
    %v3817 = vpack.c.b16 %v3457, %v3449
    %v3818 = vpack.c.b16 %v3458, %v3450
    %v3819 = vpack.c.b16 %v3459, %v3451
    %v3820 = vpack.c.b16 %v3460, %v3452
    %v3821 = vpack.c.b16 %v3461, %v3453
    %v3822 = vpack.c.b16 %v3462, %v3454
    %v3823 = vpack.c.b16 %v3463, %v3455
    %v3824 = vpack.c.b16 %v3472, %v3464
    %v3825 = vpack.c.b16 %v3473, %v3465
    %v3826 = vpack.c.b16 %v3474, %v3466
    %v3827 = vpack.c.b16 %v3475, %v3467
    %v3828 = vpack.c.b16 %v3476, %v3468
    %v3829 = vpack.c.b16 %v3477, %v3469
    %v3830 = vpack.c.b16 %v3478, %v3470
    %v3831 = vpack.c.b16 %v3479, %v3471
    %v3832 = vpack.c.b16 %v3488, %v3480
    %v3833 = vpack.c.b16 %v3489, %v3481
    %v3834 = vpack.c.b16 %v3490, %v3482
    %v3835 = vpack.c.b16 %v3491, %v3483
    %v3836 = vpack.c.b16 %v3492, %v3484
    %v3837 = vpack.c.b16 %v3493, %v3485
    %v3838 = vpack.c.b16 %v3494, %v3486
    %v3839 = vpack.c.b16 %v3495, %v3487
    %v3840 = vpack.c.b16 %v3504, %v3496
    %v3841 = vpack.c.b16 %v3505, %v3497
    %v3842 = vpack.c.b16 %v3506, %v3498
    %v3843 = vpack.c.b16 %v3507, %v3499
    %v3844 = vpack.c.b16 %v3508, %v3500
    %v3845 = vpack.c.b16 %v3509, %v3501
    %v3846 = vpack.c.b16 %v3510, %v3502
    %v3847 = vpack.c.b16 %v3511, %v3503
    %v3848 = vpack.c.b16 %v3520, %v3512
    %v3849 = vpack.c.b16 %v3521, %v3513
    %v3850 = vpack.c.b16 %v3522, %v3514
    %v3851 = vpack.c.b16 %v3523, %v3515
    %v3852 = vpack.c.b16 %v3524, %v3516
    %v3853 = vpack.c.b16 %v3525, %v3517
    %v3854 = vpack.c.b16 %v3526, %v3518
    %v3855 = vpack.c.b16 %v3527, %v3519
    %v3856 = vpack.c.b16 %v3536, %v3528
    %v3857 = vpack.c.b16 %v3537, %v3529
    %v3858 = vpack.c.b16 %v3538, %v3530
    %v3859 = vpack.c.b16 %v3539, %v3531
    %v3860 = vpack.c.b16 %v3540, %v3532
    %v3861 = vpack.c.b16 %v3541, %v3533
    %v3862 = vpack.c.b16 %v3542, %v3534
    %v3863 = vpack.c.b16 %v3543, %v3535
    %v3864 = vpack.c.b16 %v3552, %v3544
    %v3865 = vpack.c.b16 %v3553, %v3545
    %v3866 = vpack.c.b16 %v3554, %v3546
    %v3867 = vpack.c.b16 %v3555, %v3547
    %v3868 = vpack.c.b16 %v3556, %v3548
    %v3869 = vpack.c.b16 %v3557, %v3549
    %v3870 = vpack.c.b16 %v3558, %v3550
    %v3871 = vpack.c.b16 %v3559, %v3551
    %v3872 = vpack.c.b16 %v3568, %v3560
    %v3873 = vpack.c.b16 %v3569, %v3561
    %v3874 = vpack.c.b16 %v3570, %v3562
    %v3875 = vpack.c.b16 %v3571, %v3563
    %v3876 = vpack.c.b16 %v3572, %v3564
    %v3877 = vpack.c.b16 %v3573, %v3565
    %v3878 = vpack.c.b16 %v3574, %v3566
    %v3879 = vpack.c.b16 %v3575, %v3567
    %v3880 = vpack.c.b16 %v3584, %v3576
    %v3881 = vpack.c.b16 %v3585, %v3577
    %v3882 = vpack.c.b16 %v3586, %v3578
    %v3883 = vpack.c.b16 %v3587, %v3579
    %v3884 = vpack.c.b16 %v3588, %v3580
    %v3885 = vpack.c.b16 %v3589, %v3581
    %v3886 = vpack.c.b16 %v3590, %v3582
    %v3887 = vpack.c.b16 %v3591, %v3583
    %v3888 = vpack.c.b16 %v3600, %v3592
    %v3889 = vpack.c.b16 %v3601, %v3593
    %v3890 = vpack.c.b16 %v3602, %v3594
    %v3891 = vpack.c.b16 %v3603, %v3595
    %v3892 = vpack.c.b16 %v3604, %v3596
    %v3893 = vpack.c.b16 %v3605, %v3597
    %v3894 = vpack.c.b16 %v3606, %v3598
    %v3895 = vpack.c.b16 %v3607, %v3599
    %v3896 = vpack.c.b16 %v3616, %v3608
    %v3897 = vpack.c.b16 %v3617, %v3609
    %v3898 = vpack.c.b16 %v3618, %v3610
    %v3899 = vpack.c.b16 %v3619, %v3611
    %v3900 = vpack.c.b16 %v3620, %v3612
    %v3901 = vpack.c.b16 %v3621, %v3613
    %v3902 = vpack.c.b16 %v3622, %v3614
    %v3903 = vpack.c.b16 %v3623, %v3615
    %v3904 = vpack.c.b16 %v3632, %v3624
    %v3905 = vpack.c.b16 %v3633, %v3625
    %v3906 = vpack.c.b16 %v3634, %v3626
    %v3907 = vpack.c.b16 %v3635, %v3627
    %v3908 = vpack.c.b16 %v3636, %v3628
    %v3909 = vpack.c.b16 %v3637, %v3629
    %v3910 = vpack.c.b16 %v3638, %v3630
    %v3911 = vpack.c.b16 %v3639, %v3631
    %v3912 = vpack.c.b16 %v3648, %v3640
    %v3913 = vpack.c.b16 %v3649, %v3641
    %v3914 = vpack.c.b16 %v3650, %v3642
    %v3915 = vpack.c.b16 %v3651, %v3643
    %v3916 = vpack.c.b16 %v3652, %v3644
    %v3917 = vpack.c.b16 %v3653, %v3645
    %v3918 = vpack.c.b16 %v3654, %v3646
    %v3919 = vpack.c.b16 %v3655, %v3647
    %v3920 = vpack.c.b16 %v3664, %v3656
    %v3921 = vpack.c.b16 %v3665, %v3657
    %v3922 = vpack.c.b16 %v3666, %v3658
    %v3923 = vpack.c.b16 %v3667, %v3659
    %v3924 = vpack.c.b16 %v3668, %v3660
    %v3925 = vpack.c.b16 %v3669, %v3661
    %v3926 = vpack.c.b16 %v3670, %v3662
    %v3927 = vpack.c.b16 %v3671, %v3663
    %4184 = vmatprep.subr.bf16.mxu0 %v3729
    %4185 = vmatpush1.bf16.msra.mxu0 %v3728
    %4186 = vmatprep.subr.bf16.mxu0 %v3721
    %4187 = vmatpush1.bf16.msra.mxu0 %v3720
    %4188 = vmatprep.subr.bf16.mxu0 %v3713
    %4189 = vmatpush1.bf16.msra.mxu0 %v3712
    %4190 = vmatprep.subr.bf16.mxu0 %v3705
    %4191 = vmatpush1.bf16.msra.mxu0 %v3704
    %4192 = vmatprep.subr.bf16.mxu0 %v3697
    %4193 = vmatpush1.bf16.msra.mxu0 %v3696
    %4194 = vmatprep.subr.bf16.mxu0 %v3689
    %4195 = vmatpush1.bf16.msra.mxu0 %v3688
    %4196 = vmatprep.subr.bf16.mxu0 %v3681
    %4197 = vmatpush1.bf16.msra.mxu0 %v3680
    %4198 = vmatprep.subr.bf16.mxu0 %v3673
    %4199 = vmatpush1.bf16.msra.mxu0 %v3672
    %4200 = vmatprep.subr.bf16.mxu0 %v3793
    %4201 = vmatpush2.bf16.msra.mxu0 %v3792
    %4202 = vmatprep.subr.bf16.mxu0 %v3785
    %4203 = vmatpush2.bf16.msra.mxu0 %v3784
    %4204 = vmatprep.subr.bf16.mxu0 %v3777
    %4205 = vmatpush2.bf16.msra.mxu0 %v3776
    %4206 = vmatprep.subr.bf16.mxu0 %v3769
    %4207 = vmatpush2.bf16.msra.mxu0 %v3768
    %4208 = vmatprep.subr.bf16.mxu0 %v3761
    %4209 = vmatpush2.bf16.msra.mxu0 %v3760
    %4210 = vmatprep.subr.bf16.mxu0 %v3753
    %4211 = vmatpush2.bf16.msra.mxu0 %v3752
    %4212 = vmatprep.subr.bf16.mxu0 %v3745
    %4213 = vmatpush2.bf16.msra.mxu0 %v3744
    %4214 = vmatprep.subr.bf16.mxu0 %v3737
    %4215 = vmatpush2.bf16.msra.mxu0 %v3736
    %4216 = vmatprep.mubr.bf16.mxu0 %v2357
    %4217 = vmatmul.mubr.bf16.gmra.mxu0 %v2356
    %v4218 = vpop.f32.mrf.mxu0
    %v4219 = vadd.f32 %v1343, %v4218
    %v4220 = vpop.f32.mrf.mxu0
    %v4221 = vadd.f32 %v1347, %v4220
    %v4222 = vpop.f32.mrf.mxu0
    %v4223 = vadd.f32 %v1343, %v4222
    %v4224 = vpop.f32.mrf.mxu0
    %v4225 = vadd.f32 %v1347, %v4224
    %4226 = vdwg.mxu0
    %4227 = vmatprep.subr.bf16.mxu0 %v3857
    %4228 = vmatpush1.bf16.msra.mxu0 %v3856
    %4229 = vmatprep.subr.bf16.mxu0 %v3849
    %4230 = vmatpush1.bf16.msra.mxu0 %v3848
    %4231 = vmatprep.subr.bf16.mxu0 %v3841
    %4232 = vmatpush1.bf16.msra.mxu0 %v3840
    %4233 = vmatprep.subr.bf16.mxu0 %v3833
    %4234 = vmatpush1.bf16.msra.mxu0 %v3832
    %4235 = vmatprep.subr.bf16.mxu0 %v3825
    %4236 = vmatpush1.bf16.msra.mxu0 %v3824
    %4237 = vmatprep.subr.bf16.mxu0 %v3817
    %4238 = vmatpush1.bf16.msra.mxu0 %v3816
    %4239 = vmatprep.subr.bf16.mxu0 %v3809
    %4240 = vmatpush1.bf16.msra.mxu0 %v3808
    %4241 = vmatprep.subr.bf16.mxu0 %v3801
    %4242 = vmatpush1.bf16.msra.mxu0 %v3800
    %4243 = vmatprep.subr.bf16.mxu0 %v3921
    %4244 = vmatpush2.bf16.msra.mxu0 %v3920
    %4245 = vmatprep.subr.bf16.mxu0 %v3913
    %4246 = vmatpush2.bf16.msra.mxu0 %v3912
    %4247 = vmatprep.subr.bf16.mxu0 %v3905
    %4248 = vmatpush2.bf16.msra.mxu0 %v3904
    %4249 = vmatprep.subr.bf16.mxu0 %v3897
    %4250 = vmatpush2.bf16.msra.mxu0 %v3896
    %4251 = vmatprep.subr.bf16.mxu0 %v3889
    %4252 = vmatpush2.bf16.msra.mxu0 %v3888
    %4253 = vmatprep.subr.bf16.mxu0 %v3881
    %4254 = vmatpush2.bf16.msra.mxu0 %v3880
    %4255 = vmatprep.subr.bf16.mxu0 %v3873
    %4256 = vmatpush2.bf16.msra.mxu0 %v3872
    %4257 = vmatprep.subr.bf16.mxu0 %v3865
    %4258 = vmatpush2.bf16.msra.mxu0 %v3864
    %4259 = vmatprep.mubr.bf16.mxu0 %v2903
    %4260 = vmatmul.mubr.bf16.gmra.mxu0 %v2902
    %v4261 = vpop.f32.mrf.mxu0
    %v4262 = vadd.f32 %v4219, %v4261
    %v4263 = vpop.f32.mrf.mxu0
    %v4264 = vadd.f32 %v4221, %v4263
    %v4265 = vpop.f32.mrf.mxu0
    %v4266 = vadd.f32 %v4223, %v4265
    %v4267 = vpop.f32.mrf.mxu0
    %v4268 = vadd.f32 %v4225, %v4267
    %4269 = vdwg.mxu0
    %4270 = vmatprep.subr.bf16.mxu0 %v3731
    %4271 = vmatpush1.bf16.msra.mxu0 %v3730
    %4272 = vmatprep.subr.bf16.mxu0 %v3723
    %4273 = vmatpush1.bf16.msra.mxu0 %v3722
    %4274 = vmatprep.subr.bf16.mxu0 %v3715
    %4275 = vmatpush1.bf16.msra.mxu0 %v3714
    %4276 = vmatprep.subr.bf16.mxu0 %v3707
    %4277 = vmatpush1.bf16.msra.mxu0 %v3706
    %4278 = vmatprep.subr.bf16.mxu0 %v3699
    %4279 = vmatpush1.bf16.msra.mxu0 %v3698
    %4280 = vmatprep.subr.bf16.mxu0 %v3691
    %4281 = vmatpush1.bf16.msra.mxu0 %v3690
    %4282 = vmatprep.subr.bf16.mxu0 %v3683
    %4283 = vmatpush1.bf16.msra.mxu0 %v3682
    %4284 = vmatprep.subr.bf16.mxu0 %v3675
    %4285 = vmatpush1.bf16.msra.mxu0 %v3674
    %4286 = vmatprep.subr.bf16.mxu0 %v3795
    %4287 = vmatpush2.bf16.msra.mxu0 %v3794
    %4288 = vmatprep.subr.bf16.mxu0 %v3787
    %4289 = vmatpush2.bf16.msra.mxu0 %v3786
    %4290 = vmatprep.subr.bf16.mxu0 %v3779
    %4291 = vmatpush2.bf16.msra.mxu0 %v3778
    %4292 = vmatprep.subr.bf16.mxu0 %v3771
    %4293 = vmatpush2.bf16.msra.mxu0 %v3770
    %4294 = vmatprep.subr.bf16.mxu0 %v3763
    %4295 = vmatpush2.bf16.msra.mxu0 %v3762
    %4296 = vmatprep.subr.bf16.mxu0 %v3755
    %4297 = vmatpush2.bf16.msra.mxu0 %v3754
    %4298 = vmatprep.subr.bf16.mxu0 %v3747
    %4299 = vmatpush2.bf16.msra.mxu0 %v3746
    %4300 = vmatprep.subr.bf16.mxu0 %v3739
    %4301 = vmatpush2.bf16.msra.mxu0 %v3738
    %4302 = vmatprep.mubr.bf16.mxu0 %v2357
    %4303 = vmatmul.mubr.bf16.gmra.mxu0 %v2356
    %v4304 = vpop.f32.mrf.mxu0
    %v4305 = vadd.f32 %v1351, %v4304
    %v4306 = vpop.f32.mrf.mxu0
    %v4307 = vadd.f32 %v1355, %v4306
    %v4308 = vpop.f32.mrf.mxu0
    %v4309 = vadd.f32 %v1351, %v4308
    %v4310 = vpop.f32.mrf.mxu0
    %v4311 = vadd.f32 %v1355, %v4310
    %4312 = vdwg.mxu0
    %4313 = vmatprep.subr.bf16.mxu0 %v3859
    %4314 = vmatpush1.bf16.msra.mxu0 %v3858
    %4315 = vmatprep.subr.bf16.mxu0 %v3851
    %4316 = vmatpush1.bf16.msra.mxu0 %v3850
    %4317 = vmatprep.subr.bf16.mxu0 %v3843
    %4318 = vmatpush1.bf16.msra.mxu0 %v3842
    %4319 = vmatprep.subr.bf16.mxu0 %v3835
    %4320 = vmatpush1.bf16.msra.mxu0 %v3834
    %4321 = vmatprep.subr.bf16.mxu0 %v3827
    %4322 = vmatpush1.bf16.msra.mxu0 %v3826
    %4323 = vmatprep.subr.bf16.mxu0 %v3819
    %4324 = vmatpush1.bf16.msra.mxu0 %v3818
    %4325 = vmatprep.subr.bf16.mxu0 %v3811
    %4326 = vmatpush1.bf16.msra.mxu0 %v3810
    %4327 = vmatprep.subr.bf16.mxu0 %v3803
    %4328 = vmatpush1.bf16.msra.mxu0 %v3802
    %4329 = vmatprep.subr.bf16.mxu0 %v3923
    %4330 = vmatpush2.bf16.msra.mxu0 %v3922
    %4331 = vmatprep.subr.bf16.mxu0 %v3915
    %4332 = vmatpush2.bf16.msra.mxu0 %v3914
    %4333 = vmatprep.subr.bf16.mxu0 %v3907
    %4334 = vmatpush2.bf16.msra.mxu0 %v3906
    %4335 = vmatprep.subr.bf16.mxu0 %v3899
    %4336 = vmatpush2.bf16.msra.mxu0 %v3898
    %4337 = vmatprep.subr.bf16.mxu0 %v3891
    %4338 = vmatpush2.bf16.msra.mxu0 %v3890
    %4339 = vmatprep.subr.bf16.mxu0 %v3883
    %4340 = vmatpush2.bf16.msra.mxu0 %v3882
    %4341 = vmatprep.subr.bf16.mxu0 %v3875
    %4342 = vmatpush2.bf16.msra.mxu0 %v3874
    %4343 = vmatprep.subr.bf16.mxu0 %v3867
    %4344 = vmatpush2.bf16.msra.mxu0 %v3866
    %4345 = vmatprep.mubr.bf16.mxu0 %v2903
    %4346 = vmatmul.mubr.bf16.gmra.mxu0 %v2902
    %v4347 = vpop.f32.mrf.mxu0
    %v4348 = vadd.f32 %v4305, %v4347
    %v4349 = vpop.f32.mrf.mxu0
    %v4350 = vadd.f32 %v4307, %v4349
    %v4351 = vpop.f32.mrf.mxu0
    %v4352 = vadd.f32 %v4309, %v4351
    %v4353 = vpop.f32.mrf.mxu0
    %v4354 = vadd.f32 %v4311, %v4353
    %4355 = vdwg.mxu0
    %4356 = vmatprep.subr.bf16.mxu0 %v3733
    %4357 = vmatpush1.bf16.msra.mxu0 %v3732
    %4358 = vmatprep.subr.bf16.mxu0 %v3725
    %4359 = vmatpush1.bf16.msra.mxu0 %v3724
    %4360 = vmatprep.subr.bf16.mxu0 %v3717
    %4361 = vmatpush1.bf16.msra.mxu0 %v3716
    %4362 = vmatprep.subr.bf16.mxu0 %v3709
    %4363 = vmatpush1.bf16.msra.mxu0 %v3708
    %4364 = vmatprep.subr.bf16.mxu0 %v3701
    %4365 = vmatpush1.bf16.msra.mxu0 %v3700
    %4366 = vmatprep.subr.bf16.mxu0 %v3693
    %4367 = vmatpush1.bf16.msra.mxu0 %v3692
    %4368 = vmatprep.subr.bf16.mxu0 %v3685
    %4369 = vmatpush1.bf16.msra.mxu0 %v3684
    %4370 = vmatprep.subr.bf16.mxu0 %v3677
    %4371 = vmatpush1.bf16.msra.mxu0 %v3676
    %4372 = vmatprep.subr.bf16.mxu0 %v3797
    %4373 = vmatpush2.bf16.msra.mxu0 %v3796
    %4374 = vmatprep.subr.bf16.mxu0 %v3789
    %4375 = vmatpush2.bf16.msra.mxu0 %v3788
    %4376 = vmatprep.subr.bf16.mxu0 %v3781
    %4377 = vmatpush2.bf16.msra.mxu0 %v3780
    %4378 = vmatprep.subr.bf16.mxu0 %v3773
    %4379 = vmatpush2.bf16.msra.mxu0 %v3772
    %4380 = vmatprep.subr.bf16.mxu0 %v3765
    %4381 = vmatpush2.bf16.msra.mxu0 %v3764
    %4382 = vmatprep.subr.bf16.mxu0 %v3757
    %4383 = vmatpush2.bf16.msra.mxu0 %v3756
    %4384 = vmatprep.subr.bf16.mxu0 %v3749
    %4385 = vmatpush2.bf16.msra.mxu0 %v3748
    %4386 = vmatprep.subr.bf16.mxu0 %v3741
    %4387 = vmatpush2.bf16.msra.mxu0 %v3740
    %4388 = vmatprep.mubr.bf16.mxu0 %v2357
    %4389 = vmatmul.mubr.bf16.gmra.mxu0 %v2356
    %v4390 = vpop.f32.mrf.mxu0
    %v4391 = vadd.f32 %v1359, %v4390
    %v4392 = vpop.f32.mrf.mxu0
    %v4393 = vadd.f32 %v1363, %v4392
    %v4394 = vpop.f32.mrf.mxu0
    %v4395 = vadd.f32 %v1359, %v4394
    %v4396 = vpop.f32.mrf.mxu0
    %v4397 = vadd.f32 %v1363, %v4396
    %4398 = vdwg.mxu0
    %4399 = vmatprep.subr.bf16.mxu0 %v3861
    %4400 = vmatpush1.bf16.msra.mxu0 %v3860
    %4401 = vmatprep.subr.bf16.mxu0 %v3853
    %4402 = vmatpush1.bf16.msra.mxu0 %v3852
    %4403 = vmatprep.subr.bf16.mxu0 %v3845
    %4404 = vmatpush1.bf16.msra.mxu0 %v3844
    %4405 = vmatprep.subr.bf16.mxu0 %v3837
    %4406 = vmatpush1.bf16.msra.mxu0 %v3836
    %4407 = vmatprep.subr.bf16.mxu0 %v3829
    %4408 = vmatpush1.bf16.msra.mxu0 %v3828
    %4409 = vmatprep.subr.bf16.mxu0 %v3821
    %4410 = vmatpush1.bf16.msra.mxu0 %v3820
    %4411 = vmatprep.subr.bf16.mxu0 %v3813
    %4412 = vmatpush1.bf16.msra.mxu0 %v3812
    %4413 = vmatprep.subr.bf16.mxu0 %v3805
    %4414 = vmatpush1.bf16.msra.mxu0 %v3804
    %4415 = vmatprep.subr.bf16.mxu0 %v3925
    %4416 = vmatpush2.bf16.msra.mxu0 %v3924
    %4417 = vmatprep.subr.bf16.mxu0 %v3917
    %4418 = vmatpush2.bf16.msra.mxu0 %v3916
    %4419 = vmatprep.subr.bf16.mxu0 %v3909
    %4420 = vmatpush2.bf16.msra.mxu0 %v3908
    %4421 = vmatprep.subr.bf16.mxu0 %v3901
    %4422 = vmatpush2.bf16.msra.mxu0 %v3900
    %4423 = vmatprep.subr.bf16.mxu0 %v3893
    %4424 = vmatpush2.bf16.msra.mxu0 %v3892
    %4425 = vmatprep.subr.bf16.mxu0 %v3885
    %4426 = vmatpush2.bf16.msra.mxu0 %v3884
    %4427 = vmatprep.subr.bf16.mxu0 %v3877
    %4428 = vmatpush2.bf16.msra.mxu0 %v3876
    %4429 = vmatprep.subr.bf16.mxu0 %v3869
    %4430 = vmatpush2.bf16.msra.mxu0 %v3868
    %4431 = vmatprep.mubr.bf16.mxu0 %v2903
    %4432 = vmatmul.mubr.bf16.gmra.mxu0 %v2902
    %v4433 = vpop.f32.mrf.mxu0
    %v4434 = vadd.f32 %v4391, %v4433
    %v4435 = vpop.f32.mrf.mxu0
    %v4436 = vadd.f32 %v4393, %v4435
    %v4437 = vpop.f32.mrf.mxu0
    %v4438 = vadd.f32 %v4395, %v4437
    %v4439 = vpop.f32.mrf.mxu0
    %v4440 = vadd.f32 %v4397, %v4439
    %4441 = vdwg.mxu0
    %4442 = vmatprep.subr.bf16.mxu0 %v3735
    %4443 = vmatpush1.bf16.msra.mxu0 %v3734
    %4444 = vmatprep.subr.bf16.mxu0 %v3727
    %4445 = vmatpush1.bf16.msra.mxu0 %v3726
    %4446 = vmatprep.subr.bf16.mxu0 %v3719
    %4447 = vmatpush1.bf16.msra.mxu0 %v3718
    %4448 = vmatprep.subr.bf16.mxu0 %v3711
    %4449 = vmatpush1.bf16.msra.mxu0 %v3710
    %4450 = vmatprep.subr.bf16.mxu0 %v3703
    %4451 = vmatpush1.bf16.msra.mxu0 %v3702
    %4452 = vmatprep.subr.bf16.mxu0 %v3695
    %4453 = vmatpush1.bf16.msra.mxu0 %v3694
    %4454 = vmatprep.subr.bf16.mxu0 %v3687
    %4455 = vmatpush1.bf16.msra.mxu0 %v3686
    %4456 = vmatprep.subr.bf16.mxu0 %v3679
    %4457 = vmatpush1.bf16.msra.mxu0 %v3678
    %4458 = vmatprep.subr.bf16.mxu0 %v3799
    %4459 = vmatpush2.bf16.msra.mxu0 %v3798
    %4460 = vmatprep.subr.bf16.mxu0 %v3791
    %4461 = vmatpush2.bf16.msra.mxu0 %v3790
    %4462 = vmatprep.subr.bf16.mxu0 %v3783
    %4463 = vmatpush2.bf16.msra.mxu0 %v3782
    %4464 = vmatprep.subr.bf16.mxu0 %v3775
    %4465 = vmatpush2.bf16.msra.mxu0 %v3774
    %4466 = vmatprep.subr.bf16.mxu0 %v3767
    %4467 = vmatpush2.bf16.msra.mxu0 %v3766
    %4468 = vmatprep.subr.bf16.mxu0 %v3759
    %4469 = vmatpush2.bf16.msra.mxu0 %v3758
    %4470 = vmatprep.subr.bf16.mxu0 %v3751
    %4471 = vmatpush2.bf16.msra.mxu0 %v3750
    %4472 = vmatprep.subr.bf16.mxu0 %v3743
    %4473 = vmatpush2.bf16.msra.mxu0 %v3742
    %4474 = vmatprep.mubr.bf16.mxu0 %v2357
    %4475 = vmatmul.mubr.bf16.gmra.mxu0 %v2356
    %v4476 = vpop.f32.mrf.mxu0
    %v4477 = vadd.f32 %v1367, %v4476
    %v4478 = vpop.f32.mrf.mxu0
    %v4479 = vadd.f32 %v1371, %v4478
    %v4480 = vpop.f32.mrf.mxu0
    %v4481 = vadd.f32 %v1367, %v4480
    %v4482 = vpop.f32.mrf.mxu0
    %v4483 = vadd.f32 %v1371, %v4482
    %4484 = vdwg.mxu0
    %4485 = vmatprep.subr.bf16.mxu0 %v3863
    %4486 = vmatpush1.bf16.msra.mxu0 %v3862
    %4487 = vmatprep.subr.bf16.mxu0 %v3855
    %4488 = vmatpush1.bf16.msra.mxu0 %v3854
    %4489 = vmatprep.subr.bf16.mxu0 %v3847
    %4490 = vmatpush1.bf16.msra.mxu0 %v3846
    %4491 = vmatprep.subr.bf16.mxu0 %v3839
    %4492 = vmatpush1.bf16.msra.mxu0 %v3838
    %4493 = vmatprep.subr.bf16.mxu0 %v3831
    %4494 = vmatpush1.bf16.msra.mxu0 %v3830
    %4495 = vmatprep.subr.bf16.mxu0 %v3823
    %4496 = vmatpush1.bf16.msra.mxu0 %v3822
    %4497 = vmatprep.subr.bf16.mxu0 %v3815
    %4498 = vmatpush1.bf16.msra.mxu0 %v3814
    %4499 = vmatprep.subr.bf16.mxu0 %v3807
    %4500 = vmatpush1.bf16.msra.mxu0 %v3806
    %4501 = vmatprep.subr.bf16.mxu0 %v3927
    %4502 = vmatpush2.bf16.msra.mxu0 %v3926
    %4503 = vmatprep.subr.bf16.mxu0 %v3919
    %4504 = vmatpush2.bf16.msra.mxu0 %v3918
    %4505 = vmatprep.subr.bf16.mxu0 %v3911
    %4506 = vmatpush2.bf16.msra.mxu0 %v3910
    %4507 = vmatprep.subr.bf16.mxu0 %v3903
    %4508 = vmatpush2.bf16.msra.mxu0 %v3902
    %4509 = vmatprep.subr.bf16.mxu0 %v3895
    %4510 = vmatpush2.bf16.msra.mxu0 %v3894
    %4511 = vmatprep.subr.bf16.mxu0 %v3887
    %4512 = vmatpush2.bf16.msra.mxu0 %v3886
    %4513 = vmatprep.subr.bf16.mxu0 %v3879
    %4514 = vmatpush2.bf16.msra.mxu0 %v3878
    %4515 = vmatprep.subr.bf16.mxu0 %v3871
    %4516 = vmatpush2.bf16.msra.mxu0 %v3870
    %4517 = vmatprep.mubr.bf16.mxu0 %v2903
    %4518 = vmatmul.mubr.bf16.gmra.mxu0 %v2902
    %v4519 = vpop.f32.mrf.mxu0
    %v4520 = vadd.f32 %v4477, %v4519
    %v4521 = vpop.f32.mrf.mxu0
    %v4522 = vadd.f32 %v4479, %v4521
    %v4523 = vpop.f32.mrf.mxu0
    %v4524 = vadd.f32 %v4481, %v4523
    %v4525 = vpop.f32.mrf.mxu0
    %v4526 = vadd.f32 %v4483, %v4525
    %4527 = vdwg.mxu0
    %v4528 = vxor.u32 %v4262, 2147483648
    %v4529 = vxor.u32 %v4264, 2147483648
    %v4530 = vxor.u32 %v4348, 2147483648
    %v4531 = vxor.u32 %v4350, 2147483648
    %v4532 = vxor.u32 %v4434, 2147483648
    %v4533 = vxor.u32 %v4436, 2147483648
    %v4534 = vxor.u32 %v4266, 2147483648
    %v4535 = vxor.u32 %v4268, 2147483648
    %v4536 = vxor.u32 %v4352, 2147483648
    %v4537 = vxor.u32 %v4354, 2147483648
    %v4538 = vxor.u32 %v4438, 2147483648
    %v4539 = vxor.u32 %v4440, 2147483648
    %v4540 = vmul.f32 %v4528, 1.442695
    %v4541 = vpow.pop %v4540
    %v4542 = vmul.f32 %v4529, 1.442695
    %v4543 = vpow.pop %v4542
    %v4544 = vmul.f32 %v4530, 1.442695
    %v4545 = vpow.pop %v4544
    %v4546 = vmul.f32 %v4531, 1.442695
    %v4547 = vpow.pop %v4546
    %v4548 = vmul.f32 %v4532, 1.442695
    %v4549 = vpow.pop %v4548
    %v4550 = vmul.f32 %v4533, 1.442695
    %v4551 = vpow.pop %v4550
    %v4552 = vmul.f32 %v4534, 1.442695
    %v4553 = vpow.pop %v4552
    %v4554 = vmul.f32 %v4535, 1.442695
    %v4555 = vpow.pop %v4554
    %v4556 = vmul.f32 %v4536, 1.442695
    %v4557 = vpow.pop %v4556
    %v4558 = vmul.f32 %v4537, 1.442695
    %v4559 = vpow.pop %v4558
    %v4560 = vmul.f32 %v4538, 1.442695
    %v4561 = vpow.pop %v4560
    %v4562 = vmul.f32 %v4539, 1.442695
    %v4563 = vpow.pop %v4562
    %v4564 = vadd.f32 %v4541, 1.0
    %v4565 = vadd.f32 %v4543, 1.0
    %v4566 = vadd.f32 %v4545, 1.0
    %v4567 = vadd.f32 %v4547, 1.0
    %v4568 = vadd.f32 %v4549, 1.0
    %v4569 = vadd.f32 %v4551, 1.0
    %v4570 = vadd.f32 %v4553, 1.0
    %v4571 = vadd.f32 %v4555, 1.0
    %v4572 = vadd.f32 %v4557, 1.0
    %v4573 = vadd.f32 %v4559, 1.0
    %v4574 = vadd.f32 %v4561, 1.0
    %v4575 = vadd.f32 %v4563, 1.0
    %v4576 = vrcp.pop %v4564
    %v4577 = vmul.f32 1.0, %v4576
    %v4578 = vrcp.pop %v4565
    %v4579 = vmul.f32 1.0, %v4578
    %v4580 = vrcp.pop %v4566
    %v4581 = vmul.f32 1.0, %v4580
    %v4582 = vrcp.pop %v4567
    %v4583 = vmul.f32 1.0, %v4582
    %v4584 = vrcp.pop %v4568
    %v4585 = vmul.f32 1.0, %v4584
    %v4586 = vrcp.pop %v4569
    %v4587 = vmul.f32 1.0, %v4586
    %v4588 = vrcp.pop %v4570
    %v4589 = vmul.f32 1.0, %v4588
    %v4590 = vrcp.pop %v4571
    %v4591 = vmul.f32 1.0, %v4590
    %v4592 = vrcp.pop %v4572
    %v4593 = vmul.f32 1.0, %v4592
    %v4594 = vrcp.pop %v4573
    %v4595 = vmul.f32 1.0, %v4594
    %v4596 = vrcp.pop %v4574
    %v4597 = vmul.f32 1.0, %v4596
    %v4598 = vrcp.pop %v4575
    %v4599 = vmul.f32 1.0, %v4598
    %v4600 = vtanh.pop %v4520
    %v4601 = vtanh.pop %v4522
    %v4602 = vtanh.pop %v4524
    %v4603 = vtanh.pop %v4526
    %v4604 = vmul.f32 %v4581, %v1394
    %v4605 = vmul.f32 %v4583, %v1395
    %v4606 = vmul.f32 %v4593, %v1396
    %v4607 = vmul.f32 %v4595, %v1397
    %v4608 = vmul.f32 %v4577, %v4600
    %v4609 = vmul.f32 %v4579, %v4601
    %v4610 = vmul.f32 %v4589, %v4602
    %v4611 = vmul.f32 %v4591, %v4603
    %v4612 = vadd.f32 %v4604, %v4608
    %v4613 = vadd.f32 %v4605, %v4609
    %v4614 = vadd.f32 %v4606, %v4610
    %v4615 = vadd.f32 %v4607, %v4611
    %v4616 = vtanh.pop %v4612
    %v4617 = vtanh.pop %v4613
    %v4618 = vtanh.pop %v4614
    %v4619 = vtanh.pop %v4615
    %v4620 = vmul.f32 %v4585, %v4616
    %v4621 = vmul.f32 %v4587, %v4617
    %v4622 = vmul.f32 %v4597, %v4618
    %v4623 = vmul.f32 %v4599, %v4619
    %4624 = vst [vmem:[#allocation3] sm:$0xff] %v4620
    %4625 = vst [vmem:[#allocation3 + $0x8] sm:$0xff] %v4621
    %4626 = vst [vmem:[#allocation3 + $0x10] sm:$0xff] %v4622
    %4627 = vst [vmem:[#allocation3 + $0x18] sm:$0xff] %v4623
    %v4628 = vld [vmem:[#allocation2 + $0x100] sm:$0xff]
    %v4629 = vld [vmem:[#allocation2 + $0x108] sm:$0xff]
    %v4630 = vld [vmem:[#allocation2 + $0x110] sm:$0xff]
    %v4631 = vld [vmem:[#allocation2 + $0x118] sm:$0xff]
    %v4632 = vld [vmem:[#allocation2 + $0x120] sm:$0xff]
    %v4633 = vld [vmem:[#allocation2 + $0x128] sm:$0xff]
    %v4634 = vld [vmem:[#allocation2 + $0x130] sm:$0xff]
    %v4635 = vld [vmem:[#allocation2 + $0x138] sm:$0xff]
    %v4636 = vld [vmem:[#allocation2 + $0x140] sm:$0xff]
    %v4637 = vld [vmem:[#allocation2 + $0x148] sm:$0xff]
    %v4638 = vld [vmem:[#allocation2 + $0x150] sm:$0xff]
    %v4639 = vld [vmem:[#allocation2 + $0x158] sm:$0xff]
    %v4640 = vld [vmem:[#allocation2 + $0x160] sm:$0xff]
    %v4641 = vld [vmem:[#allocation2 + $0x168] sm:$0xff]
    %v4642 = vld [vmem:[#allocation2 + $0x170] sm:$0xff]
    %v4643 = vld [vmem:[#allocation2 + $0x178] sm:$0xff]
    %v4644 = vpack.c.bf16 %v2640, %v2638
    %v4645 = vpack.c.bf16 %v2641, %v2639
    %4646 = vmatprep.subr.bf16.mxu0 %v1857
    %4647 = vmatpush1.bf16.msra.mxu0 %v1856
    %4648 = vmatprep.subr.bf16.mxu0 %v1849
    %4649 = vmatpush1.bf16.msra.mxu0 %v1848
    %4650 = vmatprep.subr.bf16.mxu0 %v1841
    %4651 = vmatpush1.bf16.msra.mxu0 %v1840
    %4652 = vmatprep.subr.bf16.mxu0 %v1833
    %4653 = vmatpush1.bf16.msra.mxu0 %v1832
    %4654 = vmatprep.subr.bf16.mxu0 %v1825
    %4655 = vmatpush1.bf16.msra.mxu0 %v1824
    %4656 = vmatprep.subr.bf16.mxu0 %v1817
    %4657 = vmatpush1.bf16.msra.mxu0 %v1816
    %4658 = vmatprep.subr.bf16.mxu0 %v1809
    %4659 = vmatpush1.bf16.msra.mxu0 %v1808
    %4660 = vmatprep.subr.bf16.mxu0 %v1801
    %4661 = vmatpush1.bf16.msra.mxu0 %v1800
    %4662 = vmatprep.subr.bf16.mxu0 %v1921
    %4663 = vmatpush2.bf16.msra.mxu0 %v1920
    %4664 = vmatprep.subr.bf16.mxu0 %v1913
    %4665 = vmatpush2.bf16.msra.mxu0 %v1912
    %4666 = vmatprep.subr.bf16.mxu0 %v1905
    %4667 = vmatpush2.bf16.msra.mxu0 %v1904
    %4668 = vmatprep.subr.bf16.mxu0 %v1897
    %4669 = vmatpush2.bf16.msra.mxu0 %v1896
    %4670 = vmatprep.subr.bf16.mxu0 %v1889
    %4671 = vmatpush2.bf16.msra.mxu0 %v1888
    %4672 = vmatprep.subr.bf16.mxu0 %v1881
    %4673 = vmatpush2.bf16.msra.mxu0 %v1880
    %4674 = vmatprep.subr.bf16.mxu0 %v1873
    %4675 = vmatpush2.bf16.msra.mxu0 %v1872
    %4676 = vmatprep.subr.bf16.mxu0 %v1865
    %4677 = vmatpush2.bf16.msra.mxu0 %v1864
    %4678 = vmatprep.mubr.bf16.mxu0 %v4645
    %4679 = vmatmul.mubr.bf16.gmra.mxu0 %v4644
    %v4680 = vpop.f32.mrf.mxu0
    %v4681 = vadd.f32 0.0, %v4680
    %v4682 = vpop.f32.mrf.mxu0
    %v4683 = vadd.f32 0.0, %v4682
    %v4684 = vpop.f32.mrf.mxu0
    %v4685 = vadd.f32 0.0, %v4684
    %v4686 = vpop.f32.mrf.mxu0
    %v4687 = vadd.f32 0.0, %v4686
    %4688 = vdwg.mxu0
    %4689 = vmatprep.subr.bf16.mxu0 %v1859
    %4690 = vmatpush1.bf16.msra.mxu0 %v1858
    %4691 = vmatprep.subr.bf16.mxu0 %v1851
    %4692 = vmatpush1.bf16.msra.mxu0 %v1850
    %4693 = vmatprep.subr.bf16.mxu0 %v1843
    %4694 = vmatpush1.bf16.msra.mxu0 %v1842
    %4695 = vmatprep.subr.bf16.mxu0 %v1835
    %4696 = vmatpush1.bf16.msra.mxu0 %v1834
    %4697 = vmatprep.subr.bf16.mxu0 %v1827
    %4698 = vmatpush1.bf16.msra.mxu0 %v1826
    %4699 = vmatprep.subr.bf16.mxu0 %v1819
    %4700 = vmatpush1.bf16.msra.mxu0 %v1818
    %4701 = vmatprep.subr.bf16.mxu0 %v1811
    %4702 = vmatpush1.bf16.msra.mxu0 %v1810
    %4703 = vmatprep.subr.bf16.mxu0 %v1803
    %4704 = vmatpush1.bf16.msra.mxu0 %v1802
    %4705 = vmatprep.subr.bf16.mxu0 %v1923
    %4706 = vmatpush2.bf16.msra.mxu0 %v1922
    %4707 = vmatprep.subr.bf16.mxu0 %v1915
    %4708 = vmatpush2.bf16.msra.mxu0 %v1914
    %4709 = vmatprep.subr.bf16.mxu0 %v1907
    %4710 = vmatpush2.bf16.msra.mxu0 %v1906
    %4711 = vmatprep.subr.bf16.mxu0 %v1899
    %4712 = vmatpush2.bf16.msra.mxu0 %v1898
    %4713 = vmatprep.subr.bf16.mxu0 %v1891
    %4714 = vmatpush2.bf16.msra.mxu0 %v1890
    %4715 = vmatprep.subr.bf16.mxu0 %v1883
    %4716 = vmatpush2.bf16.msra.mxu0 %v1882
    %4717 = vmatprep.subr.bf16.mxu0 %v1875
    %4718 = vmatpush2.bf16.msra.mxu0 %v1874
    %4719 = vmatprep.subr.bf16.mxu0 %v1867
    %4720 = vmatpush2.bf16.msra.mxu0 %v1866
    %4721 = vmatprep.mubr.bf16.mxu0 %v4645
    %4722 = vmatmul.mubr.bf16.gmra.mxu0 %v4644
    %v4723 = vpop.f32.mrf.mxu0
    %v4724 = vadd.f32 0.0, %v4723
    %v4725 = vpop.f32.mrf.mxu0
    %v4726 = vadd.f32 0.0, %v4725
    %v4727 = vpop.f32.mrf.mxu0
    %v4728 = vadd.f32 0.0, %v4727
    %v4729 = vpop.f32.mrf.mxu0
    %v4730 = vadd.f32 0.0, %v4729
    %4731 = vdwg.mxu0
    %4732 = vmatprep.subr.bf16.mxu0 %v1861
    %4733 = vmatpush1.bf16.msra.mxu0 %v1860
    %4734 = vmatprep.subr.bf16.mxu0 %v1853
    %4735 = vmatpush1.bf16.msra.mxu0 %v1852
    %4736 = vmatprep.subr.bf16.mxu0 %v1845
    %4737 = vmatpush1.bf16.msra.mxu0 %v1844
    %4738 = vmatprep.subr.bf16.mxu0 %v1837
    %4739 = vmatpush1.bf16.msra.mxu0 %v1836
    %4740 = vmatprep.subr.bf16.mxu0 %v1829
    %4741 = vmatpush1.bf16.msra.mxu0 %v1828
    %4742 = vmatprep.subr.bf16.mxu0 %v1821
    %4743 = vmatpush1.bf16.msra.mxu0 %v1820
    %4744 = vmatprep.subr.bf16.mxu0 %v1813
    %4745 = vmatpush1.bf16.msra.mxu0 %v1812
    %4746 = vmatprep.subr.bf16.mxu0 %v1805
    %4747 = vmatpush1.bf16.msra.mxu0 %v1804
    %4748 = vmatprep.subr.bf16.mxu0 %v1925
    %4749 = vmatpush2.bf16.msra.mxu0 %v1924
    %4750 = vmatprep.subr.bf16.mxu0 %v1917
    %4751 = vmatpush2.bf16.msra.mxu0 %v1916
    %4752 = vmatprep.subr.bf16.mxu0 %v1909
    %4753 = vmatpush2.bf16.msra.mxu0 %v1908
    %4754 = vmatprep.subr.bf16.mxu0 %v1901
    %4755 = vmatpush2.bf16.msra.mxu0 %v1900
    %4756 = vmatprep.subr.bf16.mxu0 %v1893
    %4757 = vmatpush2.bf16.msra.mxu0 %v1892
    %4758 = vmatprep.subr.bf16.mxu0 %v1885
    %4759 = vmatpush2.bf16.msra.mxu0 %v1884
    %4760 = vmatprep.subr.bf16.mxu0 %v1877
    %4761 = vmatpush2.bf16.msra.mxu0 %v1876
    %4762 = vmatprep.subr.bf16.mxu0 %v1869
    %4763 = vmatpush2.bf16.msra.mxu0 %v1868
    %4764 = vmatprep.mubr.bf16.mxu0 %v4645
    %4765 = vmatmul.mubr.bf16.gmra.mxu0 %v4644
    %v4766 = vpop.f32.mrf.mxu0
    %v4767 = vadd.f32 0.0, %v4766
    %v4768 = vpop.f32.mrf.mxu0
    %v4769 = vadd.f32 0.0, %v4768
    %v4770 = vpop.f32.mrf.mxu0
    %v4771 = vadd.f32 0.0, %v4770
    %v4772 = vpop.f32.mrf.mxu0
    %v4773 = vadd.f32 0.0, %v4772
    %4774 = vdwg.mxu0
    %4775 = vmatprep.subr.bf16.mxu0 %v1863
    %4776 = vmatpush1.bf16.msra.mxu0 %v1862
    %4777 = vmatprep.subr.bf16.mxu0 %v1855
    %4778 = vmatpush1.bf16.msra.mxu0 %v1854
    %4779 = vmatprep.subr.bf16.mxu0 %v1847
    %4780 = vmatpush1.bf16.msra.mxu0 %v1846
    %4781 = vmatprep.subr.bf16.mxu0 %v1839
    %4782 = vmatpush1.bf16.msra.mxu0 %v1838
    %4783 = vmatprep.subr.bf16.mxu0 %v1831
    %4784 = vmatpush1.bf16.msra.mxu0 %v1830
    %4785 = vmatprep.subr.bf16.mxu0 %v1823
    %4786 = vmatpush1.bf16.msra.mxu0 %v1822
    %4787 = vmatprep.subr.bf16.mxu0 %v1815
    %4788 = vmatpush1.bf16.msra.mxu0 %v1814
    %4789 = vmatprep.subr.bf16.mxu0 %v1807
    %4790 = vmatpush1.bf16.msra.mxu0 %v1806
    %4791 = vmatprep.subr.bf16.mxu0 %v1927
    %4792 = vmatpush2.bf16.msra.mxu0 %v1926
    %4793 = vmatprep.subr.bf16.mxu0 %v1919
    %4794 = vmatpush2.bf16.msra.mxu0 %v1918
    %4795 = vmatprep.subr.bf16.mxu0 %v1911
    %4796 = vmatpush2.bf16.msra.mxu0 %v1910
    %4797 = vmatprep.subr.bf16.mxu0 %v1903
    %4798 = vmatpush2.bf16.msra.mxu0 %v1902
    %4799 = vmatprep.subr.bf16.mxu0 %v1895
    %4800 = vmatpush2.bf16.msra.mxu0 %v1894
    %4801 = vmatprep.subr.bf16.mxu0 %v1887
    %4802 = vmatpush2.bf16.msra.mxu0 %v1886
    %4803 = vmatprep.subr.bf16.mxu0 %v1879
    %4804 = vmatpush2.bf16.msra.mxu0 %v1878
    %4805 = vmatprep.subr.bf16.mxu0 %v1871
    %4806 = vmatpush2.bf16.msra.mxu0 %v1870
    %4807 = vmatprep.mubr.bf16.mxu0 %v4645
    %4808 = vmatmul.mubr.bf16.gmra.mxu0 %v4644
    %v4809 = vpop.f32.mrf.mxu0
    %v4810 = vadd.f32 0.0, %v4809
    %v4811 = vpop.f32.mrf.mxu0
    %v4812 = vadd.f32 0.0, %v4811
    %v4813 = vpop.f32.mrf.mxu0
    %v4814 = vadd.f32 0.0, %v4813
    %v4815 = vpop.f32.mrf.mxu0
    %v4816 = vadd.f32 0.0, %v4815
    %4817 = vdwg.mxu0
    %v4818 = vadd.f32 %v4628, %v4681
    %v4819 = vadd.f32 %v4629, %v4683
    %v4820 = vadd.f32 %v4630, %v4724
    %v4821 = vadd.f32 %v4631, %v4726
    %v4822 = vadd.f32 %v4632, %v4767
    %v4823 = vadd.f32 %v4633, %v4769
    %v4824 = vadd.f32 %v4634, %v4810
    %v4825 = vadd.f32 %v4635, %v4812
    %v4826 = vadd.f32 %v4636, %v4685
    %v4827 = vadd.f32 %v4637, %v4687
    %v4828 = vadd.f32 %v4638, %v4728
    %v4829 = vadd.f32 %v4639, %v4730
    %v4830 = vadd.f32 %v4640, %v4771
    %v4831 = vadd.f32 %v4641, %v4773
    %v4832 = vadd.f32 %v4642, %v4814
    %v4833 = vadd.f32 %v4643, %v4816
    %v4834 = vxor.u32 %v4818, 2147483648
    %v4835 = vxor.u32 %v4819, 2147483648
    %v4836 = vxor.u32 %v4820, 2147483648
    %v4837 = vxor.u32 %v4821, 2147483648
    %v4838 = vxor.u32 %v4822, 2147483648
    %v4839 = vxor.u32 %v4823, 2147483648
    %v4840 = vxor.u32 %v4826, 2147483648
    %v4841 = vxor.u32 %v4827, 2147483648
    %v4842 = vxor.u32 %v4828, 2147483648
    %v4843 = vxor.u32 %v4829, 2147483648
    %v4844 = vxor.u32 %v4830, 2147483648
    %v4845 = vxor.u32 %v4831, 2147483648
    %v4846 = vmul.f32 %v4834, 1.442695
    %v4847 = vpow.pop %v4846
    %v4848 = vmul.f32 %v4835, 1.442695
    %v4849 = vpow.pop %v4848
    %v4850 = vmul.f32 %v4836, 1.442695
    %v4851 = vpow.pop %v4850
    %v4852 = vmul.f32 %v4837, 1.442695
    %v4853 = vpow.pop %v4852
    %v4854 = vmul.f32 %v4838, 1.442695
    %v4855 = vpow.pop %v4854
    %v4856 = vmul.f32 %v4839, 1.442695
    %v4857 = vpow.pop %v4856
    %v4858 = vmul.f32 %v4840, 1.442695
    %v4859 = vpow.pop %v4858
    %v4860 = vmul.f32 %v4841, 1.442695
    %v4861 = vpow.pop %v4860
    %v4862 = vmul.f32 %v4842, 1.442695
    %v4863 = vpow.pop %v4862
    %v4864 = vmul.f32 %v4843, 1.442695
    %v4865 = vpow.pop %v4864
    %v4866 = vmul.f32 %v4844, 1.442695
    %v4867 = vpow.pop %v4866
    %v4868 = vmul.f32 %v4845, 1.442695
    %v4869 = vpow.pop %v4868
    %v4870 = vadd.f32 %v4847, 1.0
    %v4871 = vadd.f32 %v4849, 1.0
    %v4872 = vadd.f32 %v4851, 1.0
    %v4873 = vadd.f32 %v4853, 1.0
    %v4874 = vadd.f32 %v4855, 1.0
    %v4875 = vadd.f32 %v4857, 1.0
    %v4876 = vadd.f32 %v4859, 1.0
    %v4877 = vadd.f32 %v4861, 1.0
    %v4878 = vadd.f32 %v4863, 1.0
    %v4879 = vadd.f32 %v4865, 1.0
    %v4880 = vadd.f32 %v4867, 1.0
    %v4881 = vadd.f32 %v4869, 1.0
    %v4882 = vrcp.pop %v4870
    %v4883 = vmul.f32 1.0, %v4882
    %v4884 = vrcp.pop %v4871
    %v4885 = vmul.f32 1.0, %v4884
    %v4886 = vrcp.pop %v4872
    %v4887 = vmul.f32 1.0, %v4886
    %v4888 = vrcp.pop %v4873
    %v4889 = vmul.f32 1.0, %v4888
    %v4890 = vrcp.pop %v4874
    %v4891 = vmul.f32 1.0, %v4890
    %v4892 = vrcp.pop %v4875
    %v4893 = vmul.f32 1.0, %v4892
    %v4894 = vrcp.pop %v4876
    %v4895 = vmul.f32 1.0, %v4894
    %v4896 = vrcp.pop %v4877
    %v4897 = vmul.f32 1.0, %v4896
    %v4898 = vrcp.pop %v4878
    %v4899 = vmul.f32 1.0, %v4898
    %v4900 = vrcp.pop %v4879
    %v4901 = vmul.f32 1.0, %v4900
    %v4902 = vrcp.pop %v4880
    %v4903 = vmul.f32 1.0, %v4902
    %v4904 = vrcp.pop %v4881
    %v4905 = vmul.f32 1.0, %v4904
    %v4906 = vtanh.pop %v4824
    %v4907 = vtanh.pop %v4825
    %v4908 = vtanh.pop %v4832
    %v4909 = vtanh.pop %v4833
    %v4910 = vmul.f32 %v4887, %v2630
    %v4911 = vmul.f32 %v4889, %v2631
    %v4912 = vmul.f32 %v4899, %v2632
    %v4913 = vmul.f32 %v4901, %v2633
    %v4914 = vmul.f32 %v4883, %v4906
    %v4915 = vmul.f32 %v4885, %v4907
    %v4916 = vmul.f32 %v4895, %v4908
    %v4917 = vmul.f32 %v4897, %v4909
    %v4918 = vadd.f32 %v4910, %v4914
    %v4919 = vadd.f32 %v4911, %v4915
    %v4920 = vadd.f32 %v4912, %v4916
    %v4921 = vadd.f32 %v4913, %v4917
    %v4922 = vtanh.pop %v4918
    %v4923 = vtanh.pop %v4919
    %v4924 = vtanh.pop %v4920
    %v4925 = vtanh.pop %v4921
    %v4926 = vmul.f32 %v4891, %v4922
    %v4927 = vmul.f32 %v4893, %v4923
    %v4928 = vmul.f32 %v4903, %v4924
    %v4929 = vmul.f32 %v4905, %v4925
    %v4930 = vpack.c.bf16 %v4622, %v4620
    %v4931 = vpack.c.bf16 %v4623, %v4621
    %4932 = vmatprep.subr.bf16.mxu0 %v3729
    %4933 = vmatpush1.bf16.msra.mxu0 %v3728
    %4934 = vmatprep.subr.bf16.mxu0 %v3721
    %4935 = vmatpush1.bf16.msra.mxu0 %v3720
    %4936 = vmatprep.subr.bf16.mxu0 %v3713
    %4937 = vmatpush1.bf16.msra.mxu0 %v3712
    %4938 = vmatprep.subr.bf16.mxu0 %v3705
    %4939 = vmatpush1.bf16.msra.mxu0 %v3704
    %4940 = vmatprep.subr.bf16.mxu0 %v3697
    %4941 = vmatpush1.bf16.msra.mxu0 %v3696
    %4942 = vmatprep.subr.bf16.mxu0 %v3689
    %4943 = vmatpush1.bf16.msra.mxu0 %v3688
    %4944 = vmatprep.subr.bf16.mxu0 %v3681
    %4945 = vmatpush1.bf16.msra.mxu0 %v3680
    %4946 = vmatprep.subr.bf16.mxu0 %v3673
    %4947 = vmatpush1.bf16.msra.mxu0 %v3672
    %4948 = vmatprep.subr.bf16.mxu0 %v3793
    %4949 = vmatpush2.bf16.msra.mxu0 %v3792
    %4950 = vmatprep.subr.bf16.mxu0 %v3785
    %4951 = vmatpush2.bf16.msra.mxu0 %v3784
    %4952 = vmatprep.subr.bf16.mxu0 %v3777
    %4953 = vmatpush2.bf16.msra.mxu0 %v3776
    %4954 = vmatprep.subr.bf16.mxu0 %v3769
    %4955 = vmatpush2.bf16.msra.mxu0 %v3768
    %4956 = vmatprep.subr.bf16.mxu0 %v3761
    %4957 = vmatpush2.bf16.msra.mxu0 %v3760
    %4958 = vmatprep.subr.bf16.mxu0 %v3753
    %4959 = vmatpush2.bf16.msra.mxu0 %v3752
    %4960 = vmatprep.subr.bf16.mxu0 %v3745
    %4961 = vmatpush2.bf16.msra.mxu0 %v3744
    %4962 = vmatprep.subr.bf16.mxu0 %v3737
    %4963 = vmatpush2.bf16.msra.mxu0 %v3736
    %4964 = vmatprep.mubr.bf16.mxu0 %v4645
    %4965 = vmatmul.mubr.bf16.gmra.mxu0 %v4644
    %v4966 = vpop.f32.mrf.mxu0
    %v4967 = vadd.f32 %v1343, %v4966
    %v4968 = vpop.f32.mrf.mxu0
    %v4969 = vadd.f32 %v1347, %v4968
    %v4970 = vpop.f32.mrf.mxu0
    %v4971 = vadd.f32 %v1343, %v4970
    %v4972 = vpop.f32.mrf.mxu0
    %v4973 = vadd.f32 %v1347, %v4972
    %4974 = vdwg.mxu0
    %4975 = vmatprep.subr.bf16.mxu0 %v3857
    %4976 = vmatpush1.bf16.msra.mxu0 %v3856
    %4977 = vmatprep.subr.bf16.mxu0 %v3849
    %4978 = vmatpush1.bf16.msra.mxu0 %v3848
    %4979 = vmatprep.subr.bf16.mxu0 %v3841
    %4980 = vmatpush1.bf16.msra.mxu0 %v3840
    %4981 = vmatprep.subr.bf16.mxu0 %v3833
    %4982 = vmatpush1.bf16.msra.mxu0 %v3832
    %4983 = vmatprep.subr.bf16.mxu0 %v3825
    %4984 = vmatpush1.bf16.msra.mxu0 %v3824
    %4985 = vmatprep.subr.bf16.mxu0 %v3817
    %4986 = vmatpush1.bf16.msra.mxu0 %v3816
    %4987 = vmatprep.subr.bf16.mxu0 %v3809
    %4988 = vmatpush1.bf16.msra.mxu0 %v3808
    %4989 = vmatprep.subr.bf16.mxu0 %v3801
    %4990 = vmatpush1.bf16.msra.mxu0 %v3800
    %4991 = vmatprep.subr.bf16.mxu0 %v3921
    %4992 = vmatpush2.bf16.msra.mxu0 %v3920
    %4993 = vmatprep.subr.bf16.mxu0 %v3913
    %4994 = vmatpush2.bf16.msra.mxu0 %v3912
    %4995 = vmatprep.subr.bf16.mxu0 %v3905
    %4996 = vmatpush2.bf16.msra.mxu0 %v3904
    %4997 = vmatprep.subr.bf16.mxu0 %v3897
    %4998 = vmatpush2.bf16.msra.mxu0 %v3896
    %4999 = vmatprep.subr.bf16.mxu0 %v3889
    %5000 = vmatpush2.bf16.msra.mxu0 %v3888
    %5001 = vmatprep.subr.bf16.mxu0 %v3881
    %5002 = vmatpush2.bf16.msra.mxu0 %v3880
    %5003 = vmatprep.subr.bf16.mxu0 %v3873
    %5004 = vmatpush2.bf16.msra.mxu0 %v3872
    %5005 = vmatprep.subr.bf16.mxu0 %v3865
    %5006 = vmatpush2.bf16.msra.mxu0 %v3864
    %5007 = vmatprep.mubr.bf16.mxu0 %v4931
    %5008 = vmatmul.mubr.bf16.gmra.mxu0 %v4930
    %v5009 = vpop.f32.mrf.mxu0
    %v5010 = vadd.f32 %v4967, %v5009
    %v5011 = vpop.f32.mrf.mxu0
    %v5012 = vadd.f32 %v4969, %v5011
    %v5013 = vpop.f32.mrf.mxu0
    %v5014 = vadd.f32 %v4971, %v5013
    %v5015 = vpop.f32.mrf.mxu0
    %v5016 = vadd.f32 %v4973, %v5015
    %5017 = vdwg.mxu0
    %5018 = vmatprep.subr.bf16.mxu0 %v3731
    %5019 = vmatpush1.bf16.msra.mxu0 %v3730
    %5020 = vmatprep.subr.bf16.mxu0 %v3723
    %5021 = vmatpush1.bf16.msra.mxu0 %v3722
    %5022 = vmatprep.subr.bf16.mxu0 %v3715
    %5023 = vmatpush1.bf16.msra.mxu0 %v3714
    %5024 = vmatprep.subr.bf16.mxu0 %v3707
    %5025 = vmatpush1.bf16.msra.mxu0 %v3706
    %5026 = vmatprep.subr.bf16.mxu0 %v3699
    %5027 = vmatpush1.bf16.msra.mxu0 %v3698
    %5028 = vmatprep.subr.bf16.mxu0 %v3691
    %5029 = vmatpush1.bf16.msra.mxu0 %v3690
    %5030 = vmatprep.subr.bf16.mxu0 %v3683
    %5031 = vmatpush1.bf16.msra.mxu0 %v3682
    %5032 = vmatprep.subr.bf16.mxu0 %v3675
    %5033 = vmatpush1.bf16.msra.mxu0 %v3674
    %5034 = vmatprep.subr.bf16.mxu0 %v3795
    %5035 = vmatpush2.bf16.msra.mxu0 %v3794
    %5036 = vmatprep.subr.bf16.mxu0 %v3787
    %5037 = vmatpush2.bf16.msra.mxu0 %v3786
    %5038 = vmatprep.subr.bf16.mxu0 %v3779
    %5039 = vmatpush2.bf16.msra.mxu0 %v3778
    %5040 = vmatprep.subr.bf16.mxu0 %v3771
    %5041 = vmatpush2.bf16.msra.mxu0 %v3770
    %5042 = vmatprep.subr.bf16.mxu0 %v3763
    %5043 = vmatpush2.bf16.msra.mxu0 %v3762
    %5044 = vmatprep.subr.bf16.mxu0 %v3755
    %5045 = vmatpush2.bf16.msra.mxu0 %v3754
    %5046 = vmatprep.subr.bf16.mxu0 %v3747
    %5047 = vmatpush2.bf16.msra.mxu0 %v3746
    %5048 = vmatprep.subr.bf16.mxu0 %v3739
    %5049 = vmatpush2.bf16.msra.mxu0 %v3738
    %5050 = vmatprep.mubr.bf16.mxu0 %v4645
    %5051 = vmatmul.mubr.bf16.gmra.mxu0 %v4644
    %v5052 = vpop.f32.mrf.mxu0
    %v5053 = vadd.f32 %v1351, %v5052
    %v5054 = vpop.f32.mrf.mxu0
    %v5055 = vadd.f32 %v1355, %v5054
    %v5056 = vpop.f32.mrf.mxu0
    %v5057 = vadd.f32 %v1351, %v5056
    %v5058 = vpop.f32.mrf.mxu0
    %v5059 = vadd.f32 %v1355, %v5058
    %5060 = vdwg.mxu0
    %5061 = vmatprep.subr.bf16.mxu0 %v3859
    %5062 = vmatpush1.bf16.msra.mxu0 %v3858
    %5063 = vmatprep.subr.bf16.mxu0 %v3851
    %5064 = vmatpush1.bf16.msra.mxu0 %v3850
    %5065 = vmatprep.subr.bf16.mxu0 %v3843
    %5066 = vmatpush1.bf16.msra.mxu0 %v3842
    %5067 = vmatprep.subr.bf16.mxu0 %v3835
    %5068 = vmatpush1.bf16.msra.mxu0 %v3834
    %5069 = vmatprep.subr.bf16.mxu0 %v3827
    %5070 = vmatpush1.bf16.msra.mxu0 %v3826
    %5071 = vmatprep.subr.bf16.mxu0 %v3819
    %5072 = vmatpush1.bf16.msra.mxu0 %v3818
    %5073 = vmatprep.subr.bf16.mxu0 %v3811
    %5074 = vmatpush1.bf16.msra.mxu0 %v3810
    %5075 = vmatprep.subr.bf16.mxu0 %v3803
    %5076 = vmatpush1.bf16.msra.mxu0 %v3802
    %5077 = vmatprep.subr.bf16.mxu0 %v3923
    %5078 = vmatpush2.bf16.msra.mxu0 %v3922
    %5079 = vmatprep.subr.bf16.mxu0 %v3915
    %5080 = vmatpush2.bf16.msra.mxu0 %v3914
    %5081 = vmatprep.subr.bf16.mxu0 %v3907
    %5082 = vmatpush2.bf16.msra.mxu0 %v3906
    %5083 = vmatprep.subr.bf16.mxu0 %v3899
    %5084 = vmatpush2.bf16.msra.mxu0 %v3898
    %5085 = vmatprep.subr.bf16.mxu0 %v3891
    %5086 = vmatpush2.bf16.msra.mxu0 %v3890
    %5087 = vmatprep.subr.bf16.mxu0 %v3883
    %5088 = vmatpush2.bf16.msra.mxu0 %v3882
    %5089 = vmatprep.subr.bf16.mxu0 %v3875
    %5090 = vmatpush2.bf16.msra.mxu0 %v3874
    %5091 = vmatprep.subr.bf16.mxu0 %v3867
    %5092 = vmatpush2.bf16.msra.mxu0 %v3866
    %5093 = vmatprep.mubr.bf16.mxu0 %v4931
    %5094 = vmatmul.mubr.bf16.gmra.mxu0 %v4930
    %v5095 = vpop.f32.mrf.mxu0
    %v5096 = vadd.f32 %v5053, %v5095
    %v5097 = vpop.f32.mrf.mxu0
    %v5098 = vadd.f32 %v5055, %v5097
    %v5099 = vpop.f32.mrf.mxu0
    %v5100 = vadd.f32 %v5057, %v5099
    %v5101 = vpop.f32.mrf.mxu0
    %v5102 = vadd.f32 %v5059, %v5101
    %5103 = vdwg.mxu0
    %5104 = vmatprep.subr.bf16.mxu0 %v3733
    %5105 = vmatpush1.bf16.msra.mxu0 %v3732
    %5106 = vmatprep.subr.bf16.mxu0 %v3725
    %5107 = vmatpush1.bf16.msra.mxu0 %v3724
    %5108 = vmatprep.subr.bf16.mxu0 %v3717
    %5109 = vmatpush1.bf16.msra.mxu0 %v3716
    %5110 = vmatprep.subr.bf16.mxu0 %v3709
    %5111 = vmatpush1.bf16.msra.mxu0 %v3708
    %5112 = vmatprep.subr.bf16.mxu0 %v3701
    %5113 = vmatpush1.bf16.msra.mxu0 %v3700
    %5114 = vmatprep.subr.bf16.mxu0 %v3693
    %5115 = vmatpush1.bf16.msra.mxu0 %v3692
    %5116 = vmatprep.subr.bf16.mxu0 %v3685
    %5117 = vmatpush1.bf16.msra.mxu0 %v3684
    %5118 = vmatprep.subr.bf16.mxu0 %v3677
    %5119 = vmatpush1.bf16.msra.mxu0 %v3676
    %5120 = vmatprep.subr.bf16.mxu0 %v3797
    %5121 = vmatpush2.bf16.msra.mxu0 %v3796
    %5122 = vmatprep.subr.bf16.mxu0 %v3789
    %5123 = vmatpush2.bf16.msra.mxu0 %v3788
    %5124 = vmatprep.subr.bf16.mxu0 %v3781
    %5125 = vmatpush2.bf16.msra.mxu0 %v3780
    %5126 = vmatprep.subr.bf16.mxu0 %v3773
    %5127 = vmatpush2.bf16.msra.mxu0 %v3772
    %5128 = vmatprep.subr.bf16.mxu0 %v3765
    %5129 = vmatpush2.bf16.msra.mxu0 %v3764
    %5130 = vmatprep.subr.bf16.mxu0 %v3757
    %5131 = vmatpush2.bf16.msra.mxu0 %v3756
    %5132 = vmatprep.subr.bf16.mxu0 %v3749
    %5133 = vmatpush2.bf16.msra.mxu0 %v3748
    %5134 = vmatprep.subr.bf16.mxu0 %v3741
    %5135 = vmatpush2.bf16.msra.mxu0 %v3740
    %5136 = vmatprep.mubr.bf16.mxu0 %v4645
    %5137 = vmatmul.mubr.bf16.gmra.mxu0 %v4644
    %v5138 = vpop.f32.mrf.mxu0
    %v5139 = vadd.f32 %v1359, %v5138
    %v5140 = vpop.f32.mrf.mxu0
    %v5141 = vadd.f32 %v1363, %v5140
    %v5142 = vpop.f32.mrf.mxu0
    %v5143 = vadd.f32 %v1359, %v5142
    %v5144 = vpop.f32.mrf.mxu0
    %v5145 = vadd.f32 %v1363, %v5144
    %5146 = vdwg.mxu0
    %5147 = vmatprep.subr.bf16.mxu0 %v3861
    %5148 = vmatpush1.bf16.msra.mxu0 %v3860
    %5149 = vmatprep.subr.bf16.mxu0 %v3853
    %5150 = vmatpush1.bf16.msra.mxu0 %v3852
    %5151 = vmatprep.subr.bf16.mxu0 %v3845
    %5152 = vmatpush1.bf16.msra.mxu0 %v3844
    %5153 = vmatprep.subr.bf16.mxu0 %v3837
    %5154 = vmatpush1.bf16.msra.mxu0 %v3836
    %5155 = vmatprep.subr.bf16.mxu0 %v3829
    %5156 = vmatpush1.bf16.msra.mxu0 %v3828
    %5157 = vmatprep.subr.bf16.mxu0 %v3821
    %5158 = vmatpush1.bf16.msra.mxu0 %v3820
    %5159 = vmatprep.subr.bf16.mxu0 %v3813
    %5160 = vmatpush1.bf16.msra.mxu0 %v3812
    %5161 = vmatprep.subr.bf16.mxu0 %v3805
    %5162 = vmatpush1.bf16.msra.mxu0 %v3804
    %5163 = vmatprep.subr.bf16.mxu0 %v3925
    %5164 = vmatpush2.bf16.msra.mxu0 %v3924
    %5165 = vmatprep.subr.bf16.mxu0 %v3917
    %5166 = vmatpush2.bf16.msra.mxu0 %v3916
    %5167 = vmatprep.subr.bf16.mxu0 %v3909
    %5168 = vmatpush2.bf16.msra.mxu0 %v3908
    %5169 = vmatprep.subr.bf16.mxu0 %v3901
    %5170 = vmatpush2.bf16.msra.mxu0 %v3900
    %5171 = vmatprep.subr.bf16.mxu0 %v3893
    %5172 = vmatpush2.bf16.msra.mxu0 %v3892
    %5173 = vmatprep.subr.bf16.mxu0 %v3885
    %5174 = vmatpush2.bf16.msra.mxu0 %v3884
    %5175 = vmatprep.subr.bf16.mxu0 %v3877
    %5176 = vmatpush2.bf16.msra.mxu0 %v3876
    %5177 = vmatprep.subr.bf16.mxu0 %v3869
    %5178 = vmatpush2.bf16.msra.mxu0 %v3868
    %5179 = vmatprep.mubr.bf16.mxu0 %v4931
    %5180 = vmatmul.mubr.bf16.gmra.mxu0 %v4930
    %v5181 = vpop.f32.mrf.mxu0
    %v5182 = vadd.f32 %v5139, %v5181
    %v5183 = vpop.f32.mrf.mxu0
    %v5184 = vadd.f32 %v5141, %v5183
    %v5185 = vpop.f32.mrf.mxu0
    %v5186 = vadd.f32 %v5143, %v5185
    %v5187 = vpop.f32.mrf.mxu0
    %v5188 = vadd.f32 %v5145, %v5187
    %5189 = vdwg.mxu0
    %5190 = vmatprep.subr.bf16.mxu0 %v3735
    %5191 = vmatpush1.bf16.msra.mxu0 %v3734
    %5192 = vmatprep.subr.bf16.mxu0 %v3727
    %5193 = vmatpush1.bf16.msra.mxu0 %v3726
    %5194 = vmatprep.subr.bf16.mxu0 %v3719
    %5195 = vmatpush1.bf16.msra.mxu0 %v3718
    %5196 = vmatprep.subr.bf16.mxu0 %v3711
    %5197 = vmatpush1.bf16.msra.mxu0 %v3710
    %5198 = vmatprep.subr.bf16.mxu0 %v3703
    %5199 = vmatpush1.bf16.msra.mxu0 %v3702
    %5200 = vmatprep.subr.bf16.mxu0 %v3695
    %5201 = vmatpush1.bf16.msra.mxu0 %v3694
    %5202 = vmatprep.subr.bf16.mxu0 %v3687
    %5203 = vmatpush1.bf16.msra.mxu0 %v3686
    %5204 = vmatprep.subr.bf16.mxu0 %v3679
    %5205 = vmatpush1.bf16.msra.mxu0 %v3678
    %5206 = vmatprep.subr.bf16.mxu0 %v3799
    %5207 = vmatpush2.bf16.msra.mxu0 %v3798
    %5208 = vmatprep.subr.bf16.mxu0 %v3791
    %5209 = vmatpush2.bf16.msra.mxu0 %v3790
    %5210 = vmatprep.subr.bf16.mxu0 %v3783
    %5211 = vmatpush2.bf16.msra.mxu0 %v3782
    %5212 = vmatprep.subr.bf16.mxu0 %v3775
    %5213 = vmatpush2.bf16.msra.mxu0 %v3774
    %5214 = vmatprep.subr.bf16.mxu0 %v3767
    %5215 = vmatpush2.bf16.msra.mxu0 %v3766
    %5216 = vmatprep.subr.bf16.mxu0 %v3759
    %5217 = vmatpush2.bf16.msra.mxu0 %v3758
    %5218 = vmatprep.subr.bf16.mxu0 %v3751
    %5219 = vmatpush2.bf16.msra.mxu0 %v3750
    %5220 = vmatprep.subr.bf16.mxu0 %v3743
    %5221 = vmatpush2.bf16.msra.mxu0 %v3742
    %5222 = vmatprep.mubr.bf16.mxu0 %v4645
    %5223 = vmatmul.mubr.bf16.gmra.mxu0 %v4644
    %v5224 = vpop.f32.mrf.mxu0
    %v5225 = vadd.f32 %v1367, %v5224
    %v5226 = vpop.f32.mrf.mxu0
    %v5227 = vadd.f32 %v1371, %v5226
    %v5228 = vpop.f32.mrf.mxu0
    %v5229 = vadd.f32 %v1367, %v5228
    %v5230 = vpop.f32.mrf.mxu0
    %v5231 = vadd.f32 %v1371, %v5230
    %5232 = vdwg.mxu0
    %5233 = vmatprep.subr.bf16.mxu0 %v3863
    %5234 = vmatpush1.bf16.msra.mxu0 %v3862
    %5235 = vmatprep.subr.bf16.mxu0 %v3855
    %5236 = vmatpush1.bf16.msra.mxu0 %v3854
    %5237 = vmatprep.subr.bf16.mxu0 %v3847
    %5238 = vmatpush1.bf16.msra.mxu0 %v3846
    %5239 = vmatprep.subr.bf16.mxu0 %v3839
    %5240 = vmatpush1.bf16.msra.mxu0 %v3838
    %5241 = vmatprep.subr.bf16.mxu0 %v3831
    %5242 = vmatpush1.bf16.msra.mxu0 %v3830
    %5243 = vmatprep.subr.bf16.mxu0 %v3823
    %5244 = vmatpush1.bf16.msra.mxu0 %v3822
    %5245 = vmatprep.subr.bf16.mxu0 %v3815
    %5246 = vmatpush1.bf16.msra.mxu0 %v3814
    %5247 = vmatprep.subr.bf16.mxu0 %v3807
    %5248 = vmatpush1.bf16.msra.mxu0 %v3806
    %5249 = vmatprep.subr.bf16.mxu0 %v3927
    %5250 = vmatpush2.bf16.msra.mxu0 %v3926
    %5251 = vmatprep.subr.bf16.mxu0 %v3919
    %5252 = vmatpush2.bf16.msra.mxu0 %v3918
    %5253 = vmatprep.subr.bf16.mxu0 %v3911
    %5254 = vmatpush2.bf16.msra.mxu0 %v3910
    %5255 = vmatprep.subr.bf16.mxu0 %v3903
    %5256 = vmatpush2.bf16.msra.mxu0 %v3902
    %5257 = vmatprep.subr.bf16.mxu0 %v3895
    %5258 = vmatpush2.bf16.msra.mxu0 %v3894
    %5259 = vmatprep.subr.bf16.mxu0 %v3887
    %5260 = vmatpush2.bf16.msra.mxu0 %v3886
    %5261 = vmatprep.subr.bf16.mxu0 %v3879
    %5262 = vmatpush2.bf16.msra.mxu0 %v3878
    %5263 = vmatprep.subr.bf16.mxu0 %v3871
    %5264 = vmatpush2.bf16.msra.mxu0 %v3870
    %5265 = vmatprep.mubr.bf16.mxu0 %v4931
    %5266 = vmatmul.mubr.bf16.gmra.mxu0 %v4930
    %v5267 = vpop.f32.mrf.mxu0
    %v5268 = vadd.f32 %v5225, %v5267
    %v5269 = vpop.f32.mrf.mxu0
    %v5270 = vadd.f32 %v5227, %v5269
    %v5271 = vpop.f32.mrf.mxu0
    %v5272 = vadd.f32 %v5229, %v5271
    %v5273 = vpop.f32.mrf.mxu0
    %v5274 = vadd.f32 %v5231, %v5273
    %5275 = vdwg.mxu0
    %v5276 = vxor.u32 %v5010, 2147483648
    %v5277 = vxor.u32 %v5012, 2147483648
    %v5278 = vxor.u32 %v5096, 2147483648
    %v5279 = vxor.u32 %v5098, 2147483648
    %v5280 = vxor.u32 %v5182, 2147483648
    %v5281 = vxor.u32 %v5184, 2147483648
    %v5282 = vxor.u32 %v5014, 2147483648
    %v5283 = vxor.u32 %v5016, 2147483648
    %v5284 = vxor.u32 %v5100, 2147483648
    %v5285 = vxor.u32 %v5102, 2147483648
    %v5286 = vxor.u32 %v5186, 2147483648
    %v5287 = vxor.u32 %v5188, 2147483648
    %v5288 = vmul.f32 %v5276, 1.442695
    %v5289 = vpow.pop %v5288
    %v5290 = vmul.f32 %v5277, 1.442695
    %v5291 = vpow.pop %v5290
    %v5292 = vmul.f32 %v5278, 1.442695
    %v5293 = vpow.pop %v5292
    %v5294 = vmul.f32 %v5279, 1.442695
    %v5295 = vpow.pop %v5294
    %v5296 = vmul.f32 %v5280, 1.442695
    %v5297 = vpow.pop %v5296
    %v5298 = vmul.f32 %v5281, 1.442695
    %v5299 = vpow.pop %v5298
    %v5300 = vmul.f32 %v5282, 1.442695
    %v5301 = vpow.pop %v5300
    %v5302 = vmul.f32 %v5283, 1.442695
    %v5303 = vpow.pop %v5302
    %v5304 = vmul.f32 %v5284, 1.442695
    %v5305 = vpow.pop %v5304
    %v5306 = vmul.f32 %v5285, 1.442695
    %v5307 = vpow.pop %v5306
    %v5308 = vmul.f32 %v5286, 1.442695
    %v5309 = vpow.pop %v5308
    %v5310 = vmul.f32 %v5287, 1.442695
    %v5311 = vpow.pop %v5310
    %v5312 = vadd.f32 %v5289, 1.0
    %v5313 = vadd.f32 %v5291, 1.0
    %v5314 = vadd.f32 %v5293, 1.0
    %v5315 = vadd.f32 %v5295, 1.0
    %v5316 = vadd.f32 %v5297, 1.0
    %v5317 = vadd.f32 %v5299, 1.0
    %v5318 = vadd.f32 %v5301, 1.0
    %v5319 = vadd.f32 %v5303, 1.0
    %v5320 = vadd.f32 %v5305, 1.0
    %v5321 = vadd.f32 %v5307, 1.0
    %v5322 = vadd.f32 %v5309, 1.0
    %v5323 = vadd.f32 %v5311, 1.0
    %v5324 = vrcp.pop %v5312
    %v5325 = vmul.f32 1.0, %v5324
    %v5326 = vrcp.pop %v5313
    %v5327 = vmul.f32 1.0, %v5326
    %v5328 = vrcp.pop %v5314
    %v5329 = vmul.f32 1.0, %v5328
    %v5330 = vrcp.pop %v5315
    %v5331 = vmul.f32 1.0, %v5330
    %v5332 = vrcp.pop %v5316
    %v5333 = vmul.f32 1.0, %v5332
    %v5334 = vrcp.pop %v5317
    %v5335 = vmul.f32 1.0, %v5334
    %v5336 = vrcp.pop %v5318
    %v5337 = vmul.f32 1.0, %v5336
    %v5338 = vrcp.pop %v5319
    %v5339 = vmul.f32 1.0, %v5338
    %v5340 = vrcp.pop %v5320
    %v5341 = vmul.f32 1.0, %v5340
    %v5342 = vrcp.pop %v5321
    %v5343 = vmul.f32 1.0, %v5342
    %v5344 = vrcp.pop %v5322
    %v5345 = vmul.f32 1.0, %v5344
    %v5346 = vrcp.pop %v5323
    %v5347 = vmul.f32 1.0, %v5346
    %v5348 = vtanh.pop %v5268
    %v5349 = vtanh.pop %v5270
    %v5350 = vtanh.pop %v5272
    %v5351 = vtanh.pop %v5274
    %v5352 = vmul.f32 %v5329, %v4612
    %v5353 = vmul.f32 %v5331, %v4613
    %v5354 = vmul.f32 %v5341, %v4614
    %v5355 = vmul.f32 %v5343, %v4615
    %v5356 = vmul.f32 %v5325, %v5348
    %v5357 = vmul.f32 %v5327, %v5349
    %v5358 = vmul.f32 %v5337, %v5350
    %v5359 = vmul.f32 %v5339, %v5351
    %v5360 = vadd.f32 %v5352, %v5356
    %v5361 = vadd.f32 %v5353, %v5357
    %v5362 = vadd.f32 %v5354, %v5358
    %v5363 = vadd.f32 %v5355, %v5359
    %v5364 = vtanh.pop %v5360
    %v5365 = vtanh.pop %v5361
    %v5366 = vtanh.pop %v5362
    %v5367 = vtanh.pop %v5363
    %v5368 = vmul.f32 %v5333, %v5364
    %v5369 = vmul.f32 %v5335, %v5365
    %v5370 = vmul.f32 %v5345, %v5366
    %v5371 = vmul.f32 %v5347, %v5367
    %5372 = vst [vmem:[#allocation3 + $0x20] sm:$0xff] %v5368
    %5373 = vst [vmem:[#allocation3 + $0x28] sm:$0xff] %v5369
    %5374 = vst [vmem:[#allocation3 + $0x30] sm:$0xff] %v5370
    %5375 = vst [vmem:[#allocation3 + $0x38] sm:$0xff] %v5371
    %v5376 = vld [vmem:[#allocation2 + $0x180] sm:$0xff]
    %v5377 = vld [vmem:[#allocation2 + $0x188] sm:$0xff]
    %v5378 = vld [vmem:[#allocation2 + $0x190] sm:$0xff]
    %v5379 = vld [vmem:[#allocation2 + $0x198] sm:$0xff]
    %v5380 = vld [vmem:[#allocation2 + $0x1a0] sm:$0xff]
    %v5381 = vld [vmem:[#allocation2 + $0x1a8] sm:$0xff]
    %v5382 = vld [vmem:[#allocation2 + $0x1b0] sm:$0xff]
    %v5383 = vld [vmem:[#allocation2 + $0x1b8] sm:$0xff]
    %v5384 = vld [vmem:[#allocation2 + $0x1c0] sm:$0xff]
    %v5385 = vld [vmem:[#allocation2 + $0x1c8] sm:$0xff]
    %v5386 = vld [vmem:[#allocation2 + $0x1d0] sm:$0xff]
    %v5387 = vld [vmem:[#allocation2 + $0x1d8] sm:$0xff]
    %v5388 = vld [vmem:[#allocation2 + $0x1e0] sm:$0xff]
    %v5389 = vld [vmem:[#allocation2 + $0x1e8] sm:$0xff]
    %v5390 = vld [vmem:[#allocation2 + $0x1f0] sm:$0xff]
    %v5391 = vld [vmem:[#allocation2 + $0x1f8] sm:$0xff]
    %v5392 = vpack.c.bf16 %v4928, %v4926
    %v5393 = vpack.c.bf16 %v4929, %v4927
    %5394 = vmatprep.subr.bf16.mxu0 %v1857
    %5395 = vmatpush1.bf16.msra.mxu0 %v1856
    %5396 = vmatprep.subr.bf16.mxu0 %v1849
    %5397 = vmatpush1.bf16.msra.mxu0 %v1848
    %5398 = vmatprep.subr.bf16.mxu0 %v1841
    %5399 = vmatpush1.bf16.msra.mxu0 %v1840
    %5400 = vmatprep.subr.bf16.mxu0 %v1833
    %5401 = vmatpush1.bf16.msra.mxu0 %v1832
    %5402 = vmatprep.subr.bf16.mxu0 %v1825
    %5403 = vmatpush1.bf16.msra.mxu0 %v1824
    %5404 = vmatprep.subr.bf16.mxu0 %v1817
    %5405 = vmatpush1.bf16.msra.mxu0 %v1816
    %5406 = vmatprep.subr.bf16.mxu0 %v1809
    %5407 = vmatpush1.bf16.msra.mxu0 %v1808
    %5408 = vmatprep.subr.bf16.mxu0 %v1801
    %5409 = vmatpush1.bf16.msra.mxu0 %v1800
    %5410 = vmatprep.subr.bf16.mxu0 %v1921
    %5411 = vmatpush2.bf16.msra.mxu0 %v1920
    %5412 = vmatprep.subr.bf16.mxu0 %v1913
    %5413 = vmatpush2.bf16.msra.mxu0 %v1912
    %5414 = vmatprep.subr.bf16.mxu0 %v1905
    %5415 = vmatpush2.bf16.msra.mxu0 %v1904
    %5416 = vmatprep.subr.bf16.mxu0 %v1897
    %5417 = vmatpush2.bf16.msra.mxu0 %v1896
    %5418 = vmatprep.subr.bf16.mxu0 %v1889
    %5419 = vmatpush2.bf16.msra.mxu0 %v1888
    %5420 = vmatprep.subr.bf16.mxu0 %v1881
    %5421 = vmatpush2.bf16.msra.mxu0 %v1880
    %5422 = vmatprep.subr.bf16.mxu0 %v1873
    %5423 = vmatpush2.bf16.msra.mxu0 %v1872
    %5424 = vmatprep.subr.bf16.mxu0 %v1865
    %5425 = vmatpush2.bf16.msra.mxu0 %v1864
    %5426 = vmatprep.mubr.bf16.mxu0 %v5393
    %5427 = vmatmul.mubr.bf16.gmra.mxu0 %v5392
    %v5428 = vpop.f32.mrf.mxu0
    %v5429 = vadd.f32 0.0, %v5428
    %v5430 = vpop.f32.mrf.mxu0
    %v5431 = vadd.f32 0.0, %v5430
    %v5432 = vpop.f32.mrf.mxu0
    %v5433 = vadd.f32 0.0, %v5432
    %v5434 = vpop.f32.mrf.mxu0
    %v5435 = vadd.f32 0.0, %v5434
    %5436 = vdwg.mxu0
    %5437 = vmatprep.subr.bf16.mxu0 %v1859
    %5438 = vmatpush1.bf16.msra.mxu0 %v1858
    %5439 = vmatprep.subr.bf16.mxu0 %v1851
    %5440 = vmatpush1.bf16.msra.mxu0 %v1850
    %5441 = vmatprep.subr.bf16.mxu0 %v1843
    %5442 = vmatpush1.bf16.msra.mxu0 %v1842
    %5443 = vmatprep.subr.bf16.mxu0 %v1835
    %5444 = vmatpush1.bf16.msra.mxu0 %v1834
    %5445 = vmatprep.subr.bf16.mxu0 %v1827
    %5446 = vmatpush1.bf16.msra.mxu0 %v1826
    %5447 = vmatprep.subr.bf16.mxu0 %v1819
    %5448 = vmatpush1.bf16.msra.mxu0 %v1818
    %5449 = vmatprep.subr.bf16.mxu0 %v1811
    %5450 = vmatpush1.bf16.msra.mxu0 %v1810
    %5451 = vmatprep.subr.bf16.mxu0 %v1803
    %5452 = vmatpush1.bf16.msra.mxu0 %v1802
    %5453 = vmatprep.subr.bf16.mxu0 %v1923
    %5454 = vmatpush2.bf16.msra.mxu0 %v1922
    %5455 = vmatprep.subr.bf16.mxu0 %v1915
    %5456 = vmatpush2.bf16.msra.mxu0 %v1914
    %5457 = vmatprep.subr.bf16.mxu0 %v1907
    %5458 = vmatpush2.bf16.msra.mxu0 %v1906
    %5459 = vmatprep.subr.bf16.mxu0 %v1899
    %5460 = vmatpush2.bf16.msra.mxu0 %v1898
    %5461 = vmatprep.subr.bf16.mxu0 %v1891
    %5462 = vmatpush2.bf16.msra.mxu0 %v1890
    %5463 = vmatprep.subr.bf16.mxu0 %v1883
    %5464 = vmatpush2.bf16.msra.mxu0 %v1882
    %5465 = vmatprep.subr.bf16.mxu0 %v1875
    %5466 = vmatpush2.bf16.msra.mxu0 %v1874
    %5467 = vmatprep.subr.bf16.mxu0 %v1867
    %5468 = vmatpush2.bf16.msra.mxu0 %v1866
    %5469 = vmatprep.mubr.bf16.mxu0 %v5393
    %5470 = vmatmul.mubr.bf16.gmra.mxu0 %v5392
    %v5471 = vpop.f32.mrf.mxu0
    %v5472 = vadd.f32 0.0, %v5471
    %v5473 = vpop.f32.mrf.mxu0
    %v5474 = vadd.f32 0.0, %v5473
    %v5475 = vpop.f32.mrf.mxu0
    %v5476 = vadd.f32 0.0, %v5475
    %v5477 = vpop.f32.mrf.mxu0
    %v5478 = vadd.f32 0.0, %v5477
    %5479 = vdwg.mxu0
    %5480 = vmatprep.subr.bf16.mxu0 %v1861
    %5481 = vmatpush1.bf16.msra.mxu0 %v1860
    %5482 = vmatprep.subr.bf16.mxu0 %v1853
    %5483 = vmatpush1.bf16.msra.mxu0 %v1852
    %5484 = vmatprep.subr.bf16.mxu0 %v1845
    %5485 = vmatpush1.bf16.msra.mxu0 %v1844
    %5486 = vmatprep.subr.bf16.mxu0 %v1837
    %5487 = vmatpush1.bf16.msra.mxu0 %v1836
    %5488 = vmatprep.subr.bf16.mxu0 %v1829
    %5489 = vmatpush1.bf16.msra.mxu0 %v1828
    %5490 = vmatprep.subr.bf16.mxu0 %v1821
    %5491 = vmatpush1.bf16.msra.mxu0 %v1820
    %5492 = vmatprep.subr.bf16.mxu0 %v1813
    %5493 = vmatpush1.bf16.msra.mxu0 %v1812
    %5494 = vmatprep.subr.bf16.mxu0 %v1805
    %5495 = vmatpush1.bf16.msra.mxu0 %v1804
    %5496 = vmatprep.subr.bf16.mxu0 %v1925
    %5497 = vmatpush2.bf16.msra.mxu0 %v1924
    %5498 = vmatprep.subr.bf16.mxu0 %v1917
    %5499 = vmatpush2.bf16.msra.mxu0 %v1916
    %5500 = vmatprep.subr.bf16.mxu0 %v1909
    %5501 = vmatpush2.bf16.msra.mxu0 %v1908
    %5502 = vmatprep.subr.bf16.mxu0 %v1901
    %5503 = vmatpush2.bf16.msra.mxu0 %v1900
    %5504 = vmatprep.subr.bf16.mxu0 %v1893
    %5505 = vmatpush2.bf16.msra.mxu0 %v1892
    %5506 = vmatprep.subr.bf16.mxu0 %v1885
    %5507 = vmatpush2.bf16.msra.mxu0 %v1884
    %5508 = vmatprep.subr.bf16.mxu0 %v1877
    %5509 = vmatpush2.bf16.msra.mxu0 %v1876
    %5510 = vmatprep.subr.bf16.mxu0 %v1869
    %5511 = vmatpush2.bf16.msra.mxu0 %v1868
    %5512 = vmatprep.mubr.bf16.mxu0 %v5393
    %5513 = vmatmul.mubr.bf16.gmra.mxu0 %v5392
    %v5514 = vpop.f32.mrf.mxu0
    %v5515 = vadd.f32 0.0, %v5514
    %v5516 = vpop.f32.mrf.mxu0
    %v5517 = vadd.f32 0.0, %v5516
    %v5518 = vpop.f32.mrf.mxu0
    %v5519 = vadd.f32 0.0, %v5518
    %v5520 = vpop.f32.mrf.mxu0
    %v5521 = vadd.f32 0.0, %v5520
    %5522 = vdwg.mxu0
    %5523 = vmatprep.subr.bf16.mxu0 %v1863
    %5524 = vmatpush1.bf16.msra.mxu0 %v1862
    %5525 = vmatprep.subr.bf16.mxu0 %v1855
    %5526 = vmatpush1.bf16.msra.mxu0 %v1854
    %5527 = vmatprep.subr.bf16.mxu0 %v1847
    %5528 = vmatpush1.bf16.msra.mxu0 %v1846
    %5529 = vmatprep.subr.bf16.mxu0 %v1839
    %5530 = vmatpush1.bf16.msra.mxu0 %v1838
    %5531 = vmatprep.subr.bf16.mxu0 %v1831
    %5532 = vmatpush1.bf16.msra.mxu0 %v1830
    %5533 = vmatprep.subr.bf16.mxu0 %v1823
    %5534 = vmatpush1.bf16.msra.mxu0 %v1822
    %5535 = vmatprep.subr.bf16.mxu0 %v1815
    %5536 = vmatpush1.bf16.msra.mxu0 %v1814
    %5537 = vmatprep.subr.bf16.mxu0 %v1807
    %5538 = vmatpush1.bf16.msra.mxu0 %v1806
    %5539 = vmatprep.subr.bf16.mxu0 %v1927
    %5540 = vmatpush2.bf16.msra.mxu0 %v1926
    %5541 = vmatprep.subr.bf16.mxu0 %v1919
    %5542 = vmatpush2.bf16.msra.mxu0 %v1918
    %5543 = vmatprep.subr.bf16.mxu0 %v1911
    %5544 = vmatpush2.bf16.msra.mxu0 %v1910
    %5545 = vmatprep.subr.bf16.mxu0 %v1903
    %5546 = vmatpush2.bf16.msra.mxu0 %v1902
    %5547 = vmatprep.subr.bf16.mxu0 %v1895
    %5548 = vmatpush2.bf16.msra.mxu0 %v1894
    %5549 = vmatprep.subr.bf16.mxu0 %v1887
    %5550 = vmatpush2.bf16.msra.mxu0 %v1886
    %5551 = vmatprep.subr.bf16.mxu0 %v1879
    %5552 = vmatpush2.bf16.msra.mxu0 %v1878
    %5553 = vmatprep.subr.bf16.mxu0 %v1871
    %5554 = vmatpush2.bf16.msra.mxu0 %v1870
    %5555 = vmatprep.mubr.bf16.mxu0 %v5393
    %5556 = vmatmul.mubr.bf16.gmra.mxu0 %v5392
    %v5557 = vpop.f32.mrf.mxu0
    %v5558 = vadd.f32 0.0, %v5557
    %v5559 = vpop.f32.mrf.mxu0
    %v5560 = vadd.f32 0.0, %v5559
    %v5561 = vpop.f32.mrf.mxu0
    %v5562 = vadd.f32 0.0, %v5561
    %v5563 = vpop.f32.mrf.mxu0
    %v5564 = vadd.f32 0.0, %v5563
    %5565 = vdwg.mxu0
    %v5566 = vadd.f32 %v5376, %v5429
    %v5567 = vadd.f32 %v5377, %v5431
    %v5568 = vadd.f32 %v5378, %v5472
    %v5569 = vadd.f32 %v5379, %v5474
    %v5570 = vadd.f32 %v5380, %v5515
    %v5571 = vadd.f32 %v5381, %v5517
    %v5572 = vadd.f32 %v5382, %v5558
    %v5573 = vadd.f32 %v5383, %v5560
    %v5574 = vadd.f32 %v5384, %v5433
    %v5575 = vadd.f32 %v5385, %v5435
    %v5576 = vadd.f32 %v5386, %v5476
    %v5577 = vadd.f32 %v5387, %v5478
    %v5578 = vadd.f32 %v5388, %v5519
    %v5579 = vadd.f32 %v5389, %v5521
    %v5580 = vadd.f32 %v5390, %v5562
    %v5581 = vadd.f32 %v5391, %v5564
    %v5582 = vxor.u32 %v5566, 2147483648
    %v5583 = vxor.u32 %v5567, 2147483648
    %v5584 = vxor.u32 %v5568, 2147483648
    %v5585 = vxor.u32 %v5569, 2147483648
    %v5586 = vxor.u32 %v5570, 2147483648
    %v5587 = vxor.u32 %v5571, 2147483648
    %v5588 = vxor.u32 %v5574, 2147483648
    %v5589 = vxor.u32 %v5575, 2147483648
    %v5590 = vxor.u32 %v5576, 2147483648
    %v5591 = vxor.u32 %v5577, 2147483648
    %v5592 = vxor.u32 %v5578, 2147483648
    %v5593 = vxor.u32 %v5579, 2147483648
    %v5594 = vmul.f32 %v5582, 1.442695
    %v5595 = vpow.pop %v5594
    %v5596 = vmul.f32 %v5583, 1.442695
    %v5597 = vpow.pop %v5596
    %v5598 = vmul.f32 %v5584, 1.442695
    %v5599 = vpow.pop %v5598
    %v5600 = vmul.f32 %v5585, 1.442695
    %v5601 = vpow.pop %v5600
    %v5602 = vmul.f32 %v5586, 1.442695
    %v5603 = vpow.pop %v5602
    %v5604 = vmul.f32 %v5587, 1.442695
    %v5605 = vpow.pop %v5604
    %v5606 = vmul.f32 %v5588, 1.442695
    %v5607 = vpow.pop %v5606
    %v5608 = vmul.f32 %v5589, 1.442695
    %v5609 = vpow.pop %v5608
    %v5610 = vmul.f32 %v5590, 1.442695
    %v5611 = vpow.pop %v5610
    %v5612 = vmul.f32 %v5591, 1.442695
    %v5613 = vpow.pop %v5612
    %v5614 = vmul.f32 %v5592, 1.442695
    %v5615 = vpow.pop %v5614
    %v5616 = vmul.f32 %v5593, 1.442695
    %v5617 = vpow.pop %v5616
    %v5618 = vadd.f32 %v5595, 1.0
    %v5619 = vadd.f32 %v5597, 1.0
    %v5620 = vadd.f32 %v5599, 1.0
    %v5621 = vadd.f32 %v5601, 1.0
    %v5622 = vadd.f32 %v5603, 1.0
    %v5623 = vadd.f32 %v5605, 1.0
    %v5624 = vadd.f32 %v5607, 1.0
    %v5625 = vadd.f32 %v5609, 1.0
    %v5626 = vadd.f32 %v5611, 1.0
    %v5627 = vadd.f32 %v5613, 1.0
    %v5628 = vadd.f32 %v5615, 1.0
    %v5629 = vadd.f32 %v5617, 1.0
    %v5630 = vrcp.pop %v5618
    %v5631 = vmul.f32 1.0, %v5630
    %v5632 = vrcp.pop %v5619
    %v5633 = vmul.f32 1.0, %v5632
    %v5634 = vrcp.pop %v5620
    %v5635 = vmul.f32 1.0, %v5634
    %v5636 = vrcp.pop %v5621
    %v5637 = vmul.f32 1.0, %v5636
    %v5638 = vrcp.pop %v5622
    %v5639 = vmul.f32 1.0, %v5638
    %v5640 = vrcp.pop %v5623
    %v5641 = vmul.f32 1.0, %v5640
    %v5642 = vrcp.pop %v5624
    %v5643 = vmul.f32 1.0, %v5642
    %v5644 = vrcp.pop %v5625
    %v5645 = vmul.f32 1.0, %v5644
    %v5646 = vrcp.pop %v5626
    %v5647 = vmul.f32 1.0, %v5646
    %v5648 = vrcp.pop %v5627
    %v5649 = vmul.f32 1.0, %v5648
    %v5650 = vrcp.pop %v5628
    %v5651 = vmul.f32 1.0, %v5650
    %v5652 = vrcp.pop %v5629
    %v5653 = vmul.f32 1.0, %v5652
    %v5654 = vtanh.pop %v5572
    %v5655 = vtanh.pop %v5573
    %v5656 = vtanh.pop %v5580
    %v5657 = vtanh.pop %v5581
    %v5658 = vmul.f32 %v5635, %v4918
    %v5659 = vmul.f32 %v5637, %v4919
    %v5660 = vmul.f32 %v5647, %v4920
    %v5661 = vmul.f32 %v5649, %v4921
    %v5662 = vmul.f32 %v5631, %v5654
    %v5663 = vmul.f32 %v5633, %v5655
    %v5664 = vmul.f32 %v5643, %v5656
    %v5665 = vmul.f32 %v5645, %v5657
    %v5666 = vadd.f32 %v5658, %v5662
    %v5667 = vadd.f32 %v5659, %v5663
    %v5668 = vadd.f32 %v5660, %v5664
    %v5669 = vadd.f32 %v5661, %v5665
    %v5670 = vtanh.pop %v5666
    %v5671 = vtanh.pop %v5667
    %v5672 = vtanh.pop %v5668
    %v5673 = vtanh.pop %v5669
    %v5674 = vmul.f32 %v5639, %v5670
    %v5675 = vmul.f32 %v5641, %v5671
    %v5676 = vmul.f32 %v5651, %v5672
    %v5677 = vmul.f32 %v5653, %v5673
    %v5678 = vpack.c.bf16 %v5370, %v5368
    %v5679 = vpack.c.bf16 %v5371, %v5369
    %5680 = vmatprep.subr.bf16.mxu0 %v3729
    %5681 = vmatpush1.bf16.msra.mxu0 %v3728
    %5682 = vmatprep.subr.bf16.mxu0 %v3721
    %5683 = vmatpush1.bf16.msra.mxu0 %v3720
    %5684 = vmatprep.subr.bf16.mxu0 %v3713
    %5685 = vmatpush1.bf16.msra.mxu0 %v3712
    %5686 = vmatprep.subr.bf16.mxu0 %v3705
    %5687 = vmatpush1.bf16.msra.mxu0 %v3704
    %5688 = vmatprep.subr.bf16.mxu0 %v3697
    %5689 = vmatpush1.bf16.msra.mxu0 %v3696
    %5690 = vmatprep.subr.bf16.mxu0 %v3689
    %5691 = vmatpush1.bf16.msra.mxu0 %v3688
    %5692 = vmatprep.subr.bf16.mxu0 %v3681
    %5693 = vmatpush1.bf16.msra.mxu0 %v3680
    %5694 = vmatprep.subr.bf16.mxu0 %v3673
    %5695 = vmatpush1.bf16.msra.mxu0 %v3672
    %5696 = vmatprep.subr.bf16.mxu0 %v3793
    %5697 = vmatpush2.bf16.msra.mxu0 %v3792
    %5698 = vmatprep.subr.bf16.mxu0 %v3785
    %5699 = vmatpush2.bf16.msra.mxu0 %v3784
    %5700 = vmatprep.subr.bf16.mxu0 %v3777
    %5701 = vmatpush2.bf16.msra.mxu0 %v3776
    %5702 = vmatprep.subr.bf16.mxu0 %v3769
    %5703 = vmatpush2.bf16.msra.mxu0 %v3768
    %5704 = vmatprep.subr.bf16.mxu0 %v3761
    %5705 = vmatpush2.bf16.msra.mxu0 %v3760
    %5706 = vmatprep.subr.bf16.mxu0 %v3753
    %5707 = vmatpush2.bf16.msra.mxu0 %v3752
    %5708 = vmatprep.subr.bf16.mxu0 %v3745
    %5709 = vmatpush2.bf16.msra.mxu0 %v3744
    %5710 = vmatprep.subr.bf16.mxu0 %v3737
    %5711 = vmatpush2.bf16.msra.mxu0 %v3736
    %5712 = vmatprep.mubr.bf16.mxu0 %v5393
    %5713 = vmatmul.mubr.bf16.gmra.mxu0 %v5392
    %v5714 = vpop.f32.mrf.mxu0
    %v5715 = vadd.f32 %v1343, %v5714
    %v5716 = vpop.f32.mrf.mxu0
    %v5717 = vadd.f32 %v1347, %v5716
    %v5718 = vpop.f32.mrf.mxu0
    %v5719 = vadd.f32 %v1343, %v5718
    %v5720 = vpop.f32.mrf.mxu0
    %v5721 = vadd.f32 %v1347, %v5720
    %5722 = vdwg.mxu0
    %5723 = vmatprep.subr.bf16.mxu0 %v3857
    %5724 = vmatpush1.bf16.msra.mxu0 %v3856
    %5725 = vmatprep.subr.bf16.mxu0 %v3849
    %5726 = vmatpush1.bf16.msra.mxu0 %v3848
    %5727 = vmatprep.subr.bf16.mxu0 %v3841
    %5728 = vmatpush1.bf16.msra.mxu0 %v3840
    %5729 = vmatprep.subr.bf16.mxu0 %v3833
    %5730 = vmatpush1.bf16.msra.mxu0 %v3832
    %5731 = vmatprep.subr.bf16.mxu0 %v3825
    %5732 = vmatpush1.bf16.msra.mxu0 %v3824
    %5733 = vmatprep.subr.bf16.mxu0 %v3817
    %5734 = vmatpush1.bf16.msra.mxu0 %v3816
    %5735 = vmatprep.subr.bf16.mxu0 %v3809
    %5736 = vmatpush1.bf16.msra.mxu0 %v3808
    %5737 = vmatprep.subr.bf16.mxu0 %v3801
    %5738 = vmatpush1.bf16.msra.mxu0 %v3800
    %5739 = vmatprep.subr.bf16.mxu0 %v3921
    %5740 = vmatpush2.bf16.msra.mxu0 %v3920
    %5741 = vmatprep.subr.bf16.mxu0 %v3913
    %5742 = vmatpush2.bf16.msra.mxu0 %v3912
    %5743 = vmatprep.subr.bf16.mxu0 %v3905
    %5744 = vmatpush2.bf16.msra.mxu0 %v3904
    %5745 = vmatprep.subr.bf16.mxu0 %v3897
    %5746 = vmatpush2.bf16.msra.mxu0 %v3896
    %5747 = vmatprep.subr.bf16.mxu0 %v3889
    %5748 = vmatpush2.bf16.msra.mxu0 %v3888
    %5749 = vmatprep.subr.bf16.mxu0 %v3881
    %5750 = vmatpush2.bf16.msra.mxu0 %v3880
    %5751 = vmatprep.subr.bf16.mxu0 %v3873
    %5752 = vmatpush2.bf16.msra.mxu0 %v3872
    %5753 = vmatprep.subr.bf16.mxu0 %v3865
    %5754 = vmatpush2.bf16.msra.mxu0 %v3864
    %5755 = vmatprep.mubr.bf16.mxu0 %v5679
    %5756 = vmatmul.mubr.bf16.gmra.mxu0 %v5678
    %v5757 = vpop.f32.mrf.mxu0
    %v5758 = vadd.f32 %v5715, %v5757
    %v5759 = vpop.f32.mrf.mxu0
    %v5760 = vadd.f32 %v5717, %v5759
    %v5761 = vpop.f32.mrf.mxu0
    %v5762 = vadd.f32 %v5719, %v5761
    %v5763 = vpop.f32.mrf.mxu0
    %v5764 = vadd.f32 %v5721, %v5763
    %5765 = vdwg.mxu0
    %5766 = vmatprep.subr.bf16.mxu0 %v3731
    %5767 = vmatpush1.bf16.msra.mxu0 %v3730
    %5768 = vmatprep.subr.bf16.mxu0 %v3723
    %5769 = vmatpush1.bf16.msra.mxu0 %v3722
    %5770 = vmatprep.subr.bf16.mxu0 %v3715
    %5771 = vmatpush1.bf16.msra.mxu0 %v3714
    %5772 = vmatprep.subr.bf16.mxu0 %v3707
    %5773 = vmatpush1.bf16.msra.mxu0 %v3706
    %5774 = vmatprep.subr.bf16.mxu0 %v3699
    %5775 = vmatpush1.bf16.msra.mxu0 %v3698
    %5776 = vmatprep.subr.bf16.mxu0 %v3691
    %5777 = vmatpush1.bf16.msra.mxu0 %v3690
    %5778 = vmatprep.subr.bf16.mxu0 %v3683
    %5779 = vmatpush1.bf16.msra.mxu0 %v3682
    %5780 = vmatprep.subr.bf16.mxu0 %v3675
    %5781 = vmatpush1.bf16.msra.mxu0 %v3674
    %5782 = vmatprep.subr.bf16.mxu0 %v3795
    %5783 = vmatpush2.bf16.msra.mxu0 %v3794
    %5784 = vmatprep.subr.bf16.mxu0 %v3787
    %5785 = vmatpush2.bf16.msra.mxu0 %v3786
    %5786 = vmatprep.subr.bf16.mxu0 %v3779
    %5787 = vmatpush2.bf16.msra.mxu0 %v3778
    %5788 = vmatprep.subr.bf16.mxu0 %v3771
    %5789 = vmatpush2.bf16.msra.mxu0 %v3770
    %5790 = vmatprep.subr.bf16.mxu0 %v3763
    %5791 = vmatpush2.bf16.msra.mxu0 %v3762
    %5792 = vmatprep.subr.bf16.mxu0 %v3755
    %5793 = vmatpush2.bf16.msra.mxu0 %v3754
    %5794 = vmatprep.subr.bf16.mxu0 %v3747
    %5795 = vmatpush2.bf16.msra.mxu0 %v3746
    %5796 = vmatprep.subr.bf16.mxu0 %v3739
    %5797 = vmatpush2.bf16.msra.mxu0 %v3738
    %5798 = vmatprep.mubr.bf16.mxu0 %v5393
    %5799 = vmatmul.mubr.bf16.gmra.mxu0 %v5392
    %v5800 = vpop.f32.mrf.mxu0
    %v5801 = vadd.f32 %v1351, %v5800
    %v5802 = vpop.f32.mrf.mxu0
    %v5803 = vadd.f32 %v1355, %v5802
    %v5804 = vpop.f32.mrf.mxu0
    %v5805 = vadd.f32 %v1351, %v5804
    %v5806 = vpop.f32.mrf.mxu0
    %v5807 = vadd.f32 %v1355, %v5806
    %5808 = vdwg.mxu0
    %5809 = vmatprep.subr.bf16.mxu0 %v3859
    %5810 = vmatpush1.bf16.msra.mxu0 %v3858
    %5811 = vmatprep.subr.bf16.mxu0 %v3851
    %5812 = vmatpush1.bf16.msra.mxu0 %v3850
    %5813 = vmatprep.subr.bf16.mxu0 %v3843
    %5814 = vmatpush1.bf16.msra.mxu0 %v3842
    %5815 = vmatprep.subr.bf16.mxu0 %v3835
    %5816 = vmatpush1.bf16.msra.mxu0 %v3834
    %5817 = vmatprep.subr.bf16.mxu0 %v3827
    %5818 = vmatpush1.bf16.msra.mxu0 %v3826
    %5819 = vmatprep.subr.bf16.mxu0 %v3819
    %5820 = vmatpush1.bf16.msra.mxu0 %v3818
    %5821 = vmatprep.subr.bf16.mxu0 %v3811
    %5822 = vmatpush1.bf16.msra.mxu0 %v3810
    %5823 = vmatprep.subr.bf16.mxu0 %v3803
    %5824 = vmatpush1.bf16.msra.mxu0 %v3802
    %5825 = vmatprep.subr.bf16.mxu0 %v3923
    %5826 = vmatpush2.bf16.msra.mxu0 %v3922
    %5827 = vmatprep.subr.bf16.mxu0 %v3915
    %5828 = vmatpush2.bf16.msra.mxu0 %v3914
    %5829 = vmatprep.subr.bf16.mxu0 %v3907
    %5830 = vmatpush2.bf16.msra.mxu0 %v3906
    %5831 = vmatprep.subr.bf16.mxu0 %v3899
    %5832 = vmatpush2.bf16.msra.mxu0 %v3898
    %5833 = vmatprep.subr.bf16.mxu0 %v3891
    %5834 = vmatpush2.bf16.msra.mxu0 %v3890
    %5835 = vmatprep.subr.bf16.mxu0 %v3883
    %5836 = vmatpush2.bf16.msra.mxu0 %v3882
    %5837 = vmatprep.subr.bf16.mxu0 %v3875
    %5838 = vmatpush2.bf16.msra.mxu0 %v3874
    %5839 = vmatprep.subr.bf16.mxu0 %v3867
    %5840 = vmatpush2.bf16.msra.mxu0 %v3866
    %5841 = vmatprep.mubr.bf16.mxu0 %v5679
    %5842 = vmatmul.mubr.bf16.gmra.mxu0 %v5678
    %v5843 = vpop.f32.mrf.mxu0
    %v5844 = vadd.f32 %v5801, %v5843
    %v5845 = vpop.f32.mrf.mxu0
    %v5846 = vadd.f32 %v5803, %v5845
    %v5847 = vpop.f32.mrf.mxu0
    %v5848 = vadd.f32 %v5805, %v5847
    %v5849 = vpop.f32.mrf.mxu0
    %v5850 = vadd.f32 %v5807, %v5849
    %5851 = vdwg.mxu0
    %5852 = vmatprep.subr.bf16.mxu0 %v3733
    %5853 = vmatpush1.bf16.msra.mxu0 %v3732
    %5854 = vmatprep.subr.bf16.mxu0 %v3725
    %5855 = vmatpush1.bf16.msra.mxu0 %v3724
    %5856 = vmatprep.subr.bf16.mxu0 %v3717
    %5857 = vmatpush1.bf16.msra.mxu0 %v3716
    %5858 = vmatprep.subr.bf16.mxu0 %v3709
    %5859 = vmatpush1.bf16.msra.mxu0 %v3708
    %5860 = vmatprep.subr.bf16.mxu0 %v3701
    %5861 = vmatpush1.bf16.msra.mxu0 %v3700
    %5862 = vmatprep.subr.bf16.mxu0 %v3693
    %5863 = vmatpush1.bf16.msra.mxu0 %v3692
    %5864 = vmatprep.subr.bf16.mxu0 %v3685
    %5865 = vmatpush1.bf16.msra.mxu0 %v3684
    %5866 = vmatprep.subr.bf16.mxu0 %v3677
    %5867 = vmatpush1.bf16.msra.mxu0 %v3676
    %5868 = vmatprep.subr.bf16.mxu0 %v3797
    %5869 = vmatpush2.bf16.msra.mxu0 %v3796
    %5870 = vmatprep.subr.bf16.mxu0 %v3789
    %5871 = vmatpush2.bf16.msra.mxu0 %v3788
    %5872 = vmatprep.subr.bf16.mxu0 %v3781
    %5873 = vmatpush2.bf16.msra.mxu0 %v3780
    %5874 = vmatprep.subr.bf16.mxu0 %v3773
    %5875 = vmatpush2.bf16.msra.mxu0 %v3772
    %5876 = vmatprep.subr.bf16.mxu0 %v3765
    %5877 = vmatpush2.bf16.msra.mxu0 %v3764
    %5878 = vmatprep.subr.bf16.mxu0 %v3757
    %5879 = vmatpush2.bf16.msra.mxu0 %v3756
    %5880 = vmatprep.subr.bf16.mxu0 %v3749
    %5881 = vmatpush2.bf16.msra.mxu0 %v3748
    %5882 = vmatprep.subr.bf16.mxu0 %v3741
    %5883 = vmatpush2.bf16.msra.mxu0 %v3740
    %5884 = vmatprep.mubr.bf16.mxu0 %v5393
    %5885 = vmatmul.mubr.bf16.gmra.mxu0 %v5392
    %v5886 = vpop.f32.mrf.mxu0
    %v5887 = vadd.f32 %v1359, %v5886
    %v5888 = vpop.f32.mrf.mxu0
    %v5889 = vadd.f32 %v1363, %v5888
    %v5890 = vpop.f32.mrf.mxu0
    %v5891 = vadd.f32 %v1359, %v5890
    %v5892 = vpop.f32.mrf.mxu0
    %v5893 = vadd.f32 %v1363, %v5892
    %5894 = vdwg.mxu0
    %5895 = vmatprep.subr.bf16.mxu0 %v3861
    %5896 = vmatpush1.bf16.msra.mxu0 %v3860
    %5897 = vmatprep.subr.bf16.mxu0 %v3853
    %5898 = vmatpush1.bf16.msra.mxu0 %v3852
    %5899 = vmatprep.subr.bf16.mxu0 %v3845
    %5900 = vmatpush1.bf16.msra.mxu0 %v3844
    %5901 = vmatprep.subr.bf16.mxu0 %v3837
    %5902 = vmatpush1.bf16.msra.mxu0 %v3836
    %5903 = vmatprep.subr.bf16.mxu0 %v3829
    %5904 = vmatpush1.bf16.msra.mxu0 %v3828
    %5905 = vmatprep.subr.bf16.mxu0 %v3821
    %5906 = vmatpush1.bf16.msra.mxu0 %v3820
    %5907 = vmatprep.subr.bf16.mxu0 %v3813
    %5908 = vmatpush1.bf16.msra.mxu0 %v3812
    %5909 = vmatprep.subr.bf16.mxu0 %v3805
    %5910 = vmatpush1.bf16.msra.mxu0 %v3804
    %5911 = vmatprep.subr.bf16.mxu0 %v3925
    %5912 = vmatpush2.bf16.msra.mxu0 %v3924
    %5913 = vmatprep.subr.bf16.mxu0 %v3917
    %5914 = vmatpush2.bf16.msra.mxu0 %v3916
    %5915 = vmatprep.subr.bf16.mxu0 %v3909
    %5916 = vmatpush2.bf16.msra.mxu0 %v3908
    %5917 = vmatprep.subr.bf16.mxu0 %v3901
    %5918 = vmatpush2.bf16.msra.mxu0 %v3900
    %5919 = vmatprep.subr.bf16.mxu0 %v3893
    %5920 = vmatpush2.bf16.msra.mxu0 %v3892
    %5921 = vmatprep.subr.bf16.mxu0 %v3885
    %5922 = vmatpush2.bf16.msra.mxu0 %v3884
    %5923 = vmatprep.subr.bf16.mxu0 %v3877
    %5924 = vmatpush2.bf16.msra.mxu0 %v3876
    %5925 = vmatprep.subr.bf16.mxu0 %v3869
    %5926 = vmatpush2.bf16.msra.mxu0 %v3868
    %5927 = vmatprep.mubr.bf16.mxu0 %v5679
    %5928 = vmatmul.mubr.bf16.gmra.mxu0 %v5678
    %v5929 = vpop.f32.mrf.mxu0
    %v5930 = vadd.f32 %v5887, %v5929
    %v5931 = vpop.f32.mrf.mxu0
    %v5932 = vadd.f32 %v5889, %v5931
    %v5933 = vpop.f32.mrf.mxu0
    %v5934 = vadd.f32 %v5891, %v5933
    %v5935 = vpop.f32.mrf.mxu0
    %v5936 = vadd.f32 %v5893, %v5935
    %5937 = vdwg.mxu0
    %5938 = vmatprep.subr.bf16.mxu0 %v3735
    %5939 = vmatpush1.bf16.msra.mxu0 %v3734
    %5940 = vmatprep.subr.bf16.mxu0 %v3727
    %5941 = vmatpush1.bf16.msra.mxu0 %v3726
    %5942 = vmatprep.subr.bf16.mxu0 %v3719
    %5943 = vmatpush1.bf16.msra.mxu0 %v3718
    %5944 = vmatprep.subr.bf16.mxu0 %v3711
    %5945 = vmatpush1.bf16.msra.mxu0 %v3710
    %5946 = vmatprep.subr.bf16.mxu0 %v3703
    %5947 = vmatpush1.bf16.msra.mxu0 %v3702
    %5948 = vmatprep.subr.bf16.mxu0 %v3695
    %5949 = vmatpush1.bf16.msra.mxu0 %v3694
    %5950 = vmatprep.subr.bf16.mxu0 %v3687
    %5951 = vmatpush1.bf16.msra.mxu0 %v3686
    %5952 = vmatprep.subr.bf16.mxu0 %v3679
    %5953 = vmatpush1.bf16.msra.mxu0 %v3678
    %5954 = vmatprep.subr.bf16.mxu0 %v3799
    %5955 = vmatpush2.bf16.msra.mxu0 %v3798
    %5956 = vmatprep.subr.bf16.mxu0 %v3791
    %5957 = vmatpush2.bf16.msra.mxu0 %v3790
    %5958 = vmatprep.subr.bf16.mxu0 %v3783
    %5959 = vmatpush2.bf16.msra.mxu0 %v3782
    %5960 = vmatprep.subr.bf16.mxu0 %v3775
    %5961 = vmatpush2.bf16.msra.mxu0 %v3774
    %5962 = vmatprep.subr.bf16.mxu0 %v3767
    %5963 = vmatpush2.bf16.msra.mxu0 %v3766
    %5964 = vmatprep.subr.bf16.mxu0 %v3759
    %5965 = vmatpush2.bf16.msra.mxu0 %v3758
    %5966 = vmatprep.subr.bf16.mxu0 %v3751
    %5967 = vmatpush2.bf16.msra.mxu0 %v3750
    %5968 = vmatprep.subr.bf16.mxu0 %v3743
    %5969 = vmatpush2.bf16.msra.mxu0 %v3742
    %5970 = vmatprep.mubr.bf16.mxu0 %v5393
    %5971 = vmatmul.mubr.bf16.gmra.mxu0 %v5392
    %v5972 = vpop.f32.mrf.mxu0
    %v5973 = vadd.f32 %v1367, %v5972
    %v5974 = vpop.f32.mrf.mxu0
    %v5975 = vadd.f32 %v1371, %v5974
    %v5976 = vpop.f32.mrf.mxu0
    %v5977 = vadd.f32 %v1367, %v5976
    %v5978 = vpop.f32.mrf.mxu0
    %v5979 = vadd.f32 %v1371, %v5978
    %5980 = vdwg.mxu0
    %5981 = vmatprep.subr.bf16.mxu0 %v3863
    %5982 = vmatpush1.bf16.msra.mxu0 %v3862
    %5983 = vmatprep.subr.bf16.mxu0 %v3855
    %5984 = vmatpush1.bf16.msra.mxu0 %v3854
    %5985 = vmatprep.subr.bf16.mxu0 %v3847
    %5986 = vmatpush1.bf16.msra.mxu0 %v3846
    %5987 = vmatprep.subr.bf16.mxu0 %v3839
    %5988 = vmatpush1.bf16.msra.mxu0 %v3838
    %5989 = vmatprep.subr.bf16.mxu0 %v3831
    %5990 = vmatpush1.bf16.msra.mxu0 %v3830
    %5991 = vmatprep.subr.bf16.mxu0 %v3823
    %5992 = vmatpush1.bf16.msra.mxu0 %v3822
    %5993 = vmatprep.subr.bf16.mxu0 %v3815
    %5994 = vmatpush1.bf16.msra.mxu0 %v3814
    %5995 = vmatprep.subr.bf16.mxu0 %v3807
    %5996 = vmatpush1.bf16.msra.mxu0 %v3806
    %5997 = vmatprep.subr.bf16.mxu0 %v3927
    %5998 = vmatpush2.bf16.msra.mxu0 %v3926
    %5999 = vmatprep.subr.bf16.mxu0 %v3919
    %6000 = vmatpush2.bf16.msra.mxu0 %v3918
    %6001 = vmatprep.subr.bf16.mxu0 %v3911
    %6002 = vmatpush2.bf16.msra.mxu0 %v3910
    %6003 = vmatprep.subr.bf16.mxu0 %v3903
    %6004 = vmatpush2.bf16.msra.mxu0 %v3902
    %6005 = vmatprep.subr.bf16.mxu0 %v3895
    %6006 = vmatpush2.bf16.msra.mxu0 %v3894
    %6007 = vmatprep.subr.bf16.mxu0 %v3887
    %6008 = vmatpush2.bf16.msra.mxu0 %v3886
    %6009 = vmatprep.subr.bf16.mxu0 %v3879
    %6010 = vmatpush2.bf16.msra.mxu0 %v3878
    %6011 = vmatprep.subr.bf16.mxu0 %v3871
    %6012 = vmatpush2.bf16.msra.mxu0 %v3870
    %6013 = vmatprep.mubr.bf16.mxu0 %v5679
    %6014 = vmatmul.mubr.bf16.gmra.mxu0 %v5678
    %v6015 = vpop.f32.mrf.mxu0
    %v6016 = vadd.f32 %v5973, %v6015
    %v6017 = vpop.f32.mrf.mxu0
    %v6018 = vadd.f32 %v5975, %v6017
    %v6019 = vpop.f32.mrf.mxu0
    %v6020 = vadd.f32 %v5977, %v6019
    %v6021 = vpop.f32.mrf.mxu0
    %v6022 = vadd.f32 %v5979, %v6021
    %6023 = vdwg.mxu0
    %v6024 = vxor.u32 %v5758, 2147483648
    %v6025 = vxor.u32 %v5760, 2147483648
    %v6026 = vxor.u32 %v5844, 2147483648
    %v6027 = vxor.u32 %v5846, 2147483648
    %v6028 = vxor.u32 %v5930, 2147483648
    %v6029 = vxor.u32 %v5932, 2147483648
    %v6030 = vxor.u32 %v5762, 2147483648
    %v6031 = vxor.u32 %v5764, 2147483648
    %v6032 = vxor.u32 %v5848, 2147483648
    %v6033 = vxor.u32 %v5850, 2147483648
    %v6034 = vxor.u32 %v5934, 2147483648
    %v6035 = vxor.u32 %v5936, 2147483648
    %v6036 = vmul.f32 %v6024, 1.442695
    %v6037 = vpow.pop %v6036
    %v6038 = vmul.f32 %v6025, 1.442695
    %v6039 = vpow.pop %v6038
    %v6040 = vmul.f32 %v6026, 1.442695
    %v6041 = vpow.pop %v6040
    %v6042 = vmul.f32 %v6027, 1.442695
    %v6043 = vpow.pop %v6042
    %v6044 = vmul.f32 %v6028, 1.442695
    %v6045 = vpow.pop %v6044
    %v6046 = vmul.f32 %v6029, 1.442695
    %v6047 = vpow.pop %v6046
    %v6048 = vmul.f32 %v6030, 1.442695
    %v6049 = vpow.pop %v6048
    %v6050 = vmul.f32 %v6031, 1.442695
    %v6051 = vpow.pop %v6050
    %v6052 = vmul.f32 %v6032, 1.442695
    %v6053 = vpow.pop %v6052
    %v6054 = vmul.f32 %v6033, 1.442695
    %v6055 = vpow.pop %v6054
    %v6056 = vmul.f32 %v6034, 1.442695
    %v6057 = vpow.pop %v6056
    %v6058 = vmul.f32 %v6035, 1.442695
    %v6059 = vpow.pop %v6058
    %v6060 = vadd.f32 %v6037, 1.0
    %v6061 = vadd.f32 %v6039, 1.0
    %v6062 = vadd.f32 %v6041, 1.0
    %v6063 = vadd.f32 %v6043, 1.0
    %v6064 = vadd.f32 %v6045, 1.0
    %v6065 = vadd.f32 %v6047, 1.0
    %v6066 = vadd.f32 %v6049, 1.0
    %v6067 = vadd.f32 %v6051, 1.0
    %v6068 = vadd.f32 %v6053, 1.0
    %v6069 = vadd.f32 %v6055, 1.0
    %v6070 = vadd.f32 %v6057, 1.0
    %v6071 = vadd.f32 %v6059, 1.0
    %v6072 = vrcp.pop %v6060
    %v6073 = vmul.f32 1.0, %v6072
    %v6074 = vrcp.pop %v6061
    %v6075 = vmul.f32 1.0, %v6074
    %v6076 = vrcp.pop %v6062
    %v6077 = vmul.f32 1.0, %v6076
    %v6078 = vrcp.pop %v6063
    %v6079 = vmul.f32 1.0, %v6078
    %v6080 = vrcp.pop %v6064
    %v6081 = vmul.f32 1.0, %v6080
    %v6082 = vrcp.pop %v6065
    %v6083 = vmul.f32 1.0, %v6082
    %v6084 = vrcp.pop %v6066
    %v6085 = vmul.f32 1.0, %v6084
    %v6086 = vrcp.pop %v6067
    %v6087 = vmul.f32 1.0, %v6086
    %v6088 = vrcp.pop %v6068
    %v6089 = vmul.f32 1.0, %v6088
    %v6090 = vrcp.pop %v6069
    %v6091 = vmul.f32 1.0, %v6090
    %v6092 = vrcp.pop %v6070
    %v6093 = vmul.f32 1.0, %v6092
    %v6094 = vrcp.pop %v6071
    %v6095 = vmul.f32 1.0, %v6094
    %v6096 = vtanh.pop %v6016
    %v6097 = vtanh.pop %v6018
    %v6098 = vtanh.pop %v6020
    %v6099 = vtanh.pop %v6022
    %v6100 = vmul.f32 %v6077, %v5360
    %v6101 = vmul.f32 %v6079, %v5361
    %v6102 = vmul.f32 %v6089, %v5362
    %v6103 = vmul.f32 %v6091, %v5363
    %v6104 = vmul.f32 %v6073, %v6096
    %v6105 = vmul.f32 %v6075, %v6097
    %v6106 = vmul.f32 %v6085, %v6098
    %v6107 = vmul.f32 %v6087, %v6099
    %v6108 = vadd.f32 %v6100, %v6104
    %v6109 = vadd.f32 %v6101, %v6105
    %v6110 = vadd.f32 %v6102, %v6106
    %v6111 = vadd.f32 %v6103, %v6107
    %v6112 = vtanh.pop %v6108
    %v6113 = vtanh.pop %v6109
    %v6114 = vtanh.pop %v6110
    %v6115 = vtanh.pop %v6111
    %v6116 = vmul.f32 %v6081, %v6112
    %v6117 = vmul.f32 %v6083, %v6113
    %v6118 = vmul.f32 %v6093, %v6114
    %v6119 = vmul.f32 %v6095, %v6115
    %6120 = vst [vmem:[#allocation3 + $0x40] sm:$0xff] %v6116
    %6121 = vst [vmem:[#allocation3 + $0x48] sm:$0xff] %v6117
    %6122 = vst [vmem:[#allocation3 + $0x50] sm:$0xff] %v6118
    %6123 = vst [vmem:[#allocation3 + $0x58] sm:$0xff] %v6119
    %v6124 = vld [vmem:[#allocation2 + $0x200] sm:$0xff]
    %v6125 = vld [vmem:[#allocation2 + $0x208] sm:$0xff]
    %v6126 = vld [vmem:[#allocation2 + $0x210] sm:$0xff]
    %v6127 = vld [vmem:[#allocation2 + $0x218] sm:$0xff]
    %v6128 = vld [vmem:[#allocation2 + $0x220] sm:$0xff]
    %v6129 = vld [vmem:[#allocation2 + $0x228] sm:$0xff]
    %v6130 = vld [vmem:[#allocation2 + $0x230] sm:$0xff]
    %v6131 = vld [vmem:[#allocation2 + $0x238] sm:$0xff]
    %v6132 = vld [vmem:[#allocation2 + $0x240] sm:$0xff]
    %v6133 = vld [vmem:[#allocation2 + $0x248] sm:$0xff]
    %v6134 = vld [vmem:[#allocation2 + $0x250] sm:$0xff]
    %v6135 = vld [vmem:[#allocation2 + $0x258] sm:$0xff]
    %v6136 = vld [vmem:[#allocation2 + $0x260] sm:$0xff]
    %v6137 = vld [vmem:[#allocation2 + $0x268] sm:$0xff]
    %v6138 = vld [vmem:[#allocation2 + $0x270] sm:$0xff]
    %v6139 = vld [vmem:[#allocation2 + $0x278] sm:$0xff]
    %v6140 = vpack.c.bf16 %v5676, %v5674
    %v6141 = vpack.c.bf16 %v5677, %v5675
    %6142 = vmatprep.subr.bf16.mxu0 %v1857
    %6143 = vmatpush1.bf16.msra.mxu0 %v1856
    %6144 = vmatprep.subr.bf16.mxu0 %v1849
    %6145 = vmatpush1.bf16.msra.mxu0 %v1848
    %6146 = vmatprep.subr.bf16.mxu0 %v1841
    %6147 = vmatpush1.bf16.msra.mxu0 %v1840
    %6148 = vmatprep.subr.bf16.mxu0 %v1833
    %6149 = vmatpush1.bf16.msra.mxu0 %v1832
    %6150 = vmatprep.subr.bf16.mxu0 %v1825
    %6151 = vmatpush1.bf16.msra.mxu0 %v1824
    %6152 = vmatprep.subr.bf16.mxu0 %v1817
    %6153 = vmatpush1.bf16.msra.mxu0 %v1816
    %6154 = vmatprep.subr.bf16.mxu0 %v1809
    %6155 = vmatpush1.bf16.msra.mxu0 %v1808
    %6156 = vmatprep.subr.bf16.mxu0 %v1801
    %6157 = vmatpush1.bf16.msra.mxu0 %v1800
    %6158 = vmatprep.subr.bf16.mxu0 %v1921
    %6159 = vmatpush2.bf16.msra.mxu0 %v1920
    %6160 = vmatprep.subr.bf16.mxu0 %v1913
    %6161 = vmatpush2.bf16.msra.mxu0 %v1912
    %6162 = vmatprep.subr.bf16.mxu0 %v1905
    %6163 = vmatpush2.bf16.msra.mxu0 %v1904
    %6164 = vmatprep.subr.bf16.mxu0 %v1897
    %6165 = vmatpush2.bf16.msra.mxu0 %v1896
    %6166 = vmatprep.subr.bf16.mxu0 %v1889
    %6167 = vmatpush2.bf16.msra.mxu0 %v1888
    %6168 = vmatprep.subr.bf16.mxu0 %v1881
    %6169 = vmatpush2.bf16.msra.mxu0 %v1880
    %6170 = vmatprep.subr.bf16.mxu0 %v1873
    %6171 = vmatpush2.bf16.msra.mxu0 %v1872
    %6172 = vmatprep.subr.bf16.mxu0 %v1865
    %6173 = vmatpush2.bf16.msra.mxu0 %v1864
    %6174 = vmatprep.mubr.bf16.mxu0 %v6141
    %6175 = vmatmul.mubr.bf16.gmra.mxu0 %v6140
    %v6176 = vpop.f32.mrf.mxu0
    %v6177 = vadd.f32 0.0, %v6176
    %v6178 = vpop.f32.mrf.mxu0
    %v6179 = vadd.f32 0.0, %v6178
    %v6180 = vpop.f32.mrf.mxu0
    %v6181 = vadd.f32 0.0, %v6180
    %v6182 = vpop.f32.mrf.mxu0
    %v6183 = vadd.f32 0.0, %v6182
    %6184 = vdwg.mxu0
    %6185 = vmatprep.subr.bf16.mxu0 %v1859
    %6186 = vmatpush1.bf16.msra.mxu0 %v1858
    %6187 = vmatprep.subr.bf16.mxu0 %v1851
    %6188 = vmatpush1.bf16.msra.mxu0 %v1850
    %6189 = vmatprep.subr.bf16.mxu0 %v1843
    %6190 = vmatpush1.bf16.msra.mxu0 %v1842
    %6191 = vmatprep.subr.bf16.mxu0 %v1835
    %6192 = vmatpush1.bf16.msra.mxu0 %v1834
    %6193 = vmatprep.subr.bf16.mxu0 %v1827
    %6194 = vmatpush1.bf16.msra.mxu0 %v1826
    %6195 = vmatprep.subr.bf16.mxu0 %v1819
    %6196 = vmatpush1.bf16.msra.mxu0 %v1818
    %6197 = vmatprep.subr.bf16.mxu0 %v1811
    %6198 = vmatpush1.bf16.msra.mxu0 %v1810
    %6199 = vmatprep.subr.bf16.mxu0 %v1803
    %6200 = vmatpush1.bf16.msra.mxu0 %v1802
    %6201 = vmatprep.subr.bf16.mxu0 %v1923
    %6202 = vmatpush2.bf16.msra.mxu0 %v1922
    %6203 = vmatprep.subr.bf16.mxu0 %v1915
    %6204 = vmatpush2.bf16.msra.mxu0 %v1914
    %6205 = vmatprep.subr.bf16.mxu0 %v1907
    %6206 = vmatpush2.bf16.msra.mxu0 %v1906
    %6207 = vmatprep.subr.bf16.mxu0 %v1899
    %6208 = vmatpush2.bf16.msra.mxu0 %v1898
    %6209 = vmatprep.subr.bf16.mxu0 %v1891
    %6210 = vmatpush2.bf16.msra.mxu0 %v1890
    %6211 = vmatprep.subr.bf16.mxu0 %v1883
    %6212 = vmatpush2.bf16.msra.mxu0 %v1882
    %6213 = vmatprep.subr.bf16.mxu0 %v1875
    %6214 = vmatpush2.bf16.msra.mxu0 %v1874
    %6215 = vmatprep.subr.bf16.mxu0 %v1867
    %6216 = vmatpush2.bf16.msra.mxu0 %v1866
    %6217 = vmatprep.mubr.bf16.mxu0 %v6141
    %6218 = vmatmul.mubr.bf16.gmra.mxu0 %v6140
    %v6219 = vpop.f32.mrf.mxu0
    %v6220 = vadd.f32 0.0, %v6219
    %v6221 = vpop.f32.mrf.mxu0
    %v6222 = vadd.f32 0.0, %v6221
    %v6223 = vpop.f32.mrf.mxu0
    %v6224 = vadd.f32 0.0, %v6223
    %v6225 = vpop.f32.mrf.mxu0
    %v6226 = vadd.f32 0.0, %v6225
    %6227 = vdwg.mxu0
    %6228 = vmatprep.subr.bf16.mxu0 %v1861
    %6229 = vmatpush1.bf16.msra.mxu0 %v1860
    %6230 = vmatprep.subr.bf16.mxu0 %v1853
    %6231 = vmatpush1.bf16.msra.mxu0 %v1852
    %6232 = vmatprep.subr.bf16.mxu0 %v1845
    %6233 = vmatpush1.bf16.msra.mxu0 %v1844
    %6234 = vmatprep.subr.bf16.mxu0 %v1837
    %6235 = vmatpush1.bf16.msra.mxu0 %v1836
    %6236 = vmatprep.subr.bf16.mxu0 %v1829
    %6237 = vmatpush1.bf16.msra.mxu0 %v1828
    %6238 = vmatprep.subr.bf16.mxu0 %v1821
    %6239 = vmatpush1.bf16.msra.mxu0 %v1820
    %6240 = vmatprep.subr.bf16.mxu0 %v1813
    %6241 = vmatpush1.bf16.msra.mxu0 %v1812
    %6242 = vmatprep.subr.bf16.mxu0 %v1805
    %6243 = vmatpush1.bf16.msra.mxu0 %v1804
    %6244 = vmatprep.subr.bf16.mxu0 %v1925
    %6245 = vmatpush2.bf16.msra.mxu0 %v1924
    %6246 = vmatprep.subr.bf16.mxu0 %v1917
    %6247 = vmatpush2.bf16.msra.mxu0 %v1916
    %6248 = vmatprep.subr.bf16.mxu0 %v1909
    %6249 = vmatpush2.bf16.msra.mxu0 %v1908
    %6250 = vmatprep.subr.bf16.mxu0 %v1901
    %6251 = vmatpush2.bf16.msra.mxu0 %v1900
    %6252 = vmatprep.subr.bf16.mxu0 %v1893
    %6253 = vmatpush2.bf16.msra.mxu0 %v1892
    %6254 = vmatprep.subr.bf16.mxu0 %v1885
    %6255 = vmatpush2.bf16.msra.mxu0 %v1884
    %6256 = vmatprep.subr.bf16.mxu0 %v1877
    %6257 = vmatpush2.bf16.msra.mxu0 %v1876
    %6258 = vmatprep.subr.bf16.mxu0 %v1869
    %6259 = vmatpush2.bf16.msra.mxu0 %v1868
    %6260 = vmatprep.mubr.bf16.mxu0 %v6141
    %6261 = vmatmul.mubr.bf16.gmra.mxu0 %v6140
    %v6262 = vpop.f32.mrf.mxu0
    %v6263 = vadd.f32 0.0, %v6262
    %v6264 = vpop.f32.mrf.mxu0
    %v6265 = vadd.f32 0.0, %v6264
    %v6266 = vpop.f32.mrf.mxu0
    %v6267 = vadd.f32 0.0, %v6266
    %v6268 = vpop.f32.mrf.mxu0
    %v6269 = vadd.f32 0.0, %v6268
    %6270 = vdwg.mxu0
    %6271 = vmatprep.subr.bf16.mxu0 %v1863
    %6272 = vmatpush1.bf16.msra.mxu0 %v1862
    %6273 = vmatprep.subr.bf16.mxu0 %v1855
    %6274 = vmatpush1.bf16.msra.mxu0 %v1854
    %6275 = vmatprep.subr.bf16.mxu0 %v1847
    %6276 = vmatpush1.bf16.msra.mxu0 %v1846
    %6277 = vmatprep.subr.bf16.mxu0 %v1839
    %6278 = vmatpush1.bf16.msra.mxu0 %v1838
    %6279 = vmatprep.subr.bf16.mxu0 %v1831
    %6280 = vmatpush1.bf16.msra.mxu0 %v1830
    %6281 = vmatprep.subr.bf16.mxu0 %v1823
    %6282 = vmatpush1.bf16.msra.mxu0 %v1822
    %6283 = vmatprep.subr.bf16.mxu0 %v1815
    %6284 = vmatpush1.bf16.msra.mxu0 %v1814
    %6285 = vmatprep.subr.bf16.mxu0 %v1807
    %6286 = vmatpush1.bf16.msra.mxu0 %v1806
    %6287 = vmatprep.subr.bf16.mxu0 %v1927
    %6288 = vmatpush2.bf16.msra.mxu0 %v1926
    %6289 = vmatprep.subr.bf16.mxu0 %v1919
    %6290 = vmatpush2.bf16.msra.mxu0 %v1918
    %6291 = vmatprep.subr.bf16.mxu0 %v1911
    %6292 = vmatpush2.bf16.msra.mxu0 %v1910
    %6293 = vmatprep.subr.bf16.mxu0 %v1903
    %6294 = vmatpush2.bf16.msra.mxu0 %v1902
    %6295 = vmatprep.subr.bf16.mxu0 %v1895
    %6296 = vmatpush2.bf16.msra.mxu0 %v1894
    %6297 = vmatprep.subr.bf16.mxu0 %v1887
    %6298 = vmatpush2.bf16.msra.mxu0 %v1886
    %6299 = vmatprep.subr.bf16.mxu0 %v1879
    %6300 = vmatpush2.bf16.msra.mxu0 %v1878
    %6301 = vmatprep.subr.bf16.mxu0 %v1871
    %6302 = vmatpush2.bf16.msra.mxu0 %v1870
    %6303 = vmatprep.mubr.bf16.mxu0 %v6141
    %6304 = vmatmul.mubr.bf16.gmra.mxu0 %v6140
    %v6305 = vpop.f32.mrf.mxu0
    %v6306 = vadd.f32 0.0, %v6305
    %v6307 = vpop.f32.mrf.mxu0
    %v6308 = vadd.f32 0.0, %v6307
    %v6309 = vpop.f32.mrf.mxu0
    %v6310 = vadd.f32 0.0, %v6309
    %v6311 = vpop.f32.mrf.mxu0
    %v6312 = vadd.f32 0.0, %v6311
    %6313 = vdwg.mxu0
    %v6314 = vadd.f32 %v6124, %v6177
    %v6315 = vadd.f32 %v6125, %v6179
    %v6316 = vadd.f32 %v6126, %v6220
    %v6317 = vadd.f32 %v6127, %v6222
    %v6318 = vadd.f32 %v6128, %v6263
    %v6319 = vadd.f32 %v6129, %v6265
    %v6320 = vadd.f32 %v6130, %v6306
    %v6321 = vadd.f32 %v6131, %v6308
    %v6322 = vadd.f32 %v6132, %v6181
    %v6323 = vadd.f32 %v6133, %v6183
    %v6324 = vadd.f32 %v6134, %v6224
    %v6325 = vadd.f32 %v6135, %v6226
    %v6326 = vadd.f32 %v6136, %v6267
    %v6327 = vadd.f32 %v6137, %v6269
    %v6328 = vadd.f32 %v6138, %v6310
    %v6329 = vadd.f32 %v6139, %v6312
    %v6330 = vxor.u32 %v6314, 2147483648
    %v6331 = vxor.u32 %v6315, 2147483648
    %v6332 = vxor.u32 %v6316, 2147483648
    %v6333 = vxor.u32 %v6317, 2147483648
    %v6334 = vxor.u32 %v6318, 2147483648
    %v6335 = vxor.u32 %v6319, 2147483648
    %v6336 = vxor.u32 %v6322, 2147483648
    %v6337 = vxor.u32 %v6323, 2147483648
    %v6338 = vxor.u32 %v6324, 2147483648
    %v6339 = vxor.u32 %v6325, 2147483648
    %v6340 = vxor.u32 %v6326, 2147483648
    %v6341 = vxor.u32 %v6327, 2147483648
    %v6342 = vmul.f32 %v6330, 1.442695
    %v6343 = vpow.pop %v6342
    %v6344 = vmul.f32 %v6331, 1.442695
    %v6345 = vpow.pop %v6344
    %v6346 = vmul.f32 %v6332, 1.442695
    %v6347 = vpow.pop %v6346
    %v6348 = vmul.f32 %v6333, 1.442695
    %v6349 = vpow.pop %v6348
    %v6350 = vmul.f32 %v6334, 1.442695
    %v6351 = vpow.pop %v6350
    %v6352 = vmul.f32 %v6335, 1.442695
    %v6353 = vpow.pop %v6352
    %v6354 = vmul.f32 %v6336, 1.442695
    %v6355 = vpow.pop %v6354
    %v6356 = vmul.f32 %v6337, 1.442695
    %v6357 = vpow.pop %v6356
    %v6358 = vmul.f32 %v6338, 1.442695
    %v6359 = vpow.pop %v6358
    %v6360 = vmul.f32 %v6339, 1.442695
    %v6361 = vpow.pop %v6360
    %v6362 = vmul.f32 %v6340, 1.442695
    %v6363 = vpow.pop %v6362
    %v6364 = vmul.f32 %v6341, 1.442695
    %v6365 = vpow.pop %v6364
    %v6366 = vadd.f32 %v6343, 1.0
    %v6367 = vadd.f32 %v6345, 1.0
    %v6368 = vadd.f32 %v6347, 1.0
    %v6369 = vadd.f32 %v6349, 1.0
    %v6370 = vadd.f32 %v6351, 1.0
    %v6371 = vadd.f32 %v6353, 1.0
    %v6372 = vadd.f32 %v6355, 1.0
    %v6373 = vadd.f32 %v6357, 1.0
    %v6374 = vadd.f32 %v6359, 1.0
    %v6375 = vadd.f32 %v6361, 1.0
    %v6376 = vadd.f32 %v6363, 1.0
    %v6377 = vadd.f32 %v6365, 1.0
    %v6378 = vrcp.pop %v6366
    %v6379 = vmul.f32 1.0, %v6378
    %v6380 = vrcp.pop %v6367
    %v6381 = vmul.f32 1.0, %v6380
    %v6382 = vrcp.pop %v6368
    %v6383 = vmul.f32 1.0, %v6382
    %v6384 = vrcp.pop %v6369
    %v6385 = vmul.f32 1.0, %v6384
    %v6386 = vrcp.pop %v6370
    %v6387 = vmul.f32 1.0, %v6386
    %v6388 = vrcp.pop %v6371
    %v6389 = vmul.f32 1.0, %v6388
    %v6390 = vrcp.pop %v6372
    %v6391 = vmul.f32 1.0, %v6390
    %v6392 = vrcp.pop %v6373
    %v6393 = vmul.f32 1.0, %v6392
    %v6394 = vrcp.pop %v6374
    %v6395 = vmul.f32 1.0, %v6394
    %v6396 = vrcp.pop %v6375
    %v6397 = vmul.f32 1.0, %v6396
    %v6398 = vrcp.pop %v6376
    %v6399 = vmul.f32 1.0, %v6398
    %v6400 = vrcp.pop %v6377
    %v6401 = vmul.f32 1.0, %v6400
    %v6402 = vtanh.pop %v6320
    %v6403 = vtanh.pop %v6321
    %v6404 = vtanh.pop %v6328
    %v6405 = vtanh.pop %v6329
    %v6406 = vmul.f32 %v6383, %v5666
    %v6407 = vmul.f32 %v6385, %v5667
    %v6408 = vmul.f32 %v6395, %v5668
    %v6409 = vmul.f32 %v6397, %v5669
    %v6410 = vmul.f32 %v6379, %v6402
    %v6411 = vmul.f32 %v6381, %v6403
    %v6412 = vmul.f32 %v6391, %v6404
    %v6413 = vmul.f32 %v6393, %v6405
    %v6414 = vadd.f32 %v6406, %v6410
    %v6415 = vadd.f32 %v6407, %v6411
    %v6416 = vadd.f32 %v6408, %v6412
    %v6417 = vadd.f32 %v6409, %v6413
    %v6418 = vtanh.pop %v6414
    %v6419 = vtanh.pop %v6415
    %v6420 = vtanh.pop %v6416
    %v6421 = vtanh.pop %v6417
    %v6422 = vmul.f32 %v6387, %v6418
    %v6423 = vmul.f32 %v6389, %v6419
    %v6424 = vmul.f32 %v6399, %v6420
    %v6425 = vmul.f32 %v6401, %v6421
    %v6426 = vpack.c.bf16 %v6118, %v6116
    %v6427 = vpack.c.bf16 %v6119, %v6117
    %6428 = vmatprep.subr.bf16.mxu0 %v3729
    %6429 = vmatpush1.bf16.msra.mxu0 %v3728
    %6430 = vmatprep.subr.bf16.mxu0 %v3721
    %6431 = vmatpush1.bf16.msra.mxu0 %v3720
    %6432 = vmatprep.subr.bf16.mxu0 %v3713
    %6433 = vmatpush1.bf16.msra.mxu0 %v3712
    %6434 = vmatprep.subr.bf16.mxu0 %v3705
    %6435 = vmatpush1.bf16.msra.mxu0 %v3704
    %6436 = vmatprep.subr.bf16.mxu0 %v3697
    %6437 = vmatpush1.bf16.msra.mxu0 %v3696
    %6438 = vmatprep.subr.bf16.mxu0 %v3689
    %6439 = vmatpush1.bf16.msra.mxu0 %v3688
    %6440 = vmatprep.subr.bf16.mxu0 %v3681
    %6441 = vmatpush1.bf16.msra.mxu0 %v3680
    %6442 = vmatprep.subr.bf16.mxu0 %v3673
    %6443 = vmatpush1.bf16.msra.mxu0 %v3672
    %6444 = vmatprep.subr.bf16.mxu0 %v3793
    %6445 = vmatpush2.bf16.msra.mxu0 %v3792
    %6446 = vmatprep.subr.bf16.mxu0 %v3785
    %6447 = vmatpush2.bf16.msra.mxu0 %v3784
    %6448 = vmatprep.subr.bf16.mxu0 %v3777
    %6449 = vmatpush2.bf16.msra.mxu0 %v3776
    %6450 = vmatprep.subr.bf16.mxu0 %v3769
    %6451 = vmatpush2.bf16.msra.mxu0 %v3768
    %6452 = vmatprep.subr.bf16.mxu0 %v3761
    %6453 = vmatpush2.bf16.msra.mxu0 %v3760
    %6454 = vmatprep.subr.bf16.mxu0 %v3753
    %6455 = vmatpush2.bf16.msra.mxu0 %v3752
    %6456 = vmatprep.subr.bf16.mxu0 %v3745
    %6457 = vmatpush2.bf16.msra.mxu0 %v3744
    %6458 = vmatprep.subr.bf16.mxu0 %v3737
    %6459 = vmatpush2.bf16.msra.mxu0 %v3736
    %6460 = vmatprep.mubr.bf16.mxu0 %v6141
    %6461 = vmatmul.mubr.bf16.gmra.mxu0 %v6140
    %v6462 = vpop.f32.mrf.mxu0
    %v6463 = vadd.f32 %v1343, %v6462
    %v6464 = vpop.f32.mrf.mxu0
    %v6465 = vadd.f32 %v1347, %v6464
    %v6466 = vpop.f32.mrf.mxu0
    %v6467 = vadd.f32 %v1343, %v6466
    %v6468 = vpop.f32.mrf.mxu0
    %v6469 = vadd.f32 %v1347, %v6468
    %6470 = vdwg.mxu0
    %6471 = vmatprep.subr.bf16.mxu0 %v3857
    %6472 = vmatpush1.bf16.msra.mxu0 %v3856
    %6473 = vmatprep.subr.bf16.mxu0 %v3849
    %6474 = vmatpush1.bf16.msra.mxu0 %v3848
    %6475 = vmatprep.subr.bf16.mxu0 %v3841
    %6476 = vmatpush1.bf16.msra.mxu0 %v3840
    %6477 = vmatprep.subr.bf16.mxu0 %v3833
    %6478 = vmatpush1.bf16.msra.mxu0 %v3832
    %6479 = vmatprep.subr.bf16.mxu0 %v3825
    %6480 = vmatpush1.bf16.msra.mxu0 %v3824
    %6481 = vmatprep.subr.bf16.mxu0 %v3817
    %6482 = vmatpush1.bf16.msra.mxu0 %v3816
    %6483 = vmatprep.subr.bf16.mxu0 %v3809
    %6484 = vmatpush1.bf16.msra.mxu0 %v3808
    %6485 = vmatprep.subr.bf16.mxu0 %v3801
    %6486 = vmatpush1.bf16.msra.mxu0 %v3800
    %6487 = vmatprep.subr.bf16.mxu0 %v3921
    %6488 = vmatpush2.bf16.msra.mxu0 %v3920
    %6489 = vmatprep.subr.bf16.mxu0 %v3913
    %6490 = vmatpush2.bf16.msra.mxu0 %v3912
    %6491 = vmatprep.subr.bf16.mxu0 %v3905
    %6492 = vmatpush2.bf16.msra.mxu0 %v3904
    %6493 = vmatprep.subr.bf16.mxu0 %v3897
    %6494 = vmatpush2.bf16.msra.mxu0 %v3896
    %6495 = vmatprep.subr.bf16.mxu0 %v3889
    %6496 = vmatpush2.bf16.msra.mxu0 %v3888
    %6497 = vmatprep.subr.bf16.mxu0 %v3881
    %6498 = vmatpush2.bf16.msra.mxu0 %v3880
    %6499 = vmatprep.subr.bf16.mxu0 %v3873
    %6500 = vmatpush2.bf16.msra.mxu0 %v3872
    %6501 = vmatprep.subr.bf16.mxu0 %v3865
    %6502 = vmatpush2.bf16.msra.mxu0 %v3864
    %6503 = vmatprep.mubr.bf16.mxu0 %v6427
    %6504 = vmatmul.mubr.bf16.gmra.mxu0 %v6426
    %v6505 = vpop.f32.mrf.mxu0
    %v6506 = vadd.f32 %v6463, %v6505
    %v6507 = vpop.f32.mrf.mxu0
    %v6508 = vadd.f32 %v6465, %v6507
    %v6509 = vpop.f32.mrf.mxu0
    %v6510 = vadd.f32 %v6467, %v6509
    %v6511 = vpop.f32.mrf.mxu0
    %v6512 = vadd.f32 %v6469, %v6511
    %6513 = vdwg.mxu0
    %6514 = vmatprep.subr.bf16.mxu0 %v3731
    %6515 = vmatpush1.bf16.msra.mxu0 %v3730
    %6516 = vmatprep.subr.bf16.mxu0 %v3723
    %6517 = vmatpush1.bf16.msra.mxu0 %v3722
    %6518 = vmatprep.subr.bf16.mxu0 %v3715
    %6519 = vmatpush1.bf16.msra.mxu0 %v3714
    %6520 = vmatprep.subr.bf16.mxu0 %v3707
    %6521 = vmatpush1.bf16.msra.mxu0 %v3706
    %6522 = vmatprep.subr.bf16.mxu0 %v3699
    %6523 = vmatpush1.bf16.msra.mxu0 %v3698
    %6524 = vmatprep.subr.bf16.mxu0 %v3691
    %6525 = vmatpush1.bf16.msra.mxu0 %v3690
    %6526 = vmatprep.subr.bf16.mxu0 %v3683
    %6527 = vmatpush1.bf16.msra.mxu0 %v3682
    %6528 = vmatprep.subr.bf16.mxu0 %v3675
    %6529 = vmatpush1.bf16.msra.mxu0 %v3674
    %6530 = vmatprep.subr.bf16.mxu0 %v3795
    %6531 = vmatpush2.bf16.msra.mxu0 %v3794
    %6532 = vmatprep.subr.bf16.mxu0 %v3787
    %6533 = vmatpush2.bf16.msra.mxu0 %v3786
    %6534 = vmatprep.subr.bf16.mxu0 %v3779
    %6535 = vmatpush2.bf16.msra.mxu0 %v3778
    %6536 = vmatprep.subr.bf16.mxu0 %v3771
    %6537 = vmatpush2.bf16.msra.mxu0 %v3770
    %6538 = vmatprep.subr.bf16.mxu0 %v3763
    %6539 = vmatpush2.bf16.msra.mxu0 %v3762
    %6540 = vmatprep.subr.bf16.mxu0 %v3755
    %6541 = vmatpush2.bf16.msra.mxu0 %v3754
    %6542 = vmatprep.subr.bf16.mxu0 %v3747
    %6543 = vmatpush2.bf16.msra.mxu0 %v3746
    %6544 = vmatprep.subr.bf16.mxu0 %v3739
    %6545 = vmatpush2.bf16.msra.mxu0 %v3738
    %6546 = vmatprep.mubr.bf16.mxu0 %v6141
    %6547 = vmatmul.mubr.bf16.gmra.mxu0 %v6140
    %v6548 = vpop.f32.mrf.mxu0
    %v6549 = vadd.f32 %v1351, %v6548
    %v6550 = vpop.f32.mrf.mxu0
    %v6551 = vadd.f32 %v1355, %v6550
    %v6552 = vpop.f32.mrf.mxu0
    %v6553 = vadd.f32 %v1351, %v6552
    %v6554 = vpop.f32.mrf.mxu0
    %v6555 = vadd.f32 %v1355, %v6554
    %6556 = vdwg.mxu0
    %6557 = vmatprep.subr.bf16.mxu0 %v3859
    %6558 = vmatpush1.bf16.msra.mxu0 %v3858
    %6559 = vmatprep.subr.bf16.mxu0 %v3851
    %6560 = vmatpush1.bf16.msra.mxu0 %v3850
    %6561 = vmatprep.subr.bf16.mxu0 %v3843
    %6562 = vmatpush1.bf16.msra.mxu0 %v3842
    %6563 = vmatprep.subr.bf16.mxu0 %v3835
    %6564 = vmatpush1.bf16.msra.mxu0 %v3834
    %6565 = vmatprep.subr.bf16.mxu0 %v3827
    %6566 = vmatpush1.bf16.msra.mxu0 %v3826
    %6567 = vmatprep.subr.bf16.mxu0 %v3819
    %6568 = vmatpush1.bf16.msra.mxu0 %v3818
    %6569 = vmatprep.subr.bf16.mxu0 %v3811
    %6570 = vmatpush1.bf16.msra.mxu0 %v3810
    %6571 = vmatprep.subr.bf16.mxu0 %v3803
    %6572 = vmatpush1.bf16.msra.mxu0 %v3802
    %6573 = vmatprep.subr.bf16.mxu0 %v3923
    %6574 = vmatpush2.bf16.msra.mxu0 %v3922
    %6575 = vmatprep.subr.bf16.mxu0 %v3915
    %6576 = vmatpush2.bf16.msra.mxu0 %v3914
    %6577 = vmatprep.subr.bf16.mxu0 %v3907
    %6578 = vmatpush2.bf16.msra.mxu0 %v3906
    %6579 = vmatprep.subr.bf16.mxu0 %v3899
    %6580 = vmatpush2.bf16.msra.mxu0 %v3898
    %6581 = vmatprep.subr.bf16.mxu0 %v3891
    %6582 = vmatpush2.bf16.msra.mxu0 %v3890
    %6583 = vmatprep.subr.bf16.mxu0 %v3883
    %6584 = vmatpush2.bf16.msra.mxu0 %v3882
    %6585 = vmatprep.subr.bf16.mxu0 %v3875
    %6586 = vmatpush2.bf16.msra.mxu0 %v3874
    %6587 = vmatprep.subr.bf16.mxu0 %v3867
    %6588 = vmatpush2.bf16.msra.mxu0 %v3866
    %6589 = vmatprep.mubr.bf16.mxu0 %v6427
    %6590 = vmatmul.mubr.bf16.gmra.mxu0 %v6426
    %v6591 = vpop.f32.mrf.mxu0
    %v6592 = vadd.f32 %v6549, %v6591
    %v6593 = vpop.f32.mrf.mxu0
    %v6594 = vadd.f32 %v6551, %v6593
    %v6595 = vpop.f32.mrf.mxu0
    %v6596 = vadd.f32 %v6553, %v6595
    %v6597 = vpop.f32.mrf.mxu0
    %v6598 = vadd.f32 %v6555, %v6597
    %6599 = vdwg.mxu0
    %6600 = vmatprep.subr.bf16.mxu0 %v3733
    %6601 = vmatpush1.bf16.msra.mxu0 %v3732
    %6602 = vmatprep.subr.bf16.mxu0 %v3725
    %6603 = vmatpush1.bf16.msra.mxu0 %v3724
    %6604 = vmatprep.subr.bf16.mxu0 %v3717
    %6605 = vmatpush1.bf16.msra.mxu0 %v3716
    %6606 = vmatprep.subr.bf16.mxu0 %v3709
    %6607 = vmatpush1.bf16.msra.mxu0 %v3708
    %6608 = vmatprep.subr.bf16.mxu0 %v3701
    %6609 = vmatpush1.bf16.msra.mxu0 %v3700
    %6610 = vmatprep.subr.bf16.mxu0 %v3693
    %6611 = vmatpush1.bf16.msra.mxu0 %v3692
    %6612 = vmatprep.subr.bf16.mxu0 %v3685
    %6613 = vmatpush1.bf16.msra.mxu0 %v3684
    %6614 = vmatprep.subr.bf16.mxu0 %v3677
    %6615 = vmatpush1.bf16.msra.mxu0 %v3676
    %6616 = vmatprep.subr.bf16.mxu0 %v3797
    %6617 = vmatpush2.bf16.msra.mxu0 %v3796
    %6618 = vmatprep.subr.bf16.mxu0 %v3789
    %6619 = vmatpush2.bf16.msra.mxu0 %v3788
    %6620 = vmatprep.subr.bf16.mxu0 %v3781
    %6621 = vmatpush2.bf16.msra.mxu0 %v3780
    %6622 = vmatprep.subr.bf16.mxu0 %v3773
    %6623 = vmatpush2.bf16.msra.mxu0 %v3772
    %6624 = vmatprep.subr.bf16.mxu0 %v3765
    %6625 = vmatpush2.bf16.msra.mxu0 %v3764
    %6626 = vmatprep.subr.bf16.mxu0 %v3757
    %6627 = vmatpush2.bf16.msra.mxu0 %v3756
    %6628 = vmatprep.subr.bf16.mxu0 %v3749
    %6629 = vmatpush2.bf16.msra.mxu0 %v3748
    %6630 = vmatprep.subr.bf16.mxu0 %v3741
    %6631 = vmatpush2.bf16.msra.mxu0 %v3740
    %6632 = vmatprep.mubr.bf16.mxu0 %v6141
    %6633 = vmatmul.mubr.bf16.gmra.mxu0 %v6140
    %v6634 = vpop.f32.mrf.mxu0
    %v6635 = vadd.f32 %v1359, %v6634
    %v6636 = vpop.f32.mrf.mxu0
    %v6637 = vadd.f32 %v1363, %v6636
    %v6638 = vpop.f32.mrf.mxu0
    %v6639 = vadd.f32 %v1359, %v6638
    %v6640 = vpop.f32.mrf.mxu0
    %v6641 = vadd.f32 %v1363, %v6640
    %6642 = vdwg.mxu0
    %6643 = vmatprep.subr.bf16.mxu0 %v3861
    %6644 = vmatpush1.bf16.msra.mxu0 %v3860
    %6645 = vmatprep.subr.bf16.mxu0 %v3853
    %6646 = vmatpush1.bf16.msra.mxu0 %v3852
    %6647 = vmatprep.subr.bf16.mxu0 %v3845
    %6648 = vmatpush1.bf16.msra.mxu0 %v3844
    %6649 = vmatprep.subr.bf16.mxu0 %v3837
    %6650 = vmatpush1.bf16.msra.mxu0 %v3836
    %6651 = vmatprep.subr.bf16.mxu0 %v3829
    %6652 = vmatpush1.bf16.msra.mxu0 %v3828
    %6653 = vmatprep.subr.bf16.mxu0 %v3821
    %6654 = vmatpush1.bf16.msra.mxu0 %v3820
    %6655 = vmatprep.subr.bf16.mxu0 %v3813
    %6656 = vmatpush1.bf16.msra.mxu0 %v3812
    %6657 = vmatprep.subr.bf16.mxu0 %v3805
    %6658 = vmatpush1.bf16.msra.mxu0 %v3804
    %6659 = vmatprep.subr.bf16.mxu0 %v3925
    %6660 = vmatpush2.bf16.msra.mxu0 %v3924
    %6661 = vmatprep.subr.bf16.mxu0 %v3917
    %6662 = vmatpush2.bf16.msra.mxu0 %v3916
    %6663 = vmatprep.subr.bf16.mxu0 %v3909
    %6664 = vmatpush2.bf16.msra.mxu0 %v3908
    %6665 = vmatprep.subr.bf16.mxu0 %v3901
    %6666 = vmatpush2.bf16.msra.mxu0 %v3900
    %6667 = vmatprep.subr.bf16.mxu0 %v3893
    %6668 = vmatpush2.bf16.msra.mxu0 %v3892
    %6669 = vmatprep.subr.bf16.mxu0 %v3885
    %6670 = vmatpush2.bf16.msra.mxu0 %v3884
    %6671 = vmatprep.subr.bf16.mxu0 %v3877
    %6672 = vmatpush2.bf16.msra.mxu0 %v3876
    %6673 = vmatprep.subr.bf16.mxu0 %v3869
    %6674 = vmatpush2.bf16.msra.mxu0 %v3868
    %6675 = vmatprep.mubr.bf16.mxu0 %v6427
    %6676 = vmatmul.mubr.bf16.gmra.mxu0 %v6426
    %v6677 = vpop.f32.mrf.mxu0
    %v6678 = vadd.f32 %v6635, %v6677
    %v6679 = vpop.f32.mrf.mxu0
    %v6680 = vadd.f32 %v6637, %v6679
    %v6681 = vpop.f32.mrf.mxu0
    %v6682 = vadd.f32 %v6639, %v6681
    %v6683 = vpop.f32.mrf.mxu0
    %v6684 = vadd.f32 %v6641, %v6683
    %6685 = vdwg.mxu0
    %6686 = vmatprep.subr.bf16.mxu0 %v3735
    %6687 = vmatpush1.bf16.msra.mxu0 %v3734
    %6688 = vmatprep.subr.bf16.mxu0 %v3727
    %6689 = vmatpush1.bf16.msra.mxu0 %v3726
    %6690 = vmatprep.subr.bf16.mxu0 %v3719
    %6691 = vmatpush1.bf16.msra.mxu0 %v3718
    %6692 = vmatprep.subr.bf16.mxu0 %v3711
    %6693 = vmatpush1.bf16.msra.mxu0 %v3710
    %6694 = vmatprep.subr.bf16.mxu0 %v3703
    %6695 = vmatpush1.bf16.msra.mxu0 %v3702
    %6696 = vmatprep.subr.bf16.mxu0 %v3695
    %6697 = vmatpush1.bf16.msra.mxu0 %v3694
    %6698 = vmatprep.subr.bf16.mxu0 %v3687
    %6699 = vmatpush1.bf16.msra.mxu0 %v3686
    %6700 = vmatprep.subr.bf16.mxu0 %v3679
    %6701 = vmatpush1.bf16.msra.mxu0 %v3678
    %6702 = vmatprep.subr.bf16.mxu0 %v3799
    %6703 = vmatpush2.bf16.msra.mxu0 %v3798
    %6704 = vmatprep.subr.bf16.mxu0 %v3791
    %6705 = vmatpush2.bf16.msra.mxu0 %v3790
    %6706 = vmatprep.subr.bf16.mxu0 %v3783
    %6707 = vmatpush2.bf16.msra.mxu0 %v3782
    %6708 = vmatprep.subr.bf16.mxu0 %v3775
    %6709 = vmatpush2.bf16.msra.mxu0 %v3774
    %6710 = vmatprep.subr.bf16.mxu0 %v3767
    %6711 = vmatpush2.bf16.msra.mxu0 %v3766
    %6712 = vmatprep.subr.bf16.mxu0 %v3759
    %6713 = vmatpush2.bf16.msra.mxu0 %v3758
    %6714 = vmatprep.subr.bf16.mxu0 %v3751
    %6715 = vmatpush2.bf16.msra.mxu0 %v3750
    %6716 = vmatprep.subr.bf16.mxu0 %v3743
    %6717 = vmatpush2.bf16.msra.mxu0 %v3742
    %6718 = vmatprep.mubr.bf16.mxu0 %v6141
    %6719 = vmatmul.mubr.bf16.gmra.mxu0 %v6140
    %v6720 = vpop.f32.mrf.mxu0
    %v6721 = vadd.f32 %v1367, %v6720
    %v6722 = vpop.f32.mrf.mxu0
    %v6723 = vadd.f32 %v1371, %v6722
    %v6724 = vpop.f32.mrf.mxu0
    %v6725 = vadd.f32 %v1367, %v6724
    %v6726 = vpop.f32.mrf.mxu0
    %v6727 = vadd.f32 %v1371, %v6726
    %6728 = vdwg.mxu0
    %6729 = vmatprep.subr.bf16.mxu0 %v3863
    %6730 = vmatpush1.bf16.msra.mxu0 %v3862
    %6731 = vmatprep.subr.bf16.mxu0 %v3855
    %6732 = vmatpush1.bf16.msra.mxu0 %v3854
    %6733 = vmatprep.subr.bf16.mxu0 %v3847
    %6734 = vmatpush1.bf16.msra.mxu0 %v3846
    %6735 = vmatprep.subr.bf16.mxu0 %v3839
    %6736 = vmatpush1.bf16.msra.mxu0 %v3838
    %6737 = vmatprep.subr.bf16.mxu0 %v3831
    %6738 = vmatpush1.bf16.msra.mxu0 %v3830
    %6739 = vmatprep.subr.bf16.mxu0 %v3823
    %6740 = vmatpush1.bf16.msra.mxu0 %v3822
    %6741 = vmatprep.subr.bf16.mxu0 %v3815
    %6742 = vmatpush1.bf16.msra.mxu0 %v3814
    %6743 = vmatprep.subr.bf16.mxu0 %v3807
    %6744 = vmatpush1.bf16.msra.mxu0 %v3806
    %6745 = vmatprep.subr.bf16.mxu0 %v3927
    %6746 = vmatpush2.bf16.msra.mxu0 %v3926
    %6747 = vmatprep.subr.bf16.mxu0 %v3919
    %6748 = vmatpush2.bf16.msra.mxu0 %v3918
    %6749 = vmatprep.subr.bf16.mxu0 %v3911
    %6750 = vmatpush2.bf16.msra.mxu0 %v3910
    %6751 = vmatprep.subr.bf16.mxu0 %v3903
    %6752 = vmatpush2.bf16.msra.mxu0 %v3902
    %6753 = vmatprep.subr.bf16.mxu0 %v3895
    %6754 = vmatpush2.bf16.msra.mxu0 %v3894
    %6755 = vmatprep.subr.bf16.mxu0 %v3887
    %6756 = vmatpush2.bf16.msra.mxu0 %v3886
    %6757 = vmatprep.subr.bf16.mxu0 %v3879
    %6758 = vmatpush2.bf16.msra.mxu0 %v3878
    %6759 = vmatprep.subr.bf16.mxu0 %v3871
    %6760 = vmatpush2.bf16.msra.mxu0 %v3870
    %6761 = vmatprep.mubr.bf16.mxu0 %v6427
    %6762 = vmatmul.mubr.bf16.gmra.mxu0 %v6426
    %v6763 = vpop.f32.mrf.mxu0
    %v6764 = vadd.f32 %v6721, %v6763
    %v6765 = vpop.f32.mrf.mxu0
    %v6766 = vadd.f32 %v6723, %v6765
    %v6767 = vpop.f32.mrf.mxu0
    %v6768 = vadd.f32 %v6725, %v6767
    %v6769 = vpop.f32.mrf.mxu0
    %v6770 = vadd.f32 %v6727, %v6769
    %6771 = vdwg.mxu0
    %v6772 = vxor.u32 %v6506, 2147483648
    %v6773 = vxor.u32 %v6508, 2147483648
    %v6774 = vxor.u32 %v6592, 2147483648
    %v6775 = vxor.u32 %v6594, 2147483648
    %v6776 = vxor.u32 %v6678, 2147483648
    %v6777 = vxor.u32 %v6680, 2147483648
    %v6778 = vxor.u32 %v6510, 2147483648
    %v6779 = vxor.u32 %v6512, 2147483648
    %v6780 = vxor.u32 %v6596, 2147483648
    %v6781 = vxor.u32 %v6598, 2147483648
    %v6782 = vxor.u32 %v6682, 2147483648
    %v6783 = vxor.u32 %v6684, 2147483648
    %v6784 = vmul.f32 %v6772, 1.442695
    %v6785 = vpow.pop %v6784
    %v6786 = vmul.f32 %v6773, 1.442695
    %v6787 = vpow.pop %v6786
    %v6788 = vmul.f32 %v6774, 1.442695
    %v6789 = vpow.pop %v6788
    %v6790 = vmul.f32 %v6775, 1.442695
    %v6791 = vpow.pop %v6790
    %v6792 = vmul.f32 %v6776, 1.442695
    %v6793 = vpow.pop %v6792
    %v6794 = vmul.f32 %v6777, 1.442695
    %v6795 = vpow.pop %v6794
    %v6796 = vmul.f32 %v6778, 1.442695
    %v6797 = vpow.pop %v6796
    %v6798 = vmul.f32 %v6779, 1.442695
    %v6799 = vpow.pop %v6798
    %v6800 = vmul.f32 %v6780, 1.442695
    %v6801 = vpow.pop %v6800
    %v6802 = vmul.f32 %v6781, 1.442695
    %v6803 = vpow.pop %v6802
    %v6804 = vmul.f32 %v6782, 1.442695
    %v6805 = vpow.pop %v6804
    %v6806 = vmul.f32 %v6783, 1.442695
    %v6807 = vpow.pop %v6806
    %v6808 = vadd.f32 %v6785, 1.0
    %v6809 = vadd.f32 %v6787, 1.0
    %v6810 = vadd.f32 %v6789, 1.0
    %v6811 = vadd.f32 %v6791, 1.0
    %v6812 = vadd.f32 %v6793, 1.0
    %v6813 = vadd.f32 %v6795, 1.0
    %v6814 = vadd.f32 %v6797, 1.0
    %v6815 = vadd.f32 %v6799, 1.0
    %v6816 = vadd.f32 %v6801, 1.0
    %v6817 = vadd.f32 %v6803, 1.0
    %v6818 = vadd.f32 %v6805, 1.0
    %v6819 = vadd.f32 %v6807, 1.0
    %v6820 = vrcp.pop %v6808
    %v6821 = vmul.f32 1.0, %v6820
    %v6822 = vrcp.pop %v6809
    %v6823 = vmul.f32 1.0, %v6822
    %v6824 = vrcp.pop %v6810
    %v6825 = vmul.f32 1.0, %v6824
    %v6826 = vrcp.pop %v6811
    %v6827 = vmul.f32 1.0, %v6826
    %v6828 = vrcp.pop %v6812
    %v6829 = vmul.f32 1.0, %v6828
    %v6830 = vrcp.pop %v6813
    %v6831 = vmul.f32 1.0, %v6830
    %v6832 = vrcp.pop %v6814
    %v6833 = vmul.f32 1.0, %v6832
    %v6834 = vrcp.pop %v6815
    %v6835 = vmul.f32 1.0, %v6834
    %v6836 = vrcp.pop %v6816
    %v6837 = vmul.f32 1.0, %v6836
    %v6838 = vrcp.pop %v6817
    %v6839 = vmul.f32 1.0, %v6838
    %v6840 = vrcp.pop %v6818
    %v6841 = vmul.f32 1.0, %v6840
    %v6842 = vrcp.pop %v6819
    %v6843 = vmul.f32 1.0, %v6842
    %v6844 = vtanh.pop %v6764
    %v6845 = vtanh.pop %v6766
    %v6846 = vtanh.pop %v6768
    %v6847 = vtanh.pop %v6770
    %v6848 = vmul.f32 %v6825, %v6108
    %v6849 = vmul.f32 %v6827, %v6109
    %v6850 = vmul.f32 %v6837, %v6110
    %v6851 = vmul.f32 %v6839, %v6111
    %v6852 = vmul.f32 %v6821, %v6844
    %v6853 = vmul.f32 %v6823, %v6845
    %v6854 = vmul.f32 %v6833, %v6846
    %v6855 = vmul.f32 %v6835, %v6847
    %v6856 = vadd.f32 %v6848, %v6852
    %v6857 = vadd.f32 %v6849, %v6853
    %v6858 = vadd.f32 %v6850, %v6854
    %v6859 = vadd.f32 %v6851, %v6855
    %v6860 = vtanh.pop %v6856
    %v6861 = vtanh.pop %v6857
    %v6862 = vtanh.pop %v6858
    %v6863 = vtanh.pop %v6859
    %v6864 = vmul.f32 %v6829, %v6860
    %v6865 = vmul.f32 %v6831, %v6861
    %v6866 = vmul.f32 %v6841, %v6862
    %v6867 = vmul.f32 %v6843, %v6863
    %6868 = vst [vmem:[#allocation3 + $0x60] sm:$0xff] %v6864
    %6869 = vst [vmem:[#allocation3 + $0x68] sm:$0xff] %v6865
    %6870 = vst [vmem:[#allocation3 + $0x70] sm:$0xff] %v6866
    %6871 = vst [vmem:[#allocation3 + $0x78] sm:$0xff] %v6867
    %v6872 = vld [vmem:[#allocation2 + $0x280] sm:$0xff]
    %v6873 = vld [vmem:[#allocation2 + $0x288] sm:$0xff]
    %v6874 = vld [vmem:[#allocation2 + $0x290] sm:$0xff]
    %v6875 = vld [vmem:[#allocation2 + $0x298] sm:$0xff]
    %v6876 = vld [vmem:[#allocation2 + $0x2a0] sm:$0xff]
    %v6877 = vld [vmem:[#allocation2 + $0x2a8] sm:$0xff]
    %v6878 = vld [vmem:[#allocation2 + $0x2b0] sm:$0xff]
    %v6879 = vld [vmem:[#allocation2 + $0x2b8] sm:$0xff]
    %v6880 = vld [vmem:[#allocation2 + $0x2c0] sm:$0xff]
    %v6881 = vld [vmem:[#allocation2 + $0x2c8] sm:$0xff]
    %v6882 = vld [vmem:[#allocation2 + $0x2d0] sm:$0xff]
    %v6883 = vld [vmem:[#allocation2 + $0x2d8] sm:$0xff]
    %v6884 = vld [vmem:[#allocation2 + $0x2e0] sm:$0xff]
    %v6885 = vld [vmem:[#allocation2 + $0x2e8] sm:$0xff]
    %v6886 = vld [vmem:[#allocation2 + $0x2f0] sm:$0xff]
    %v6887 = vld [vmem:[#allocation2 + $0x2f8] sm:$0xff]
    %v6888 = vpack.c.bf16 %v6424, %v6422
    %v6889 = vpack.c.bf16 %v6425, %v6423
    %6890 = vmatprep.subr.bf16.mxu0 %v1857
    %6891 = vmatpush1.bf16.msra.mxu0 %v1856
    %6892 = vmatprep.subr.bf16.mxu0 %v1849
    %6893 = vmatpush1.bf16.msra.mxu0 %v1848
    %6894 = vmatprep.subr.bf16.mxu0 %v1841
    %6895 = vmatpush1.bf16.msra.mxu0 %v1840
    %6896 = vmatprep.subr.bf16.mxu0 %v1833
    %6897 = vmatpush1.bf16.msra.mxu0 %v1832
    %6898 = vmatprep.subr.bf16.mxu0 %v1825
    %6899 = vmatpush1.bf16.msra.mxu0 %v1824
    %6900 = vmatprep.subr.bf16.mxu0 %v1817
    %6901 = vmatpush1.bf16.msra.mxu0 %v1816
    %6902 = vmatprep.subr.bf16.mxu0 %v1809
    %6903 = vmatpush1.bf16.msra.mxu0 %v1808
    %6904 = vmatprep.subr.bf16.mxu0 %v1801
    %6905 = vmatpush1.bf16.msra.mxu0 %v1800
    %6906 = vmatprep.subr.bf16.mxu0 %v1921
    %6907 = vmatpush2.bf16.msra.mxu0 %v1920
    %6908 = vmatprep.subr.bf16.mxu0 %v1913
    %6909 = vmatpush2.bf16.msra.mxu0 %v1912
    %6910 = vmatprep.subr.bf16.mxu0 %v1905
    %6911 = vmatpush2.bf16.msra.mxu0 %v1904
    %6912 = vmatprep.subr.bf16.mxu0 %v1897
    %6913 = vmatpush2.bf16.msra.mxu0 %v1896
    %6914 = vmatprep.subr.bf16.mxu0 %v1889
    %6915 = vmatpush2.bf16.msra.mxu0 %v1888
    %6916 = vmatprep.subr.bf16.mxu0 %v1881
    %6917 = vmatpush2.bf16.msra.mxu0 %v1880
    %6918 = vmatprep.subr.bf16.mxu0 %v1873
    %6919 = vmatpush2.bf16.msra.mxu0 %v1872
    %6920 = vmatprep.subr.bf16.mxu0 %v1865
    %6921 = vmatpush2.bf16.msra.mxu0 %v1864
    %6922 = vmatprep.mubr.bf16.mxu0 %v6889
    %6923 = vmatmul.mubr.bf16.gmra.mxu0 %v6888
    %v6924 = vpop.f32.mrf.mxu0
    %v6925 = vadd.f32 0.0, %v6924
    %v6926 = vpop.f32.mrf.mxu0
    %v6927 = vadd.f32 0.0, %v6926
    %v6928 = vpop.f32.mrf.mxu0
    %v6929 = vadd.f32 0.0, %v6928
    %v6930 = vpop.f32.mrf.mxu0
    %v6931 = vadd.f32 0.0, %v6930
    %6932 = vdwg.mxu0
    %6933 = vmatprep.subr.bf16.mxu0 %v1859
    %6934 = vmatpush1.bf16.msra.mxu0 %v1858
    %6935 = vmatprep.subr.bf16.mxu0 %v1851
    %6936 = vmatpush1.bf16.msra.mxu0 %v1850
    %6937 = vmatprep.subr.bf16.mxu0 %v1843
    %6938 = vmatpush1.bf16.msra.mxu0 %v1842
    %6939 = vmatprep.subr.bf16.mxu0 %v1835
    %6940 = vmatpush1.bf16.msra.mxu0 %v1834
    %6941 = vmatprep.subr.bf16.mxu0 %v1827
    %6942 = vmatpush1.bf16.msra.mxu0 %v1826
    %6943 = vmatprep.subr.bf16.mxu0 %v1819
    %6944 = vmatpush1.bf16.msra.mxu0 %v1818
    %6945 = vmatprep.subr.bf16.mxu0 %v1811
    %6946 = vmatpush1.bf16.msra.mxu0 %v1810
    %6947 = vmatprep.subr.bf16.mxu0 %v1803
    %6948 = vmatpush1.bf16.msra.mxu0 %v1802
    %6949 = vmatprep.subr.bf16.mxu0 %v1923
    %6950 = vmatpush2.bf16.msra.mxu0 %v1922
    %6951 = vmatprep.subr.bf16.mxu0 %v1915
    %6952 = vmatpush2.bf16.msra.mxu0 %v1914
    %6953 = vmatprep.subr.bf16.mxu0 %v1907
    %6954 = vmatpush2.bf16.msra.mxu0 %v1906
    %6955 = vmatprep.subr.bf16.mxu0 %v1899
    %6956 = vmatpush2.bf16.msra.mxu0 %v1898
    %6957 = vmatprep.subr.bf16.mxu0 %v1891
    %6958 = vmatpush2.bf16.msra.mxu0 %v1890
    %6959 = vmatprep.subr.bf16.mxu0 %v1883
    %6960 = vmatpush2.bf16.msra.mxu0 %v1882
    %6961 = vmatprep.subr.bf16.mxu0 %v1875
    %6962 = vmatpush2.bf16.msra.mxu0 %v1874
    %6963 = vmatprep.subr.bf16.mxu0 %v1867
    %6964 = vmatpush2.bf16.msra.mxu0 %v1866
    %6965 = vmatprep.mubr.bf16.mxu0 %v6889
    %6966 = vmatmul.mubr.bf16.gmra.mxu0 %v6888
    %v6967 = vpop.f32.mrf.mxu0
    %v6968 = vadd.f32 0.0, %v6967
    %v6969 = vpop.f32.mrf.mxu0
    %v6970 = vadd.f32 0.0, %v6969
    %v6971 = vpop.f32.mrf.mxu0
    %v6972 = vadd.f32 0.0, %v6971
    %v6973 = vpop.f32.mrf.mxu0
    %v6974 = vadd.f32 0.0, %v6973
    %6975 = vdwg.mxu0
    %6976 = vmatprep.subr.bf16.mxu0 %v1861
    %6977 = vmatpush1.bf16.msra.mxu0 %v1860
    %6978 = vmatprep.subr.bf16.mxu0 %v1853
    %6979 = vmatpush1.bf16.msra.mxu0 %v1852
    %6980 = vmatprep.subr.bf16.mxu0 %v1845
    %6981 = vmatpush1.bf16.msra.mxu0 %v1844
    %6982 = vmatprep.subr.bf16.mxu0 %v1837
    %6983 = vmatpush1.bf16.msra.mxu0 %v1836
    %6984 = vmatprep.subr.bf16.mxu0 %v1829
    %6985 = vmatpush1.bf16.msra.mxu0 %v1828
    %6986 = vmatprep.subr.bf16.mxu0 %v1821
    %6987 = vmatpush1.bf16.msra.mxu0 %v1820
    %6988 = vmatprep.subr.bf16.mxu0 %v1813
    %6989 = vmatpush1.bf16.msra.mxu0 %v1812
    %6990 = vmatprep.subr.bf16.mxu0 %v1805
    %6991 = vmatpush1.bf16.msra.mxu0 %v1804
    %6992 = vmatprep.subr.bf16.mxu0 %v1925
    %6993 = vmatpush2.bf16.msra.mxu0 %v1924
    %6994 = vmatprep.subr.bf16.mxu0 %v1917
    %6995 = vmatpush2.bf16.msra.mxu0 %v1916
    %6996 = vmatprep.subr.bf16.mxu0 %v1909
    %6997 = vmatpush2.bf16.msra.mxu0 %v1908
    %6998 = vmatprep.subr.bf16.mxu0 %v1901
    %6999 = vmatpush2.bf16.msra.mxu0 %v1900
    %7000 = vmatprep.subr.bf16.mxu0 %v1893
    %7001 = vmatpush2.bf16.msra.mxu0 %v1892
    %7002 = vmatprep.subr.bf16.mxu0 %v1885
    %7003 = vmatpush2.bf16.msra.mxu0 %v1884
    %7004 = vmatprep.subr.bf16.mxu0 %v1877
    %7005 = vmatpush2.bf16.msra.mxu0 %v1876
    %7006 = vmatprep.subr.bf16.mxu0 %v1869
    %7007 = vmatpush2.bf16.msra.mxu0 %v1868
    %7008 = vmatprep.mubr.bf16.mxu0 %v6889
    %7009 = vmatmul.mubr.bf16.gmra.mxu0 %v6888
    %v7010 = vpop.f32.mrf.mxu0
    %v7011 = vadd.f32 0.0, %v7010
    %v7012 = vpop.f32.mrf.mxu0
    %v7013 = vadd.f32 0.0, %v7012
    %v7014 = vpop.f32.mrf.mxu0
    %v7015 = vadd.f32 0.0, %v7014
    %v7016 = vpop.f32.mrf.mxu0
    %v7017 = vadd.f32 0.0, %v7016
    %7018 = vdwg.mxu0
    %7019 = vmatprep.subr.bf16.mxu0 %v1863
    %7020 = vmatpush1.bf16.msra.mxu0 %v1862
    %7021 = vmatprep.subr.bf16.mxu0 %v1855
    %7022 = vmatpush1.bf16.msra.mxu0 %v1854
    %7023 = vmatprep.subr.bf16.mxu0 %v1847
    %7024 = vmatpush1.bf16.msra.mxu0 %v1846
    %7025 = vmatprep.subr.bf16.mxu0 %v1839
    %7026 = vmatpush1.bf16.msra.mxu0 %v1838
    %7027 = vmatprep.subr.bf16.mxu0 %v1831
    %7028 = vmatpush1.bf16.msra.mxu0 %v1830
    %7029 = vmatprep.subr.bf16.mxu0 %v1823
    %7030 = vmatpush1.bf16.msra.mxu0 %v1822
    %7031 = vmatprep.subr.bf16.mxu0 %v1815
    %7032 = vmatpush1.bf16.msra.mxu0 %v1814
    %7033 = vmatprep.subr.bf16.mxu0 %v1807
    %7034 = vmatpush1.bf16.msra.mxu0 %v1806
    %7035 = vmatprep.subr.bf16.mxu0 %v1927
    %7036 = vmatpush2.bf16.msra.mxu0 %v1926
    %7037 = vmatprep.subr.bf16.mxu0 %v1919
    %7038 = vmatpush2.bf16.msra.mxu0 %v1918
    %7039 = vmatprep.subr.bf16.mxu0 %v1911
    %7040 = vmatpush2.bf16.msra.mxu0 %v1910
    %7041 = vmatprep.subr.bf16.mxu0 %v1903
    %7042 = vmatpush2.bf16.msra.mxu0 %v1902
    %7043 = vmatprep.subr.bf16.mxu0 %v1895
    %7044 = vmatpush2.bf16.msra.mxu0 %v1894
    %7045 = vmatprep.subr.bf16.mxu0 %v1887
    %7046 = vmatpush2.bf16.msra.mxu0 %v1886
    %7047 = vmatprep.subr.bf16.mxu0 %v1879
    %7048 = vmatpush2.bf16.msra.mxu0 %v1878
    %7049 = vmatprep.subr.bf16.mxu0 %v1871
    %7050 = vmatpush2.bf16.msra.mxu0 %v1870
    %7051 = vmatprep.mubr.bf16.mxu0 %v6889
    %7052 = vmatmul.mubr.bf16.gmra.mxu0 %v6888
    %v7053 = vpop.f32.mrf.mxu0
    %v7054 = vadd.f32 0.0, %v7053
    %v7055 = vpop.f32.mrf.mxu0
    %v7056 = vadd.f32 0.0, %v7055
    %v7057 = vpop.f32.mrf.mxu0
    %v7058 = vadd.f32 0.0, %v7057
    %v7059 = vpop.f32.mrf.mxu0
    %v7060 = vadd.f32 0.0, %v7059
    %7061 = vdwg.mxu0
    %v7062 = vadd.f32 %v6872, %v6925
    %v7063 = vadd.f32 %v6873, %v6927
    %v7064 = vadd.f32 %v6874, %v6968
    %v7065 = vadd.f32 %v6875, %v6970
    %v7066 = vadd.f32 %v6876, %v7011
    %v7067 = vadd.f32 %v6877, %v7013
    %v7068 = vadd.f32 %v6878, %v7054
    %v7069 = vadd.f32 %v6879, %v7056
    %v7070 = vadd.f32 %v6880, %v6929
    %v7071 = vadd.f32 %v6881, %v6931
    %v7072 = vadd.f32 %v6882, %v6972
    %v7073 = vadd.f32 %v6883, %v6974
    %v7074 = vadd.f32 %v6884, %v7015
    %v7075 = vadd.f32 %v6885, %v7017
    %v7076 = vadd.f32 %v6886, %v7058
    %v7077 = vadd.f32 %v6887, %v7060
    %v7078 = vxor.u32 %v7062, 2147483648
    %v7079 = vxor.u32 %v7063, 2147483648
    %v7080 = vxor.u32 %v7064, 2147483648
    %v7081 = vxor.u32 %v7065, 2147483648
    %v7082 = vxor.u32 %v7066, 2147483648
    %v7083 = vxor.u32 %v7067, 2147483648
    %v7084 = vxor.u32 %v7070, 2147483648
    %v7085 = vxor.u32 %v7071, 2147483648
    %v7086 = vxor.u32 %v7072, 2147483648
    %v7087 = vxor.u32 %v7073, 2147483648
    %v7088 = vxor.u32 %v7074, 2147483648
    %v7089 = vxor.u32 %v7075, 2147483648
    %v7090 = vmul.f32 %v7078, 1.442695
    %v7091 = vpow.pop %v7090
    %v7092 = vmul.f32 %v7079, 1.442695
    %v7093 = vpow.pop %v7092
    %v7094 = vmul.f32 %v7080, 1.442695
    %v7095 = vpow.pop %v7094
    %v7096 = vmul.f32 %v7081, 1.442695
    %v7097 = vpow.pop %v7096
    %v7098 = vmul.f32 %v7082, 1.442695
    %v7099 = vpow.pop %v7098
    %v7100 = vmul.f32 %v7083, 1.442695
    %v7101 = vpow.pop %v7100
    %v7102 = vmul.f32 %v7084, 1.442695
    %v7103 = vpow.pop %v7102
    %v7104 = vmul.f32 %v7085, 1.442695
    %v7105 = vpow.pop %v7104
    %v7106 = vmul.f32 %v7086, 1.442695
    %v7107 = vpow.pop %v7106
    %v7108 = vmul.f32 %v7087, 1.442695
    %v7109 = vpow.pop %v7108
    %v7110 = vmul.f32 %v7088, 1.442695
    %v7111 = vpow.pop %v7110
    %v7112 = vmul.f32 %v7089, 1.442695
    %v7113 = vpow.pop %v7112
    %v7114 = vadd.f32 %v7091, 1.0
    %v7115 = vadd.f32 %v7093, 1.0
    %v7116 = vadd.f32 %v7095, 1.0
    %v7117 = vadd.f32 %v7097, 1.0
    %v7118 = vadd.f32 %v7099, 1.0
    %v7119 = vadd.f32 %v7101, 1.0
    %v7120 = vadd.f32 %v7103, 1.0
    %v7121 = vadd.f32 %v7105, 1.0
    %v7122 = vadd.f32 %v7107, 1.0
    %v7123 = vadd.f32 %v7109, 1.0
    %v7124 = vadd.f32 %v7111, 1.0
    %v7125 = vadd.f32 %v7113, 1.0
    %v7126 = vrcp.pop %v7114
    %v7127 = vmul.f32 1.0, %v7126
    %v7128 = vrcp.pop %v7115
    %v7129 = vmul.f32 1.0, %v7128
    %v7130 = vrcp.pop %v7116
    %v7131 = vmul.f32 1.0, %v7130
    %v7132 = vrcp.pop %v7117
    %v7133 = vmul.f32 1.0, %v7132
    %v7134 = vrcp.pop %v7118
    %v7135 = vmul.f32 1.0, %v7134
    %v7136 = vrcp.pop %v7119
    %v7137 = vmul.f32 1.0, %v7136
    %v7138 = vrcp.pop %v7120
    %v7139 = vmul.f32 1.0, %v7138
    %v7140 = vrcp.pop %v7121
    %v7141 = vmul.f32 1.0, %v7140
    %v7142 = vrcp.pop %v7122
    %v7143 = vmul.f32 1.0, %v7142
    %v7144 = vrcp.pop %v7123
    %v7145 = vmul.f32 1.0, %v7144
    %v7146 = vrcp.pop %v7124
    %v7147 = vmul.f32 1.0, %v7146
    %v7148 = vrcp.pop %v7125
    %v7149 = vmul.f32 1.0, %v7148
    %v7150 = vtanh.pop %v7068
    %v7151 = vtanh.pop %v7069
    %v7152 = vtanh.pop %v7076
    %v7153 = vtanh.pop %v7077
    %v7154 = vmul.f32 %v7131, %v6414
    %v7155 = vmul.f32 %v7133, %v6415
    %v7156 = vmul.f32 %v7143, %v6416
    %v7157 = vmul.f32 %v7145, %v6417
    %v7158 = vmul.f32 %v7127, %v7150
    %v7159 = vmul.f32 %v7129, %v7151
    %v7160 = vmul.f32 %v7139, %v7152
    %v7161 = vmul.f32 %v7141, %v7153
    %v7162 = vadd.f32 %v7154, %v7158
    %v7163 = vadd.f32 %v7155, %v7159
    %v7164 = vadd.f32 %v7156, %v7160
    %v7165 = vadd.f32 %v7157, %v7161
    %v7166 = vtanh.pop %v7162
    %v7167 = vtanh.pop %v7163
    %v7168 = vtanh.pop %v7164
    %v7169 = vtanh.pop %v7165
    %v7170 = vmul.f32 %v7135, %v7166
    %v7171 = vmul.f32 %v7137, %v7167
    %v7172 = vmul.f32 %v7147, %v7168
    %v7173 = vmul.f32 %v7149, %v7169
    %v7174 = vpack.c.bf16 %v6866, %v6864
    %v7175 = vpack.c.bf16 %v6867, %v6865
    %7176 = vmatprep.subr.bf16.mxu0 %v3729
    %7177 = vmatpush1.bf16.msra.mxu0 %v3728
    %7178 = vmatprep.subr.bf16.mxu0 %v3721
    %7179 = vmatpush1.bf16.msra.mxu0 %v3720
    %7180 = vmatprep.subr.bf16.mxu0 %v3713
    %7181 = vmatpush1.bf16.msra.mxu0 %v3712
    %7182 = vmatprep.subr.bf16.mxu0 %v3705
    %7183 = vmatpush1.bf16.msra.mxu0 %v3704
    %7184 = vmatprep.subr.bf16.mxu0 %v3697
    %7185 = vmatpush1.bf16.msra.mxu0 %v3696
    %7186 = vmatprep.subr.bf16.mxu0 %v3689
    %7187 = vmatpush1.bf16.msra.mxu0 %v3688
    %7188 = vmatprep.subr.bf16.mxu0 %v3681
    %7189 = vmatpush1.bf16.msra.mxu0 %v3680
    %7190 = vmatprep.subr.bf16.mxu0 %v3673
    %7191 = vmatpush1.bf16.msra.mxu0 %v3672
    %7192 = vmatprep.subr.bf16.mxu0 %v3793
    %7193 = vmatpush2.bf16.msra.mxu0 %v3792
    %7194 = vmatprep.subr.bf16.mxu0 %v3785
    %7195 = vmatpush2.bf16.msra.mxu0 %v3784
    %7196 = vmatprep.subr.bf16.mxu0 %v3777
    %7197 = vmatpush2.bf16.msra.mxu0 %v3776
    %7198 = vmatprep.subr.bf16.mxu0 %v3769
    %7199 = vmatpush2.bf16.msra.mxu0 %v3768
    %7200 = vmatprep.subr.bf16.mxu0 %v3761
    %7201 = vmatpush2.bf16.msra.mxu0 %v3760
    %7202 = vmatprep.subr.bf16.mxu0 %v3753
    %7203 = vmatpush2.bf16.msra.mxu0 %v3752
    %7204 = vmatprep.subr.bf16.mxu0 %v3745
    %7205 = vmatpush2.bf16.msra.mxu0 %v3744
    %7206 = vmatprep.subr.bf16.mxu0 %v3737
    %7207 = vmatpush2.bf16.msra.mxu0 %v3736
    %7208 = vmatprep.mubr.bf16.mxu0 %v6889
    %7209 = vmatmul.mubr.bf16.gmra.mxu0 %v6888
    %v7210 = vpop.f32.mrf.mxu0
    %v7211 = vadd.f32 %v1343, %v7210
    %v7212 = vpop.f32.mrf.mxu0
    %v7213 = vadd.f32 %v1347, %v7212
    %v7214 = vpop.f32.mrf.mxu0
    %v7215 = vadd.f32 %v1343, %v7214
    %v7216 = vpop.f32.mrf.mxu0
    %v7217 = vadd.f32 %v1347, %v7216
    %7218 = vdwg.mxu0
    %7219 = vmatprep.subr.bf16.mxu0 %v3857
    %7220 = vmatpush1.bf16.msra.mxu0 %v3856
    %7221 = vmatprep.subr.bf16.mxu0 %v3849
    %7222 = vmatpush1.bf16.msra.mxu0 %v3848
    %7223 = vmatprep.subr.bf16.mxu0 %v3841
    %7224 = vmatpush1.bf16.msra.mxu0 %v3840
    %7225 = vmatprep.subr.bf16.mxu0 %v3833
    %7226 = vmatpush1.bf16.msra.mxu0 %v3832
    %7227 = vmatprep.subr.bf16.mxu0 %v3825
    %7228 = vmatpush1.bf16.msra.mxu0 %v3824
    %7229 = vmatprep.subr.bf16.mxu0 %v3817
    %7230 = vmatpush1.bf16.msra.mxu0 %v3816
    %7231 = vmatprep.subr.bf16.mxu0 %v3809
    %7232 = vmatpush1.bf16.msra.mxu0 %v3808
    %7233 = vmatprep.subr.bf16.mxu0 %v3801
    %7234 = vmatpush1.bf16.msra.mxu0 %v3800
    %7235 = vmatprep.subr.bf16.mxu0 %v3921
    %7236 = vmatpush2.bf16.msra.mxu0 %v3920
    %7237 = vmatprep.subr.bf16.mxu0 %v3913
    %7238 = vmatpush2.bf16.msra.mxu0 %v3912
    %7239 = vmatprep.subr.bf16.mxu0 %v3905
    %7240 = vmatpush2.bf16.msra.mxu0 %v3904
    %7241 = vmatprep.subr.bf16.mxu0 %v3897
    %7242 = vmatpush2.bf16.msra.mxu0 %v3896
    %7243 = vmatprep.subr.bf16.mxu0 %v3889
    %7244 = vmatpush2.bf16.msra.mxu0 %v3888
    %7245 = vmatprep.subr.bf16.mxu0 %v3881
    %7246 = vmatpush2.bf16.msra.mxu0 %v3880
    %7247 = vmatprep.subr.bf16.mxu0 %v3873
    %7248 = vmatpush2.bf16.msra.mxu0 %v3872
    %7249 = vmatprep.subr.bf16.mxu0 %v3865
    %7250 = vmatpush2.bf16.msra.mxu0 %v3864
    %7251 = vmatprep.mubr.bf16.mxu0 %v7175
    %7252 = vmatmul.mubr.bf16.gmra.mxu0 %v7174
    %v7253 = vpop.f32.mrf.mxu0
    %v7254 = vadd.f32 %v7211, %v7253
    %v7255 = vpop.f32.mrf.mxu0
    %v7256 = vadd.f32 %v7213, %v7255
    %v7257 = vpop.f32.mrf.mxu0
    %v7258 = vadd.f32 %v7215, %v7257
    %v7259 = vpop.f32.mrf.mxu0
    %v7260 = vadd.f32 %v7217, %v7259
    %7261 = vdwg.mxu0
    %7262 = vmatprep.subr.bf16.mxu0 %v3731
    %7263 = vmatpush1.bf16.msra.mxu0 %v3730
    %7264 = vmatprep.subr.bf16.mxu0 %v3723
    %7265 = vmatpush1.bf16.msra.mxu0 %v3722
    %7266 = vmatprep.subr.bf16.mxu0 %v3715
    %7267 = vmatpush1.bf16.msra.mxu0 %v3714
    %7268 = vmatprep.subr.bf16.mxu0 %v3707
    %7269 = vmatpush1.bf16.msra.mxu0 %v3706
    %7270 = vmatprep.subr.bf16.mxu0 %v3699
    %7271 = vmatpush1.bf16.msra.mxu0 %v3698
    %7272 = vmatprep.subr.bf16.mxu0 %v3691
    %7273 = vmatpush1.bf16.msra.mxu0 %v3690
    %7274 = vmatprep.subr.bf16.mxu0 %v3683
    %7275 = vmatpush1.bf16.msra.mxu0 %v3682
    %7276 = vmatprep.subr.bf16.mxu0 %v3675
    %7277 = vmatpush1.bf16.msra.mxu0 %v3674
    %7278 = vmatprep.subr.bf16.mxu0 %v3795
    %7279 = vmatpush2.bf16.msra.mxu0 %v3794
    %7280 = vmatprep.subr.bf16.mxu0 %v3787
    %7281 = vmatpush2.bf16.msra.mxu0 %v3786
    %7282 = vmatprep.subr.bf16.mxu0 %v3779
    %7283 = vmatpush2.bf16.msra.mxu0 %v3778
    %7284 = vmatprep.subr.bf16.mxu0 %v3771
    %7285 = vmatpush2.bf16.msra.mxu0 %v3770
    %7286 = vmatprep.subr.bf16.mxu0 %v3763
    %7287 = vmatpush2.bf16.msra.mxu0 %v3762
    %7288 = vmatprep.subr.bf16.mxu0 %v3755
    %7289 = vmatpush2.bf16.msra.mxu0 %v3754
    %7290 = vmatprep.subr.bf16.mxu0 %v3747
    %7291 = vmatpush2.bf16.msra.mxu0 %v3746
    %7292 = vmatprep.subr.bf16.mxu0 %v3739
    %7293 = vmatpush2.bf16.msra.mxu0 %v3738
    %7294 = vmatprep.mubr.bf16.mxu0 %v6889
    %7295 = vmatmul.mubr.bf16.gmra.mxu0 %v6888
    %v7296 = vpop.f32.mrf.mxu0
    %v7297 = vadd.f32 %v1351, %v7296
    %v7298 = vpop.f32.mrf.mxu0
    %v7299 = vadd.f32 %v1355, %v7298
    %v7300 = vpop.f32.mrf.mxu0
    %v7301 = vadd.f32 %v1351, %v7300
    %v7302 = vpop.f32.mrf.mxu0
    %v7303 = vadd.f32 %v1355, %v7302
    %7304 = vdwg.mxu0
    %7305 = vmatprep.subr.bf16.mxu0 %v3859
    %7306 = vmatpush1.bf16.msra.mxu0 %v3858
    %7307 = vmatprep.subr.bf16.mxu0 %v3851
    %7308 = vmatpush1.bf16.msra.mxu0 %v3850
    %7309 = vmatprep.subr.bf16.mxu0 %v3843
    %7310 = vmatpush1.bf16.msra.mxu0 %v3842
    %7311 = vmatprep.subr.bf16.mxu0 %v3835
    %7312 = vmatpush1.bf16.msra.mxu0 %v3834
    %7313 = vmatprep.subr.bf16.mxu0 %v3827
    %7314 = vmatpush1.bf16.msra.mxu0 %v3826
    %7315 = vmatprep.subr.bf16.mxu0 %v3819
    %7316 = vmatpush1.bf16.msra.mxu0 %v3818
    %7317 = vmatprep.subr.bf16.mxu0 %v3811
    %7318 = vmatpush1.bf16.msra.mxu0 %v3810
    %7319 = vmatprep.subr.bf16.mxu0 %v3803
    %7320 = vmatpush1.bf16.msra.mxu0 %v3802
    %7321 = vmatprep.subr.bf16.mxu0 %v3923
    %7322 = vmatpush2.bf16.msra.mxu0 %v3922
    %7323 = vmatprep.subr.bf16.mxu0 %v3915
    %7324 = vmatpush2.bf16.msra.mxu0 %v3914
    %7325 = vmatprep.subr.bf16.mxu0 %v3907
    %7326 = vmatpush2.bf16.msra.mxu0 %v3906
    %7327 = vmatprep.subr.bf16.mxu0 %v3899
    %7328 = vmatpush2.bf16.msra.mxu0 %v3898
    %7329 = vmatprep.subr.bf16.mxu0 %v3891
    %7330 = vmatpush2.bf16.msra.mxu0 %v3890
    %7331 = vmatprep.subr.bf16.mxu0 %v3883
    %7332 = vmatpush2.bf16.msra.mxu0 %v3882
    %7333 = vmatprep.subr.bf16.mxu0 %v3875
    %7334 = vmatpush2.bf16.msra.mxu0 %v3874
    %7335 = vmatprep.subr.bf16.mxu0 %v3867
    %7336 = vmatpush2.bf16.msra.mxu0 %v3866
    %7337 = vmatprep.mubr.bf16.mxu0 %v7175
    %7338 = vmatmul.mubr.bf16.gmra.mxu0 %v7174
    %v7339 = vpop.f32.mrf.mxu0
    %v7340 = vadd.f32 %v7297, %v7339
    %v7341 = vpop.f32.mrf.mxu0
    %v7342 = vadd.f32 %v7299, %v7341
    %v7343 = vpop.f32.mrf.mxu0
    %v7344 = vadd.f32 %v7301, %v7343
    %v7345 = vpop.f32.mrf.mxu0
    %v7346 = vadd.f32 %v7303, %v7345
    %7347 = vdwg.mxu0
    %7348 = vmatprep.subr.bf16.mxu0 %v3733
    %7349 = vmatpush1.bf16.msra.mxu0 %v3732
    %7350 = vmatprep.subr.bf16.mxu0 %v3725
    %7351 = vmatpush1.bf16.msra.mxu0 %v3724
    %7352 = vmatprep.subr.bf16.mxu0 %v3717
    %7353 = vmatpush1.bf16.msra.mxu0 %v3716
    %7354 = vmatprep.subr.bf16.mxu0 %v3709
    %7355 = vmatpush1.bf16.msra.mxu0 %v3708
    %7356 = vmatprep.subr.bf16.mxu0 %v3701
    %7357 = vmatpush1.bf16.msra.mxu0 %v3700
    %7358 = vmatprep.subr.bf16.mxu0 %v3693
    %7359 = vmatpush1.bf16.msra.mxu0 %v3692
    %7360 = vmatprep.subr.bf16.mxu0 %v3685
    %7361 = vmatpush1.bf16.msra.mxu0 %v3684
    %7362 = vmatprep.subr.bf16.mxu0 %v3677
    %7363 = vmatpush1.bf16.msra.mxu0 %v3676
    %7364 = vmatprep.subr.bf16.mxu0 %v3797
    %7365 = vmatpush2.bf16.msra.mxu0 %v3796
    %7366 = vmatprep.subr.bf16.mxu0 %v3789
    %7367 = vmatpush2.bf16.msra.mxu0 %v3788
    %7368 = vmatprep.subr.bf16.mxu0 %v3781
    %7369 = vmatpush2.bf16.msra.mxu0 %v3780
    %7370 = vmatprep.subr.bf16.mxu0 %v3773
    %7371 = vmatpush2.bf16.msra.mxu0 %v3772
    %7372 = vmatprep.subr.bf16.mxu0 %v3765
    %7373 = vmatpush2.bf16.msra.mxu0 %v3764
    %7374 = vmatprep.subr.bf16.mxu0 %v3757
    %7375 = vmatpush2.bf16.msra.mxu0 %v3756
    %7376 = vmatprep.subr.bf16.mxu0 %v3749
    %7377 = vmatpush2.bf16.msra.mxu0 %v3748
    %7378 = vmatprep.subr.bf16.mxu0 %v3741
    %7379 = vmatpush2.bf16.msra.mxu0 %v3740
    %7380 = vmatprep.mubr.bf16.mxu0 %v6889
    %7381 = vmatmul.mubr.bf16.gmra.mxu0 %v6888
    %v7382 = vpop.f32.mrf.mxu0
    %v7383 = vadd.f32 %v1359, %v7382
    %v7384 = vpop.f32.mrf.mxu0
    %v7385 = vadd.f32 %v1363, %v7384
    %v7386 = vpop.f32.mrf.mxu0
    %v7387 = vadd.f32 %v1359, %v7386
    %v7388 = vpop.f32.mrf.mxu0
    %v7389 = vadd.f32 %v1363, %v7388
    %7390 = vdwg.mxu0
    %7391 = vmatprep.subr.bf16.mxu0 %v3861
    %7392 = vmatpush1.bf16.msra.mxu0 %v3860
    %7393 = vmatprep.subr.bf16.mxu0 %v3853
    %7394 = vmatpush1.bf16.msra.mxu0 %v3852
    %7395 = vmatprep.subr.bf16.mxu0 %v3845
    %7396 = vmatpush1.bf16.msra.mxu0 %v3844
    %7397 = vmatprep.subr.bf16.mxu0 %v3837
    %7398 = vmatpush1.bf16.msra.mxu0 %v3836
    %7399 = vmatprep.subr.bf16.mxu0 %v3829
    %7400 = vmatpush1.bf16.msra.mxu0 %v3828
    %7401 = vmatprep.subr.bf16.mxu0 %v3821
    %7402 = vmatpush1.bf16.msra.mxu0 %v3820
    %7403 = vmatprep.subr.bf16.mxu0 %v3813
    %7404 = vmatpush1.bf16.msra.mxu0 %v3812
    %7405 = vmatprep.subr.bf16.mxu0 %v3805
    %7406 = vmatpush1.bf16.msra.mxu0 %v3804
    %7407 = vmatprep.subr.bf16.mxu0 %v3925
    %7408 = vmatpush2.bf16.msra.mxu0 %v3924
    %7409 = vmatprep.subr.bf16.mxu0 %v3917
    %7410 = vmatpush2.bf16.msra.mxu0 %v3916
    %7411 = vmatprep.subr.bf16.mxu0 %v3909
    %7412 = vmatpush2.bf16.msra.mxu0 %v3908
    %7413 = vmatprep.subr.bf16.mxu0 %v3901
    %7414 = vmatpush2.bf16.msra.mxu0 %v3900
    %7415 = vmatprep.subr.bf16.mxu0 %v3893
    %7416 = vmatpush2.bf16.msra.mxu0 %v3892
    %7417 = vmatprep.subr.bf16.mxu0 %v3885
    %7418 = vmatpush2.bf16.msra.mxu0 %v3884
    %7419 = vmatprep.subr.bf16.mxu0 %v3877
    %7420 = vmatpush2.bf16.msra.mxu0 %v3876
    %7421 = vmatprep.subr.bf16.mxu0 %v3869
    %7422 = vmatpush2.bf16.msra.mxu0 %v3868
    %7423 = vmatprep.mubr.bf16.mxu0 %v7175
    %7424 = vmatmul.mubr.bf16.gmra.mxu0 %v7174
    %v7425 = vpop.f32.mrf.mxu0
    %v7426 = vadd.f32 %v7383, %v7425
    %v7427 = vpop.f32.mrf.mxu0
    %v7428 = vadd.f32 %v7385, %v7427
    %v7429 = vpop.f32.mrf.mxu0
    %v7430 = vadd.f32 %v7387, %v7429
    %v7431 = vpop.f32.mrf.mxu0
    %v7432 = vadd.f32 %v7389, %v7431
    %7433 = vdwg.mxu0
    %7434 = vmatprep.subr.bf16.mxu0 %v3735
    %7435 = vmatpush1.bf16.msra.mxu0 %v3734
    %7436 = vmatprep.subr.bf16.mxu0 %v3727
    %7437 = vmatpush1.bf16.msra.mxu0 %v3726
    %7438 = vmatprep.subr.bf16.mxu0 %v3719
    %7439 = vmatpush1.bf16.msra.mxu0 %v3718
    %7440 = vmatprep.subr.bf16.mxu0 %v3711
    %7441 = vmatpush1.bf16.msra.mxu0 %v3710
    %7442 = vmatprep.subr.bf16.mxu0 %v3703
    %7443 = vmatpush1.bf16.msra.mxu0 %v3702
    %7444 = vmatprep.subr.bf16.mxu0 %v3695
    %7445 = vmatpush1.bf16.msra.mxu0 %v3694
    %7446 = vmatprep.subr.bf16.mxu0 %v3687
    %7447 = vmatpush1.bf16.msra.mxu0 %v3686
    %7448 = vmatprep.subr.bf16.mxu0 %v3679
    %7449 = vmatpush1.bf16.msra.mxu0 %v3678
    %7450 = vmatprep.subr.bf16.mxu0 %v3799
    %7451 = vmatpush2.bf16.msra.mxu0 %v3798
    %7452 = vmatprep.subr.bf16.mxu0 %v3791
    %7453 = vmatpush2.bf16.msra.mxu0 %v3790
    %7454 = vmatprep.subr.bf16.mxu0 %v3783
    %7455 = vmatpush2.bf16.msra.mxu0 %v3782
    %7456 = vmatprep.subr.bf16.mxu0 %v3775
    %7457 = vmatpush2.bf16.msra.mxu0 %v3774
    %7458 = vmatprep.subr.bf16.mxu0 %v3767
    %7459 = vmatpush2.bf16.msra.mxu0 %v3766
    %7460 = vmatprep.subr.bf16.mxu0 %v3759
    %7461 = vmatpush2.bf16.msra.mxu0 %v3758
    %7462 = vmatprep.subr.bf16.mxu0 %v3751
    %7463 = vmatpush2.bf16.msra.mxu0 %v3750
    %7464 = vmatprep.subr.bf16.mxu0 %v3743
    %7465 = vmatpush2.bf16.msra.mxu0 %v3742
    %7466 = vmatprep.mubr.bf16.mxu0 %v6889
    %7467 = vmatmul.mubr.bf16.gmra.mxu0 %v6888
    %v7468 = vpop.f32.mrf.mxu0
    %v7469 = vadd.f32 %v1367, %v7468
    %v7470 = vpop.f32.mrf.mxu0
    %v7471 = vadd.f32 %v1371, %v7470
    %v7472 = vpop.f32.mrf.mxu0
    %v7473 = vadd.f32 %v1367, %v7472
    %v7474 = vpop.f32.mrf.mxu0
    %v7475 = vadd.f32 %v1371, %v7474
    %7476 = vdwg.mxu0
    %7477 = vmatprep.subr.bf16.mxu0 %v3863
    %7478 = vmatpush1.bf16.msra.mxu0 %v3862
    %7479 = vmatprep.subr.bf16.mxu0 %v3855
    %7480 = vmatpush1.bf16.msra.mxu0 %v3854
    %7481 = vmatprep.subr.bf16.mxu0 %v3847
    %7482 = vmatpush1.bf16.msra.mxu0 %v3846
    %7483 = vmatprep.subr.bf16.mxu0 %v3839
    %7484 = vmatpush1.bf16.msra.mxu0 %v3838
    %7485 = vmatprep.subr.bf16.mxu0 %v3831
    %7486 = vmatpush1.bf16.msra.mxu0 %v3830
    %7487 = vmatprep.subr.bf16.mxu0 %v3823
    %7488 = vmatpush1.bf16.msra.mxu0 %v3822
    %7489 = vmatprep.subr.bf16.mxu0 %v3815
    %7490 = vmatpush1.bf16.msra.mxu0 %v3814
    %7491 = vmatprep.subr.bf16.mxu0 %v3807
    %7492 = vmatpush1.bf16.msra.mxu0 %v3806
    %7493 = vmatprep.subr.bf16.mxu0 %v3927
    %7494 = vmatpush2.bf16.msra.mxu0 %v3926
    %7495 = vmatprep.subr.bf16.mxu0 %v3919
    %7496 = vmatpush2.bf16.msra.mxu0 %v3918
    %7497 = vmatprep.subr.bf16.mxu0 %v3911
    %7498 = vmatpush2.bf16.msra.mxu0 %v3910
    %7499 = vmatprep.subr.bf16.mxu0 %v3903
    %7500 = vmatpush2.bf16.msra.mxu0 %v3902
    %7501 = vmatprep.subr.bf16.mxu0 %v3895
    %7502 = vmatpush2.bf16.msra.mxu0 %v3894
    %7503 = vmatprep.subr.bf16.mxu0 %v3887
    %7504 = vmatpush2.bf16.msra.mxu0 %v3886
    %7505 = vmatprep.subr.bf16.mxu0 %v3879
    %7506 = vmatpush2.bf16.msra.mxu0 %v3878
    %7507 = vmatprep.subr.bf16.mxu0 %v3871
    %7508 = vmatpush2.bf16.msra.mxu0 %v3870
    %7509 = vmatprep.mubr.bf16.mxu0 %v7175
    %7510 = vmatmul.mubr.bf16.gmra.mxu0 %v7174
    %v7511 = vpop.f32.mrf.mxu0
    %v7512 = vadd.f32 %v7469, %v7511
    %v7513 = vpop.f32.mrf.mxu0
    %v7514 = vadd.f32 %v7471, %v7513
    %v7515 = vpop.f32.mrf.mxu0
    %v7516 = vadd.f32 %v7473, %v7515
    %v7517 = vpop.f32.mrf.mxu0
    %v7518 = vadd.f32 %v7475, %v7517
    %7519 = vdwg.mxu0
    %v7520 = vxor.u32 %v7254, 2147483648
    %v7521 = vxor.u32 %v7256, 2147483648
    %v7522 = vxor.u32 %v7340, 2147483648
    %v7523 = vxor.u32 %v7342, 2147483648
    %v7524 = vxor.u32 %v7426, 2147483648
    %v7525 = vxor.u32 %v7428, 2147483648
    %v7526 = vxor.u32 %v7258, 2147483648
    %v7527 = vxor.u32 %v7260, 2147483648
    %v7528 = vxor.u32 %v7344, 2147483648
    %v7529 = vxor.u32 %v7346, 2147483648
    %v7530 = vxor.u32 %v7430, 2147483648
    %v7531 = vxor.u32 %v7432, 2147483648
    %v7532 = vmul.f32 %v7520, 1.442695
    %v7533 = vpow.pop %v7532
    %v7534 = vmul.f32 %v7521, 1.442695
    %v7535 = vpow.pop %v7534
    %v7536 = vmul.f32 %v7522, 1.442695
    %v7537 = vpow.pop %v7536
    %v7538 = vmul.f32 %v7523, 1.442695
    %v7539 = vpow.pop %v7538
    %v7540 = vmul.f32 %v7524, 1.442695
    %v7541 = vpow.pop %v7540
    %v7542 = vmul.f32 %v7525, 1.442695
    %v7543 = vpow.pop %v7542
    %v7544 = vmul.f32 %v7526, 1.442695
    %v7545 = vpow.pop %v7544
    %v7546 = vmul.f32 %v7527, 1.442695
    %v7547 = vpow.pop %v7546
    %v7548 = vmul.f32 %v7528, 1.442695
    %v7549 = vpow.pop %v7548
    %v7550 = vmul.f32 %v7529, 1.442695
    %v7551 = vpow.pop %v7550
    %v7552 = vmul.f32 %v7530, 1.442695
    %v7553 = vpow.pop %v7552
    %v7554 = vmul.f32 %v7531, 1.442695
    %v7555 = vpow.pop %v7554
    %v7556 = vadd.f32 %v7533, 1.0
    %v7557 = vadd.f32 %v7535, 1.0
    %v7558 = vadd.f32 %v7537, 1.0
    %v7559 = vadd.f32 %v7539, 1.0
    %v7560 = vadd.f32 %v7541, 1.0
    %v7561 = vadd.f32 %v7543, 1.0
    %v7562 = vadd.f32 %v7545, 1.0
    %v7563 = vadd.f32 %v7547, 1.0
    %v7564 = vadd.f32 %v7549, 1.0
    %v7565 = vadd.f32 %v7551, 1.0
    %v7566 = vadd.f32 %v7553, 1.0
    %v7567 = vadd.f32 %v7555, 1.0
    %v7568 = vrcp.pop %v7556
    %v7569 = vmul.f32 1.0, %v7568
    %v7570 = vrcp.pop %v7557
    %v7571 = vmul.f32 1.0, %v7570
    %v7572 = vrcp.pop %v7558
    %v7573 = vmul.f32 1.0, %v7572
    %v7574 = vrcp.pop %v7559
    %v7575 = vmul.f32 1.0, %v7574
    %v7576 = vrcp.pop %v7560
    %v7577 = vmul.f32 1.0, %v7576
    %v7578 = vrcp.pop %v7561
    %v7579 = vmul.f32 1.0, %v7578
    %v7580 = vrcp.pop %v7562
    %v7581 = vmul.f32 1.0, %v7580
    %v7582 = vrcp.pop %v7563
    %v7583 = vmul.f32 1.0, %v7582
    %v7584 = vrcp.pop %v7564
    %v7585 = vmul.f32 1.0, %v7584
    %v7586 = vrcp.pop %v7565
    %v7587 = vmul.f32 1.0, %v7586
    %v7588 = vrcp.pop %v7566
    %v7589 = vmul.f32 1.0, %v7588
    %v7590 = vrcp.pop %v7567
    %v7591 = vmul.f32 1.0, %v7590
    %v7592 = vtanh.pop %v7512
    %v7593 = vtanh.pop %v7514
    %v7594 = vtanh.pop %v7516
    %v7595 = vtanh.pop %v7518
    %v7596 = vmul.f32 %v7573, %v6856
    %v7597 = vmul.f32 %v7575, %v6857
    %v7598 = vmul.f32 %v7585, %v6858
    %v7599 = vmul.f32 %v7587, %v6859
    %v7600 = vmul.f32 %v7569, %v7592
    %v7601 = vmul.f32 %v7571, %v7593
    %v7602 = vmul.f32 %v7581, %v7594
    %v7603 = vmul.f32 %v7583, %v7595
    %v7604 = vadd.f32 %v7596, %v7600
    %v7605 = vadd.f32 %v7597, %v7601
    %v7606 = vadd.f32 %v7598, %v7602
    %v7607 = vadd.f32 %v7599, %v7603
    %v7608 = vtanh.pop %v7604
    %v7609 = vtanh.pop %v7605
    %v7610 = vtanh.pop %v7606
    %v7611 = vtanh.pop %v7607
    %v7612 = vmul.f32 %v7577, %v7608
    %v7613 = vmul.f32 %v7579, %v7609
    %v7614 = vmul.f32 %v7589, %v7610
    %v7615 = vmul.f32 %v7591, %v7611
    %7616 = vst [vmem:[#allocation3 + $0x80] sm:$0xff] %v7612
    %7617 = vst [vmem:[#allocation3 + $0x88] sm:$0xff] %v7613
    %7618 = vst [vmem:[#allocation3 + $0x90] sm:$0xff] %v7614
    %7619 = vst [vmem:[#allocation3 + $0x98] sm:$0xff] %v7615
    %v7620 = vld [vmem:[#allocation2 + $0x300] sm:$0xff]
    %v7621 = vld [vmem:[#allocation2 + $0x308] sm:$0xff]
    %v7622 = vld [vmem:[#allocation2 + $0x310] sm:$0xff]
    %v7623 = vld [vmem:[#allocation2 + $0x318] sm:$0xff]
    %v7624 = vld [vmem:[#allocation2 + $0x320] sm:$0xff]
    %v7625 = vld [vmem:[#allocation2 + $0x328] sm:$0xff]
    %v7626 = vld [vmem:[#allocation2 + $0x330] sm:$0xff]
    %v7627 = vld [vmem:[#allocation2 + $0x338] sm:$0xff]
    %v7628 = vld [vmem:[#allocation2 + $0x340] sm:$0xff]
    %v7629 = vld [vmem:[#allocation2 + $0x348] sm:$0xff]
    %v7630 = vld [vmem:[#allocation2 + $0x350] sm:$0xff]
    %v7631 = vld [vmem:[#allocation2 + $0x358] sm:$0xff]
    %v7632 = vld [vmem:[#allocation2 + $0x360] sm:$0xff]
    %v7633 = vld [vmem:[#allocation2 + $0x368] sm:$0xff]
    %v7634 = vld [vmem:[#allocation2 + $0x370] sm:$0xff]
    %v7635 = vld [vmem:[#allocation2 + $0x378] sm:$0xff]
    %v7636 = vpack.c.bf16 %v7172, %v7170
    %v7637 = vpack.c.bf16 %v7173, %v7171
    %7638 = vmatprep.subr.bf16.mxu0 %v1857
    %7639 = vmatpush1.bf16.msra.mxu0 %v1856
    %7640 = vmatprep.subr.bf16.mxu0 %v1849
    %7641 = vmatpush1.bf16.msra.mxu0 %v1848
    %7642 = vmatprep.subr.bf16.mxu0 %v1841
    %7643 = vmatpush1.bf16.msra.mxu0 %v1840
    %7644 = vmatprep.subr.bf16.mxu0 %v1833
    %7645 = vmatpush1.bf16.msra.mxu0 %v1832
    %7646 = vmatprep.subr.bf16.mxu0 %v1825
    %7647 = vmatpush1.bf16.msra.mxu0 %v1824
    %7648 = vmatprep.subr.bf16.mxu0 %v1817
    %7649 = vmatpush1.bf16.msra.mxu0 %v1816
    %7650 = vmatprep.subr.bf16.mxu0 %v1809
    %7651 = vmatpush1.bf16.msra.mxu0 %v1808
    %7652 = vmatprep.subr.bf16.mxu0 %v1801
    %7653 = vmatpush1.bf16.msra.mxu0 %v1800
    %7654 = vmatprep.subr.bf16.mxu0 %v1921
    %7655 = vmatpush2.bf16.msra.mxu0 %v1920
    %7656 = vmatprep.subr.bf16.mxu0 %v1913
    %7657 = vmatpush2.bf16.msra.mxu0 %v1912
    %7658 = vmatprep.subr.bf16.mxu0 %v1905
    %7659 = vmatpush2.bf16.msra.mxu0 %v1904
    %7660 = vmatprep.subr.bf16.mxu0 %v1897
    %7661 = vmatpush2.bf16.msra.mxu0 %v1896
    %7662 = vmatprep.subr.bf16.mxu0 %v1889
    %7663 = vmatpush2.bf16.msra.mxu0 %v1888
    %7664 = vmatprep.subr.bf16.mxu0 %v1881
    %7665 = vmatpush2.bf16.msra.mxu0 %v1880
    %7666 = vmatprep.subr.bf16.mxu0 %v1873
    %7667 = vmatpush2.bf16.msra.mxu0 %v1872
    %7668 = vmatprep.subr.bf16.mxu0 %v1865
    %7669 = vmatpush2.bf16.msra.mxu0 %v1864
    %7670 = vmatprep.mubr.bf16.mxu0 %v7637
    %7671 = vmatmul.mubr.bf16.gmra.mxu0 %v7636
    %v7672 = vpop.f32.mrf.mxu0
    %v7673 = vadd.f32 0.0, %v7672
    %v7674 = vpop.f32.mrf.mxu0
    %v7675 = vadd.f32 0.0, %v7674
    %v7676 = vpop.f32.mrf.mxu0
    %v7677 = vadd.f32 0.0, %v7676
    %v7678 = vpop.f32.mrf.mxu0
    %v7679 = vadd.f32 0.0, %v7678
    %7680 = vdwg.mxu0
    %7681 = vmatprep.subr.bf16.mxu0 %v1859
    %7682 = vmatpush1.bf16.msra.mxu0 %v1858
    %7683 = vmatprep.subr.bf16.mxu0 %v1851
    %7684 = vmatpush1.bf16.msra.mxu0 %v1850
    %7685 = vmatprep.subr.bf16.mxu0 %v1843
    %7686 = vmatpush1.bf16.msra.mxu0 %v1842
    %7687 = vmatprep.subr.bf16.mxu0 %v1835
    %7688 = vmatpush1.bf16.msra.mxu0 %v1834
    %7689 = vmatprep.subr.bf16.mxu0 %v1827
    %7690 = vmatpush1.bf16.msra.mxu0 %v1826
    %7691 = vmatprep.subr.bf16.mxu0 %v1819
    %7692 = vmatpush1.bf16.msra.mxu0 %v1818
    %7693 = vmatprep.subr.bf16.mxu0 %v1811
    %7694 = vmatpush1.bf16.msra.mxu0 %v1810
    %7695 = vmatprep.subr.bf16.mxu0 %v1803
    %7696 = vmatpush1.bf16.msra.mxu0 %v1802
    %7697 = vmatprep.subr.bf16.mxu0 %v1923
    %7698 = vmatpush2.bf16.msra.mxu0 %v1922
    %7699 = vmatprep.subr.bf16.mxu0 %v1915
    %7700 = vmatpush2.bf16.msra.mxu0 %v1914
    %7701 = vmatprep.subr.bf16.mxu0 %v1907
    %7702 = vmatpush2.bf16.msra.mxu0 %v1906
    %7703 = vmatprep.subr.bf16.mxu0 %v1899
    %7704 = vmatpush2.bf16.msra.mxu0 %v1898
    %7705 = vmatprep.subr.bf16.mxu0 %v1891
    %7706 = vmatpush2.bf16.msra.mxu0 %v1890
    %7707 = vmatprep.subr.bf16.mxu0 %v1883
    %7708 = vmatpush2.bf16.msra.mxu0 %v1882
    %7709 = vmatprep.subr.bf16.mxu0 %v1875
    %7710 = vmatpush2.bf16.msra.mxu0 %v1874
    %7711 = vmatprep.subr.bf16.mxu0 %v1867
    %7712 = vmatpush2.bf16.msra.mxu0 %v1866
    %7713 = vmatprep.mubr.bf16.mxu0 %v7637
    %7714 = vmatmul.mubr.bf16.gmra.mxu0 %v7636
    %v7715 = vpop.f32.mrf.mxu0
    %v7716 = vadd.f32 0.0, %v7715
    %v7717 = vpop.f32.mrf.mxu0
    %v7718 = vadd.f32 0.0, %v7717
    %v7719 = vpop.f32.mrf.mxu0
    %v7720 = vadd.f32 0.0, %v7719
    %v7721 = vpop.f32.mrf.mxu0
    %v7722 = vadd.f32 0.0, %v7721
    %7723 = vdwg.mxu0
    %7724 = vmatprep.subr.bf16.mxu0 %v1861
    %7725 = vmatpush1.bf16.msra.mxu0 %v1860
    %7726 = vmatprep.subr.bf16.mxu0 %v1853
    %7727 = vmatpush1.bf16.msra.mxu0 %v1852
    %7728 = vmatprep.subr.bf16.mxu0 %v1845
    %7729 = vmatpush1.bf16.msra.mxu0 %v1844
    %7730 = vmatprep.subr.bf16.mxu0 %v1837
    %7731 = vmatpush1.bf16.msra.mxu0 %v1836
    %7732 = vmatprep.subr.bf16.mxu0 %v1829
    %7733 = vmatpush1.bf16.msra.mxu0 %v1828
    %7734 = vmatprep.subr.bf16.mxu0 %v1821
    %7735 = vmatpush1.bf16.msra.mxu0 %v1820
    %7736 = vmatprep.subr.bf16.mxu0 %v1813
    %7737 = vmatpush1.bf16.msra.mxu0 %v1812
    %7738 = vmatprep.subr.bf16.mxu0 %v1805
    %7739 = vmatpush1.bf16.msra.mxu0 %v1804
    %7740 = vmatprep.subr.bf16.mxu0 %v1925
    %7741 = vmatpush2.bf16.msra.mxu0 %v1924
    %7742 = vmatprep.subr.bf16.mxu0 %v1917
    %7743 = vmatpush2.bf16.msra.mxu0 %v1916
    %7744 = vmatprep.subr.bf16.mxu0 %v1909
    %7745 = vmatpush2.bf16.msra.mxu0 %v1908
    %7746 = vmatprep.subr.bf16.mxu0 %v1901
    %7747 = vmatpush2.bf16.msra.mxu0 %v1900
    %7748 = vmatprep.subr.bf16.mxu0 %v1893
    %7749 = vmatpush2.bf16.msra.mxu0 %v1892
    %7750 = vmatprep.subr.bf16.mxu0 %v1885
    %7751 = vmatpush2.bf16.msra.mxu0 %v1884
    %7752 = vmatprep.subr.bf16.mxu0 %v1877
    %7753 = vmatpush2.bf16.msra.mxu0 %v1876
    %7754 = vmatprep.subr.bf16.mxu0 %v1869
    %7755 = vmatpush2.bf16.msra.mxu0 %v1868
    %7756 = vmatprep.mubr.bf16.mxu0 %v7637
    %7757 = vmatmul.mubr.bf16.gmra.mxu0 %v7636
    %v7758 = vpop.f32.mrf.mxu0
    %v7759 = vadd.f32 0.0, %v7758
    %v7760 = vpop.f32.mrf.mxu0
    %v7761 = vadd.f32 0.0, %v7760
    %v7762 = vpop.f32.mrf.mxu0
    %v7763 = vadd.f32 0.0, %v7762
    %v7764 = vpop.f32.mrf.mxu0
    %v7765 = vadd.f32 0.0, %v7764
    %7766 = vdwg.mxu0
    %7767 = vmatprep.subr.bf16.mxu0 %v1863
    %7768 = vmatpush1.bf16.msra.mxu0 %v1862
    %7769 = vmatprep.subr.bf16.mxu0 %v1855
    %7770 = vmatpush1.bf16.msra.mxu0 %v1854
    %7771 = vmatprep.subr.bf16.mxu0 %v1847
    %7772 = vmatpush1.bf16.msra.mxu0 %v1846
    %7773 = vmatprep.subr.bf16.mxu0 %v1839
    %7774 = vmatpush1.bf16.msra.mxu0 %v1838
    %7775 = vmatprep.subr.bf16.mxu0 %v1831
    %7776 = vmatpush1.bf16.msra.mxu0 %v1830
    %7777 = vmatprep.subr.bf16.mxu0 %v1823
    %7778 = vmatpush1.bf16.msra.mxu0 %v1822
    %7779 = vmatprep.subr.bf16.mxu0 %v1815
    %7780 = vmatpush1.bf16.msra.mxu0 %v1814
    %7781 = vmatprep.subr.bf16.mxu0 %v1807
    %7782 = vmatpush1.bf16.msra.mxu0 %v1806
    %7783 = vmatprep.subr.bf16.mxu0 %v1927
    %7784 = vmatpush2.bf16.msra.mxu0 %v1926
    %7785 = vmatprep.subr.bf16.mxu0 %v1919
    %7786 = vmatpush2.bf16.msra.mxu0 %v1918
    %7787 = vmatprep.subr.bf16.mxu0 %v1911
    %7788 = vmatpush2.bf16.msra.mxu0 %v1910
    %7789 = vmatprep.subr.bf16.mxu0 %v1903
    %7790 = vmatpush2.bf16.msra.mxu0 %v1902
    %7791 = vmatprep.subr.bf16.mxu0 %v1895
    %7792 = vmatpush2.bf16.msra.mxu0 %v1894
    %7793 = vmatprep.subr.bf16.mxu0 %v1887
    %7794 = vmatpush2.bf16.msra.mxu0 %v1886
    %7795 = vmatprep.subr.bf16.mxu0 %v1879
    %7796 = vmatpush2.bf16.msra.mxu0 %v1878
    %7797 = vmatprep.subr.bf16.mxu0 %v1871
    %7798 = vmatpush2.bf16.msra.mxu0 %v1870
    %7799 = vmatprep.mubr.bf16.mxu0 %v7637
    %7800 = vmatmul.mubr.bf16.gmra.mxu0 %v7636
    %v7801 = vpop.f32.mrf.mxu0
    %v7802 = vadd.f32 0.0, %v7801
    %v7803 = vpop.f32.mrf.mxu0
    %v7804 = vadd.f32 0.0, %v7803
    %v7805 = vpop.f32.mrf.mxu0
    %v7806 = vadd.f32 0.0, %v7805
    %v7807 = vpop.f32.mrf.mxu0
    %v7808 = vadd.f32 0.0, %v7807
    %7809 = vdwg.mxu0
    %v7810 = vadd.f32 %v7620, %v7673
    %v7811 = vadd.f32 %v7621, %v7675
    %v7812 = vadd.f32 %v7622, %v7716
    %v7813 = vadd.f32 %v7623, %v7718
    %v7814 = vadd.f32 %v7624, %v7759
    %v7815 = vadd.f32 %v7625, %v7761
    %v7816 = vadd.f32 %v7626, %v7802
    %v7817 = vadd.f32 %v7627, %v7804
    %v7818 = vadd.f32 %v7628, %v7677
    %v7819 = vadd.f32 %v7629, %v7679
    %v7820 = vadd.f32 %v7630, %v7720
    %v7821 = vadd.f32 %v7631, %v7722
    %v7822 = vadd.f32 %v7632, %v7763
    %v7823 = vadd.f32 %v7633, %v7765
    %v7824 = vadd.f32 %v7634, %v7806
    %v7825 = vadd.f32 %v7635, %v7808
    %v7826 = vxor.u32 %v7810, 2147483648
    %v7827 = vxor.u32 %v7811, 2147483648
    %v7828 = vxor.u32 %v7812, 2147483648
    %v7829 = vxor.u32 %v7813, 2147483648
    %v7830 = vxor.u32 %v7814, 2147483648
    %v7831 = vxor.u32 %v7815, 2147483648
    %v7832 = vxor.u32 %v7818, 2147483648
    %v7833 = vxor.u32 %v7819, 2147483648
    %v7834 = vxor.u32 %v7820, 2147483648
    %v7835 = vxor.u32 %v7821, 2147483648
    %v7836 = vxor.u32 %v7822, 2147483648
    %v7837 = vxor.u32 %v7823, 2147483648
    %v7838 = vmul.f32 %v7826, 1.442695
    %v7839 = vpow.pop %v7838
    %v7840 = vmul.f32 %v7827, 1.442695
    %v7841 = vpow.pop %v7840
    %v7842 = vmul.f32 %v7828, 1.442695
    %v7843 = vpow.pop %v7842
    %v7844 = vmul.f32 %v7829, 1.442695
    %v7845 = vpow.pop %v7844
    %v7846 = vmul.f32 %v7830, 1.442695
    %v7847 = vpow.pop %v7846
    %v7848 = vmul.f32 %v7831, 1.442695
    %v7849 = vpow.pop %v7848
    %v7850 = vmul.f32 %v7832, 1.442695
    %v7851 = vpow.pop %v7850
    %v7852 = vmul.f32 %v7833, 1.442695
    %v7853 = vpow.pop %v7852
    %v7854 = vmul.f32 %v7834, 1.442695
    %v7855 = vpow.pop %v7854
    %v7856 = vmul.f32 %v7835, 1.442695
    %v7857 = vpow.pop %v7856
    %v7858 = vmul.f32 %v7836, 1.442695
    %v7859 = vpow.pop %v7858
    %v7860 = vmul.f32 %v7837, 1.442695
    %v7861 = vpow.pop %v7860
    %v7862 = vadd.f32 %v7839, 1.0
    %v7863 = vadd.f32 %v7841, 1.0
    %v7864 = vadd.f32 %v7843, 1.0
    %v7865 = vadd.f32 %v7845, 1.0
    %v7866 = vadd.f32 %v7847, 1.0
    %v7867 = vadd.f32 %v7849, 1.0
    %v7868 = vadd.f32 %v7851, 1.0
    %v7869 = vadd.f32 %v7853, 1.0
    %v7870 = vadd.f32 %v7855, 1.0
    %v7871 = vadd.f32 %v7857, 1.0
    %v7872 = vadd.f32 %v7859, 1.0
    %v7873 = vadd.f32 %v7861, 1.0
    %v7874 = vrcp.pop %v7862
    %v7875 = vmul.f32 1.0, %v7874
    %v7876 = vrcp.pop %v7863
    %v7877 = vmul.f32 1.0, %v7876
    %v7878 = vrcp.pop %v7864
    %v7879 = vmul.f32 1.0, %v7878
    %v7880 = vrcp.pop %v7865
    %v7881 = vmul.f32 1.0, %v7880
    %v7882 = vrcp.pop %v7866
    %v7883 = vmul.f32 1.0, %v7882
    %v7884 = vrcp.pop %v7867
    %v7885 = vmul.f32 1.0, %v7884
    %v7886 = vrcp.pop %v7868
    %v7887 = vmul.f32 1.0, %v7886
    %v7888 = vrcp.pop %v7869
    %v7889 = vmul.f32 1.0, %v7888
    %v7890 = vrcp.pop %v7870
    %v7891 = vmul.f32 1.0, %v7890
    %v7892 = vrcp.pop %v7871
    %v7893 = vmul.f32 1.0, %v7892
    %v7894 = vrcp.pop %v7872
    %v7895 = vmul.f32 1.0, %v7894
    %v7896 = vrcp.pop %v7873
    %v7897 = vmul.f32 1.0, %v7896
    %v7898 = vtanh.pop %v7816
    %v7899 = vtanh.pop %v7817
    %v7900 = vtanh.pop %v7824
    %v7901 = vtanh.pop %v7825
    %v7902 = vmul.f32 %v7879, %v7162
    %v7903 = vmul.f32 %v7881, %v7163
    %v7904 = vmul.f32 %v7891, %v7164
    %v7905 = vmul.f32 %v7893, %v7165
    %v7906 = vmul.f32 %v7875, %v7898
    %v7907 = vmul.f32 %v7877, %v7899
    %v7908 = vmul.f32 %v7887, %v7900
    %v7909 = vmul.f32 %v7889, %v7901
    %v7910 = vadd.f32 %v7902, %v7906
    %v7911 = vadd.f32 %v7903, %v7907
    %v7912 = vadd.f32 %v7904, %v7908
    %v7913 = vadd.f32 %v7905, %v7909
    %v7914 = vtanh.pop %v7910
    %v7915 = vtanh.pop %v7911
    %v7916 = vtanh.pop %v7912
    %v7917 = vtanh.pop %v7913
    %v7918 = vmul.f32 %v7883, %v7914
    %v7919 = vmul.f32 %v7885, %v7915
    %v7920 = vmul.f32 %v7895, %v7916
    %v7921 = vmul.f32 %v7897, %v7917
    %v7922 = vpack.c.bf16 %v7614, %v7612
    %v7923 = vpack.c.bf16 %v7615, %v7613
    %7924 = vmatprep.subr.bf16.mxu0 %v3729
    %7925 = vmatpush1.bf16.msra.mxu0 %v3728
    %7926 = vmatprep.subr.bf16.mxu0 %v3721
    %7927 = vmatpush1.bf16.msra.mxu0 %v3720
    %7928 = vmatprep.subr.bf16.mxu0 %v3713
    %7929 = vmatpush1.bf16.msra.mxu0 %v3712
    %7930 = vmatprep.subr.bf16.mxu0 %v3705
    %7931 = vmatpush1.bf16.msra.mxu0 %v3704
    %7932 = vmatprep.subr.bf16.mxu0 %v3697
    %7933 = vmatpush1.bf16.msra.mxu0 %v3696
    %7934 = vmatprep.subr.bf16.mxu0 %v3689
    %7935 = vmatpush1.bf16.msra.mxu0 %v3688
    %7936 = vmatprep.subr.bf16.mxu0 %v3681
    %7937 = vmatpush1.bf16.msra.mxu0 %v3680
    %7938 = vmatprep.subr.bf16.mxu0 %v3673
    %7939 = vmatpush1.bf16.msra.mxu0 %v3672
    %7940 = vmatprep.subr.bf16.mxu0 %v3793
    %7941 = vmatpush2.bf16.msra.mxu0 %v3792
    %7942 = vmatprep.subr.bf16.mxu0 %v3785
    %7943 = vmatpush2.bf16.msra.mxu0 %v3784
    %7944 = vmatprep.subr.bf16.mxu0 %v3777
    %7945 = vmatpush2.bf16.msra.mxu0 %v3776
    %7946 = vmatprep.subr.bf16.mxu0 %v3769
    %7947 = vmatpush2.bf16.msra.mxu0 %v3768
    %7948 = vmatprep.subr.bf16.mxu0 %v3761
    %7949 = vmatpush2.bf16.msra.mxu0 %v3760
    %7950 = vmatprep.subr.bf16.mxu0 %v3753
    %7951 = vmatpush2.bf16.msra.mxu0 %v3752
    %7952 = vmatprep.subr.bf16.mxu0 %v3745
    %7953 = vmatpush2.bf16.msra.mxu0 %v3744
    %7954 = vmatprep.subr.bf16.mxu0 %v3737
    %7955 = vmatpush2.bf16.msra.mxu0 %v3736
    %7956 = vmatprep.mubr.bf16.mxu0 %v7637
    %7957 = vmatmul.mubr.bf16.gmra.mxu0 %v7636
    %v7958 = vpop.f32.mrf.mxu0
    %v7959 = vadd.f32 %v1343, %v7958
    %v7960 = vpop.f32.mrf.mxu0
    %v7961 = vadd.f32 %v1347, %v7960
    %v7962 = vpop.f32.mrf.mxu0
    %v7963 = vadd.f32 %v1343, %v7962
    %v7964 = vpop.f32.mrf.mxu0
    %v7965 = vadd.f32 %v1347, %v7964
    %7966 = vdwg.mxu0
    %7967 = vmatprep.subr.bf16.mxu0 %v3857
    %7968 = vmatpush1.bf16.msra.mxu0 %v3856
    %7969 = vmatprep.subr.bf16.mxu0 %v3849
    %7970 = vmatpush1.bf16.msra.mxu0 %v3848
    %7971 = vmatprep.subr.bf16.mxu0 %v3841
    %7972 = vmatpush1.bf16.msra.mxu0 %v3840
    %7973 = vmatprep.subr.bf16.mxu0 %v3833
    %7974 = vmatpush1.bf16.msra.mxu0 %v3832
    %7975 = vmatprep.subr.bf16.mxu0 %v3825
    %7976 = vmatpush1.bf16.msra.mxu0 %v3824
    %7977 = vmatprep.subr.bf16.mxu0 %v3817
    %7978 = vmatpush1.bf16.msra.mxu0 %v3816
    %7979 = vmatprep.subr.bf16.mxu0 %v3809
    %7980 = vmatpush1.bf16.msra.mxu0 %v3808
    %7981 = vmatprep.subr.bf16.mxu0 %v3801
    %7982 = vmatpush1.bf16.msra.mxu0 %v3800
    %7983 = vmatprep.subr.bf16.mxu0 %v3921
    %7984 = vmatpush2.bf16.msra.mxu0 %v3920
    %7985 = vmatprep.subr.bf16.mxu0 %v3913
    %7986 = vmatpush2.bf16.msra.mxu0 %v3912
    %7987 = vmatprep.subr.bf16.mxu0 %v3905
    %7988 = vmatpush2.bf16.msra.mxu0 %v3904
    %7989 = vmatprep.subr.bf16.mxu0 %v3897
    %7990 = vmatpush2.bf16.msra.mxu0 %v3896
    %7991 = vmatprep.subr.bf16.mxu0 %v3889
    %7992 = vmatpush2.bf16.msra.mxu0 %v3888
    %7993 = vmatprep.subr.bf16.mxu0 %v3881
    %7994 = vmatpush2.bf16.msra.mxu0 %v3880
    %7995 = vmatprep.subr.bf16.mxu0 %v3873
    %7996 = vmatpush2.bf16.msra.mxu0 %v3872
    %7997 = vmatprep.subr.bf16.mxu0 %v3865
    %7998 = vmatpush2.bf16.msra.mxu0 %v3864
    %7999 = vmatprep.mubr.bf16.mxu0 %v7923
    %8000 = vmatmul.mubr.bf16.gmra.mxu0 %v7922
    %v8001 = vpop.f32.mrf.mxu0
    %v8002 = vadd.f32 %v7959, %v8001
    %v8003 = vpop.f32.mrf.mxu0
    %v8004 = vadd.f32 %v7961, %v8003
    %v8005 = vpop.f32.mrf.mxu0
    %v8006 = vadd.f32 %v7963, %v8005
    %v8007 = vpop.f32.mrf.mxu0
    %v8008 = vadd.f32 %v7965, %v8007
    %8009 = vdwg.mxu0
    %8010 = vmatprep.subr.bf16.mxu0 %v3731
    %8011 = vmatpush1.bf16.msra.mxu0 %v3730
    %8012 = vmatprep.subr.bf16.mxu0 %v3723
    %8013 = vmatpush1.bf16.msra.mxu0 %v3722
    %8014 = vmatprep.subr.bf16.mxu0 %v3715
    %8015 = vmatpush1.bf16.msra.mxu0 %v3714
    %8016 = vmatprep.subr.bf16.mxu0 %v3707
    %8017 = vmatpush1.bf16.msra.mxu0 %v3706
    %8018 = vmatprep.subr.bf16.mxu0 %v3699
    %8019 = vmatpush1.bf16.msra.mxu0 %v3698
    %8020 = vmatprep.subr.bf16.mxu0 %v3691
    %8021 = vmatpush1.bf16.msra.mxu0 %v3690
    %8022 = vmatprep.subr.bf16.mxu0 %v3683
    %8023 = vmatpush1.bf16.msra.mxu0 %v3682
    %8024 = vmatprep.subr.bf16.mxu0 %v3675
    %8025 = vmatpush1.bf16.msra.mxu0 %v3674
    %8026 = vmatprep.subr.bf16.mxu0 %v3795
    %8027 = vmatpush2.bf16.msra.mxu0 %v3794
    %8028 = vmatprep.subr.bf16.mxu0 %v3787
    %8029 = vmatpush2.bf16.msra.mxu0 %v3786
    %8030 = vmatprep.subr.bf16.mxu0 %v3779
    %8031 = vmatpush2.bf16.msra.mxu0 %v3778
    %8032 = vmatprep.subr.bf16.mxu0 %v3771
    %8033 = vmatpush2.bf16.msra.mxu0 %v3770
    %8034 = vmatprep.subr.bf16.mxu0 %v3763
    %8035 = vmatpush2.bf16.msra.mxu0 %v3762
    %8036 = vmatprep.subr.bf16.mxu0 %v3755
    %8037 = vmatpush2.bf16.msra.mxu0 %v3754
    %8038 = vmatprep.subr.bf16.mxu0 %v3747
    %8039 = vmatpush2.bf16.msra.mxu0 %v3746
    %8040 = vmatprep.subr.bf16.mxu0 %v3739
    %8041 = vmatpush2.bf16.msra.mxu0 %v3738
    %8042 = vmatprep.mubr.bf16.mxu0 %v7637
    %8043 = vmatmul.mubr.bf16.gmra.mxu0 %v7636
    %v8044 = vpop.f32.mrf.mxu0
    %v8045 = vadd.f32 %v1351, %v8044
    %v8046 = vpop.f32.mrf.mxu0
    %v8047 = vadd.f32 %v1355, %v8046
    %v8048 = vpop.f32.mrf.mxu0
    %v8049 = vadd.f32 %v1351, %v8048
    %v8050 = vpop.f32.mrf.mxu0
    %v8051 = vadd.f32 %v1355, %v8050
    %8052 = vdwg.mxu0
    %8053 = vmatprep.subr.bf16.mxu0 %v3859
    %8054 = vmatpush1.bf16.msra.mxu0 %v3858
    %8055 = vmatprep.subr.bf16.mxu0 %v3851
    %8056 = vmatpush1.bf16.msra.mxu0 %v3850
    %8057 = vmatprep.subr.bf16.mxu0 %v3843
    %8058 = vmatpush1.bf16.msra.mxu0 %v3842
    %8059 = vmatprep.subr.bf16.mxu0 %v3835
    %8060 = vmatpush1.bf16.msra.mxu0 %v3834
    %8061 = vmatprep.subr.bf16.mxu0 %v3827
    %8062 = vmatpush1.bf16.msra.mxu0 %v3826
    %8063 = vmatprep.subr.bf16.mxu0 %v3819
    %8064 = vmatpush1.bf16.msra.mxu0 %v3818
    %8065 = vmatprep.subr.bf16.mxu0 %v3811
    %8066 = vmatpush1.bf16.msra.mxu0 %v3810
    %8067 = vmatprep.subr.bf16.mxu0 %v3803
    %8068 = vmatpush1.bf16.msra.mxu0 %v3802
    %8069 = vmatprep.subr.bf16.mxu0 %v3923
    %8070 = vmatpush2.bf16.msra.mxu0 %v3922
    %8071 = vmatprep.subr.bf16.mxu0 %v3915
    %8072 = vmatpush2.bf16.msra.mxu0 %v3914
    %8073 = vmatprep.subr.bf16.mxu0 %v3907
    %8074 = vmatpush2.bf16.msra.mxu0 %v3906
    %8075 = vmatprep.subr.bf16.mxu0 %v3899
    %8076 = vmatpush2.bf16.msra.mxu0 %v3898
    %8077 = vmatprep.subr.bf16.mxu0 %v3891
    %8078 = vmatpush2.bf16.msra.mxu0 %v3890
    %8079 = vmatprep.subr.bf16.mxu0 %v3883
    %8080 = vmatpush2.bf16.msra.mxu0 %v3882
    %8081 = vmatprep.subr.bf16.mxu0 %v3875
    %8082 = vmatpush2.bf16.msra.mxu0 %v3874
    %8083 = vmatprep.subr.bf16.mxu0 %v3867
    %8084 = vmatpush2.bf16.msra.mxu0 %v3866
    %8085 = vmatprep.mubr.bf16.mxu0 %v7923
    %8086 = vmatmul.mubr.bf16.gmra.mxu0 %v7922
    %v8087 = vpop.f32.mrf.mxu0
    %v8088 = vadd.f32 %v8045, %v8087
    %v8089 = vpop.f32.mrf.mxu0
    %v8090 = vadd.f32 %v8047, %v8089
    %v8091 = vpop.f32.mrf.mxu0
    %v8092 = vadd.f32 %v8049, %v8091
    %v8093 = vpop.f32.mrf.mxu0
    %v8094 = vadd.f32 %v8051, %v8093
    %8095 = vdwg.mxu0
    %8096 = vmatprep.subr.bf16.mxu0 %v3733
    %8097 = vmatpush1.bf16.msra.mxu0 %v3732
    %8098 = vmatprep.subr.bf16.mxu0 %v3725
    %8099 = vmatpush1.bf16.msra.mxu0 %v3724
    %8100 = vmatprep.subr.bf16.mxu0 %v3717
    %8101 = vmatpush1.bf16.msra.mxu0 %v3716
    %8102 = vmatprep.subr.bf16.mxu0 %v3709
    %8103 = vmatpush1.bf16.msra.mxu0 %v3708
    %8104 = vmatprep.subr.bf16.mxu0 %v3701
    %8105 = vmatpush1.bf16.msra.mxu0 %v3700
    %8106 = vmatprep.subr.bf16.mxu0 %v3693
    %8107 = vmatpush1.bf16.msra.mxu0 %v3692
    %8108 = vmatprep.subr.bf16.mxu0 %v3685
    %8109 = vmatpush1.bf16.msra.mxu0 %v3684
    %8110 = vmatprep.subr.bf16.mxu0 %v3677
    %8111 = vmatpush1.bf16.msra.mxu0 %v3676
    %8112 = vmatprep.subr.bf16.mxu0 %v3797
    %8113 = vmatpush2.bf16.msra.mxu0 %v3796
    %8114 = vmatprep.subr.bf16.mxu0 %v3789
    %8115 = vmatpush2.bf16.msra.mxu0 %v3788
    %8116 = vmatprep.subr.bf16.mxu0 %v3781
    %8117 = vmatpush2.bf16.msra.mxu0 %v3780
    %8118 = vmatprep.subr.bf16.mxu0 %v3773
    %8119 = vmatpush2.bf16.msra.mxu0 %v3772
    %8120 = vmatprep.subr.bf16.mxu0 %v3765
    %8121 = vmatpush2.bf16.msra.mxu0 %v3764
    %8122 = vmatprep.subr.bf16.mxu0 %v3757
    %8123 = vmatpush2.bf16.msra.mxu0 %v3756
    %8124 = vmatprep.subr.bf16.mxu0 %v3749
    %8125 = vmatpush2.bf16.msra.mxu0 %v3748
    %8126 = vmatprep.subr.bf16.mxu0 %v3741
    %8127 = vmatpush2.bf16.msra.mxu0 %v3740
    %8128 = vmatprep.mubr.bf16.mxu0 %v7637
    %8129 = vmatmul.mubr.bf16.gmra.mxu0 %v7636
    %v8130 = vpop.f32.mrf.mxu0
    %v8131 = vadd.f32 %v1359, %v8130
    %v8132 = vpop.f32.mrf.mxu0
    %v8133 = vadd.f32 %v1363, %v8132
    %v8134 = vpop.f32.mrf.mxu0
    %v8135 = vadd.f32 %v1359, %v8134
    %v8136 = vpop.f32.mrf.mxu0
    %v8137 = vadd.f32 %v1363, %v8136
    %8138 = vdwg.mxu0
    %8139 = vmatprep.subr.bf16.mxu0 %v3861
    %8140 = vmatpush1.bf16.msra.mxu0 %v3860
    %8141 = vmatprep.subr.bf16.mxu0 %v3853
    %8142 = vmatpush1.bf16.msra.mxu0 %v3852
    %8143 = vmatprep.subr.bf16.mxu0 %v3845
    %8144 = vmatpush1.bf16.msra.mxu0 %v3844
    %8145 = vmatprep.subr.bf16.mxu0 %v3837
    %8146 = vmatpush1.bf16.msra.mxu0 %v3836
    %8147 = vmatprep.subr.bf16.mxu0 %v3829
    %8148 = vmatpush1.bf16.msra.mxu0 %v3828
    %8149 = vmatprep.subr.bf16.mxu0 %v3821
    %8150 = vmatpush1.bf16.msra.mxu0 %v3820
    %8151 = vmatprep.subr.bf16.mxu0 %v3813
    %8152 = vmatpush1.bf16.msra.mxu0 %v3812
    %8153 = vmatprep.subr.bf16.mxu0 %v3805
    %8154 = vmatpush1.bf16.msra.mxu0 %v3804
    %8155 = vmatprep.subr.bf16.mxu0 %v3925
    %8156 = vmatpush2.bf16.msra.mxu0 %v3924
    %8157 = vmatprep.subr.bf16.mxu0 %v3917
    %8158 = vmatpush2.bf16.msra.mxu0 %v3916
    %8159 = vmatprep.subr.bf16.mxu0 %v3909
    %8160 = vmatpush2.bf16.msra.mxu0 %v3908
    %8161 = vmatprep.subr.bf16.mxu0 %v3901
    %8162 = vmatpush2.bf16.msra.mxu0 %v3900
    %8163 = vmatprep.subr.bf16.mxu0 %v3893
    %8164 = vmatpush2.bf16.msra.mxu0 %v3892
    %8165 = vmatprep.subr.bf16.mxu0 %v3885
    %8166 = vmatpush2.bf16.msra.mxu0 %v3884
    %8167 = vmatprep.subr.bf16.mxu0 %v3877
    %8168 = vmatpush2.bf16.msra.mxu0 %v3876
    %8169 = vmatprep.subr.bf16.mxu0 %v3869
    %8170 = vmatpush2.bf16.msra.mxu0 %v3868
    %8171 = vmatprep.mubr.bf16.mxu0 %v7923
    %8172 = vmatmul.mubr.bf16.gmra.mxu0 %v7922
    %v8173 = vpop.f32.mrf.mxu0
    %v8174 = vadd.f32 %v8131, %v8173
    %v8175 = vpop.f32.mrf.mxu0
    %v8176 = vadd.f32 %v8133, %v8175
    %v8177 = vpop.f32.mrf.mxu0
    %v8178 = vadd.f32 %v8135, %v8177
    %v8179 = vpop.f32.mrf.mxu0
    %v8180 = vadd.f32 %v8137, %v8179
    %8181 = vdwg.mxu0
    %8182 = vmatprep.subr.bf16.mxu0 %v3735
    %8183 = vmatpush1.bf16.msra.mxu0 %v3734
    %8184 = vmatprep.subr.bf16.mxu0 %v3727
    %8185 = vmatpush1.bf16.msra.mxu0 %v3726
    %8186 = vmatprep.subr.bf16.mxu0 %v3719
    %8187 = vmatpush1.bf16.msra.mxu0 %v3718
    %8188 = vmatprep.subr.bf16.mxu0 %v3711
    %8189 = vmatpush1.bf16.msra.mxu0 %v3710
    %8190 = vmatprep.subr.bf16.mxu0 %v3703
    %8191 = vmatpush1.bf16.msra.mxu0 %v3702
    %8192 = vmatprep.subr.bf16.mxu0 %v3695
    %8193 = vmatpush1.bf16.msra.mxu0 %v3694
    %8194 = vmatprep.subr.bf16.mxu0 %v3687
    %8195 = vmatpush1.bf16.msra.mxu0 %v3686
    %8196 = vmatprep.subr.bf16.mxu0 %v3679
    %8197 = vmatpush1.bf16.msra.mxu0 %v3678
    %8198 = vmatprep.subr.bf16.mxu0 %v3799
    %8199 = vmatpush2.bf16.msra.mxu0 %v3798
    %8200 = vmatprep.subr.bf16.mxu0 %v3791
    %8201 = vmatpush2.bf16.msra.mxu0 %v3790
    %8202 = vmatprep.subr.bf16.mxu0 %v3783
    %8203 = vmatpush2.bf16.msra.mxu0 %v3782
    %8204 = vmatprep.subr.bf16.mxu0 %v3775
    %8205 = vmatpush2.bf16.msra.mxu0 %v3774
    %8206 = vmatprep.subr.bf16.mxu0 %v3767
    %8207 = vmatpush2.bf16.msra.mxu0 %v3766
    %8208 = vmatprep.subr.bf16.mxu0 %v3759
    %8209 = vmatpush2.bf16.msra.mxu0 %v3758
    %8210 = vmatprep.subr.bf16.mxu0 %v3751
    %8211 = vmatpush2.bf16.msra.mxu0 %v3750
    %8212 = vmatprep.subr.bf16.mxu0 %v3743
    %8213 = vmatpush2.bf16.msra.mxu0 %v3742
    %8214 = vmatprep.mubr.bf16.mxu0 %v7637
    %8215 = vmatmul.mubr.bf16.gmra.mxu0 %v7636
    %v8216 = vpop.f32.mrf.mxu0
    %v8217 = vadd.f32 %v1367, %v8216
    %v8218 = vpop.f32.mrf.mxu0
    %v8219 = vadd.f32 %v1371, %v8218
    %v8220 = vpop.f32.mrf.mxu0
    %v8221 = vadd.f32 %v1367, %v8220
    %v8222 = vpop.f32.mrf.mxu0
    %v8223 = vadd.f32 %v1371, %v8222
    %8224 = vdwg.mxu0
    %8225 = vmatprep.subr.bf16.mxu0 %v3863
    %8226 = vmatpush1.bf16.msra.mxu0 %v3862
    %8227 = vmatprep.subr.bf16.mxu0 %v3855
    %8228 = vmatpush1.bf16.msra.mxu0 %v3854
    %8229 = vmatprep.subr.bf16.mxu0 %v3847
    %8230 = vmatpush1.bf16.msra.mxu0 %v3846
    %8231 = vmatprep.subr.bf16.mxu0 %v3839
    %8232 = vmatpush1.bf16.msra.mxu0 %v3838
    %8233 = vmatprep.subr.bf16.mxu0 %v3831
    %8234 = vmatpush1.bf16.msra.mxu0 %v3830
    %8235 = vmatprep.subr.bf16.mxu0 %v3823
    %8236 = vmatpush1.bf16.msra.mxu0 %v3822
    %8237 = vmatprep.subr.bf16.mxu0 %v3815
    %8238 = vmatpush1.bf16.msra.mxu0 %v3814
    %8239 = vmatprep.subr.bf16.mxu0 %v3807
    %8240 = vmatpush1.bf16.msra.mxu0 %v3806
    %8241 = vmatprep.subr.bf16.mxu0 %v3927
    %8242 = vmatpush2.bf16.msra.mxu0 %v3926
    %8243 = vmatprep.subr.bf16.mxu0 %v3919
    %8244 = vmatpush2.bf16.msra.mxu0 %v3918
    %8245 = vmatprep.subr.bf16.mxu0 %v3911
    %8246 = vmatpush2.bf16.msra.mxu0 %v3910
    %8247 = vmatprep.subr.bf16.mxu0 %v3903
    %8248 = vmatpush2.bf16.msra.mxu0 %v3902
    %8249 = vmatprep.subr.bf16.mxu0 %v3895
    %8250 = vmatpush2.bf16.msra.mxu0 %v3894
    %8251 = vmatprep.subr.bf16.mxu0 %v3887
    %8252 = vmatpush2.bf16.msra.mxu0 %v3886
    %8253 = vmatprep.subr.bf16.mxu0 %v3879
    %8254 = vmatpush2.bf16.msra.mxu0 %v3878
    %8255 = vmatprep.subr.bf16.mxu0 %v3871
    %8256 = vmatpush2.bf16.msra.mxu0 %v3870
    %8257 = vmatprep.mubr.bf16.mxu0 %v7923
    %8258 = vmatmul.mubr.bf16.gmra.mxu0 %v7922
    %v8259 = vpop.f32.mrf.mxu0
    %v8260 = vadd.f32 %v8217, %v8259
    %v8261 = vpop.f32.mrf.mxu0
    %v8262 = vadd.f32 %v8219, %v8261
    %v8263 = vpop.f32.mrf.mxu0
    %v8264 = vadd.f32 %v8221, %v8263
    %v8265 = vpop.f32.mrf.mxu0
    %v8266 = vadd.f32 %v8223, %v8265
    %8267 = vdwg.mxu0
    %v8268 = vxor.u32 %v8002, 2147483648
    %v8269 = vxor.u32 %v8004, 2147483648
    %v8270 = vxor.u32 %v8088, 2147483648
    %v8271 = vxor.u32 %v8090, 2147483648
    %v8272 = vxor.u32 %v8174, 2147483648
    %v8273 = vxor.u32 %v8176, 2147483648
    %v8274 = vxor.u32 %v8006, 2147483648
    %v8275 = vxor.u32 %v8008, 2147483648
    %v8276 = vxor.u32 %v8092, 2147483648
    %v8277 = vxor.u32 %v8094, 2147483648
    %v8278 = vxor.u32 %v8178, 2147483648
    %v8279 = vxor.u32 %v8180, 2147483648
    %v8280 = vmul.f32 %v8268, 1.442695
    %v8281 = vpow.pop %v8280
    %v8282 = vmul.f32 %v8269, 1.442695
    %v8283 = vpow.pop %v8282
    %v8284 = vmul.f32 %v8270, 1.442695
    %v8285 = vpow.pop %v8284
    %v8286 = vmul.f32 %v8271, 1.442695
    %v8287 = vpow.pop %v8286
    %v8288 = vmul.f32 %v8272, 1.442695
    %v8289 = vpow.pop %v8288
    %v8290 = vmul.f32 %v8273, 1.442695
    %v8291 = vpow.pop %v8290
    %v8292 = vmul.f32 %v8274, 1.442695
    %v8293 = vpow.pop %v8292
    %v8294 = vmul.f32 %v8275, 1.442695
    %v8295 = vpow.pop %v8294
    %v8296 = vmul.f32 %v8276, 1.442695
    %v8297 = vpow.pop %v8296
    %v8298 = vmul.f32 %v8277, 1.442695
    %v8299 = vpow.pop %v8298
    %v8300 = vmul.f32 %v8278, 1.442695
    %v8301 = vpow.pop %v8300
    %v8302 = vmul.f32 %v8279, 1.442695
    %v8303 = vpow.pop %v8302
    %v8304 = vadd.f32 %v8281, 1.0
    %v8305 = vadd.f32 %v8283, 1.0
    %v8306 = vadd.f32 %v8285, 1.0
    %v8307 = vadd.f32 %v8287, 1.0
    %v8308 = vadd.f32 %v8289, 1.0
    %v8309 = vadd.f32 %v8291, 1.0
    %v8310 = vadd.f32 %v8293, 1.0
    %v8311 = vadd.f32 %v8295, 1.0
    %v8312 = vadd.f32 %v8297, 1.0
    %v8313 = vadd.f32 %v8299, 1.0
    %v8314 = vadd.f32 %v8301, 1.0
    %v8315 = vadd.f32 %v8303, 1.0
    %v8316 = vrcp.pop %v8304
    %v8317 = vmul.f32 1.0, %v8316
    %v8318 = vrcp.pop %v8305
    %v8319 = vmul.f32 1.0, %v8318
    %v8320 = vrcp.pop %v8306
    %v8321 = vmul.f32 1.0, %v8320
    %v8322 = vrcp.pop %v8307
    %v8323 = vmul.f32 1.0, %v8322
    %v8324 = vrcp.pop %v8308
    %v8325 = vmul.f32 1.0, %v8324
    %v8326 = vrcp.pop %v8309
    %v8327 = vmul.f32 1.0, %v8326
    %v8328 = vrcp.pop %v8310
    %v8329 = vmul.f32 1.0, %v8328
    %v8330 = vrcp.pop %v8311
    %v8331 = vmul.f32 1.0, %v8330
    %v8332 = vrcp.pop %v8312
    %v8333 = vmul.f32 1.0, %v8332
    %v8334 = vrcp.pop %v8313
    %v8335 = vmul.f32 1.0, %v8334
    %v8336 = vrcp.pop %v8314
    %v8337 = vmul.f32 1.0, %v8336
    %v8338 = vrcp.pop %v8315
    %v8339 = vmul.f32 1.0, %v8338
    %v8340 = vtanh.pop %v8260
    %v8341 = vtanh.pop %v8262
    %v8342 = vtanh.pop %v8264
    %v8343 = vtanh.pop %v8266
    %v8344 = vmul.f32 %v8321, %v7604
    %v8345 = vmul.f32 %v8323, %v7605
    %v8346 = vmul.f32 %v8333, %v7606
    %v8347 = vmul.f32 %v8335, %v7607
    %v8348 = vmul.f32 %v8317, %v8340
    %v8349 = vmul.f32 %v8319, %v8341
    %v8350 = vmul.f32 %v8329, %v8342
    %v8351 = vmul.f32 %v8331, %v8343
    %v8352 = vadd.f32 %v8344, %v8348
    %v8353 = vadd.f32 %v8345, %v8349
    %v8354 = vadd.f32 %v8346, %v8350
    %v8355 = vadd.f32 %v8347, %v8351
    %v8356 = vtanh.pop %v8352
    %v8357 = vtanh.pop %v8353
    %v8358 = vtanh.pop %v8354
    %v8359 = vtanh.pop %v8355
    %v8360 = vmul.f32 %v8325, %v8356
    %v8361 = vmul.f32 %v8327, %v8357
    %v8362 = vmul.f32 %v8337, %v8358
    %v8363 = vmul.f32 %v8339, %v8359
    %8364 = vst [vmem:[#allocation3 + $0xa0] sm:$0xff] %v8360
    %8365 = vst [vmem:[#allocation3 + $0xa8] sm:$0xff] %v8361
    %8366 = vst [vmem:[#allocation3 + $0xb0] sm:$0xff] %v8362
    %8367 = vst [vmem:[#allocation3 + $0xb8] sm:$0xff] %v8363
    %v8368 = vld [vmem:[#allocation2 + $0x380] sm:$0xff]
    %v8369 = vld [vmem:[#allocation2 + $0x388] sm:$0xff]
    %v8370 = vld [vmem:[#allocation2 + $0x390] sm:$0xff]
    %v8371 = vld [vmem:[#allocation2 + $0x398] sm:$0xff]
    %v8372 = vld [vmem:[#allocation2 + $0x3a0] sm:$0xff]
    %v8373 = vld [vmem:[#allocation2 + $0x3a8] sm:$0xff]
    %v8374 = vld [vmem:[#allocation2 + $0x3b0] sm:$0xff]
    %v8375 = vld [vmem:[#allocation2 + $0x3b8] sm:$0xff]
    %v8376 = vld [vmem:[#allocation2 + $0x3c0] sm:$0xff]
    %v8377 = vld [vmem:[#allocation2 + $0x3c8] sm:$0xff]
    %v8378 = vld [vmem:[#allocation2 + $0x3d0] sm:$0xff]
    %v8379 = vld [vmem:[#allocation2 + $0x3d8] sm:$0xff]
    %v8380 = vld [vmem:[#allocation2 + $0x3e0] sm:$0xff]
    %v8381 = vld [vmem:[#allocation2 + $0x3e8] sm:$0xff]
    %v8382 = vld [vmem:[#allocation2 + $0x3f0] sm:$0xff]
    %v8383 = vld [vmem:[#allocation2 + $0x3f8] sm:$0xff]
    %v8384 = vpack.c.bf16 %v7920, %v7918
    %v8385 = vpack.c.bf16 %v7921, %v7919
    %8386 = vmatprep.subr.bf16.mxu0 %v1857
    %8387 = vmatpush1.bf16.msra.mxu0 %v1856
    %8388 = vmatprep.subr.bf16.mxu0 %v1849
    %8389 = vmatpush1.bf16.msra.mxu0 %v1848
    %8390 = vmatprep.subr.bf16.mxu0 %v1841
    %8391 = vmatpush1.bf16.msra.mxu0 %v1840
    %8392 = vmatprep.subr.bf16.mxu0 %v1833
    %8393 = vmatpush1.bf16.msra.mxu0 %v1832
    %8394 = vmatprep.subr.bf16.mxu0 %v1825
    %8395 = vmatpush1.bf16.msra.mxu0 %v1824
    %8396 = vmatprep.subr.bf16.mxu0 %v1817
    %8397 = vmatpush1.bf16.msra.mxu0 %v1816
    %8398 = vmatprep.subr.bf16.mxu0 %v1809
    %8399 = vmatpush1.bf16.msra.mxu0 %v1808
    %8400 = vmatprep.subr.bf16.mxu0 %v1801
    %8401 = vmatpush1.bf16.msra.mxu0 %v1800
    %8402 = vmatprep.subr.bf16.mxu0 %v1921
    %8403 = vmatpush2.bf16.msra.mxu0 %v1920
    %8404 = vmatprep.subr.bf16.mxu0 %v1913
    %8405 = vmatpush2.bf16.msra.mxu0 %v1912
    %8406 = vmatprep.subr.bf16.mxu0 %v1905
    %8407 = vmatpush2.bf16.msra.mxu0 %v1904
    %8408 = vmatprep.subr.bf16.mxu0 %v1897
    %8409 = vmatpush2.bf16.msra.mxu0 %v1896
    %8410 = vmatprep.subr.bf16.mxu0 %v1889
    %8411 = vmatpush2.bf16.msra.mxu0 %v1888
    %8412 = vmatprep.subr.bf16.mxu0 %v1881
    %8413 = vmatpush2.bf16.msra.mxu0 %v1880
    %8414 = vmatprep.subr.bf16.mxu0 %v1873
    %8415 = vmatpush2.bf16.msra.mxu0 %v1872
    %8416 = vmatprep.subr.bf16.mxu0 %v1865
    %8417 = vmatpush2.bf16.msra.mxu0 %v1864
    %8418 = vmatprep.mubr.bf16.mxu0 %v8385
    %8419 = vmatmul.mubr.bf16.gmra.mxu0 %v8384
    %v8420 = vpop.f32.mrf.mxu0
    %v8421 = vadd.f32 0.0, %v8420
    %v8422 = vpop.f32.mrf.mxu0
    %v8423 = vadd.f32 0.0, %v8422
    %v8424 = vpop.f32.mrf.mxu0
    %v8425 = vadd.f32 0.0, %v8424
    %v8426 = vpop.f32.mrf.mxu0
    %v8427 = vadd.f32 0.0, %v8426
    %8428 = vdwg.mxu0
    %8429 = vmatprep.subr.bf16.mxu0 %v1859
    %8430 = vmatpush1.bf16.msra.mxu0 %v1858
    %8431 = vmatprep.subr.bf16.mxu0 %v1851
    %8432 = vmatpush1.bf16.msra.mxu0 %v1850
    %8433 = vmatprep.subr.bf16.mxu0 %v1843
    %8434 = vmatpush1.bf16.msra.mxu0 %v1842
    %8435 = vmatprep.subr.bf16.mxu0 %v1835
    %8436 = vmatpush1.bf16.msra.mxu0 %v1834
    %8437 = vmatprep.subr.bf16.mxu0 %v1827
    %8438 = vmatpush1.bf16.msra.mxu0 %v1826
    %8439 = vmatprep.subr.bf16.mxu0 %v1819
    %8440 = vmatpush1.bf16.msra.mxu0 %v1818
    %8441 = vmatprep.subr.bf16.mxu0 %v1811
    %8442 = vmatpush1.bf16.msra.mxu0 %v1810
    %8443 = vmatprep.subr.bf16.mxu0 %v1803
    %8444 = vmatpush1.bf16.msra.mxu0 %v1802
    %8445 = vmatprep.subr.bf16.mxu0 %v1923
    %8446 = vmatpush2.bf16.msra.mxu0 %v1922
    %8447 = vmatprep.subr.bf16.mxu0 %v1915
    %8448 = vmatpush2.bf16.msra.mxu0 %v1914
    %8449 = vmatprep.subr.bf16.mxu0 %v1907
    %8450 = vmatpush2.bf16.msra.mxu0 %v1906
    %8451 = vmatprep.subr.bf16.mxu0 %v1899
    %8452 = vmatpush2.bf16.msra.mxu0 %v1898
    %8453 = vmatprep.subr.bf16.mxu0 %v1891
    %8454 = vmatpush2.bf16.msra.mxu0 %v1890
    %8455 = vmatprep.subr.bf16.mxu0 %v1883
    %8456 = vmatpush2.bf16.msra.mxu0 %v1882
    %8457 = vmatprep.subr.bf16.mxu0 %v1875
    %8458 = vmatpush2.bf16.msra.mxu0 %v1874
    %8459 = vmatprep.subr.bf16.mxu0 %v1867
    %8460 = vmatpush2.bf16.msra.mxu0 %v1866
    %8461 = vmatprep.mubr.bf16.mxu0 %v8385
    %8462 = vmatmul.mubr.bf16.gmra.mxu0 %v8384
    %v8463 = vpop.f32.mrf.mxu0
    %v8464 = vadd.f32 0.0, %v8463
    %v8465 = vpop.f32.mrf.mxu0
    %v8466 = vadd.f32 0.0, %v8465
    %v8467 = vpop.f32.mrf.mxu0
    %v8468 = vadd.f32 0.0, %v8467
    %v8469 = vpop.f32.mrf.mxu0
    %v8470 = vadd.f32 0.0, %v8469
    %8471 = vdwg.mxu0
    %8472 = vmatprep.subr.bf16.mxu0 %v1861
    %8473 = vmatpush1.bf16.msra.mxu0 %v1860
    %8474 = vmatprep.subr.bf16.mxu0 %v1853
    %8475 = vmatpush1.bf16.msra.mxu0 %v1852
    %8476 = vmatprep.subr.bf16.mxu0 %v1845
    %8477 = vmatpush1.bf16.msra.mxu0 %v1844
    %8478 = vmatprep.subr.bf16.mxu0 %v1837
    %8479 = vmatpush1.bf16.msra.mxu0 %v1836
    %8480 = vmatprep.subr.bf16.mxu0 %v1829
    %8481 = vmatpush1.bf16.msra.mxu0 %v1828
    %8482 = vmatprep.subr.bf16.mxu0 %v1821
    %8483 = vmatpush1.bf16.msra.mxu0 %v1820
    %8484 = vmatprep.subr.bf16.mxu0 %v1813
    %8485 = vmatpush1.bf16.msra.mxu0 %v1812
    %8486 = vmatprep.subr.bf16.mxu0 %v1805
    %8487 = vmatpush1.bf16.msra.mxu0 %v1804
    %8488 = vmatprep.subr.bf16.mxu0 %v1925
    %8489 = vmatpush2.bf16.msra.mxu0 %v1924
    %8490 = vmatprep.subr.bf16.mxu0 %v1917
    %8491 = vmatpush2.bf16.msra.mxu0 %v1916
    %8492 = vmatprep.subr.bf16.mxu0 %v1909
    %8493 = vmatpush2.bf16.msra.mxu0 %v1908
    %8494 = vmatprep.subr.bf16.mxu0 %v1901
    %8495 = vmatpush2.bf16.msra.mxu0 %v1900
    %8496 = vmatprep.subr.bf16.mxu0 %v1893
    %8497 = vmatpush2.bf16.msra.mxu0 %v1892
    %8498 = vmatprep.subr.bf16.mxu0 %v1885
    %8499 = vmatpush2.bf16.msra.mxu0 %v1884
    %8500 = vmatprep.subr.bf16.mxu0 %v1877
    %8501 = vmatpush2.bf16.msra.mxu0 %v1876
    %8502 = vmatprep.subr.bf16.mxu0 %v1869
    %8503 = vmatpush2.bf16.msra.mxu0 %v1868
    %8504 = vmatprep.mubr.bf16.mxu0 %v8385
    %8505 = vmatmul.mubr.bf16.gmra.mxu0 %v8384
    %v8506 = vpop.f32.mrf.mxu0
    %v8507 = vadd.f32 0.0, %v8506
    %v8508 = vpop.f32.mrf.mxu0
    %v8509 = vadd.f32 0.0, %v8508
    %v8510 = vpop.f32.mrf.mxu0
    %v8511 = vadd.f32 0.0, %v8510
    %v8512 = vpop.f32.mrf.mxu0
    %v8513 = vadd.f32 0.0, %v8512
    %8514 = vdwg.mxu0
    %8515 = vmatprep.subr.bf16.mxu0 %v1863
    %8516 = vmatpush1.bf16.msra.mxu0 %v1862
    %8517 = vmatprep.subr.bf16.mxu0 %v1855
    %8518 = vmatpush1.bf16.msra.mxu0 %v1854
    %8519 = vmatprep.subr.bf16.mxu0 %v1847
    %8520 = vmatpush1.bf16.msra.mxu0 %v1846
    %8521 = vmatprep.subr.bf16.mxu0 %v1839
    %8522 = vmatpush1.bf16.msra.mxu0 %v1838
    %8523 = vmatprep.subr.bf16.mxu0 %v1831
    %8524 = vmatpush1.bf16.msra.mxu0 %v1830
    %8525 = vmatprep.subr.bf16.mxu0 %v1823
    %8526 = vmatpush1.bf16.msra.mxu0 %v1822
    %8527 = vmatprep.subr.bf16.mxu0 %v1815
    %8528 = vmatpush1.bf16.msra.mxu0 %v1814
    %8529 = vmatprep.subr.bf16.mxu0 %v1807
    %8530 = vmatpush1.bf16.msra.mxu0 %v1806
    %8531 = vmatprep.subr.bf16.mxu0 %v1927
    %8532 = vmatpush2.bf16.msra.mxu0 %v1926
    %8533 = vmatprep.subr.bf16.mxu0 %v1919
    %8534 = vmatpush2.bf16.msra.mxu0 %v1918
    %8535 = vmatprep.subr.bf16.mxu0 %v1911
    %8536 = vmatpush2.bf16.msra.mxu0 %v1910
    %8537 = vmatprep.subr.bf16.mxu0 %v1903
    %8538 = vmatpush2.bf16.msra.mxu0 %v1902
    %8539 = vmatprep.subr.bf16.mxu0 %v1895
    %8540 = vmatpush2.bf16.msra.mxu0 %v1894
    %8541 = vmatprep.subr.bf16.mxu0 %v1887
    %8542 = vmatpush2.bf16.msra.mxu0 %v1886
    %8543 = vmatprep.subr.bf16.mxu0 %v1879
    %8544 = vmatpush2.bf16.msra.mxu0 %v1878
    %8545 = vmatprep.subr.bf16.mxu0 %v1871
    %8546 = vmatpush2.bf16.msra.mxu0 %v1870
    %8547 = vmatprep.mubr.bf16.mxu0 %v8385
    %8548 = vmatmul.mubr.bf16.gmra.mxu0 %v8384
    %v8549 = vpop.f32.mrf.mxu0
    %v8550 = vadd.f32 0.0, %v8549
    %v8551 = vpop.f32.mrf.mxu0
    %v8552 = vadd.f32 0.0, %v8551
    %v8553 = vpop.f32.mrf.mxu0
    %v8554 = vadd.f32 0.0, %v8553
    %v8555 = vpop.f32.mrf.mxu0
    %v8556 = vadd.f32 0.0, %v8555
    %8557 = vdwg.mxu0
    %v8558 = vadd.f32 %v8368, %v8421
    %v8559 = vadd.f32 %v8369, %v8423
    %v8560 = vadd.f32 %v8370, %v8464
    %v8561 = vadd.f32 %v8371, %v8466
    %v8562 = vadd.f32 %v8372, %v8507
    %v8563 = vadd.f32 %v8373, %v8509
    %v8564 = vadd.f32 %v8374, %v8550
    %v8565 = vadd.f32 %v8375, %v8552
    %v8566 = vadd.f32 %v8376, %v8425
    %v8567 = vadd.f32 %v8377, %v8427
    %v8568 = vadd.f32 %v8378, %v8468
    %v8569 = vadd.f32 %v8379, %v8470
    %v8570 = vadd.f32 %v8380, %v8511
    %v8571 = vadd.f32 %v8381, %v8513
    %v8572 = vadd.f32 %v8382, %v8554
    %v8573 = vadd.f32 %v8383, %v8556
    %v8574 = vxor.u32 %v8558, 2147483648
    %v8575 = vxor.u32 %v8559, 2147483648
    %v8576 = vxor.u32 %v8560, 2147483648
    %v8577 = vxor.u32 %v8561, 2147483648
    %v8578 = vxor.u32 %v8562, 2147483648
    %v8579 = vxor.u32 %v8563, 2147483648
    %v8580 = vxor.u32 %v8566, 2147483648
    %v8581 = vxor.u32 %v8567, 2147483648
    %v8582 = vxor.u32 %v8568, 2147483648
    %v8583 = vxor.u32 %v8569, 2147483648
    %v8584 = vxor.u32 %v8570, 2147483648
    %v8585 = vxor.u32 %v8571, 2147483648
    %v8586 = vmul.f32 %v8574, 1.442695
    %v8587 = vpow.pop %v8586
    %v8588 = vmul.f32 %v8575, 1.442695
    %v8589 = vpow.pop %v8588
    %v8590 = vmul.f32 %v8576, 1.442695
    %v8591 = vpow.pop %v8590
    %v8592 = vmul.f32 %v8577, 1.442695
    %v8593 = vpow.pop %v8592
    %v8594 = vmul.f32 %v8578, 1.442695
    %v8595 = vpow.pop %v8594
    %v8596 = vmul.f32 %v8579, 1.442695
    %v8597 = vpow.pop %v8596
    %v8598 = vmul.f32 %v8580, 1.442695
    %v8599 = vpow.pop %v8598
    %v8600 = vmul.f32 %v8581, 1.442695
    %v8601 = vpow.pop %v8600
    %v8602 = vmul.f32 %v8582, 1.442695
    %v8603 = vpow.pop %v8602
    %v8604 = vmul.f32 %v8583, 1.442695
    %v8605 = vpow.pop %v8604
    %v8606 = vmul.f32 %v8584, 1.442695
    %v8607 = vpow.pop %v8606
    %v8608 = vmul.f32 %v8585, 1.442695
    %v8609 = vpow.pop %v8608
    %v8610 = vadd.f32 %v8587, 1.0
    %v8611 = vadd.f32 %v8589, 1.0
    %v8612 = vadd.f32 %v8591, 1.0
    %v8613 = vadd.f32 %v8593, 1.0
    %v8614 = vadd.f32 %v8595, 1.0
    %v8615 = vadd.f32 %v8597, 1.0
    %v8616 = vadd.f32 %v8599, 1.0
    %v8617 = vadd.f32 %v8601, 1.0
    %v8618 = vadd.f32 %v8603, 1.0
    %v8619 = vadd.f32 %v8605, 1.0
    %v8620 = vadd.f32 %v8607, 1.0
    %v8621 = vadd.f32 %v8609, 1.0
    %v8622 = vrcp.pop %v8610
    %v8623 = vmul.f32 1.0, %v8622
    %v8624 = vrcp.pop %v8611
    %v8625 = vmul.f32 1.0, %v8624
    %v8626 = vrcp.pop %v8612
    %v8627 = vmul.f32 1.0, %v8626
    %v8628 = vrcp.pop %v8613
    %v8629 = vmul.f32 1.0, %v8628
    %v8630 = vrcp.pop %v8614
    %v8631 = vmul.f32 1.0, %v8630
    %v8632 = vrcp.pop %v8615
    %v8633 = vmul.f32 1.0, %v8632
    %v8634 = vrcp.pop %v8616
    %v8635 = vmul.f32 1.0, %v8634
    %v8636 = vrcp.pop %v8617
    %v8637 = vmul.f32 1.0, %v8636
    %v8638 = vrcp.pop %v8618
    %v8639 = vmul.f32 1.0, %v8638
    %v8640 = vrcp.pop %v8619
    %v8641 = vmul.f32 1.0, %v8640
    %v8642 = vrcp.pop %v8620
    %v8643 = vmul.f32 1.0, %v8642
    %v8644 = vrcp.pop %v8621
    %v8645 = vmul.f32 1.0, %v8644
    %v8646 = vtanh.pop %v8564
    %v8647 = vtanh.pop %v8565
    %v8648 = vtanh.pop %v8572
    %v8649 = vtanh.pop %v8573
    %v8650 = vmul.f32 %v8627, %v7910
    %v8651 = vmul.f32 %v8629, %v7911
    %v8652 = vmul.f32 %v8639, %v7912
    %v8653 = vmul.f32 %v8641, %v7913
    %v8654 = vmul.f32 %v8623, %v8646
    %v8655 = vmul.f32 %v8625, %v8647
    %v8656 = vmul.f32 %v8635, %v8648
    %v8657 = vmul.f32 %v8637, %v8649
    %v8658 = vadd.f32 %v8650, %v8654
    %v8659 = vadd.f32 %v8651, %v8655
    %v8660 = vadd.f32 %v8652, %v8656
    %v8661 = vadd.f32 %v8653, %v8657
    %v8662 = vtanh.pop %v8658
    %v8663 = vtanh.pop %v8659
    %v8664 = vtanh.pop %v8660
    %v8665 = vtanh.pop %v8661
    %v8666 = vmul.f32 %v8631, %v8662
    %v8667 = vmul.f32 %v8633, %v8663
    %v8668 = vmul.f32 %v8643, %v8664
    %v8669 = vmul.f32 %v8645, %v8665
    %v8670 = vpack.c.bf16 %v8362, %v8360
    %v8671 = vpack.c.bf16 %v8363, %v8361
    %8672 = vmatprep.subr.bf16.mxu0 %v3729
    %8673 = vmatpush1.bf16.msra.mxu0 %v3728
    %8674 = vmatprep.subr.bf16.mxu0 %v3721
    %8675 = vmatpush1.bf16.msra.mxu0 %v3720
    %8676 = vmatprep.subr.bf16.mxu0 %v3713
    %8677 = vmatpush1.bf16.msra.mxu0 %v3712
    %8678 = vmatprep.subr.bf16.mxu0 %v3705
    %8679 = vmatpush1.bf16.msra.mxu0 %v3704
    %8680 = vmatprep.subr.bf16.mxu0 %v3697
    %8681 = vmatpush1.bf16.msra.mxu0 %v3696
    %8682 = vmatprep.subr.bf16.mxu0 %v3689
    %8683 = vmatpush1.bf16.msra.mxu0 %v3688
    %8684 = vmatprep.subr.bf16.mxu0 %v3681
    %8685 = vmatpush1.bf16.msra.mxu0 %v3680
    %8686 = vmatprep.subr.bf16.mxu0 %v3673
    %8687 = vmatpush1.bf16.msra.mxu0 %v3672
    %8688 = vmatprep.subr.bf16.mxu0 %v3793
    %8689 = vmatpush2.bf16.msra.mxu0 %v3792
    %8690 = vmatprep.subr.bf16.mxu0 %v3785
    %8691 = vmatpush2.bf16.msra.mxu0 %v3784
    %8692 = vmatprep.subr.bf16.mxu0 %v3777
    %8693 = vmatpush2.bf16.msra.mxu0 %v3776
    %8694 = vmatprep.subr.bf16.mxu0 %v3769
    %8695 = vmatpush2.bf16.msra.mxu0 %v3768
    %8696 = vmatprep.subr.bf16.mxu0 %v3761
    %8697 = vmatpush2.bf16.msra.mxu0 %v3760
    %8698 = vmatprep.subr.bf16.mxu0 %v3753
    %8699 = vmatpush2.bf16.msra.mxu0 %v3752
    %8700 = vmatprep.subr.bf16.mxu0 %v3745
    %8701 = vmatpush2.bf16.msra.mxu0 %v3744
    %8702 = vmatprep.subr.bf16.mxu0 %v3737
    %8703 = vmatpush2.bf16.msra.mxu0 %v3736
    %8704 = vmatprep.mubr.bf16.mxu0 %v8385
    %8705 = vmatmul.mubr.bf16.gmra.mxu0 %v8384
    %v8706 = vpop.f32.mrf.mxu0
    %v8707 = vadd.f32 %v1343, %v8706
    %v8708 = vpop.f32.mrf.mxu0
    %v8709 = vadd.f32 %v1347, %v8708
    %v8710 = vpop.f32.mrf.mxu0
    %v8711 = vadd.f32 %v1343, %v8710
    %v8712 = vpop.f32.mrf.mxu0
    %v8713 = vadd.f32 %v1347, %v8712
    %8714 = vdwg.mxu0
    %8715 = vmatprep.subr.bf16.mxu0 %v3857
    %8716 = vmatpush1.bf16.msra.mxu0 %v3856
    %8717 = vmatprep.subr.bf16.mxu0 %v3849
    %8718 = vmatpush1.bf16.msra.mxu0 %v3848
    %8719 = vmatprep.subr.bf16.mxu0 %v3841
    %8720 = vmatpush1.bf16.msra.mxu0 %v3840
    %8721 = vmatprep.subr.bf16.mxu0 %v3833
    %8722 = vmatpush1.bf16.msra.mxu0 %v3832
    %8723 = vmatprep.subr.bf16.mxu0 %v3825
    %8724 = vmatpush1.bf16.msra.mxu0 %v3824
    %8725 = vmatprep.subr.bf16.mxu0 %v3817
    %8726 = vmatpush1.bf16.msra.mxu0 %v3816
    %8727 = vmatprep.subr.bf16.mxu0 %v3809
    %8728 = vmatpush1.bf16.msra.mxu0 %v3808
    %8729 = vmatprep.subr.bf16.mxu0 %v3801
    %8730 = vmatpush1.bf16.msra.mxu0 %v3800
    %8731 = vmatprep.subr.bf16.mxu0 %v3921
    %8732 = vmatpush2.bf16.msra.mxu0 %v3920
    %8733 = vmatprep.subr.bf16.mxu0 %v3913
    %8734 = vmatpush2.bf16.msra.mxu0 %v3912
    %8735 = vmatprep.subr.bf16.mxu0 %v3905
    %8736 = vmatpush2.bf16.msra.mxu0 %v3904
    %8737 = vmatprep.subr.bf16.mxu0 %v3897
    %8738 = vmatpush2.bf16.msra.mxu0 %v3896
    %8739 = vmatprep.subr.bf16.mxu0 %v3889
    %8740 = vmatpush2.bf16.msra.mxu0 %v3888
    %8741 = vmatprep.subr.bf16.mxu0 %v3881
    %8742 = vmatpush2.bf16.msra.mxu0 %v3880
    %8743 = vmatprep.subr.bf16.mxu0 %v3873
    %8744 = vmatpush2.bf16.msra.mxu0 %v3872
    %8745 = vmatprep.subr.bf16.mxu0 %v3865
    %8746 = vmatpush2.bf16.msra.mxu0 %v3864
    %8747 = vmatprep.mubr.bf16.mxu0 %v8671
    %8748 = vmatmul.mubr.bf16.gmra.mxu0 %v8670
    %v8749 = vpop.f32.mrf.mxu0
    %v8750 = vadd.f32 %v8707, %v8749
    %v8751 = vpop.f32.mrf.mxu0
    %v8752 = vadd.f32 %v8709, %v8751
    %v8753 = vpop.f32.mrf.mxu0
    %v8754 = vadd.f32 %v8711, %v8753
    %v8755 = vpop.f32.mrf.mxu0
    %v8756 = vadd.f32 %v8713, %v8755
    %8757 = vdwg.mxu0
    %8758 = vmatprep.subr.bf16.mxu0 %v3731
    %8759 = vmatpush1.bf16.msra.mxu0 %v3730
    %8760 = vmatprep.subr.bf16.mxu0 %v3723
    %8761 = vmatpush1.bf16.msra.mxu0 %v3722
    %8762 = vmatprep.subr.bf16.mxu0 %v3715
    %8763 = vmatpush1.bf16.msra.mxu0 %v3714
    %8764 = vmatprep.subr.bf16.mxu0 %v3707
    %8765 = vmatpush1.bf16.msra.mxu0 %v3706
    %8766 = vmatprep.subr.bf16.mxu0 %v3699
    %8767 = vmatpush1.bf16.msra.mxu0 %v3698
    %8768 = vmatprep.subr.bf16.mxu0 %v3691
    %8769 = vmatpush1.bf16.msra.mxu0 %v3690
    %8770 = vmatprep.subr.bf16.mxu0 %v3683
    %8771 = vmatpush1.bf16.msra.mxu0 %v3682
    %8772 = vmatprep.subr.bf16.mxu0 %v3675
    %8773 = vmatpush1.bf16.msra.mxu0 %v3674
    %8774 = vmatprep.subr.bf16.mxu0 %v3795
    %8775 = vmatpush2.bf16.msra.mxu0 %v3794
    %8776 = vmatprep.subr.bf16.mxu0 %v3787
    %8777 = vmatpush2.bf16.msra.mxu0 %v3786
    %8778 = vmatprep.subr.bf16.mxu0 %v3779
    %8779 = vmatpush2.bf16.msra.mxu0 %v3778
    %8780 = vmatprep.subr.bf16.mxu0 %v3771
    %8781 = vmatpush2.bf16.msra.mxu0 %v3770
    %8782 = vmatprep.subr.bf16.mxu0 %v3763
    %8783 = vmatpush2.bf16.msra.mxu0 %v3762
    %8784 = vmatprep.subr.bf16.mxu0 %v3755
    %8785 = vmatpush2.bf16.msra.mxu0 %v3754
    %8786 = vmatprep.subr.bf16.mxu0 %v3747
    %8787 = vmatpush2.bf16.msra.mxu0 %v3746
    %8788 = vmatprep.subr.bf16.mxu0 %v3739
    %8789 = vmatpush2.bf16.msra.mxu0 %v3738
    %8790 = vmatprep.mubr.bf16.mxu0 %v8385
    %8791 = vmatmul.mubr.bf16.gmra.mxu0 %v8384
    %v8792 = vpop.f32.mrf.mxu0
    %v8793 = vadd.f32 %v1351, %v8792
    %v8794 = vpop.f32.mrf.mxu0
    %v8795 = vadd.f32 %v1355, %v8794
    %v8796 = vpop.f32.mrf.mxu0
    %v8797 = vadd.f32 %v1351, %v8796
    %v8798 = vpop.f32.mrf.mxu0
    %v8799 = vadd.f32 %v1355, %v8798
    %8800 = vdwg.mxu0
    %8801 = vmatprep.subr.bf16.mxu0 %v3859
    %8802 = vmatpush1.bf16.msra.mxu0 %v3858
    %8803 = vmatprep.subr.bf16.mxu0 %v3851
    %8804 = vmatpush1.bf16.msra.mxu0 %v3850
    %8805 = vmatprep.subr.bf16.mxu0 %v3843
    %8806 = vmatpush1.bf16.msra.mxu0 %v3842
    %8807 = vmatprep.subr.bf16.mxu0 %v3835
    %8808 = vmatpush1.bf16.msra.mxu0 %v3834
    %8809 = vmatprep.subr.bf16.mxu0 %v3827
    %8810 = vmatpush1.bf16.msra.mxu0 %v3826
    %8811 = vmatprep.subr.bf16.mxu0 %v3819
    %8812 = vmatpush1.bf16.msra.mxu0 %v3818
    %8813 = vmatprep.subr.bf16.mxu0 %v3811
    %8814 = vmatpush1.bf16.msra.mxu0 %v3810
    %8815 = vmatprep.subr.bf16.mxu0 %v3803
    %8816 = vmatpush1.bf16.msra.mxu0 %v3802
    %8817 = vmatprep.subr.bf16.mxu0 %v3923
    %8818 = vmatpush2.bf16.msra.mxu0 %v3922
    %8819 = vmatprep.subr.bf16.mxu0 %v3915
    %8820 = vmatpush2.bf16.msra.mxu0 %v3914
    %8821 = vmatprep.subr.bf16.mxu0 %v3907
    %8822 = vmatpush2.bf16.msra.mxu0 %v3906
    %8823 = vmatprep.subr.bf16.mxu0 %v3899
    %8824 = vmatpush2.bf16.msra.mxu0 %v3898
    %8825 = vmatprep.subr.bf16.mxu0 %v3891
    %8826 = vmatpush2.bf16.msra.mxu0 %v3890
    %8827 = vmatprep.subr.bf16.mxu0 %v3883
    %8828 = vmatpush2.bf16.msra.mxu0 %v3882
    %8829 = vmatprep.subr.bf16.mxu0 %v3875
    %8830 = vmatpush2.bf16.msra.mxu0 %v3874
    %8831 = vmatprep.subr.bf16.mxu0 %v3867
    %8832 = vmatpush2.bf16.msra.mxu0 %v3866
    %8833 = vmatprep.mubr.bf16.mxu0 %v8671
    %8834 = vmatmul.mubr.bf16.gmra.mxu0 %v8670
    %v8835 = vpop.f32.mrf.mxu0
    %v8836 = vadd.f32 %v8793, %v8835
    %v8837 = vpop.f32.mrf.mxu0
    %v8838 = vadd.f32 %v8795, %v8837
    %v8839 = vpop.f32.mrf.mxu0
    %v8840 = vadd.f32 %v8797, %v8839
    %v8841 = vpop.f32.mrf.mxu0
    %v8842 = vadd.f32 %v8799, %v8841
    %8843 = vdwg.mxu0
    %8844 = vmatprep.subr.bf16.mxu0 %v3733
    %8845 = vmatpush1.bf16.msra.mxu0 %v3732
    %8846 = vmatprep.subr.bf16.mxu0 %v3725
    %8847 = vmatpush1.bf16.msra.mxu0 %v3724
    %8848 = vmatprep.subr.bf16.mxu0 %v3717
    %8849 = vmatpush1.bf16.msra.mxu0 %v3716
    %8850 = vmatprep.subr.bf16.mxu0 %v3709
    %8851 = vmatpush1.bf16.msra.mxu0 %v3708
    %8852 = vmatprep.subr.bf16.mxu0 %v3701
    %8853 = vmatpush1.bf16.msra.mxu0 %v3700
    %8854 = vmatprep.subr.bf16.mxu0 %v3693
    %8855 = vmatpush1.bf16.msra.mxu0 %v3692
    %8856 = vmatprep.subr.bf16.mxu0 %v3685
    %8857 = vmatpush1.bf16.msra.mxu0 %v3684
    %8858 = vmatprep.subr.bf16.mxu0 %v3677
    %8859 = vmatpush1.bf16.msra.mxu0 %v3676
    %8860 = vmatprep.subr.bf16.mxu0 %v3797
    %8861 = vmatpush2.bf16.msra.mxu0 %v3796
    %8862 = vmatprep.subr.bf16.mxu0 %v3789
    %8863 = vmatpush2.bf16.msra.mxu0 %v3788
    %8864 = vmatprep.subr.bf16.mxu0 %v3781
    %8865 = vmatpush2.bf16.msra.mxu0 %v3780
    %8866 = vmatprep.subr.bf16.mxu0 %v3773
    %8867 = vmatpush2.bf16.msra.mxu0 %v3772
    %8868 = vmatprep.subr.bf16.mxu0 %v3765
    %8869 = vmatpush2.bf16.msra.mxu0 %v3764
    %8870 = vmatprep.subr.bf16.mxu0 %v3757
    %8871 = vmatpush2.bf16.msra.mxu0 %v3756
    %8872 = vmatprep.subr.bf16.mxu0 %v3749
    %8873 = vmatpush2.bf16.msra.mxu0 %v3748
    %8874 = vmatprep.subr.bf16.mxu0 %v3741
    %8875 = vmatpush2.bf16.msra.mxu0 %v3740
    %8876 = vmatprep.mubr.bf16.mxu0 %v8385
    %8877 = vmatmul.mubr.bf16.gmra.mxu0 %v8384
    %v8878 = vpop.f32.mrf.mxu0
    %v8879 = vadd.f32 %v1359, %v8878
    %v8880 = vpop.f32.mrf.mxu0
    %v8881 = vadd.f32 %v1363, %v8880
    %v8882 = vpop.f32.mrf.mxu0
    %v8883 = vadd.f32 %v1359, %v8882
    %v8884 = vpop.f32.mrf.mxu0
    %v8885 = vadd.f32 %v1363, %v8884
    %8886 = vdwg.mxu0
    %8887 = vmatprep.subr.bf16.mxu0 %v3861
    %8888 = vmatpush1.bf16.msra.mxu0 %v3860
    %8889 = vmatprep.subr.bf16.mxu0 %v3853
    %8890 = vmatpush1.bf16.msra.mxu0 %v3852
    %8891 = vmatprep.subr.bf16.mxu0 %v3845
    %8892 = vmatpush1.bf16.msra.mxu0 %v3844
    %8893 = vmatprep.subr.bf16.mxu0 %v3837
    %8894 = vmatpush1.bf16.msra.mxu0 %v3836
    %8895 = vmatprep.subr.bf16.mxu0 %v3829
    %8896 = vmatpush1.bf16.msra.mxu0 %v3828
    %8897 = vmatprep.subr.bf16.mxu0 %v3821
    %8898 = vmatpush1.bf16.msra.mxu0 %v3820
    %8899 = vmatprep.subr.bf16.mxu0 %v3813
    %8900 = vmatpush1.bf16.msra.mxu0 %v3812
    %8901 = vmatprep.subr.bf16.mxu0 %v3805
    %8902 = vmatpush1.bf16.msra.mxu0 %v3804
    %8903 = vmatprep.subr.bf16.mxu0 %v3925
    %8904 = vmatpush2.bf16.msra.mxu0 %v3924
    %8905 = vmatprep.subr.bf16.mxu0 %v3917
    %8906 = vmatpush2.bf16.msra.mxu0 %v3916
    %8907 = vmatprep.subr.bf16.mxu0 %v3909
    %8908 = vmatpush2.bf16.msra.mxu0 %v3908
    %8909 = vmatprep.subr.bf16.mxu0 %v3901
    %8910 = vmatpush2.bf16.msra.mxu0 %v3900
    %8911 = vmatprep.subr.bf16.mxu0 %v3893
    %8912 = vmatpush2.bf16.msra.mxu0 %v3892
    %8913 = vmatprep.subr.bf16.mxu0 %v3885
    %8914 = vmatpush2.bf16.msra.mxu0 %v3884
    %8915 = vmatprep.subr.bf16.mxu0 %v3877
    %8916 = vmatpush2.bf16.msra.mxu0 %v3876
    %8917 = vmatprep.subr.bf16.mxu0 %v3869
    %8918 = vmatpush2.bf16.msra.mxu0 %v3868
    %8919 = vmatprep.mubr.bf16.mxu0 %v8671
    %8920 = vmatmul.mubr.bf16.gmra.mxu0 %v8670
    %v8921 = vpop.f32.mrf.mxu0
    %v8922 = vadd.f32 %v8879, %v8921
    %v8923 = vpop.f32.mrf.mxu0
    %v8924 = vadd.f32 %v8881, %v8923
    %v8925 = vpop.f32.mrf.mxu0
    %v8926 = vadd.f32 %v8883, %v8925
    %v8927 = vpop.f32.mrf.mxu0
    %v8928 = vadd.f32 %v8885, %v8927
    %8929 = vdwg.mxu0
    %8930 = vmatprep.subr.bf16.mxu0 %v3735
    %8931 = vmatpush1.bf16.msra.mxu0 %v3734
    %8932 = vmatprep.subr.bf16.mxu0 %v3727
    %8933 = vmatpush1.bf16.msra.mxu0 %v3726
    %8934 = vmatprep.subr.bf16.mxu0 %v3719
    %8935 = vmatpush1.bf16.msra.mxu0 %v3718
    %8936 = vmatprep.subr.bf16.mxu0 %v3711
    %8937 = vmatpush1.bf16.msra.mxu0 %v3710
    %8938 = vmatprep.subr.bf16.mxu0 %v3703
    %8939 = vmatpush1.bf16.msra.mxu0 %v3702
    %8940 = vmatprep.subr.bf16.mxu0 %v3695
    %8941 = vmatpush1.bf16.msra.mxu0 %v3694
    %8942 = vmatprep.subr.bf16.mxu0 %v3687
    %8943 = vmatpush1.bf16.msra.mxu0 %v3686
    %8944 = vmatprep.subr.bf16.mxu0 %v3679
    %8945 = vmatpush1.bf16.msra.mxu0 %v3678
    %8946 = vmatprep.subr.bf16.mxu0 %v3799
    %8947 = vmatpush2.bf16.msra.mxu0 %v3798
    %8948 = vmatprep.subr.bf16.mxu0 %v3791
    %8949 = vmatpush2.bf16.msra.mxu0 %v3790
    %8950 = vmatprep.subr.bf16.mxu0 %v3783
    %8951 = vmatpush2.bf16.msra.mxu0 %v3782
    %8952 = vmatprep.subr.bf16.mxu0 %v3775
    %8953 = vmatpush2.bf16.msra.mxu0 %v3774
    %8954 = vmatprep.subr.bf16.mxu0 %v3767
    %8955 = vmatpush2.bf16.msra.mxu0 %v3766
    %8956 = vmatprep.subr.bf16.mxu0 %v3759
    %8957 = vmatpush2.bf16.msra.mxu0 %v3758
    %8958 = vmatprep.subr.bf16.mxu0 %v3751
    %8959 = vmatpush2.bf16.msra.mxu0 %v3750
    %8960 = vmatprep.subr.bf16.mxu0 %v3743
    %8961 = vmatpush2.bf16.msra.mxu0 %v3742
    %8962 = vmatprep.mubr.bf16.mxu0 %v8385
    %8963 = vmatmul.mubr.bf16.gmra.mxu0 %v8384
    %v8964 = vpop.f32.mrf.mxu0
    %v8965 = vadd.f32 %v1367, %v8964
    %v8966 = vpop.f32.mrf.mxu0
    %v8967 = vadd.f32 %v1371, %v8966
    %v8968 = vpop.f32.mrf.mxu0
    %v8969 = vadd.f32 %v1367, %v8968
    %v8970 = vpop.f32.mrf.mxu0
    %v8971 = vadd.f32 %v1371, %v8970
    %8972 = vdwg.mxu0
    %8973 = vmatprep.subr.bf16.mxu0 %v3863
    %8974 = vmatpush1.bf16.msra.mxu0 %v3862
    %8975 = vmatprep.subr.bf16.mxu0 %v3855
    %8976 = vmatpush1.bf16.msra.mxu0 %v3854
    %8977 = vmatprep.subr.bf16.mxu0 %v3847
    %8978 = vmatpush1.bf16.msra.mxu0 %v3846
    %8979 = vmatprep.subr.bf16.mxu0 %v3839
    %8980 = vmatpush1.bf16.msra.mxu0 %v3838
    %8981 = vmatprep.subr.bf16.mxu0 %v3831
    %8982 = vmatpush1.bf16.msra.mxu0 %v3830
    %8983 = vmatprep.subr.bf16.mxu0 %v3823
    %8984 = vmatpush1.bf16.msra.mxu0 %v3822
    %8985 = vmatprep.subr.bf16.mxu0 %v3815
    %8986 = vmatpush1.bf16.msra.mxu0 %v3814
    %8987 = vmatprep.subr.bf16.mxu0 %v3807
    %8988 = vmatpush1.bf16.msra.mxu0 %v3806
    %8989 = vmatprep.subr.bf16.mxu0 %v3927
    %8990 = vmatpush2.bf16.msra.mxu0 %v3926
    %8991 = vmatprep.subr.bf16.mxu0 %v3919
    %8992 = vmatpush2.bf16.msra.mxu0 %v3918
    %8993 = vmatprep.subr.bf16.mxu0 %v3911
    %8994 = vmatpush2.bf16.msra.mxu0 %v3910
    %8995 = vmatprep.subr.bf16.mxu0 %v3903
    %8996 = vmatpush2.bf16.msra.mxu0 %v3902
    %8997 = vmatprep.subr.bf16.mxu0 %v3895
    %8998 = vmatpush2.bf16.msra.mxu0 %v3894
    %8999 = vmatprep.subr.bf16.mxu0 %v3887
    %9000 = vmatpush2.bf16.msra.mxu0 %v3886
    %9001 = vmatprep.subr.bf16.mxu0 %v3879
    %9002 = vmatpush2.bf16.msra.mxu0 %v3878
    %9003 = vmatprep.subr.bf16.mxu0 %v3871
    %9004 = vmatpush2.bf16.msra.mxu0 %v3870
    %9005 = vmatprep.mubr.bf16.mxu0 %v8671
    %9006 = vmatmul.mubr.bf16.gmra.mxu0 %v8670
    %v9007 = vpop.f32.mrf.mxu0
    %v9008 = vadd.f32 %v8965, %v9007
    %v9009 = vpop.f32.mrf.mxu0
    %v9010 = vadd.f32 %v8967, %v9009
    %v9011 = vpop.f32.mrf.mxu0
    %v9012 = vadd.f32 %v8969, %v9011
    %v9013 = vpop.f32.mrf.mxu0
    %v9014 = vadd.f32 %v8971, %v9013
    %9015 = vdwg.mxu0
    %v9016 = vxor.u32 %v8750, 2147483648
    %v9017 = vxor.u32 %v8752, 2147483648
    %v9018 = vxor.u32 %v8836, 2147483648
    %v9019 = vxor.u32 %v8838, 2147483648
    %v9020 = vxor.u32 %v8922, 2147483648
    %v9021 = vxor.u32 %v8924, 2147483648
    %v9022 = vxor.u32 %v8754, 2147483648
    %v9023 = vxor.u32 %v8756, 2147483648
    %v9024 = vxor.u32 %v8840, 2147483648
    %v9025 = vxor.u32 %v8842, 2147483648
    %v9026 = vxor.u32 %v8926, 2147483648
    %v9027 = vxor.u32 %v8928, 2147483648
    %v9028 = vmul.f32 %v9016, 1.442695
    %v9029 = vpow.pop %v9028
    %v9030 = vmul.f32 %v9017, 1.442695
    %v9031 = vpow.pop %v9030
    %v9032 = vmul.f32 %v9018, 1.442695
    %v9033 = vpow.pop %v9032
    %v9034 = vmul.f32 %v9019, 1.442695
    %v9035 = vpow.pop %v9034
    %v9036 = vmul.f32 %v9020, 1.442695
    %v9037 = vpow.pop %v9036
    %v9038 = vmul.f32 %v9021, 1.442695
    %v9039 = vpow.pop %v9038
    %v9040 = vmul.f32 %v9022, 1.442695
    %v9041 = vpow.pop %v9040
    %v9042 = vmul.f32 %v9023, 1.442695
    %v9043 = vpow.pop %v9042
    %v9044 = vmul.f32 %v9024, 1.442695
    %v9045 = vpow.pop %v9044
    %v9046 = vmul.f32 %v9025, 1.442695
    %v9047 = vpow.pop %v9046
    %v9048 = vmul.f32 %v9026, 1.442695
    %v9049 = vpow.pop %v9048
    %v9050 = vmul.f32 %v9027, 1.442695
    %v9051 = vpow.pop %v9050
    %v9052 = vadd.f32 %v9029, 1.0
    %v9053 = vadd.f32 %v9031, 1.0
    %v9054 = vadd.f32 %v9033, 1.0
    %v9055 = vadd.f32 %v9035, 1.0
    %v9056 = vadd.f32 %v9037, 1.0
    %v9057 = vadd.f32 %v9039, 1.0
    %v9058 = vadd.f32 %v9041, 1.0
    %v9059 = vadd.f32 %v9043, 1.0
    %v9060 = vadd.f32 %v9045, 1.0
    %v9061 = vadd.f32 %v9047, 1.0
    %v9062 = vadd.f32 %v9049, 1.0
    %v9063 = vadd.f32 %v9051, 1.0
    %v9064 = vrcp.pop %v9052
    %v9065 = vmul.f32 1.0, %v9064
    %v9066 = vrcp.pop %v9053
    %v9067 = vmul.f32 1.0, %v9066
    %v9068 = vrcp.pop %v9054
    %v9069 = vmul.f32 1.0, %v9068
    %v9070 = vrcp.pop %v9055
    %v9071 = vmul.f32 1.0, %v9070
    %v9072 = vrcp.pop %v9056
    %v9073 = vmul.f32 1.0, %v9072
    %v9074 = vrcp.pop %v9057
    %v9075 = vmul.f32 1.0, %v9074
    %v9076 = vrcp.pop %v9058
    %v9077 = vmul.f32 1.0, %v9076
    %v9078 = vrcp.pop %v9059
    %v9079 = vmul.f32 1.0, %v9078
    %v9080 = vrcp.pop %v9060
    %v9081 = vmul.f32 1.0, %v9080
    %v9082 = vrcp.pop %v9061
    %v9083 = vmul.f32 1.0, %v9082
    %v9084 = vrcp.pop %v9062
    %v9085 = vmul.f32 1.0, %v9084
    %v9086 = vrcp.pop %v9063
    %v9087 = vmul.f32 1.0, %v9086
    %v9088 = vtanh.pop %v9008
    %v9089 = vtanh.pop %v9010
    %v9090 = vtanh.pop %v9012
    %v9091 = vtanh.pop %v9014
    %v9092 = vmul.f32 %v9069, %v8352
    %v9093 = vmul.f32 %v9071, %v8353
    %v9094 = vmul.f32 %v9081, %v8354
    %v9095 = vmul.f32 %v9083, %v8355
    %v9096 = vmul.f32 %v9065, %v9088
    %v9097 = vmul.f32 %v9067, %v9089
    %v9098 = vmul.f32 %v9077, %v9090
    %v9099 = vmul.f32 %v9079, %v9091
    %v9100 = vadd.f32 %v9092, %v9096
    %v9101 = vadd.f32 %v9093, %v9097
    %v9102 = vadd.f32 %v9094, %v9098
    %v9103 = vadd.f32 %v9095, %v9099
    %v9104 = vtanh.pop %v9100
    %v9105 = vtanh.pop %v9101
    %v9106 = vtanh.pop %v9102
    %v9107 = vtanh.pop %v9103
    %v9108 = vmul.f32 %v9073, %v9104
    %v9109 = vmul.f32 %v9075, %v9105
    %v9110 = vmul.f32 %v9085, %v9106
    %v9111 = vmul.f32 %v9087, %v9107
    %9112 = vst [vmem:[#allocation3 + $0xc0] sm:$0xff] %v9108
    %9113 = vst [vmem:[#allocation3 + $0xc8] sm:$0xff] %v9109
    %9114 = vst [vmem:[#allocation3 + $0xd0] sm:$0xff] %v9110
    %9115 = vst [vmem:[#allocation3 + $0xd8] sm:$0xff] %v9111
    %v9116 = vpack.c.bf16 %v8668, %v8666
    %v9117 = vpack.c.bf16 %v8669, %v8667
    %v9118 = vpack.c.bf16 %v9110, %v9108
    %v9119 = vpack.c.bf16 %v9111, %v9109
    %9120 = vmatprep.subr.bf16.mxu0 %v3729
    %9121 = vmatpush1.bf16.msra.mxu0 %v3728
    %9122 = vmatprep.subr.bf16.mxu0 %v3721
    %9123 = vmatpush1.bf16.msra.mxu0 %v3720
    %9124 = vmatprep.subr.bf16.mxu0 %v3713
    %9125 = vmatpush1.bf16.msra.mxu0 %v3712
    %9126 = vmatprep.subr.bf16.mxu0 %v3705
    %9127 = vmatpush1.bf16.msra.mxu0 %v3704
    %9128 = vmatprep.subr.bf16.mxu0 %v3697
    %9129 = vmatpush1.bf16.msra.mxu0 %v3696
    %9130 = vmatprep.subr.bf16.mxu0 %v3689
    %9131 = vmatpush1.bf16.msra.mxu0 %v3688
    %9132 = vmatprep.subr.bf16.mxu0 %v3681
    %9133 = vmatpush1.bf16.msra.mxu0 %v3680
    %9134 = vmatprep.subr.bf16.mxu0 %v3673
    %9135 = vmatpush1.bf16.msra.mxu0 %v3672
    %9136 = vmatprep.subr.bf16.mxu0 %v3793
    %9137 = vmatpush2.bf16.msra.mxu0 %v3792
    %9138 = vmatprep.subr.bf16.mxu0 %v3785
    %9139 = vmatpush2.bf16.msra.mxu0 %v3784
    %9140 = vmatprep.subr.bf16.mxu0 %v3777
    %9141 = vmatpush2.bf16.msra.mxu0 %v3776
    %9142 = vmatprep.subr.bf16.mxu0 %v3769
    %9143 = vmatpush2.bf16.msra.mxu0 %v3768
    %9144 = vmatprep.subr.bf16.mxu0 %v3761
    %9145 = vmatpush2.bf16.msra.mxu0 %v3760
    %9146 = vmatprep.subr.bf16.mxu0 %v3753
    %9147 = vmatpush2.bf16.msra.mxu0 %v3752
    %9148 = vmatprep.subr.bf16.mxu0 %v3745
    %9149 = vmatpush2.bf16.msra.mxu0 %v3744
    %9150 = vmatprep.subr.bf16.mxu0 %v3737
    %9151 = vmatpush2.bf16.msra.mxu0 %v3736
    %9152 = vmatprep.mubr.bf16.mxu0 %v9117
    %9153 = vmatmul.mubr.bf16.gmra.mxu0 %v9116
    %v9154 = vpop.f32.mrf.mxu0
    %v9155 = vadd.f32 %v1343, %v9154
    %v9156 = vpop.f32.mrf.mxu0
    %v9157 = vadd.f32 %v1347, %v9156
    %v9158 = vpop.f32.mrf.mxu0
    %v9159 = vadd.f32 %v1343, %v9158
    %v9160 = vpop.f32.mrf.mxu0
    %v9161 = vadd.f32 %v1347, %v9160
    %9162 = vdwg.mxu0
    %9163 = vmatprep.subr.bf16.mxu0 %v3857
    %9164 = vmatpush1.bf16.msra.mxu0 %v3856
    %9165 = vmatprep.subr.bf16.mxu0 %v3849
    %9166 = vmatpush1.bf16.msra.mxu0 %v3848
    %9167 = vmatprep.subr.bf16.mxu0 %v3841
    %9168 = vmatpush1.bf16.msra.mxu0 %v3840
    %9169 = vmatprep.subr.bf16.mxu0 %v3833
    %9170 = vmatpush1.bf16.msra.mxu0 %v3832
    %9171 = vmatprep.subr.bf16.mxu0 %v3825
    %9172 = vmatpush1.bf16.msra.mxu0 %v3824
    %9173 = vmatprep.subr.bf16.mxu0 %v3817
    %9174 = vmatpush1.bf16.msra.mxu0 %v3816
    %9175 = vmatprep.subr.bf16.mxu0 %v3809
    %9176 = vmatpush1.bf16.msra.mxu0 %v3808
    %9177 = vmatprep.subr.bf16.mxu0 %v3801
    %9178 = vmatpush1.bf16.msra.mxu0 %v3800
    %9179 = vmatprep.subr.bf16.mxu0 %v3921
    %9180 = vmatpush2.bf16.msra.mxu0 %v3920
    %9181 = vmatprep.subr.bf16.mxu0 %v3913
    %9182 = vmatpush2.bf16.msra.mxu0 %v3912
    %9183 = vmatprep.subr.bf16.mxu0 %v3905
    %9184 = vmatpush2.bf16.msra.mxu0 %v3904
    %9185 = vmatprep.subr.bf16.mxu0 %v3897
    %9186 = vmatpush2.bf16.msra.mxu0 %v3896
    %9187 = vmatprep.subr.bf16.mxu0 %v3889
    %9188 = vmatpush2.bf16.msra.mxu0 %v3888
    %9189 = vmatprep.subr.bf16.mxu0 %v3881
    %9190 = vmatpush2.bf16.msra.mxu0 %v3880
    %9191 = vmatprep.subr.bf16.mxu0 %v3873
    %9192 = vmatpush2.bf16.msra.mxu0 %v3872
    %9193 = vmatprep.subr.bf16.mxu0 %v3865
    %9194 = vmatpush2.bf16.msra.mxu0 %v3864
    %9195 = vmatprep.mubr.bf16.mxu0 %v9119
    %9196 = vmatmul.mubr.bf16.gmra.mxu0 %v9118
    %v9197 = vpop.f32.mrf.mxu0
    %v9198 = vadd.f32 %v9155, %v9197
    %v9199 = vpop.f32.mrf.mxu0
    %v9200 = vadd.f32 %v9157, %v9199
    %v9201 = vpop.f32.mrf.mxu0
    %v9202 = vadd.f32 %v9159, %v9201
    %v9203 = vpop.f32.mrf.mxu0
    %v9204 = vadd.f32 %v9161, %v9203
    %9205 = vdwg.mxu0
    %9206 = vmatprep.subr.bf16.mxu0 %v3731
    %9207 = vmatpush1.bf16.msra.mxu0 %v3730
    %9208 = vmatprep.subr.bf16.mxu0 %v3723
    %9209 = vmatpush1.bf16.msra.mxu0 %v3722
    %9210 = vmatprep.subr.bf16.mxu0 %v3715
    %9211 = vmatpush1.bf16.msra.mxu0 %v3714
    %9212 = vmatprep.subr.bf16.mxu0 %v3707
    %9213 = vmatpush1.bf16.msra.mxu0 %v3706
    %9214 = vmatprep.subr.bf16.mxu0 %v3699
    %9215 = vmatpush1.bf16.msra.mxu0 %v3698
    %9216 = vmatprep.subr.bf16.mxu0 %v3691
    %9217 = vmatpush1.bf16.msra.mxu0 %v3690
    %9218 = vmatprep.subr.bf16.mxu0 %v3683
    %9219 = vmatpush1.bf16.msra.mxu0 %v3682
    %9220 = vmatprep.subr.bf16.mxu0 %v3675
    %9221 = vmatpush1.bf16.msra.mxu0 %v3674
    %9222 = vmatprep.subr.bf16.mxu0 %v3795
    %9223 = vmatpush2.bf16.msra.mxu0 %v3794
    %9224 = vmatprep.subr.bf16.mxu0 %v3787
    %9225 = vmatpush2.bf16.msra.mxu0 %v3786
    %9226 = vmatprep.subr.bf16.mxu0 %v3779
    %9227 = vmatpush2.bf16.msra.mxu0 %v3778
    %9228 = vmatprep.subr.bf16.mxu0 %v3771
    %9229 = vmatpush2.bf16.msra.mxu0 %v3770
    %9230 = vmatprep.subr.bf16.mxu0 %v3763
    %9231 = vmatpush2.bf16.msra.mxu0 %v3762
    %9232 = vmatprep.subr.bf16.mxu0 %v3755
    %9233 = vmatpush2.bf16.msra.mxu0 %v3754
    %9234 = vmatprep.subr.bf16.mxu0 %v3747
    %9235 = vmatpush2.bf16.msra.mxu0 %v3746
    %9236 = vmatprep.subr.bf16.mxu0 %v3739
    %9237 = vmatpush2.bf16.msra.mxu0 %v3738
    %9238 = vmatprep.mubr.bf16.mxu0 %v9117
    %9239 = vmatmul.mubr.bf16.gmra.mxu0 %v9116
    %v9240 = vpop.f32.mrf.mxu0
    %v9241 = vadd.f32 %v1351, %v9240
    %v9242 = vpop.f32.mrf.mxu0
    %v9243 = vadd.f32 %v1355, %v9242
    %v9244 = vpop.f32.mrf.mxu0
    %v9245 = vadd.f32 %v1351, %v9244
    %v9246 = vpop.f32.mrf.mxu0
    %v9247 = vadd.f32 %v1355, %v9246
    %9248 = vdwg.mxu0
    %9249 = vmatprep.subr.bf16.mxu0 %v3859
    %9250 = vmatpush1.bf16.msra.mxu0 %v3858
    %9251 = vmatprep.subr.bf16.mxu0 %v3851
    %9252 = vmatpush1.bf16.msra.mxu0 %v3850
    %9253 = vmatprep.subr.bf16.mxu0 %v3843
    %9254 = vmatpush1.bf16.msra.mxu0 %v3842
    %9255 = vmatprep.subr.bf16.mxu0 %v3835
    %9256 = vmatpush1.bf16.msra.mxu0 %v3834
    %9257 = vmatprep.subr.bf16.mxu0 %v3827
    %9258 = vmatpush1.bf16.msra.mxu0 %v3826
    %9259 = vmatprep.subr.bf16.mxu0 %v3819
    %9260 = vmatpush1.bf16.msra.mxu0 %v3818
    %9261 = vmatprep.subr.bf16.mxu0 %v3811
    %9262 = vmatpush1.bf16.msra.mxu0 %v3810
    %9263 = vmatprep.subr.bf16.mxu0 %v3803
    %9264 = vmatpush1.bf16.msra.mxu0 %v3802
    %9265 = vmatprep.subr.bf16.mxu0 %v3923
    %9266 = vmatpush2.bf16.msra.mxu0 %v3922
    %9267 = vmatprep.subr.bf16.mxu0 %v3915
    %9268 = vmatpush2.bf16.msra.mxu0 %v3914
    %9269 = vmatprep.subr.bf16.mxu0 %v3907
    %9270 = vmatpush2.bf16.msra.mxu0 %v3906
    %9271 = vmatprep.subr.bf16.mxu0 %v3899
    %9272 = vmatpush2.bf16.msra.mxu0 %v3898
    %9273 = vmatprep.subr.bf16.mxu0 %v3891
    %9274 = vmatpush2.bf16.msra.mxu0 %v3890
    %9275 = vmatprep.subr.bf16.mxu0 %v3883
    %9276 = vmatpush2.bf16.msra.mxu0 %v3882
    %9277 = vmatprep.subr.bf16.mxu0 %v3875
    %9278 = vmatpush2.bf16.msra.mxu0 %v3874
    %9279 = vmatprep.subr.bf16.mxu0 %v3867
    %9280 = vmatpush2.bf16.msra.mxu0 %v3866
    %9281 = vmatprep.mubr.bf16.mxu0 %v9119
    %9282 = vmatmul.mubr.bf16.gmra.mxu0 %v9118
    %v9283 = vpop.f32.mrf.mxu0
    %v9284 = vadd.f32 %v9241, %v9283
    %v9285 = vpop.f32.mrf.mxu0
    %v9286 = vadd.f32 %v9243, %v9285
    %v9287 = vpop.f32.mrf.mxu0
    %v9288 = vadd.f32 %v9245, %v9287
    %v9289 = vpop.f32.mrf.mxu0
    %v9290 = vadd.f32 %v9247, %v9289
    %9291 = vdwg.mxu0
    %9292 = vmatprep.subr.bf16.mxu0 %v3733
    %9293 = vmatpush1.bf16.msra.mxu0 %v3732
    %9294 = vmatprep.subr.bf16.mxu0 %v3725
    %9295 = vmatpush1.bf16.msra.mxu0 %v3724
    %9296 = vmatprep.subr.bf16.mxu0 %v3717
    %9297 = vmatpush1.bf16.msra.mxu0 %v3716
    %9298 = vmatprep.subr.bf16.mxu0 %v3709
    %9299 = vmatpush1.bf16.msra.mxu0 %v3708
    %9300 = vmatprep.subr.bf16.mxu0 %v3701
    %9301 = vmatpush1.bf16.msra.mxu0 %v3700
    %9302 = vmatprep.subr.bf16.mxu0 %v3693
    %9303 = vmatpush1.bf16.msra.mxu0 %v3692
    %9304 = vmatprep.subr.bf16.mxu0 %v3685
    %9305 = vmatpush1.bf16.msra.mxu0 %v3684
    %9306 = vmatprep.subr.bf16.mxu0 %v3677
    %9307 = vmatpush1.bf16.msra.mxu0 %v3676
    %9308 = vmatprep.subr.bf16.mxu0 %v3797
    %9309 = vmatpush2.bf16.msra.mxu0 %v3796
    %9310 = vmatprep.subr.bf16.mxu0 %v3789
    %9311 = vmatpush2.bf16.msra.mxu0 %v3788
    %9312 = vmatprep.subr.bf16.mxu0 %v3781
    %9313 = vmatpush2.bf16.msra.mxu0 %v3780
    %9314 = vmatprep.subr.bf16.mxu0 %v3773
    %9315 = vmatpush2.bf16.msra.mxu0 %v3772
    %9316 = vmatprep.subr.bf16.mxu0 %v3765
    %9317 = vmatpush2.bf16.msra.mxu0 %v3764
    %9318 = vmatprep.subr.bf16.mxu0 %v3757
    %9319 = vmatpush2.bf16.msra.mxu0 %v3756
    %9320 = vmatprep.subr.bf16.mxu0 %v3749
    %9321 = vmatpush2.bf16.msra.mxu0 %v3748
    %9322 = vmatprep.subr.bf16.mxu0 %v3741
    %9323 = vmatpush2.bf16.msra.mxu0 %v3740
    %9324 = vmatprep.mubr.bf16.mxu0 %v9117
    %9325 = vmatmul.mubr.bf16.gmra.mxu0 %v9116
    %v9326 = vpop.f32.mrf.mxu0
    %v9327 = vadd.f32 %v1359, %v9326
    %v9328 = vpop.f32.mrf.mxu0
    %v9329 = vadd.f32 %v1363, %v9328
    %v9330 = vpop.f32.mrf.mxu0
    %v9331 = vadd.f32 %v1359, %v9330
    %v9332 = vpop.f32.mrf.mxu0
    %v9333 = vadd.f32 %v1363, %v9332
    %9334 = vdwg.mxu0
    %9335 = vmatprep.subr.bf16.mxu0 %v3861
    %9336 = vmatpush1.bf16.msra.mxu0 %v3860
    %9337 = vmatprep.subr.bf16.mxu0 %v3853
    %9338 = vmatpush1.bf16.msra.mxu0 %v3852
    %9339 = vmatprep.subr.bf16.mxu0 %v3845
    %9340 = vmatpush1.bf16.msra.mxu0 %v3844
    %9341 = vmatprep.subr.bf16.mxu0 %v3837
    %9342 = vmatpush1.bf16.msra.mxu0 %v3836
    %9343 = vmatprep.subr.bf16.mxu0 %v3829
    %9344 = vmatpush1.bf16.msra.mxu0 %v3828
    %9345 = vmatprep.subr.bf16.mxu0 %v3821
    %9346 = vmatpush1.bf16.msra.mxu0 %v3820
    %9347 = vmatprep.subr.bf16.mxu0 %v3813
    %9348 = vmatpush1.bf16.msra.mxu0 %v3812
    %9349 = vmatprep.subr.bf16.mxu0 %v3805
    %9350 = vmatpush1.bf16.msra.mxu0 %v3804
    %9351 = vmatprep.subr.bf16.mxu0 %v3925
    %9352 = vmatpush2.bf16.msra.mxu0 %v3924
    %9353 = vmatprep.subr.bf16.mxu0 %v3917
    %9354 = vmatpush2.bf16.msra.mxu0 %v3916
    %9355 = vmatprep.subr.bf16.mxu0 %v3909
    %9356 = vmatpush2.bf16.msra.mxu0 %v3908
    %9357 = vmatprep.subr.bf16.mxu0 %v3901
    %9358 = vmatpush2.bf16.msra.mxu0 %v3900
    %9359 = vmatprep.subr.bf16.mxu0 %v3893
    %9360 = vmatpush2.bf16.msra.mxu0 %v3892
    %9361 = vmatprep.subr.bf16.mxu0 %v3885
    %9362 = vmatpush2.bf16.msra.mxu0 %v3884
    %9363 = vmatprep.subr.bf16.mxu0 %v3877
    %9364 = vmatpush2.bf16.msra.mxu0 %v3876
    %9365 = vmatprep.subr.bf16.mxu0 %v3869
    %9366 = vmatpush2.bf16.msra.mxu0 %v3868
    %9367 = vmatprep.mubr.bf16.mxu0 %v9119
    %9368 = vmatmul.mubr.bf16.gmra.mxu0 %v9118
    %v9369 = vpop.f32.mrf.mxu0
    %v9370 = vadd.f32 %v9327, %v9369
    %v9371 = vpop.f32.mrf.mxu0
    %v9372 = vadd.f32 %v9329, %v9371
    %v9373 = vpop.f32.mrf.mxu0
    %v9374 = vadd.f32 %v9331, %v9373
    %v9375 = vpop.f32.mrf.mxu0
    %v9376 = vadd.f32 %v9333, %v9375
    %9377 = vdwg.mxu0
    %9378 = vmatprep.subr.bf16.mxu0 %v3735
    %9379 = vmatpush1.bf16.msra.mxu0 %v3734
    %9380 = vmatprep.subr.bf16.mxu0 %v3727
    %9381 = vmatpush1.bf16.msra.mxu0 %v3726
    %9382 = vmatprep.subr.bf16.mxu0 %v3719
    %9383 = vmatpush1.bf16.msra.mxu0 %v3718
    %9384 = vmatprep.subr.bf16.mxu0 %v3711
    %9385 = vmatpush1.bf16.msra.mxu0 %v3710
    %9386 = vmatprep.subr.bf16.mxu0 %v3703
    %9387 = vmatpush1.bf16.msra.mxu0 %v3702
    %9388 = vmatprep.subr.bf16.mxu0 %v3695
    %9389 = vmatpush1.bf16.msra.mxu0 %v3694
    %9390 = vmatprep.subr.bf16.mxu0 %v3687
    %9391 = vmatpush1.bf16.msra.mxu0 %v3686
    %9392 = vmatprep.subr.bf16.mxu0 %v3679
    %9393 = vmatpush1.bf16.msra.mxu0 %v3678
    %9394 = vmatprep.subr.bf16.mxu0 %v3799
    %9395 = vmatpush2.bf16.msra.mxu0 %v3798
    %9396 = vmatprep.subr.bf16.mxu0 %v3791
    %9397 = vmatpush2.bf16.msra.mxu0 %v3790
    %9398 = vmatprep.subr.bf16.mxu0 %v3783
    %9399 = vmatpush2.bf16.msra.mxu0 %v3782
    %9400 = vmatprep.subr.bf16.mxu0 %v3775
    %9401 = vmatpush2.bf16.msra.mxu0 %v3774
    %9402 = vmatprep.subr.bf16.mxu0 %v3767
    %9403 = vmatpush2.bf16.msra.mxu0 %v3766
    %9404 = vmatprep.subr.bf16.mxu0 %v3759
    %9405 = vmatpush2.bf16.msra.mxu0 %v3758
    %9406 = vmatprep.subr.bf16.mxu0 %v3751
    %9407 = vmatpush2.bf16.msra.mxu0 %v3750
    %9408 = vmatprep.subr.bf16.mxu0 %v3743
    %9409 = vmatpush2.bf16.msra.mxu0 %v3742
    %9410 = vmatprep.mubr.bf16.mxu0 %v9117
    %9411 = vmatmul.mubr.bf16.gmra.mxu0 %v9116
    %v9412 = vpop.f32.mrf.mxu0
    %v9413 = vadd.f32 %v1367, %v9412
    %v9414 = vpop.f32.mrf.mxu0
    %v9415 = vadd.f32 %v1371, %v9414
    %v9416 = vpop.f32.mrf.mxu0
    %v9417 = vadd.f32 %v1367, %v9416
    %v9418 = vpop.f32.mrf.mxu0
    %v9419 = vadd.f32 %v1371, %v9418
    %9420 = vdwg.mxu0
    %9421 = vmatprep.subr.bf16.mxu0 %v3863
    %9422 = vmatpush1.bf16.msra.mxu0 %v3862
    %9423 = vmatprep.subr.bf16.mxu0 %v3855
    %9424 = vmatpush1.bf16.msra.mxu0 %v3854
    %9425 = vmatprep.subr.bf16.mxu0 %v3847
    %9426 = vmatpush1.bf16.msra.mxu0 %v3846
    %9427 = vmatprep.subr.bf16.mxu0 %v3839
    %9428 = vmatpush1.bf16.msra.mxu0 %v3838
    %9429 = vmatprep.subr.bf16.mxu0 %v3831
    %9430 = vmatpush1.bf16.msra.mxu0 %v3830
    %9431 = vmatprep.subr.bf16.mxu0 %v3823
    %9432 = vmatpush1.bf16.msra.mxu0 %v3822
    %9433 = vmatprep.subr.bf16.mxu0 %v3815
    %9434 = vmatpush1.bf16.msra.mxu0 %v3814
    %9435 = vmatprep.subr.bf16.mxu0 %v3807
    %9436 = vmatpush1.bf16.msra.mxu0 %v3806
    %9437 = vmatprep.subr.bf16.mxu0 %v3927
    %9438 = vmatpush2.bf16.msra.mxu0 %v3926
    %9439 = vmatprep.subr.bf16.mxu0 %v3919
    %9440 = vmatpush2.bf16.msra.mxu0 %v3918
    %9441 = vmatprep.subr.bf16.mxu0 %v3911
    %9442 = vmatpush2.bf16.msra.mxu0 %v3910
    %9443 = vmatprep.subr.bf16.mxu0 %v3903
    %9444 = vmatpush2.bf16.msra.mxu0 %v3902
    %9445 = vmatprep.subr.bf16.mxu0 %v3895
    %9446 = vmatpush2.bf16.msra.mxu0 %v3894
    %9447 = vmatprep.subr.bf16.mxu0 %v3887
    %9448 = vmatpush2.bf16.msra.mxu0 %v3886
    %9449 = vmatprep.subr.bf16.mxu0 %v3879
    %9450 = vmatpush2.bf16.msra.mxu0 %v3878
    %9451 = vmatprep.subr.bf16.mxu0 %v3871
    %9452 = vmatpush2.bf16.msra.mxu0 %v3870
    %9453 = vmatprep.mubr.bf16.mxu0 %v9119
    %9454 = vmatmul.mubr.bf16.gmra.mxu0 %v9118
    %v9455 = vpop.f32.mrf.mxu0
    %v9456 = vadd.f32 %v9413, %v9455
    %v9457 = vpop.f32.mrf.mxu0
    %v9458 = vadd.f32 %v9415, %v9457
    %v9459 = vpop.f32.mrf.mxu0
    %v9460 = vadd.f32 %v9417, %v9459
    %v9461 = vpop.f32.mrf.mxu0
    %v9462 = vadd.f32 %v9419, %v9461
    %9463 = vdwg.mxu0
    %v9464 = vxor.u32 %v9198, 2147483648
    %v9465 = vxor.u32 %v9200, 2147483648
    %v9466 = vxor.u32 %v9284, 2147483648
    %v9467 = vxor.u32 %v9286, 2147483648
    %v9468 = vxor.u32 %v9370, 2147483648
    %v9469 = vxor.u32 %v9372, 2147483648
    %v9470 = vxor.u32 %v9202, 2147483648
    %v9471 = vxor.u32 %v9204, 2147483648
    %v9472 = vxor.u32 %v9288, 2147483648
    %v9473 = vxor.u32 %v9290, 2147483648
    %v9474 = vxor.u32 %v9374, 2147483648
    %v9475 = vxor.u32 %v9376, 2147483648
    %v9476 = vmul.f32 %v9464, 1.442695
    %v9477 = vpow.pop %v9476
    %v9478 = vmul.f32 %v9465, 1.442695
    %v9479 = vpow.pop %v9478
    %v9480 = vmul.f32 %v9466, 1.442695
    %v9481 = vpow.pop %v9480
    %v9482 = vmul.f32 %v9467, 1.442695
    %v9483 = vpow.pop %v9482
    %v9484 = vmul.f32 %v9468, 1.442695
    %v9485 = vpow.pop %v9484
    %v9486 = vmul.f32 %v9469, 1.442695
    %v9487 = vpow.pop %v9486
    %v9488 = vmul.f32 %v9470, 1.442695
    %v9489 = vpow.pop %v9488
    %v9490 = vmul.f32 %v9471, 1.442695
    %v9491 = vpow.pop %v9490
    %v9492 = vmul.f32 %v9472, 1.442695
    %v9493 = vpow.pop %v9492
    %v9494 = vmul.f32 %v9473, 1.442695
    %v9495 = vpow.pop %v9494
    %v9496 = vmul.f32 %v9474, 1.442695
    %v9497 = vpow.pop %v9496
    %v9498 = vmul.f32 %v9475, 1.442695
    %v9499 = vpow.pop %v9498
    %v9500 = vadd.f32 %v9477, 1.0
    %v9501 = vadd.f32 %v9479, 1.0
    %v9502 = vadd.f32 %v9481, 1.0
    %v9503 = vadd.f32 %v9483, 1.0
    %v9504 = vadd.f32 %v9485, 1.0
    %v9505 = vadd.f32 %v9487, 1.0
    %v9506 = vadd.f32 %v9489, 1.0
    %v9507 = vadd.f32 %v9491, 1.0
    %v9508 = vadd.f32 %v9493, 1.0
    %v9509 = vadd.f32 %v9495, 1.0
    %v9510 = vadd.f32 %v9497, 1.0
    %v9511 = vadd.f32 %v9499, 1.0
    %v9512 = vrcp.pop %v9500
    %v9513 = vmul.f32 1.0, %v9512
    %v9514 = vrcp.pop %v9501
    %v9515 = vmul.f32 1.0, %v9514
    %v9516 = vrcp.pop %v9502
    %v9517 = vmul.f32 1.0, %v9516
    %v9518 = vrcp.pop %v9503
    %v9519 = vmul.f32 1.0, %v9518
    %v9520 = vrcp.pop %v9504
    %v9521 = vmul.f32 1.0, %v9520
    %v9522 = vrcp.pop %v9505
    %v9523 = vmul.f32 1.0, %v9522
    %v9524 = vrcp.pop %v9506
    %v9525 = vmul.f32 1.0, %v9524
    %v9526 = vrcp.pop %v9507
    %v9527 = vmul.f32 1.0, %v9526
    %v9528 = vrcp.pop %v9508
    %v9529 = vmul.f32 1.0, %v9528
    %v9530 = vrcp.pop %v9509
    %v9531 = vmul.f32 1.0, %v9530
    %v9532 = vrcp.pop %v9510
    %v9533 = vmul.f32 1.0, %v9532
    %v9534 = vrcp.pop %v9511
    %v9535 = vmul.f32 1.0, %v9534
    %v9536 = vtanh.pop %v9456
    %v9537 = vtanh.pop %v9458
    %v9538 = vtanh.pop %v9460
    %v9539 = vtanh.pop %v9462
    %v9540 = vmul.f32 %v9517, %v9100
    %v9541 = vmul.f32 %v9519, %v9101
    %v9542 = vmul.f32 %v9529, %v9102
    %v9543 = vmul.f32 %v9531, %v9103
    %v9544 = vmul.f32 %v9513, %v9536
    %v9545 = vmul.f32 %v9515, %v9537
    %v9546 = vmul.f32 %v9525, %v9538
    %v9547 = vmul.f32 %v9527, %v9539
    %v9548 = vadd.f32 %v9540, %v9544
    %v9549 = vadd.f32 %v9541, %v9545
    %v9550 = vadd.f32 %v9542, %v9546
    %v9551 = vadd.f32 %v9543, %v9547
    %v9552 = vtanh.pop %v9548
    %v9553 = vtanh.pop %v9549
    %v9554 = vtanh.pop %v9550
    %v9555 = vtanh.pop %v9551
    %v9556 = vmul.f32 %v9521, %v9552
    %v9557 = vmul.f32 %v9523, %v9553
    %v9558 = vmul.f32 %v9533, %v9554
    %v9559 = vmul.f32 %v9535, %v9555
    %9560 = vst [vmem:[#allocation3 + $0xe0] sm:$0xff] %v9556
    %9561 = vst [vmem:[#allocation3 + $0xe8] sm:$0xff] %v9557
    %9562 = vst [vmem:[#allocation3 + $0xf0] sm:$0xff] %v9558
    %9563 = vst [vmem:[#allocation3 + $0xf8] sm:$0xff] %v9559
    %9564 = vst [vmem:[#allocation19] sm:$0xff] %v8666
    %9565 = vst [vmem:[#allocation19 + $0x8] sm:$0xff] %v8667
    %9566 = vst [vmem:[#allocation19 + $0x10] sm:$0xff] %v8668
    %9567 = vst [vmem:[#allocation19 + $0x18] sm:$0xff] %v8669
    %9568 = vst [vmem:[#allocation21] sm:$0xff] %v8658
    %9569 = vst [vmem:[#allocation21 + $0x8] sm:$0xff] %v8659
    %9570 = vst [vmem:[#allocation21 + $0x10] sm:$0xff] %v8660
    %9571 = vst [vmem:[#allocation21 + $0x18] sm:$0xff] %v8661
    %s9572 = scalar_lea.vmem [#allocation19], 32
    %9573 = vst [vmem:[%s9572] sm:$0xff] %v9556
    %9574 = vst [vmem:[%s9572 + $0x8] sm:$0xff] %v9557
    %9575 = vst [vmem:[%s9572 + $0x10] sm:$0xff] %v9558
    %9576 = vst [vmem:[%s9572 + $0x18] sm:$0xff] %v9559
    %s9577 = scalar_lea.vmem [#allocation21], 32
    %9578 = vst [vmem:[%s9577] sm:$0xff] %v9548
    %9579 = vst [vmem:[%s9577 + $0x8] sm:$0xff] %v9549
    %9580 = vst [vmem:[%s9577 + $0x10] sm:$0xff] %v9550
    %9581 = vst [vmem:[%s9577 + $0x18] sm:$0xff] %v9551
    %s9582 = smul.u32 4, 32
    %s9583 = smul.u32 %s9582, 1
    %s9584 = sshll.u32 %s9583, 4
    %9585 = dma.done %s128, %s9584
    %v9586 = vld [vmem:[#allocation3] sm:$0xff]
    %v9587 = vld [vmem:[#allocation3 + $0x8] sm:$0xff]
    %v9588 = vld [vmem:[#allocation3 + $0x10] sm:$0xff]
    %v9589 = vld [vmem:[#allocation3 + $0x18] sm:$0xff]
    %v9590 = vld [vmem:[#allocation3 + $0x20] sm:$0xff]
    %v9591 = vld [vmem:[#allocation3 + $0x28] sm:$0xff]
    %v9592 = vld [vmem:[#allocation3 + $0x30] sm:$0xff]
    %v9593 = vld [vmem:[#allocation3 + $0x38] sm:$0xff]
    %v9594 = vld [vmem:[#allocation3 + $0x40] sm:$0xff]
    %v9595 = vld [vmem:[#allocation3 + $0x48] sm:$0xff]
    %v9596 = vld [vmem:[#allocation3 + $0x50] sm:$0xff]
    %v9597 = vld [vmem:[#allocation3 + $0x58] sm:$0xff]
    %v9598 = vld [vmem:[#allocation3 + $0x60] sm:$0xff]
    %v9599 = vld [vmem:[#allocation3 + $0x68] sm:$0xff]
    %v9600 = vld [vmem:[#allocation3 + $0x70] sm:$0xff]
    %v9601 = vld [vmem:[#allocation3 + $0x78] sm:$0xff]
    %v9602 = vld [vmem:[#allocation3 + $0x80] sm:$0xff]
    %v9603 = vld [vmem:[#allocation3 + $0x88] sm:$0xff]
    %v9604 = vld [vmem:[#allocation3 + $0x90] sm:$0xff]
    %v9605 = vld [vmem:[#allocation3 + $0x98] sm:$0xff]
    %v9606 = vld [vmem:[#allocation3 + $0xa0] sm:$0xff]
    %v9607 = vld [vmem:[#allocation3 + $0xa8] sm:$0xff]
    %v9608 = vld [vmem:[#allocation3 + $0xb0] sm:$0xff]
    %v9609 = vld [vmem:[#allocation3 + $0xb8] sm:$0xff]
    %v9610 = vld [vmem:[#allocation3 + $0xc0] sm:$0xff]
    %v9611 = vld [vmem:[#allocation3 + $0xc8] sm:$0xff]
    %v9612 = vld [vmem:[#allocation3 + $0xd0] sm:$0xff]
    %v9613 = vld [vmem:[#allocation3 + $0xd8] sm:$0xff]
    %v9614 = vld [vmem:[#allocation3 + $0xe0] sm:$0xff]
    %v9615 = vld [vmem:[#allocation3 + $0xe8] sm:$0xff]
    %v9616 = vld [vmem:[#allocation3 + $0xf0] sm:$0xff]
    %v9617 = vld [vmem:[#allocation3 + $0xf8] sm:$0xff]
    %v9618 = vpack.c.bf16 %v9588, %v9586
    %v9619 = vpack.c.bf16 %v9589, %v9587
    %v9620 = vpack.c.bf16 %v9592, %v9590
    %v9621 = vpack.c.bf16 %v9593, %v9591
    %v9622 = vpack.c.bf16 %v9596, %v9594
    %v9623 = vpack.c.bf16 %v9597, %v9595
    %v9624 = vpack.c.bf16 %v9600, %v9598
    %v9625 = vpack.c.bf16 %v9601, %v9599
    %v9626 = vpack.c.bf16 %v9604, %v9602
    %v9627 = vpack.c.bf16 %v9605, %v9603
    %v9628 = vpack.c.bf16 %v9608, %v9606
    %v9629 = vpack.c.bf16 %v9609, %v9607
    %v9630 = vpack.c.bf16 %v9612, %v9610
    %v9631 = vpack.c.bf16 %v9613, %v9611
    %v9632 = vpack.c.bf16 %v9616, %v9614
    %v9633 = vpack.c.bf16 %v9617, %v9615
    %v9634 = vld [vmem:[#allocation5] sm:$0xf]
    %v9635 = vld [vmem:[#allocation5 + $0x4] sm:$0xf]
    %v9636 = vld [vmem:[#allocation5 + $0x8] sm:$0xf]
    %v9637 = vld [vmem:[#allocation5 + $0xc] sm:$0xf]
    %v9638 = vld [vmem:[#allocation5 + $0x10] sm:$0xf]
    %v9639 = vld [vmem:[#allocation5 + $0x14] sm:$0xf]
    %v9640 = vld [vmem:[#allocation5 + $0x18] sm:$0xf]
    %v9641 = vld [vmem:[#allocation5 + $0x1c] sm:$0xf]
    %v9642 = vld [vmem:[#allocation5 + $0x20] sm:$0xf]
    %v9643 = vld [vmem:[#allocation5 + $0x24] sm:$0xf]
    %v9644 = vld [vmem:[#allocation5 + $0x28] sm:$0xf]
    %v9645 = vld [vmem:[#allocation5 + $0x2c] sm:$0xf]
    %v9646 = vld [vmem:[#allocation5 + $0x30] sm:$0xf]
    %v9647 = vld [vmem:[#allocation5 + $0x34] sm:$0xf]
    %v9648 = vld [vmem:[#allocation5 + $0x38] sm:$0xf]
    %v9649 = vld [vmem:[#allocation5 + $0x3c] sm:$0xf]
    %v9650 = vld [vmem:[#allocation5 + $0x40] sm:$0xf]
    %v9651 = vld [vmem:[#allocation5 + $0x44] sm:$0xf]
    %v9652 = vld [vmem:[#allocation5 + $0x48] sm:$0xf]
    %v9653 = vld [vmem:[#allocation5 + $0x4c] sm:$0xf]
    %v9654 = vld [vmem:[#allocation5 + $0x50] sm:$0xf]
    %v9655 = vld [vmem:[#allocation5 + $0x54] sm:$0xf]
    %v9656 = vld [vmem:[#allocation5 + $0x58] sm:$0xf]
    %v9657 = vld [vmem:[#allocation5 + $0x5c] sm:$0xf]
    %v9658 = vld [vmem:[#allocation5 + $0x60] sm:$0xf]
    %v9659 = vld [vmem:[#allocation5 + $0x64] sm:$0xf]
    %v9660 = vld [vmem:[#allocation5 + $0x68] sm:$0xf]
    %v9661 = vld [vmem:[#allocation5 + $0x6c] sm:$0xf]
    %v9662 = vld [vmem:[#allocation5 + $0x70] sm:$0xf]
    %v9663 = vld [vmem:[#allocation5 + $0x74] sm:$0xf]
    %v9664 = vld [vmem:[#allocation5 + $0x78] sm:$0xf]
    %v9665 = vld [vmem:[#allocation5 + $0x7c] sm:$0xf]
    %v9666 = vld [vmem:[%s7] sm:$0x1]
    %v9668 = vlaneseq
    %v9669 = vshrl.u32 %v9668, 7
    %v9670 = vsub.s32 0, %v9669
    %v9671 = vrot.slane %v9666, %v9670
    %v9705 = vunpack.c.l.b16 %v9634
    %v9706 = vunpack.c.l.b16 %v9635
    %v9707 = vunpack.c.l.b16 %v9636
    %v9708 = vunpack.c.l.b16 %v9637
    %v9709 = vunpack.c.l.b16 %v9638
    %v9710 = vunpack.c.l.b16 %v9639
    %v9711 = vunpack.c.l.b16 %v9640
    %v9712 = vunpack.c.l.b16 %v9641
    %v9713 = vunpack.c.l.b16 %v9642
    %v9714 = vunpack.c.l.b16 %v9643
    %v9715 = vunpack.c.l.b16 %v9644
    %v9716 = vunpack.c.l.b16 %v9645
    %v9717 = vunpack.c.l.b16 %v9646
    %v9718 = vunpack.c.l.b16 %v9647
    %v9719 = vunpack.c.l.b16 %v9648
    %v9720 = vunpack.c.l.b16 %v9649
    %v9721 = vunpack.c.l.b16 %v9650
    %v9722 = vunpack.c.l.b16 %v9651
    %v9723 = vunpack.c.l.b16 %v9652
    %v9724 = vunpack.c.l.b16 %v9653
    %v9725 = vunpack.c.l.b16 %v9654
    %v9726 = vunpack.c.l.b16 %v9655
    %v9727 = vunpack.c.l.b16 %v9656
    %v9728 = vunpack.c.l.b16 %v9657
    %v9729 = vunpack.c.l.b16 %v9658
    %v9730 = vunpack.c.l.b16 %v9659
    %v9731 = vunpack.c.l.b16 %v9660
    %v9732 = vunpack.c.l.b16 %v9661
    %v9733 = vunpack.c.l.b16 %v9662
    %v9734 = vunpack.c.l.b16 %v9663
    %v9735 = vunpack.c.l.b16 %v9664
    %v9736 = vunpack.c.l.b16 %v9665
    %v9737 = vpack.c.b16 %v9706, %v9705
    %v9738 = vpack.c.b16 %v9708, %v9707
    %v9739 = vpack.c.b16 %v9710, %v9709
    %v9740 = vpack.c.b16 %v9712, %v9711
    %v9741 = vpack.c.b16 %v9714, %v9713
    %v9742 = vpack.c.b16 %v9716, %v9715
    %v9743 = vpack.c.b16 %v9718, %v9717
    %v9744 = vpack.c.b16 %v9720, %v9719
    %v9745 = vpack.c.b16 %v9722, %v9721
    %v9746 = vpack.c.b16 %v9724, %v9723
    %v9747 = vpack.c.b16 %v9726, %v9725
    %v9748 = vpack.c.b16 %v9728, %v9727
    %v9749 = vpack.c.b16 %v9730, %v9729
    %v9750 = vpack.c.b16 %v9732, %v9731
    %v9751 = vpack.c.b16 %v9734, %v9733
    %v9752 = vpack.c.b16 %v9736, %v9735
    %9769 = vmatprep.subr.bf16.mxu0 0
    %9770 = vmatpush1.bf16.msra.mxu0 %v9744
    %9771 = vmatprep.subr.bf16.mxu0 0
    %9772 = vmatpush1.bf16.msra.mxu0 %v9743
    %9773 = vmatprep.subr.bf16.mxu0 0
    %9774 = vmatpush1.bf16.msra.mxu0 %v9742
    %9775 = vmatprep.subr.bf16.mxu0 0
    %9776 = vmatpush1.bf16.msra.mxu0 %v9741
    %9777 = vmatprep.subr.bf16.mxu0 0
    %9778 = vmatpush1.bf16.msra.mxu0 %v9740
    %9779 = vmatprep.subr.bf16.mxu0 0
    %9780 = vmatpush1.bf16.msra.mxu0 %v9739
    %9781 = vmatprep.subr.bf16.mxu0 0
    %9782 = vmatpush1.bf16.msra.mxu0 %v9738
    %9783 = vmatprep.subr.bf16.mxu0 0
    %9784 = vmatpush1.bf16.msra.mxu0 %v9737
    %9785 = vmatprep.subr.bf16.mxu0 0
    %9786 = vmatpush2.bf16.msra.mxu0 %v9752
    %9787 = vmatprep.subr.bf16.mxu0 0
    %9788 = vmatpush2.bf16.msra.mxu0 %v9751
    %9789 = vmatprep.subr.bf16.mxu0 0
    %9790 = vmatpush2.bf16.msra.mxu0 %v9750
    %9791 = vmatprep.subr.bf16.mxu0 0
    %9792 = vmatpush2.bf16.msra.mxu0 %v9749
    %9793 = vmatprep.subr.bf16.mxu0 0
    %9794 = vmatpush2.bf16.msra.mxu0 %v9748
    %9795 = vmatprep.subr.bf16.mxu0 0
    %9796 = vmatpush2.bf16.msra.mxu0 %v9747
    %9797 = vmatprep.subr.bf16.mxu0 0
    %9798 = vmatpush2.bf16.msra.mxu0 %v9746
    %9799 = vmatprep.subr.bf16.mxu0 0
    %9800 = vmatpush2.bf16.msra.mxu0 %v9745
    %9801 = vmatprep.mubr.bf16.mxu0 %v9619
    %9802 = vmatmul.mubr.bf16.gmra.mxu0 %v9618
    %v9803 = vpop.f32.mrf.mxu0
    %v9804 = vadd.f32 %v9671, %v9803
    %v9805 = vpop.f32.mrf.mxu0
    %v9806 = vpop.f32.mrf.mxu0
    %v9807 = vadd.f32 %v9671, %v9806
    %v9808 = vpop.f32.mrf.mxu0
    %9809 = vmatprep.mubr.bf16.mxu0 %v9621
    %9810 = vmatmul.mubr.bf16.gmra.mxu0 %v9620
    %v9811 = vpop.f32.mrf.mxu0
    %v9812 = vadd.f32 %v9671, %v9811
    %v9813 = vpop.f32.mrf.mxu0
    %v9814 = vpop.f32.mrf.mxu0
    %v9815 = vadd.f32 %v9671, %v9814
    %v9816 = vpop.f32.mrf.mxu0
    %9817 = vmatprep.mubr.bf16.mxu0 %v9623
    %9818 = vmatmul.mubr.bf16.gmra.mxu0 %v9622
    %v9819 = vpop.f32.mrf.mxu0
    %v9820 = vadd.f32 %v9671, %v9819
    %v9821 = vpop.f32.mrf.mxu0
    %v9822 = vpop.f32.mrf.mxu0
    %v9823 = vadd.f32 %v9671, %v9822
    %v9824 = vpop.f32.mrf.mxu0
    %9825 = vmatprep.mubr.bf16.mxu0 %v9625
    %9826 = vmatmul.mubr.bf16.gmra.mxu0 %v9624
    %v9827 = vpop.f32.mrf.mxu0
    %v9828 = vadd.f32 %v9671, %v9827
    %v9829 = vpop.f32.mrf.mxu0
    %v9830 = vpop.f32.mrf.mxu0
    %v9831 = vadd.f32 %v9671, %v9830
    %v9832 = vpop.f32.mrf.mxu0
    %9833 = vmatprep.mubr.bf16.mxu0 %v9627
    %9834 = vmatmul.mubr.bf16.gmra.mxu0 %v9626
    %v9835 = vpop.f32.mrf.mxu0
    %v9836 = vadd.f32 %v9671, %v9835
    %v9837 = vpop.f32.mrf.mxu0
    %v9838 = vpop.f32.mrf.mxu0
    %v9839 = vadd.f32 %v9671, %v9838
    %v9840 = vpop.f32.mrf.mxu0
    %9841 = vmatprep.mubr.bf16.mxu0 %v9629
    %9842 = vmatmul.mubr.bf16.gmra.mxu0 %v9628
    %v9843 = vpop.f32.mrf.mxu0
    %v9844 = vadd.f32 %v9671, %v9843
    %v9845 = vpop.f32.mrf.mxu0
    %v9846 = vpop.f32.mrf.mxu0
    %v9847 = vadd.f32 %v9671, %v9846
    %v9848 = vpop.f32.mrf.mxu0
    %9849 = vmatprep.mubr.bf16.mxu0 %v9631
    %9850 = vmatmul.mubr.bf16.gmra.mxu0 %v9630
    %v9851 = vpop.f32.mrf.mxu0
    %v9852 = vadd.f32 %v9671, %v9851
    %v9853 = vpop.f32.mrf.mxu0
    %v9854 = vpop.f32.mrf.mxu0
    %v9855 = vadd.f32 %v9671, %v9854
    %v9856 = vpop.f32.mrf.mxu0
    %9857 = vmatprep.mubr.bf16.mxu0 %v9633
    %9858 = vmatmul.mubr.bf16.gmra.mxu0 %v9632
    %v9859 = vpop.f32.mrf.mxu0
    %v9860 = vadd.f32 %v9671, %v9859
    %v9861 = vpop.f32.mrf.mxu0
    %v9862 = vpop.f32.mrf.mxu0
    %v9863 = vadd.f32 %v9671, %v9862
    %v9864 = vpop.f32.mrf.mxu0
    %9865 = vdwg.mxu0
    %9866 = vst [vmem:[#allocation18] sm:$0xff] %v9804
    %9867 = vst [vmem:[#allocation18 + $0x8] sm:$0xff] %v9807
    %9868 = vst [vmem:[#allocation18 + $0x10] sm:$0xff] %v9812
    %9869 = vst [vmem:[#allocation18 + $0x18] sm:$0xff] %v9815
    %9870 = vst [vmem:[#allocation18 + $0x20] sm:$0xff] %v9820
    %9871 = vst [vmem:[#allocation18 + $0x28] sm:$0xff] %v9823
    %9872 = vst [vmem:[#allocation18 + $0x30] sm:$0xff] %v9828
    %9873 = vst [vmem:[#allocation18 + $0x38] sm:$0xff] %v9831
    %9874 = vst [vmem:[#allocation18 + $0x40] sm:$0xff] %v9836
    %9875 = vst [vmem:[#allocation18 + $0x48] sm:$0xff] %v9839
    %9876 = vst [vmem:[#allocation18 + $0x50] sm:$0xff] %v9844
    %9877 = vst [vmem:[#allocation18 + $0x58] sm:$0xff] %v9847
    %9878 = vst [vmem:[#allocation18 + $0x60] sm:$0xff] %v9852
    %9879 = vst [vmem:[#allocation18 + $0x68] sm:$0xff] %v9855
    %9880 = vst [vmem:[#allocation18 + $0x70] sm:$0xff] %v9860
    %9881 = vst [vmem:[#allocation18 + $0x78] sm:$0xff] %v9863
    // Predicated region
    $region66: #{tpu_custom_call.1} parent=1 // pred_check
      _
    $region67: #{tpu_custom_call.1} parent=1 // pred_check_branch
      %9883 = sbr.rel (0) target = $region69
    $region68: #{tpu_custom_call.1} parent=1 // pred_region
      %s9885 = ssub.s32 2048, 2048
      %9886 = vsyncadd [#allocation9], %s9885
      %s9887 = sshll.u32 [#allocation18], 4
      %s9888 = int_to_ptr.vmem [resolvable:$true] %s9887
      %9893 = dma.vmem_to_hbm [thread:$0]  %s9888, 2048, %s10, [#allocation9], 128, 128, 8
    $region69: #{tpu_custom_call.1} parent=1 // pred_fallthru
      _
    // Predicated region
    $region70: #{tpu_custom_call.1} parent=1 // pred_check
      _
    $region71: #{tpu_custom_call.1} parent=1 // pred_check_branch
      %9895 = sbr.rel (0) target = $region73
    $region72: #{tpu_custom_call.1} parent=1 // pred_region
      %s9897 = ssub.s32 1024, 1024
      %9898 = vsyncadd [#allocation20], %s9897
      %s9899 = sshll.u32 [#allocation19], 4
      %s9900 = int_to_ptr.vmem [resolvable:$true] %s9899
      %9905 = dma.vmem_to_hbm [thread:$0]  %s9900, 1024, %s11, [#allocation20], 256, 256, 16
    $region73: #{tpu_custom_call.1} parent=1 // pred_fallthru
      _
    // Predicated region
    $region74: #{tpu_custom_call.1} parent=1 // pred_check
      _
    $region75: #{tpu_custom_call.1} parent=1 // pred_check_branch
      %9907 = sbr.rel (0) target = $region77
    $region76: #{tpu_custom_call.1} parent=1 // pred_region
      %s9909 = ssub.s32 1024, 1024
      %9910 = vsyncadd [#allocation20], %s9909
      %s9911 = sshll.u32 [#allocation21], 4
      %s9912 = int_to_ptr.vmem [resolvable:$true] %s9911
      %9917 = dma.vmem_to_hbm [thread:$0]  %s9912, 1024, %s12, [#allocation20], 256, 256, 16
    $region77: #{tpu_custom_call.1} parent=1 // pred_fallthru
      _
    // Predicated region
    $region78: #{tpu_custom_call.1} parent=1 // pred_check
      _
    $region79: #{tpu_custom_call.1} parent=1 // pred_check_branch
      %9919 = sbr.rel (0) target = $region81
    $region80: #{tpu_custom_call.1} parent=1 // pred_region
      %9920 = dma.done [#allocation9], 2048
    $region81: #{tpu_custom_call.1} parent=1 // pred_fallthru
      _
    // Predicated region
    $region82: #{tpu_custom_call.1} parent=1 // pred_check
      _
    $region83: #{tpu_custom_call.1} parent=1 // pred_check_branch
      %9922 = sbr.rel (0) target = $region85
    $region84: #{tpu_custom_call.1} parent=1 // pred_region
      %9923 = dma.done [#allocation20], 1024
    $region85: #{tpu_custom_call.1} parent=1 // pred_fallthru
      _
    // Predicated region
    $region86: #{tpu_custom_call.1} parent=1 // pred_check
      _
    $region87: #{tpu_custom_call.1} parent=1 // pred_check_branch
      %9925 = sbr.rel (0) target = $region89
    $region88: #{tpu_custom_call.1} parent=1 // pred_region
      %9926 = dma.done [#allocation20], 1024
    $region89: #{tpu_custom_call.1} parent=1 // pred_fallthru
      _
    %9927 = vsyncpa [#allocation8], 1
    %9928 = vsyncpa [#allocation11], 1
    %9929 = vsyncpa [#allocation14], 1
    %9930 = vsyncpa [#allocation17], 1
    %9931 = vsyncpa [#allocation9], 1
    %9932 = vsyncpa [#allocation20], 1
  %9933 = vsyncmov [#allocation6]
  %s9934 = vpop.sfrf %9933
  %p9935 = scmp.eq.s32.totalorder %s9934, 0
  %p9936 = pneg %p9935
  %9938 = shalt.err (%p9936)
  %s9939 = scalar_lea.sflag [#allocation6], 1
  %9940 = vsyncmov %s9939
  %s9941 = vpop.sfrf %9940
  %p9942 = scmp.eq.s32.totalorder %s9941, 0
  %p9943 = pneg %p9942
  %9945 = shalt.err (%p9943)

</llo_original>
